<compile_context>
chip_gen: v6e
topology: v6e:2x2x1
jax: 0.10.0
libtpu: 0.0.40
codegen_flags: <defaults>
</compile_context>

<pallas_src>
import numpy as np

import jax
import jax.numpy as jnp
from jax.experimental import pallas as pl
from jax.experimental.pallas import tpu as pltpu


# --------------------------------------------------------------------------
# In-kernel helpers (traced inside the Pallas kernel; only plain VPU/MXU ops,
# no reshapes that move data between lanes and sublanes).
# --------------------------------------------------------------------------
def _iota2(shape, dim):
    return jax.lax.broadcasted_iota(jnp.int32, shape, dim)


def _placement(m, factor, r, dtype):
    """(factor*m, m) 0/1 matrix P with P[i, j] = 1 iff i == factor*j + r."""
    i = _iota2((factor * m, m), 0)
    j = _iota2((factor * m, m), 1)
    return (i == factor * j + r).astype(dtype)


def _group_mats(n_lanes, c):
    """0/1 channel-group matrices: g (n_lanes, c) with g[l, k] = (l % c == k),
    and its transpose orientation gt (c, n_lanes)."""
    g = (_iota2((n_lanes, c), 0) % c == _iota2((n_lanes, c), 1)).astype(jnp.float32)
    gt = (_iota2((c, n_lanes), 1) % c == _iota2((c, n_lanes), 0)).astype(jnp.float32)
    return g, gt


def _bn_relu(parts, gamma, beta, c):
    """Training-mode BatchNorm (batch stats, biased var, eps=1e-5) + ReLU.

    `parts` are f32 (rows, n) tiles whose lanes end with the channel (minor,
    so lane % c == channel); together they cover every output position exactly
    once.  Per-channel reductions / broadcasts go through tiny 0/1 matmuls so
    no lane<->sublane reshapes are needed.
    """
    n = parts[0].shape[1]
    count = sum(p.shape[0] for p in parts) * (n // c)
    g, gt = _group_mats(n, c)
    s = sum([jnp.sum(p, axis=0, keepdims=True) for p in parts])         # (1, n)
    sq = sum([jnp.sum(p * p, axis=0, keepdims=True) for p in parts])    # (1, n)
    s_c = jnp.dot(s, g, preferred_element_type=jnp.float32)             # (1, c)
    sq_c = jnp.dot(sq, g, preferred_element_type=jnp.float32)
    mean = s_c / count
    var = sq_c / count - mean * mean
    scale_c = gamma * jax.lax.rsqrt(var + 1e-5)
    shift_c = beta - mean * scale_c
    scale_l = jnp.dot(scale_c, gt, preferred_element_type=jnp.float32)  # (1, n)
    shift_l = jnp.dot(shift_c, gt, preferred_element_type=jnp.float32)
    return [jnp.maximum(p * scale_l + shift_l, 0.0) for p in parts]


def _stride2_matmuls(x, w0, w1, height):
    """The two banded matmuls (output-row phases ry=0/1) of a stride-2, k=4,
    pad=1 ConvTranspose2d.

    x: (B*height, W*Cin) bf16, rows (b, h), lanes (w, c).
    Returns y0, y1: (B*height, W*2*Cout) f32, lanes (w_out phase folded)."""
    m, l = x.shape
    zrow = jnp.zeros((1, l), x.dtype)
    up = jnp.concatenate([zrow, x[:m - 1, :]], axis=0)   # input row h-1
    dn = jnp.concatenate([x[1:, :], zrow], axis=0)       # input row h+1
    h = _iota2((m, l), 0) % height
    up = jnp.where(h == 0, jnp.zeros_like(up), up)              # zero at image top
    dn = jnp.where(h == height - 1, jnp.zeros_like(dn), dn)     # zero at image bottom
    a0 = jnp.concatenate([up, x], axis=1)                # rows {h-1, h}  (ry = 0)
    a1 = jnp.concatenate([x, dn], axis=1)                # rows {h, h+1}  (ry = 1)
    y0 = jnp.dot(a0, w0, preferred_element_type=jnp.float32)
    y1 = jnp.dot(a1, w1, preferred_element_type=jnp.float32)
    return y0, y1


def _row_interleave(y0, y1, out_dtype):
    """Interleave rows: out[2j] = y0[j], out[2j+1] = y1[j], via 0/1 MXU
    placement matmuls (keeps (b, h)-major row order, no relayout reshapes)."""
    m = y0.shape[0]
    p0 = _placement(m, 2, 0, y0.dtype)
    p1 = _placement(m, 2, 1, y1.dtype)
    z = (jnp.dot(p0, y0, preferred_element_type=jnp.float32)
         + jnp.dot(p1, y1, preferred_element_type=jnp.float32))
    return z.astype(out_dtype)


# ------------------------------------------------------------------ kernel ---
def _generator_kernel(noise_ref, w1_ref, g1_ref, be1_ref,
                      w2a_ref, w2b_ref, g2_ref, be2_ref,
                      w3a_ref, w3b_ref, g3_ref, be3_ref,
                      w4a_ref, w4b_ref, g4_ref, be4_ref,
                      w5a_ref, w5b_ref, b5_ref, o_ref):
    f32, bf16 = jnp.float32, jnp.bfloat16
    batch = noise_ref.shape[0]

    # ---- deconv1 (1x1 -> 4x4): ONE matmul, 16 output pixels folded into N ---
    y = jnp.dot(noise_ref[...].astype(bf16), w1_ref[...],
                preferred_element_type=f32)              # (B, 16*C1), lanes (oy, ox, c)
    c1 = g1_ref.shape[1]
    nl = 4 * c1                                          # lanes per output row (ox, c)
    # scatter the 4 output rows (oy) into the row dim -> rows (b, oy), lanes (ox, c)
    x = sum([jnp.dot(_placement(batch, 4, oy, f32), y[:, oy * nl:(oy + 1) * nl],
                     preferred_element_type=f32)
             for oy in range(4)])                        # (4B, 4*C1)
    x = _bn_relu([x], g1_ref[...], be1_ref[...], c1)[0].astype(bf16)

    # ---- deconv2..deconv4: banded stride-2 matmuls + BatchNorm + ReLU -------
    layers = ((4, w2a_ref, w2b_ref, g2_ref, be2_ref),
              (8, w3a_ref, w3b_ref, g3_ref, be3_ref),
              (16, w4a_ref, w4b_ref, g4_ref, be4_ref))
    for height, wa, wb, gamma, beta in layers:
        cout = gamma.shape[1]
        y0, y1 = _stride2_matmuls(x, wa[...], wb[...], height)
        y0, y1 = _bn_relu([y0, y1], gamma[...], beta[...], cout)
        x = _row_interleave(y0.astype(bf16), y1.astype(bf16), bf16)

    # ---- deconv5: banded stride-2 matmuls + bias + tanh ---------------------
    # Output lanes are channel-major (co, ox) so NCHW planes are static slices.
    y0, y1 = _stride2_matmuls(x, w5a_ref[...], w5b_ref[...], 32)
    bias = b5_ref[...]
    y0 = jnp.tanh(y0 + bias)
    y1 = jnp.tanh(y1 + bias)
    z = _row_interleave(y0, y1, f32)                     # (B*64, 3*64), rows (b, oy)

    # Direct NCHW stores (64-lane-wide planes), no wrapper transpose needed.
    for b in range(batch):
        for co in range(3):
            o_ref[b, co, :, :] = z[b * 64:(b + 1) * 64, co * 64:(co + 1) * 64]


# --------------------------------------------------------------- generator ---
@jax.jit
def generator_forward(prep, noise):
    """noise (B, nz) -> image (B, 3, 64, 64) NCHW, one fused Pallas call.

    torch: input.expand(1,1,-1,-1).permute(2,3,0,1) == NCHW (B, nz, 1, 1)."""
    batch = noise.shape[0]
    args = (noise,
            prep["w1"], prep["g1"], prep["be1"],
            prep["w2a"], prep["w2b"], prep["g2"], prep["be2"],
            prep["w3a"], prep["w3b"], prep["g3"], prep["be3"],
            prep["w4a"], prep["w4b"], prep["g4"], prep["be4"],
            prep["w5a"], prep["w5b"], prep["b5"])
    vmem = pl.BlockSpec(memory_space=pltpu.MemorySpace.VMEM)
    return pl.pallas_call(
        _generator_kernel,
        out_shape=jax.ShapeDtypeStruct((batch, 3, 64, 64), jnp.float32),
        in_specs=[vmem] * len(args),
        out_specs=vmem,
    )(*args)


# ------------------------------------------------------------------ params ---
def init_params(key, noise_size, d=8):
    ks = jax.random.split(key, 5)

    def w_init(k, cin, cout):
        return 0.02 * jax.random.normal(k, (cin, cout, 4, 4), jnp.float32)

    # TODO(synk): the reference module declares deconv4 as (d*2 -> d*2) but then
    # applies BatchNorm2d(d) and deconv5(d -> 3); as written it cannot run.
    # We use the DCGAN-consistent d*2 -> d so the forward pass is executable.
    return {
        "w1": w_init(ks[0], noise_size, d * 8), "b1": jnp.zeros((d * 8,)),
        "g1": jnp.ones((d * 8,)), "be1": jnp.zeros((d * 8,)),
        "w2": w_init(ks[1], d * 8, d * 4), "b2": jnp.zeros((d * 4,)),
        "g2": jnp.ones((d * 4,)), "be2": jnp.zeros((d * 4,)),
        "w3": w_init(ks[2], d * 4, d * 2), "b3": jnp.zeros((d * 2,)),
        "g3": jnp.ones((d * 2,)), "be3": jnp.zeros((d * 2,)),
        "w4": w_init(ks[3], d * 2, d), "b4": jnp.zeros((d,)),
        "g4": jnp.ones((d,)), "be4": jnp.zeros((d,)),
        "w5": w_init(ks[4], d, 3), "b5": jnp.zeros((3,)),
    }


def _fused_stride2_weight(w, ry, width, channel_major_out=False):
    """Banded, phase-folded matmul weight for output-row phase `ry` of a
    stride-2, k=4, pad=1 ConvTranspose2d.

    Operand lane order is (dy, w_in, ci), where dy selects input row
    my + ry - 1 + dy; output lane order is (mx, rx, co) -- or (co, mx, rx) if
    channel_major_out -- where the output column is 2*mx + rx.
    """
    w = np.asarray(w, np.float32)                 # (Cin, Cout, 4, 4)
    cin, cout = w.shape[0], w.shape[1]
    wf = np.zeros((2, width, cin, width, 2, cout), np.float32)
    for dy in range(2):
        ky = 3 - ry - 2 * dy
        for rx in range(2):
            for dx in range(2):
                kx = 3 - rx - 2 * dx
                for mx in range(width):
                    w_in = mx + rx - 1 + dx
                    if 0 <= w_in < width:
                        wf[dy, w_in, :, mx, rx, :] = w[:, :, ky, kx]
    if channel_major_out:
        wf = wf.transpose(0, 1, 2, 5, 3, 4)       # lanes (co, mx, rx)
    return wf.reshape(2 * width * cin, width * 2 * cout)


def prepare_params(params, compute_dtype=jnp.bfloat16):
    """One-time weight layout prep (hoisted out of the forward pass)."""
    w1 = np.asarray(params["w1"], np.float32)     # (nz, C1, 4, 4)
    nz, c1 = w1.shape[0], w1.shape[1]
    prep = {
        # deconv1 columns ordered (oy, ox, c) -> one (nz, 16*C1) matmul.
        "w1": jnp.asarray(w1.transpose(0, 2, 3, 1).reshape(nz, 16 * c1),
                          dtype=compute_dtype),
        # deconv5 bias tiled to the channel-major (co, ox) lane order.
        "b5": jnp.asarray(
            np.repeat(np.asarray(params["b5"], np.float32), 64)[None, :]),
    }
    widths = {2: 4, 3: 8, 4: 16, 5: 32}
    for i in (2, 3, 4, 5):
        cm = (i == 5)
        prep[f"w{i}a"] = jnp.asarray(
            _fused_stride2_weight(params[f"w{i}"], 0, widths[i], cm),
            dtype=compute_dtype)
        prep[f"w{i}b"] = jnp.asarray(
            _fused_stride2_weight(params[f"w{i}"], 1, widths[i], cm),
            dtype=compute_dtype)
    for i in (1, 2, 3, 4):
        prep[f"g{i}"] = jnp.asarray(params[f"g{i}"], jnp.float32).reshape(1, -1)
        prep[f"be{i}"] = jnp.asarray(params[f"be{i}"], jnp.float32).reshape(1, -1)
    # b1..b4 are intentionally dropped: a per-channel constant added before
    # training-mode BatchNorm is exactly cancelled by the mean subtraction.
    return prep


if __name__ == "__main__":
    key = jax.random.PRNGKey(0)
    kp, kn = jax.random.split(key)

    noise_size, d, batch = 16, 8, 2
    params = init_params(kp, noise_size, d=d)
    prep = prepare_params(params)
    noise = jax.random.normal(kn, (batch, noise_size), jnp.float32)

    out = generator_forward(prep, noise)
    out = jax.block_until_ready(out)

    assert out.shape == (batch, 3, 64, 64), out.shape
    assert bool(jnp.all(jnp.isfinite(out)))
    assert bool(jnp.all(jnp.abs(out) <= 1.0 + 1e-6))  # tanh range
    print("KERNEL_OK")
</pallas_src>

<mosaic_0001>
module attributes {stable_mosaic.version = 11 : i64} {
  func.func @_generator_kernel(%arg0: memref<2x16xf32, #tpu.memory_space<vmem>>, %arg1: memref<16x1024xbf16, #tpu.memory_space<vmem>>, %arg2: memref<1x64xf32, #tpu.memory_space<vmem>>, %arg3: memref<1x64xf32, #tpu.memory_space<vmem>>, %arg4: memref<512x256xbf16, #tpu.memory_space<vmem>>, %arg5: memref<512x256xbf16, #tpu.memory_space<vmem>>, %arg6: memref<1x32xf32, #tpu.memory_space<vmem>>, %arg7: memref<1x32xf32, #tpu.memory_space<vmem>>, %arg8: memref<512x256xbf16, #tpu.memory_space<vmem>>, %arg9: memref<512x256xbf16, #tpu.memory_space<vmem>>, %arg10: memref<1x16xf32, #tpu.memory_space<vmem>>, %arg11: memref<1x16xf32, #tpu.memory_space<vmem>>, %arg12: memref<512x256xbf16, #tpu.memory_space<vmem>>, %arg13: memref<512x256xbf16, #tpu.memory_space<vmem>>, %arg14: memref<1x8xf32, #tpu.memory_space<vmem>>, %arg15: memref<1x8xf32, #tpu.memory_space<vmem>>, %arg16: memref<512x192xbf16, #tpu.memory_space<vmem>>, %arg17: memref<512x192xbf16, #tpu.memory_space<vmem>>, %arg18: memref<1x192xf32, #tpu.memory_space<vmem>>, %arg19: memref<2x3x64x64xf32, #tpu.memory_space<vmem>>) attributes {dimension_semantics = [], scalar_prefetch = 0 : i64, scratch_operands = 0 : i64, tpu.core_type = #tpu.core_type<tc>} {
    %c0 = arith.constant 0 : index
    %c0_0 = arith.constant 0 : index
    %0 = vector.load %arg0[%c0, %c0_0] : memref<2x16xf32, #tpu.memory_space<vmem>>, vector<2x16xf32>
    %1 = arith.truncf %0 : vector<2x16xf32> to vector<2x16xbf16>
    %c0_1 = arith.constant 0 : index
    %c0_2 = arith.constant 0 : index
    %2 = vector.load %arg1[%c0_1, %c0_2] : memref<16x1024xbf16, #tpu.memory_space<vmem>>, vector<16x1024xbf16>
    %cst = arith.constant dense<0.000000e+00> : vector<2x1024xf32>
    %3 = tpu.matmul %1, %2, %cst {dimension_numbers = #tpu.dot_dimension_numbers<[1], [0], [0], [1], [0, 0, 1, 1], [], []>} : vector<2x16xbf16>, vector<16x1024xbf16>, vector<2x1024xf32> -> vector<2x1024xf32>
    %4 = tpu.iota {dimensions = array<i32: 0>} : vector<8x2xi32>
    %5 = tpu.iota {dimensions = array<i32: 1>} : vector<8x2xi32>
    %c4_i32 = arith.constant 4 : i32
    %6 = vector.broadcast %c4_i32 : i32 to vector<8x2xi32>
    %7 = arith.muli %6, %5 : vector<8x2xi32>
    %c0_i32 = arith.constant 0 : i32
    %8 = vector.broadcast %c0_i32 : i32 to vector<8x2xi32>
    %9 = arith.addi %7, %8 : vector<8x2xi32>
    %10 = arith.cmpi eq, %4, %9 : vector<8x2xi32>
    %11 = arith.extui %10 : vector<8x2xi1> to vector<8x2xi32>
    %12 = arith.sitofp %11 : vector<8x2xi32> to vector<8x2xf32>
    %13 = vector.extract_strided_slice %3 {offsets = [0, 0], sizes = [2, 256], strides = [1, 1]} : vector<2x1024xf32> to vector<2x256xf32>
    %cst_3 = arith.constant dense<0.000000e+00> : vector<8x256xf32>
    %14 = tpu.matmul %12, %13, %cst_3 {dimension_numbers = #tpu.dot_dimension_numbers<[1], [0], [0], [1], [0, 0, 1, 1], [], []>} : vector<8x2xf32>, vector<2x256xf32>, vector<8x256xf32> -> vector<8x256xf32>
    %15 = tpu.iota {dimensions = array<i32: 0>} : vector<8x2xi32>
    %16 = tpu.iota {dimensions = array<i32: 1>} : vector<8x2xi32>
    %c4_i32_4 = arith.constant 4 : i32
    %17 = vector.broadcast %c4_i32_4 : i32 to vector<8x2xi32>
    %18 = arith.muli %17, %16 : vector<8x2xi32>
    %c1_i32 = arith.constant 1 : i32
    %19 = vector.broadcast %c1_i32 : i32 to vector<8x2xi32>
    %20 = arith.addi %18, %19 : vector<8x2xi32>
    %21 = arith.cmpi eq, %15, %20 : vector<8x2xi32>
    %22 = arith.extui %21 : vector<8x2xi1> to vector<8x2xi32>
    %23 = arith.sitofp %22 : vector<8x2xi32> to vector<8x2xf32>
    %24 = vector.extract_strided_slice %3 {offsets = [0, 256], sizes = [2, 256], strides = [1, 1]} : vector<2x1024xf32> to vector<2x256xf32>
    %cst_5 = arith.constant dense<0.000000e+00> : vector<8x256xf32>
    %25 = tpu.matmul %23, %24, %cst_5 {dimension_numbers = #tpu.dot_dimension_numbers<[1], [0], [0], [1], [0, 0, 1, 1], [], []>} : vector<8x2xf32>, vector<2x256xf32>, vector<8x256xf32> -> vector<8x256xf32>
    %26 = tpu.iota {dimensions = array<i32: 0>} : vector<8x2xi32>
    %27 = tpu.iota {dimensions = array<i32: 1>} : vector<8x2xi32>
    %c4_i32_6 = arith.constant 4 : i32
    %28 = vector.broadcast %c4_i32_6 : i32 to vector<8x2xi32>
    %29 = arith.muli %28, %27 : vector<8x2xi32>
    %c2_i32 = arith.constant 2 : i32
    %30 = vector.broadcast %c2_i32 : i32 to vector<8x2xi32>
    %31 = arith.addi %29, %30 : vector<8x2xi32>
    %32 = arith.cmpi eq, %26, %31 : vector<8x2xi32>
    %33 = arith.extui %32 : vector<8x2xi1> to vector<8x2xi32>
    %34 = arith.sitofp %33 : vector<8x2xi32> to vector<8x2xf32>
    %35 = vector.extract_strided_slice %3 {offsets = [0, 512], sizes = [2, 256], strides = [1, 1]} : vector<2x1024xf32> to vector<2x256xf32>
    %cst_7 = arith.constant dense<0.000000e+00> : vector<8x256xf32>
    %36 = tpu.matmul %34, %35, %cst_7 {dimension_numbers = #tpu.dot_dimension_numbers<[1], [0], [0], [1], [0, 0, 1, 1], [], []>} : vector<8x2xf32>, vector<2x256xf32>, vector<8x256xf32> -> vector<8x256xf32>
    %37 = tpu.iota {dimensions = array<i32: 0>} : vector<8x2xi32>
    %38 = tpu.iota {dimensions = array<i32: 1>} : vector<8x2xi32>
    %c4_i32_8 = arith.constant 4 : i32
    %39 = vector.broadcast %c4_i32_8 : i32 to vector<8x2xi32>
    %40 = arith.muli %39, %38 : vector<8x2xi32>
    %c3_i32 = arith.constant 3 : i32
    %41 = vector.broadcast %c3_i32 : i32 to vector<8x2xi32>
    %42 = arith.addi %40, %41 : vector<8x2xi32>
    %43 = arith.cmpi eq, %37, %42 : vector<8x2xi32>
    %44 = arith.extui %43 : vector<8x2xi1> to vector<8x2xi32>
    %45 = arith.sitofp %44 : vector<8x2xi32> to vector<8x2xf32>
    %46 = vector.extract_strided_slice %3 {offsets = [0, 768], sizes = [2, 256], strides = [1, 1]} : vector<2x1024xf32> to vector<2x256xf32>
    %cst_9 = arith.constant dense<0.000000e+00> : vector<8x256xf32>
    %47 = tpu.matmul %45, %46, %cst_9 {dimension_numbers = #tpu.dot_dimension_numbers<[1], [0], [0], [1], [0, 0, 1, 1], [], []>} : vector<8x2xf32>, vector<2x256xf32>, vector<8x256xf32> -> vector<8x256xf32>
    %cst_10 = arith.constant 0.000000e+00 : f32
    %48 = vector.broadcast %cst_10 : f32 to vector<8x256xf32>
    %49 = arith.addf %48, %14 : vector<8x256xf32>
    %50 = arith.addf %49, %25 : vector<8x256xf32>
    %51 = arith.addf %50, %36 : vector<8x256xf32>
    %52 = arith.addf %51, %47 : vector<8x256xf32>
    %c0_11 = arith.constant 0 : index
    %c0_12 = arith.constant 0 : index
    %53 = vector.load %arg2[%c0_11, %c0_12] : memref<1x64xf32, #tpu.memory_space<vmem>>, vector<1x64xf32>
    %c0_13 = arith.constant 0 : index
    %c0_14 = arith.constant 0 : index
    %54 = vector.load %arg3[%c0_13, %c0_14] : memref<1x64xf32, #tpu.memory_space<vmem>>, vector<1x64xf32>
    %55 = tpu.iota {dimensions = array<i32: 0>} : vector<256x64xi32>
    %c64_i32 = arith.constant 64 : i32
    %c0_i32_15 = arith.constant 0 : i32
    %56 = arith.cmpi eq, %c64_i32, %c0_i32_15 : i32
    %c1_i32_16 = arith.constant 1 : i32
    %57 = arith.select %56, %c1_i32_16, %c64_i32 : i32
    %58 = vector.broadcast %57 : i32 to vector<256x64xi32>
    %59 = arith.remsi %55, %58 : vector<256x64xi32>
    %c0_i32_17 = arith.constant 0 : i32
    %60 = vector.broadcast %c0_i32_17 : i32 to vector<256x64xi32>
    %61 = arith.cmpi ne, %59, %60 : vector<256x64xi32>
    %c0_i32_18 = arith.constant 0 : i32
    %62 = vector.broadcast %c0_i32_18 : i32 to vector<256x64xi32>
    %63 = arith.cmpi slt, %59, %62 : vector<256x64xi32>
    %c0_i32_19 = arith.constant 0 : i32
    %64 = arith.cmpi slt, %57, %c0_i32_19 : i32
    %65 = vector.broadcast %64 : i1 to vector<256x64xi1>
    %66 = vector.broadcast %65 : vector<256x64xi1> to vector<256x64xi1>
    %67 = arith.xori %63, %66 : vector<256x64xi1>
    %68 = arith.andi %67, %61 : vector<256x64xi1>
    %69 = vector.broadcast %57 : i32 to vector<256x64xi32>
    %70 = arith.addi %59, %69 : vector<256x64xi32>
    %71 = arith.select %68, %70, %59 : vector<256x64xi1>, vector<256x64xi32>
    %72 = tpu.iota {dimensions = array<i32: 1>} : vector<256x64xi32>
    %73 = arith.cmpi eq, %71, %72 : vector<256x64xi32>
    %74 = arith.extui %73 : vector<256x64xi1> to vector<256x64xi32>
    %75 = arith.sitofp %74 : vector<256x64xi32> to vector<256x64xf32>
    %76 = tpu.iota {dimensions = array<i32: 1>} : vector<64x256xi32>
    %c64_i32_20 = arith.constant 64 : i32
    %c0_i32_21 = arith.constant 0 : i32
    %77 = arith.cmpi eq, %c64_i32_20, %c0_i32_21 : i32
    %c1_i32_22 = arith.constant 1 : i32
    %78 = arith.select %77, %c1_i32_22, %c64_i32_20 : i32
    %79 = vector.broadcast %78 : i32 to vector<64x256xi32>
    %80 = arith.remsi %76, %79 : vector<64x256xi32>
    %c0_i32_23 = arith.constant 0 : i32
    %81 = vector.broadcast %c0_i32_23 : i32 to vector<64x256xi32>
    %82 = arith.cmpi ne, %80, %81 : vector<64x256xi32>
    %c0_i32_24 = arith.constant 0 : i32
    %83 = vector.broadcast %c0_i32_24 : i32 to vector<64x256xi32>
    %84 = arith.cmpi slt, %80, %83 : vector<64x256xi32>
    %c0_i32_25 = arith.constant 0 : i32
    %85 = arith.cmpi slt, %78, %c0_i32_25 : i32
    %86 = vector.broadcast %85 : i1 to vector<64x256xi1>
    %87 = vector.broadcast %86 : vector<64x256xi1> to vector<64x256xi1>
    %88 = arith.xori %84, %87 : vector<64x256xi1>
    %89 = arith.andi %88, %82 : vector<64x256xi1>
    %90 = vector.broadcast %78 : i32 to vector<64x256xi32>
    %91 = arith.addi %80, %90 : vector<64x256xi32>
    %92 = arith.select %89, %91, %80 : vector<64x256xi1>, vector<64x256xi32>
    %93 = tpu.iota {dimensions = array<i32: 0>} : vector<64x256xi32>
    %94 = arith.cmpi eq, %92, %93 : vector<64x256xi32>
    %95 = arith.extui %94 : vector<64x256xi1> to vector<64x256xi32>
    %96 = arith.sitofp %95 : vector<64x256xi32> to vector<64x256xf32>
    %cst_26 = arith.constant dense<0.000000e+00> : vector<256xf32>
    %97 = vector.multi_reduction <add>, %52, %cst_26 [0] : vector<8x256xf32> to vector<256xf32>
    %98 = vector.shape_cast %97 : vector<256xf32> to vector<1x256xf32>
    %cst_27 = arith.constant 0.000000e+00 : f32
    %99 = vector.broadcast %cst_27 : f32 to vector<1x256xf32>
    %100 = arith.addf %99, %98 : vector<1x256xf32>
    %101 = arith.mulf %52, %52 : vector<8x256xf32>
    %cst_28 = arith.constant dense<0.000000e+00> : vector<256xf32>
    %102 = vector.multi_reduction <add>, %101, %cst_28 [0] : vector<8x256xf32> to vector<256xf32>
    %103 = vector.shape_cast %102 : vector<256xf32> to vector<1x256xf32>
    %cst_29 = arith.constant 0.000000e+00 : f32
    %104 = vector.broadcast %cst_29 : f32 to vector<1x256xf32>
    %105 = arith.addf %104, %103 : vector<1x256xf32>
    %cst_30 = arith.constant dense<0.000000e+00> : vector<1x64xf32>
    %106 = tpu.matmul %100, %75, %cst_30 {dimension_numbers = #tpu.dot_dimension_numbers<[1], [0], [0], [1], [0, 0, 1, 1], [], []>} : vector<1x256xf32>, vector<256x64xf32>, vector<1x64xf32> -> vector<1x64xf32>
    %cst_31 = arith.constant dense<0.000000e+00> : vector<1x64xf32>
    %107 = tpu.matmul %105, %75, %cst_31 {dimension_numbers = #tpu.dot_dimension_numbers<[1], [0], [0], [1], [0, 0, 1, 1], [], []>} : vector<1x256xf32>, vector<256x64xf32>, vector<1x64xf32> -> vector<1x64xf32>
    %cst_32 = arith.constant 3.200000e+01 : f32
    %108 = vector.broadcast %cst_32 : f32 to vector<1x64xf32>
    %109 = arith.divf %106, %108 : vector<1x64xf32>
    %cst_33 = arith.constant 3.200000e+01 : f32
    %110 = vector.broadcast %cst_33 : f32 to vector<1x64xf32>
    %111 = arith.divf %107, %110 : vector<1x64xf32>
    %112 = arith.mulf %109, %109 : vector<1x64xf32>
    %113 = arith.subf %111, %112 : vector<1x64xf32>
    %cst_34 = arith.constant 9.99999974E-6 : f32
    %114 = vector.broadcast %cst_34 : f32 to vector<1x64xf32>
    %115 = arith.addf %113, %114 : vector<1x64xf32>
    %116 = math.rsqrt %115 : vector<1x64xf32>
    %117 = arith.mulf %53, %116 : vector<1x64xf32>
    %118 = arith.mulf %109, %117 : vector<1x64xf32>
    %119 = arith.subf %54, %118 : vector<1x64xf32>
    %cst_35 = arith.constant dense<0.000000e+00> : vector<1x256xf32>
    %120 = tpu.matmul %117, %96, %cst_35 {dimension_numbers = #tpu.dot_dimension_numbers<[1], [0], [0], [1], [0, 0, 1, 1], [], []>} : vector<1x64xf32>, vector<64x256xf32>, vector<1x256xf32> -> vector<1x256xf32>
    %cst_36 = arith.constant dense<0.000000e+00> : vector<1x256xf32>
    %121 = tpu.matmul %119, %96, %cst_36 {dimension_numbers = #tpu.dot_dimension_numbers<[1], [0], [0], [1], [0, 0, 1, 1], [], []>} : vector<1x64xf32>, vector<64x256xf32>, vector<1x256xf32> -> vector<1x256xf32>
    %122 = vector.broadcast %120 : vector<1x256xf32> to vector<8x256xf32>
    %123 = arith.mulf %52, %122 : vector<8x256xf32>
    %124 = vector.broadcast %121 : vector<1x256xf32> to vector<8x256xf32>
    %125 = arith.addf %123, %124 : vector<8x256xf32>
    %cst_37 = arith.constant 0.000000e+00 : f32
    %126 = vector.broadcast %cst_37 : f32 to vector<8x256xf32>
    %127 = arith.maximumf %125, %126 : vector<8x256xf32>
    %128 = arith.truncf %127 : vector<8x256xf32> to vector<8x256xbf16>
    %c0_38 = arith.constant 0 : index
    %c0_39 = arith.constant 0 : index
    %129 = vector.load %arg4[%c0_38, %c0_39] : memref<512x256xbf16, #tpu.memory_space<vmem>>, vector<512x256xbf16>
    %c0_40 = arith.constant 0 : index
    %c0_41 = arith.constant 0 : index
    %130 = vector.load %arg5[%c0_40, %c0_41] : memref<512x256xbf16, #tpu.memory_space<vmem>>, vector<512x256xbf16>
    %cst_42 = arith.constant 0.000000e+00 : bf16
    %131 = vector.broadcast %cst_42 : bf16 to vector<1x256xbf16>
    %132 = vector.extract_strided_slice %128 {offsets = [0, 0], sizes = [7, 256], strides = [1, 1]} : vector<8x256xbf16> to vector<7x256xbf16>
    %133 = tpu.concatenate %131, %132 in 0 : vector<1x256xbf16>, vector<7x256xbf16> -> vector<8x256xbf16>
    %134 = vector.extract_strided_slice %128 {offsets = [1, 0], sizes = [7, 256], strides = [1, 1]} : vector<8x256xbf16> to vector<7x256xbf16>
    %135 = tpu.concatenate %134, %131 in 0 : vector<7x256xbf16>, vector<1x256xbf16> -> vector<8x256xbf16>
    %136 = tpu.iota {dimensions = array<i32: 0>} : vector<8x256xi32>
    %c4_i32_43 = arith.constant 4 : i32
    %c0_i32_44 = arith.constant 0 : i32
    %137 = arith.cmpi eq, %c4_i32_43, %c0_i32_44 : i32
    %c1_i32_45 = arith.constant 1 : i32
    %138 = arith.select %137, %c1_i32_45, %c4_i32_43 : i32
    %139 = vector.broadcast %138 : i32 to vector<8x256xi32>
    %140 = arith.remsi %136, %139 : vector<8x256xi32>
    %c0_i32_46 = arith.constant 0 : i32
    %141 = vector.broadcast %c0_i32_46 : i32 to vector<8x256xi32>
    %142 = arith.cmpi ne, %140, %141 : vector<8x256xi32>
    %c0_i32_47 = arith.constant 0 : i32
    %143 = vector.broadcast %c0_i32_47 : i32 to vector<8x256xi32>
    %144 = arith.cmpi slt, %140, %143 : vector<8x256xi32>
    %c0_i32_48 = arith.constant 0 : i32
    %145 = arith.cmpi slt, %138, %c0_i32_48 : i32
    %146 = vector.broadcast %145 : i1 to vector<8x256xi1>
    %147 = vector.broadcast %146 : vector<8x256xi1> to vector<8x256xi1>
    %148 = arith.xori %144, %147 : vector<8x256xi1>
    %149 = arith.andi %148, %142 : vector<8x256xi1>
    %150 = vector.broadcast %138 : i32 to vector<8x256xi32>
    %151 = arith.addi %140, %150 : vector<8x256xi32>
    %152 = arith.select %149, %151, %140 : vector<8x256xi1>, vector<8x256xi32>
    %c0_i32_49 = arith.constant 0 : i32
    %153 = vector.broadcast %c0_i32_49 : i32 to vector<8x256xi32>
    %154 = arith.cmpi eq, %152, %153 : vector<8x256xi32>
    %cst_50 = arith.constant 0.000000e+00 : bf16
    %155 = vector.broadcast %cst_50 : bf16 to vector<8x256xbf16>
    %156 = arith.select %154, %155, %133 : vector<8x256xi1>, vector<8x256xbf16>
    %c3_i32_51 = arith.constant 3 : i32
    %157 = vector.broadcast %c3_i32_51 : i32 to vector<8x256xi32>
    %158 = arith.cmpi eq, %152, %157 : vector<8x256xi32>
    %cst_52 = arith.constant 0.000000e+00 : bf16
    %159 = vector.broadcast %cst_52 : bf16 to vector<8x256xbf16>
    %160 = arith.select %158, %159, %135 : vector<8x256xi1>, vector<8x256xbf16>
    %161 = tpu.concatenate %156, %128 in 1 : vector<8x256xbf16>, vector<8x256xbf16> -> vector<8x512xbf16>
    %162 = tpu.concatenate %128, %160 in 1 : vector<8x256xbf16>, vector<8x256xbf16> -> vector<8x512xbf16>
    %cst_53 = arith.constant dense<0.000000e+00> : vector<8x256xf32>
    %163 = tpu.matmul %161, %129, %cst_53 {dimension_numbers = #tpu.dot_dimension_numbers<[1], [0], [0], [1], [0, 0, 1, 1], [], []>} : vector<8x512xbf16>, vector<512x256xbf16>, vector<8x256xf32> -> vector<8x256xf32>
    %cst_54 = arith.constant dense<0.000000e+00> : vector<8x256xf32>
    %164 = tpu.matmul %162, %130, %cst_54 {dimension_numbers = #tpu.dot_dimension_numbers<[1], [0], [0], [1], [0, 0, 1, 1], [], []>} : vector<8x512xbf16>, vector<512x256xbf16>, vector<8x256xf32> -> vector<8x256xf32>
    %c0_55 = arith.constant 0 : index
    %c0_56 = arith.constant 0 : index
    %165 = vector.load %arg6[%c0_55, %c0_56] : memref<1x32xf32, #tpu.memory_space<vmem>>, vector<1x32xf32>
    %c0_57 = arith.constant 0 : index
    %c0_58 = arith.constant 0 : index
    %166 = vector.load %arg7[%c0_57, %c0_58] : memref<1x32xf32, #tpu.memory_space<vmem>>, vector<1x32xf32>
    %167 = tpu.iota {dimensions = array<i32: 0>} : vector<256x32xi32>
    %c32_i32 = arith.constant 32 : i32
    %c0_i32_59 = arith.constant 0 : i32
    %168 = arith.cmpi eq, %c32_i32, %c0_i32_59 : i32
    %c1_i32_60 = arith.constant 1 : i32
    %169 = arith.select %168, %c1_i32_60, %c32_i32 : i32
    %170 = vector.broadcast %169 : i32 to vector<256x32xi32>
    %171 = arith.remsi %167, %170 : vector<256x32xi32>
    %c0_i32_61 = arith.constant 0 : i32
    %172 = vector.broadcast %c0_i32_61 : i32 to vector<256x32xi32>
    %173 = arith.cmpi ne, %171, %172 : vector<256x32xi32>
    %c0_i32_62 = arith.constant 0 : i32
    %174 = vector.broadcast %c0_i32_62 : i32 to vector<256x32xi32>
    %175 = arith.cmpi slt, %171, %174 : vector<256x32xi32>
    %c0_i32_63 = arith.constant 0 : i32
    %176 = arith.cmpi slt, %169, %c0_i32_63 : i32
    %177 = vector.broadcast %176 : i1 to vector<256x32xi1>
    %178 = vector.broadcast %177 : vector<256x32xi1> to vector<256x32xi1>
    %179 = arith.xori %175, %178 : vector<256x32xi1>
    %180 = arith.andi %179, %173 : vector<256x32xi1>
    %181 = vector.broadcast %169 : i32 to vector<256x32xi32>
    %182 = arith.addi %171, %181 : vector<256x32xi32>
    %183 = arith.select %180, %182, %171 : vector<256x32xi1>, vector<256x32xi32>
    %184 = tpu.iota {dimensions = array<i32: 1>} : vector<256x32xi32>
    %185 = arith.cmpi eq, %183, %184 : vector<256x32xi32>
    %186 = arith.extui %185 : vector<256x32xi1> to vector<256x32xi32>
    %187 = arith.sitofp %186 : vector<256x32xi32> to vector<256x32xf32>
    %188 = tpu.iota {dimensions = array<i32: 1>} : vector<32x256xi32>
    %c32_i32_64 = arith.constant 32 : i32
    %c0_i32_65 = arith.constant 0 : i32
    %189 = arith.cmpi eq, %c32_i32_64, %c0_i32_65 : i32
    %c1_i32_66 = arith.constant 1 : i32
    %190 = arith.select %189, %c1_i32_66, %c32_i32_64 : i32
    %191 = vector.broadcast %190 : i32 to vector<32x256xi32>
    %192 = arith.remsi %188, %191 : vector<32x256xi32>
    %c0_i32_67 = arith.constant 0 : i32
    %193 = vector.broadcast %c0_i32_67 : i32 to vector<32x256xi32>
    %194 = arith.cmpi ne, %192, %193 : vector<32x256xi32>
    %c0_i32_68 = arith.constant 0 : i32
    %195 = vector.broadcast %c0_i32_68 : i32 to vector<32x256xi32>
    %196 = arith.cmpi slt, %192, %195 : vector<32x256xi32>
    %c0_i32_69 = arith.constant 0 : i32
    %197 = arith.cmpi slt, %190, %c0_i32_69 : i32
    %198 = vector.broadcast %197 : i1 to vector<32x256xi1>
    %199 = vector.broadcast %198 : vector<32x256xi1> to vector<32x256xi1>
    %200 = arith.xori %196, %199 : vector<32x256xi1>
    %201 = arith.andi %200, %194 : vector<32x256xi1>
    %202 = vector.broadcast %190 : i32 to vector<32x256xi32>
    %203 = arith.addi %192, %202 : vector<32x256xi32>
    %204 = arith.select %201, %203, %192 : vector<32x256xi1>, vector<32x256xi32>
    %205 = tpu.iota {dimensions = array<i32: 0>} : vector<32x256xi32>
    %206 = arith.cmpi eq, %204, %205 : vector<32x256xi32>
    %207 = arith.extui %206 : vector<32x256xi1> to vector<32x256xi32>
    %208 = arith.sitofp %207 : vector<32x256xi32> to vector<32x256xf32>
    %cst_70 = arith.constant dense<0.000000e+00> : vector<256xf32>
    %209 = vector.multi_reduction <add>, %163, %cst_70 [0] : vector<8x256xf32> to vector<256xf32>
    %210 = vector.shape_cast %209 : vector<256xf32> to vector<1x256xf32>
    %cst_71 = arith.constant dense<0.000000e+00> : vector<256xf32>
    %211 = vector.multi_reduction <add>, %164, %cst_71 [0] : vector<8x256xf32> to vector<256xf32>
    %212 = vector.shape_cast %211 : vector<256xf32> to vector<1x256xf32>
    %cst_72 = arith.constant 0.000000e+00 : f32
    %213 = vector.broadcast %cst_72 : f32 to vector<1x256xf32>
    %214 = arith.addf %213, %210 : vector<1x256xf32>
    %215 = arith.addf %214, %212 : vector<1x256xf32>
    %216 = arith.mulf %163, %163 : vector<8x256xf32>
    %cst_73 = arith.constant dense<0.000000e+00> : vector<256xf32>
    %217 = vector.multi_reduction <add>, %216, %cst_73 [0] : vector<8x256xf32> to vector<256xf32>
    %218 = vector.shape_cast %217 : vector<256xf32> to vector<1x256xf32>
    %219 = arith.mulf %164, %164 : vector<8x256xf32>
    %cst_74 = arith.constant dense<0.000000e+00> : vector<256xf32>
    %220 = vector.multi_reduction <add>, %219, %cst_74 [0] : vector<8x256xf32> to vector<256xf32>
    %221 = vector.shape_cast %220 : vector<256xf32> to vector<1x256xf32>
    %cst_75 = arith.constant 0.000000e+00 : f32
    %222 = vector.broadcast %cst_75 : f32 to vector<1x256xf32>
    %223 = arith.addf %222, %218 : vector<1x256xf32>
    %224 = arith.addf %223, %221 : vector<1x256xf32>
    %cst_76 = arith.constant dense<0.000000e+00> : vector<1x32xf32>
    %225 = tpu.matmul %215, %187, %cst_76 {dimension_numbers = #tpu.dot_dimension_numbers<[1], [0], [0], [1], [0, 0, 1, 1], [], []>} : vector<1x256xf32>, vector<256x32xf32>, vector<1x32xf32> -> vector<1x32xf32>
    %cst_77 = arith.constant dense<0.000000e+00> : vector<1x32xf32>
    %226 = tpu.matmul %224, %187, %cst_77 {dimension_numbers = #tpu.dot_dimension_numbers<[1], [0], [0], [1], [0, 0, 1, 1], [], []>} : vector<1x256xf32>, vector<256x32xf32>, vector<1x32xf32> -> vector<1x32xf32>
    %cst_78 = arith.constant 1.280000e+02 : f32
    %227 = vector.broadcast %cst_78 : f32 to vector<1x32xf32>
    %228 = arith.divf %225, %227 : vector<1x32xf32>
    %cst_79 = arith.constant 1.280000e+02 : f32
    %229 = vector.broadcast %cst_79 : f32 to vector<1x32xf32>
    %230 = arith.divf %226, %229 : vector<1x32xf32>
    %231 = arith.mulf %228, %228 : vector<1x32xf32>
    %232 = arith.subf %230, %231 : vector<1x32xf32>
    %cst_80 = arith.constant 9.99999974E-6 : f32
    %233 = vector.broadcast %cst_80 : f32 to vector<1x32xf32>
    %234 = arith.addf %232, %233 : vector<1x32xf32>
    %235 = math.rsqrt %234 : vector<1x32xf32>
    %236 = arith.mulf %165, %235 : vector<1x32xf32>
    %237 = arith.mulf %228, %236 : vector<1x32xf32>
    %238 = arith.subf %166, %237 : vector<1x32xf32>
    %cst_81 = arith.constant dense<0.000000e+00> : vector<1x256xf32>
    %239 = tpu.matmul %236, %208, %cst_81 {dimension_numbers = #tpu.dot_dimension_numbers<[1], [0], [0], [1], [0, 0, 1, 1], [], []>} : vector<1x32xf32>, vector<32x256xf32>, vector<1x256xf32> -> vector<1x256xf32>
    %cst_82 = arith.constant dense<0.000000e+00> : vector<1x256xf32>
    %240 = tpu.matmul %238, %208, %cst_82 {dimension_numbers = #tpu.dot_dimension_numbers<[1], [0], [0], [1], [0, 0, 1, 1], [], []>} : vector<1x32xf32>, vector<32x256xf32>, vector<1x256xf32> -> vector<1x256xf32>
    %241 = vector.broadcast %239 : vector<1x256xf32> to vector<8x256xf32>
    %242 = arith.mulf %163, %241 : vector<8x256xf32>
    %243 = vector.broadcast %240 : vector<1x256xf32> to vector<8x256xf32>
    %244 = arith.addf %242, %243 : vector<8x256xf32>
    %cst_83 = arith.constant 0.000000e+00 : f32
    %245 = vector.broadcast %cst_83 : f32 to vector<8x256xf32>
    %246 = arith.maximumf %244, %245 : vector<8x256xf32>
    %247 = vector.broadcast %239 : vector<1x256xf32> to vector<8x256xf32>
    %248 = arith.mulf %164, %247 : vector<8x256xf32>
    %249 = vector.broadcast %240 : vector<1x256xf32> to vector<8x256xf32>
    %250 = arith.addf %248, %249 : vector<8x256xf32>
    %cst_84 = arith.constant 0.000000e+00 : f32
    %251 = vector.broadcast %cst_84 : f32 to vector<8x256xf32>
    %252 = arith.maximumf %250, %251 : vector<8x256xf32>
    %253 = arith.truncf %246 : vector<8x256xf32> to vector<8x256xbf16>
    %254 = arith.truncf %252 : vector<8x256xf32> to vector<8x256xbf16>
    %255 = tpu.iota {dimensions = array<i32: 0>} : vector<16x8xi32>
    %256 = tpu.iota {dimensions = array<i32: 1>} : vector<16x8xi32>
    %c2_i32_85 = arith.constant 2 : i32
    %257 = vector.broadcast %c2_i32_85 : i32 to vector<16x8xi32>
    %258 = arith.muli %257, %256 : vector<16x8xi32>
    %c0_i32_86 = arith.constant 0 : i32
    %259 = vector.broadcast %c0_i32_86 : i32 to vector<16x8xi32>
    %260 = arith.addi %258, %259 : vector<16x8xi32>
    %261 = arith.cmpi eq, %255, %260 : vector<16x8xi32>
    %262 = arith.extui %261 : vector<16x8xi1> to vector<16x8xi32>
    %263 = arith.sitofp %262 : vector<16x8xi32> to vector<16x8xf32>
    %264 = arith.truncf %263 : vector<16x8xf32> to vector<16x8xbf16>
    %265 = tpu.iota {dimensions = array<i32: 0>} : vector<16x8xi32>
    %266 = tpu.iota {dimensions = array<i32: 1>} : vector<16x8xi32>
    %c2_i32_87 = arith.constant 2 : i32
    %267 = vector.broadcast %c2_i32_87 : i32 to vector<16x8xi32>
    %268 = arith.muli %267, %266 : vector<16x8xi32>
    %c1_i32_88 = arith.constant 1 : i32
    %269 = vector.broadcast %c1_i32_88 : i32 to vector<16x8xi32>
    %270 = arith.addi %268, %269 : vector<16x8xi32>
    %271 = arith.cmpi eq, %265, %270 : vector<16x8xi32>
    %272 = arith.extui %271 : vector<16x8xi1> to vector<16x8xi32>
    %273 = arith.sitofp %272 : vector<16x8xi32> to vector<16x8xf32>
    %274 = arith.truncf %273 : vector<16x8xf32> to vector<16x8xbf16>
    %cst_89 = arith.constant dense<0.000000e+00> : vector<16x256xf32>
    %275 = tpu.matmul %264, %253, %cst_89 {dimension_numbers = #tpu.dot_dimension_numbers<[1], [0], [0], [1], [0, 0, 1, 1], [], []>} : vector<16x8xbf16>, vector<8x256xbf16>, vector<16x256xf32> -> vector<16x256xf32>
    %cst_90 = arith.constant dense<0.000000e+00> : vector<16x256xf32>
    %276 = tpu.matmul %274, %254, %cst_90 {dimension_numbers = #tpu.dot_dimension_numbers<[1], [0], [0], [1], [0, 0, 1, 1], [], []>} : vector<16x8xbf16>, vector<8x256xbf16>, vector<16x256xf32> -> vector<16x256xf32>
    %277 = arith.addf %275, %276 : vector<16x256xf32>
    %278 = arith.truncf %277 : vector<16x256xf32> to vector<16x256xbf16>
    %c0_91 = arith.constant 0 : index
    %c0_92 = arith.constant 0 : index
    %279 = vector.load %arg8[%c0_91, %c0_92] : memref<512x256xbf16, #tpu.memory_space<vmem>>, vector<512x256xbf16>
    %c0_93 = arith.constant 0 : index
    %c0_94 = arith.constant 0 : index
    %280 = vector.load %arg9[%c0_93, %c0_94] : memref<512x256xbf16, #tpu.memory_space<vmem>>, vector<512x256xbf16>
    %cst_95 = arith.constant 0.000000e+00 : bf16
    %281 = vector.broadcast %cst_95 : bf16 to vector<1x256xbf16>
    %282 = vector.extract_strided_slice %278 {offsets = [0, 0], sizes = [15, 256], strides = [1, 1]} : vector<16x256xbf16> to vector<15x256xbf16>
    %283 = tpu.concatenate %281, %282 in 0 : vector<1x256xbf16>, vector<15x256xbf16> -> vector<16x256xbf16>
    %284 = vector.extract_strided_slice %278 {offsets = [1, 0], sizes = [15, 256], strides = [1, 1]} : vector<16x256xbf16> to vector<15x256xbf16>
    %285 = tpu.concatenate %284, %281 in 0 : vector<15x256xbf16>, vector<1x256xbf16> -> vector<16x256xbf16>
    %286 = tpu.iota {dimensions = array<i32: 0>} : vector<16x256xi32>
    %c8_i32 = arith.constant 8 : i32
    %c0_i32_96 = arith.constant 0 : i32
    %287 = arith.cmpi eq, %c8_i32, %c0_i32_96 : i32
    %c1_i32_97 = arith.constant 1 : i32
    %288 = arith.select %287, %c1_i32_97, %c8_i32 : i32
    %289 = vector.broadcast %288 : i32 to vector<16x256xi32>
    %290 = arith.remsi %286, %289 : vector<16x256xi32>
    %c0_i32_98 = arith.constant 0 : i32
    %291 = vector.broadcast %c0_i32_98 : i32 to vector<16x256xi32>
    %292 = arith.cmpi ne, %290, %291 : vector<16x256xi32>
    %c0_i32_99 = arith.constant 0 : i32
    %293 = vector.broadcast %c0_i32_99 : i32 to vector<16x256xi32>
    %294 = arith.cmpi slt, %290, %293 : vector<16x256xi32>
    %c0_i32_100 = arith.constant 0 : i32
    %295 = arith.cmpi slt, %288, %c0_i32_100 : i32
    %296 = vector.broadcast %295 : i1 to vector<16x256xi1>
    %297 = vector.broadcast %296 : vector<16x256xi1> to vector<16x256xi1>
    %298 = arith.xori %294, %297 : vector<16x256xi1>
    %299 = arith.andi %298, %292 : vector<16x256xi1>
    %300 = vector.broadcast %288 : i32 to vector<16x256xi32>
    %301 = arith.addi %290, %300 : vector<16x256xi32>
    %302 = arith.select %299, %301, %290 : vector<16x256xi1>, vector<16x256xi32>
    %c0_i32_101 = arith.constant 0 : i32
    %303 = vector.broadcast %c0_i32_101 : i32 to vector<16x256xi32>
    %304 = arith.cmpi eq, %302, %303 : vector<16x256xi32>
    %cst_102 = arith.constant 0.000000e+00 : bf16
    %305 = vector.broadcast %cst_102 : bf16 to vector<16x256xbf16>
    %306 = arith.select %304, %305, %283 : vector<16x256xi1>, vector<16x256xbf16>
    %c7_i32 = arith.constant 7 : i32
    %307 = vector.broadcast %c7_i32 : i32 to vector<16x256xi32>
    %308 = arith.cmpi eq, %302, %307 : vector<16x256xi32>
    %cst_103 = arith.constant 0.000000e+00 : bf16
    %309 = vector.broadcast %cst_103 : bf16 to vector<16x256xbf16>
    %310 = arith.select %308, %309, %285 : vector<16x256xi1>, vector<16x256xbf16>
    %311 = tpu.concatenate %306, %278 in 1 : vector<16x256xbf16>, vector<16x256xbf16> -> vector<16x512xbf16>
    %312 = tpu.concatenate %278, %310 in 1 : vector<16x256xbf16>, vector<16x256xbf16> -> vector<16x512xbf16>
    %cst_104 = arith.constant dense<0.000000e+00> : vector<16x256xf32>
    %313 = tpu.matmul %311, %279, %cst_104 {dimension_numbers = #tpu.dot_dimension_numbers<[1], [0], [0], [1], [0, 0, 1, 1], [], []>} : vector<16x512xbf16>, vector<512x256xbf16>, vector<16x256xf32> -> vector<16x256xf32>
    %cst_105 = arith.constant dense<0.000000e+00> : vector<16x256xf32>
    %314 = tpu.matmul %312, %280, %cst_105 {dimension_numbers = #tpu.dot_dimension_numbers<[1], [0], [0], [1], [0, 0, 1, 1], [], []>} : vector<16x512xbf16>, vector<512x256xbf16>, vector<16x256xf32> -> vector<16x256xf32>
    %c0_106 = arith.constant 0 : index
    %c0_107 = arith.constant 0 : index
    %315 = vector.load %arg10[%c0_106, %c0_107] : memref<1x16xf32, #tpu.memory_space<vmem>>, vector<1x16xf32>
    %c0_108 = arith.constant 0 : index
    %c0_109 = arith.constant 0 : index
    %316 = vector.load %arg11[%c0_108, %c0_109] : memref<1x16xf32, #tpu.memory_space<vmem>>, vector<1x16xf32>
    %317 = tpu.iota {dimensions = array<i32: 0>} : vector<256x16xi32>
    %c16_i32 = arith.constant 16 : i32
    %c0_i32_110 = arith.constant 0 : i32
    %318 = arith.cmpi eq, %c16_i32, %c0_i32_110 : i32
    %c1_i32_111 = arith.constant 1 : i32
    %319 = arith.select %318, %c1_i32_111, %c16_i32 : i32
    %320 = vector.broadcast %319 : i32 to vector<256x16xi32>
    %321 = arith.remsi %317, %320 : vector<256x16xi32>
    %c0_i32_112 = arith.constant 0 : i32
    %322 = vector.broadcast %c0_i32_112 : i32 to vector<256x16xi32>
    %323 = arith.cmpi ne, %321, %322 : vector<256x16xi32>
    %c0_i32_113 = arith.constant 0 : i32
    %324 = vector.broadcast %c0_i32_113 : i32 to vector<256x16xi32>
    %325 = arith.cmpi slt, %321, %324 : vector<256x16xi32>
    %c0_i32_114 = arith.constant 0 : i32
    %326 = arith.cmpi slt, %319, %c0_i32_114 : i32
    %327 = vector.broadcast %326 : i1 to vector<256x16xi1>
    %328 = vector.broadcast %327 : vector<256x16xi1> to vector<256x16xi1>
    %329 = arith.xori %325, %328 : vector<256x16xi1>
    %330 = arith.andi %329, %323 : vector<256x16xi1>
    %331 = vector.broadcast %319 : i32 to vector<256x16xi32>
    %332 = arith.addi %321, %331 : vector<256x16xi32>
    %333 = arith.select %330, %332, %321 : vector<256x16xi1>, vector<256x16xi32>
    %334 = tpu.iota {dimensions = array<i32: 1>} : vector<256x16xi32>
    %335 = arith.cmpi eq, %333, %334 : vector<256x16xi32>
    %336 = arith.extui %335 : vector<256x16xi1> to vector<256x16xi32>
    %337 = arith.sitofp %336 : vector<256x16xi32> to vector<256x16xf32>
    %338 = tpu.iota {dimensions = array<i32: 1>} : vector<16x256xi32>
    %c16_i32_115 = arith.constant 16 : i32
    %c0_i32_116 = arith.constant 0 : i32
    %339 = arith.cmpi eq, %c16_i32_115, %c0_i32_116 : i32
    %c1_i32_117 = arith.constant 1 : i32
    %340 = arith.select %339, %c1_i32_117, %c16_i32_115 : i32
    %341 = vector.broadcast %340 : i32 to vector<16x256xi32>
    %342 = arith.remsi %338, %341 : vector<16x256xi32>
    %c0_i32_118 = arith.constant 0 : i32
    %343 = vector.broadcast %c0_i32_118 : i32 to vector<16x256xi32>
    %344 = arith.cmpi ne, %342, %343 : vector<16x256xi32>
    %c0_i32_119 = arith.constant 0 : i32
    %345 = vector.broadcast %c0_i32_119 : i32 to vector<16x256xi32>
    %346 = arith.cmpi slt, %342, %345 : vector<16x256xi32>
    %c0_i32_120 = arith.constant 0 : i32
    %347 = arith.cmpi slt, %340, %c0_i32_120 : i32
    %348 = vector.broadcast %347 : i1 to vector<16x256xi1>
    %349 = vector.broadcast %348 : vector<16x256xi1> to vector<16x256xi1>
    %350 = arith.xori %346, %349 : vector<16x256xi1>
    %351 = arith.andi %350, %344 : vector<16x256xi1>
    %352 = vector.broadcast %340 : i32 to vector<16x256xi32>
    %353 = arith.addi %342, %352 : vector<16x256xi32>
    %354 = arith.select %351, %353, %342 : vector<16x256xi1>, vector<16x256xi32>
    %355 = tpu.iota {dimensions = array<i32: 0>} : vector<16x256xi32>
    %356 = arith.cmpi eq, %354, %355 : vector<16x256xi32>
    %357 = arith.extui %356 : vector<16x256xi1> to vector<16x256xi32>
    %358 = arith.sitofp %357 : vector<16x256xi32> to vector<16x256xf32>
    %cst_121 = arith.constant dense<0.000000e+00> : vector<256xf32>
    %359 = vector.multi_reduction <add>, %313, %cst_121 [0] : vector<16x256xf32> to vector<256xf32>
    %360 = vector.shape_cast %359 : vector<256xf32> to vector<1x256xf32>
    %cst_122 = arith.constant dense<0.000000e+00> : vector<256xf32>
    %361 = vector.multi_reduction <add>, %314, %cst_122 [0] : vector<16x256xf32> to vector<256xf32>
    %362 = vector.shape_cast %361 : vector<256xf32> to vector<1x256xf32>
    %cst_123 = arith.constant 0.000000e+00 : f32
    %363 = vector.broadcast %cst_123 : f32 to vector<1x256xf32>
    %364 = arith.addf %363, %360 : vector<1x256xf32>
    %365 = arith.addf %364, %362 : vector<1x256xf32>
    %366 = arith.mulf %313, %313 : vector<16x256xf32>
    %cst_124 = arith.constant dense<0.000000e+00> : vector<256xf32>
    %367 = vector.multi_reduction <add>, %366, %cst_124 [0] : vector<16x256xf32> to vector<256xf32>
    %368 = vector.shape_cast %367 : vector<256xf32> to vector<1x256xf32>
    %369 = arith.mulf %314, %314 : vector<16x256xf32>
    %cst_125 = arith.constant dense<0.000000e+00> : vector<256xf32>
    %370 = vector.multi_reduction <add>, %369, %cst_125 [0] : vector<16x256xf32> to vector<256xf32>
    %371 = vector.shape_cast %370 : vector<256xf32> to vector<1x256xf32>
    %cst_126 = arith.constant 0.000000e+00 : f32
    %372 = vector.broadcast %cst_126 : f32 to vector<1x256xf32>
    %373 = arith.addf %372, %368 : vector<1x256xf32>
    %374 = arith.addf %373, %371 : vector<1x256xf32>
    %cst_127 = arith.constant dense<0.000000e+00> : vector<1x16xf32>
    %375 = tpu.matmul %365, %337, %cst_127 {dimension_numbers = #tpu.dot_dimension_numbers<[1], [0], [0], [1], [0, 0, 1, 1], [], []>} : vector<1x256xf32>, vector<256x16xf32>, vector<1x16xf32> -> vector<1x16xf32>
    %cst_128 = arith.constant dense<0.000000e+00> : vector<1x16xf32>
    %376 = tpu.matmul %374, %337, %cst_128 {dimension_numbers = #tpu.dot_dimension_numbers<[1], [0], [0], [1], [0, 0, 1, 1], [], []>} : vector<1x256xf32>, vector<256x16xf32>, vector<1x16xf32> -> vector<1x16xf32>
    %cst_129 = arith.constant 5.120000e+02 : f32
    %377 = vector.broadcast %cst_129 : f32 to vector<1x16xf32>
    %378 = arith.divf %375, %377 : vector<1x16xf32>
    %cst_130 = arith.constant 5.120000e+02 : f32
    %379 = vector.broadcast %cst_130 : f32 to vector<1x16xf32>
    %380 = arith.divf %376, %379 : vector<1x16xf32>
    %381 = arith.mulf %378, %378 : vector<1x16xf32>
    %382 = arith.subf %380, %381 : vector<1x16xf32>
    %cst_131 = arith.constant 9.99999974E-6 : f32
    %383 = vector.broadcast %cst_131 : f32 to vector<1x16xf32>
    %384 = arith.addf %382, %383 : vector<1x16xf32>
    %385 = math.rsqrt %384 : vector<1x16xf32>
    %386 = arith.mulf %315, %385 : vector<1x16xf32>
    %387 = arith.mulf %378, %386 : vector<1x16xf32>
    %388 = arith.subf %316, %387 : vector<1x16xf32>
    %cst_132 = arith.constant dense<0.000000e+00> : vector<1x256xf32>
    %389 = tpu.matmul %386, %358, %cst_132 {dimension_numbers = #tpu.dot_dimension_numbers<[1], [0], [0], [1], [0, 0, 1, 1], [], []>} : vector<1x16xf32>, vector<16x256xf32>, vector<1x256xf32> -> vector<1x256xf32>
    %cst_133 = arith.constant dense<0.000000e+00> : vector<1x256xf32>
    %390 = tpu.matmul %388, %358, %cst_133 {dimension_numbers = #tpu.dot_dimension_numbers<[1], [0], [0], [1], [0, 0, 1, 1], [], []>} : vector<1x16xf32>, vector<16x256xf32>, vector<1x256xf32> -> vector<1x256xf32>
    %391 = vector.broadcast %389 : vector<1x256xf32> to vector<16x256xf32>
    %392 = arith.mulf %313, %391 : vector<16x256xf32>
    %393 = vector.broadcast %390 : vector<1x256xf32> to vector<16x256xf32>
    %394 = arith.addf %392, %393 : vector<16x256xf32>
    %cst_134 = arith.constant 0.000000e+00 : f32
    %395 = vector.broadcast %cst_134 : f32 to vector<16x256xf32>
    %396 = arith.maximumf %394, %395 : vector<16x256xf32>
    %397 = vector.broadcast %389 : vector<1x256xf32> to vector<16x256xf32>
    %398 = arith.mulf %314, %397 : vector<16x256xf32>
    %399 = vector.broadcast %390 : vector<1x256xf32> to vector<16x256xf32>
    %400 = arith.addf %398, %399 : vector<16x256xf32>
    %cst_135 = arith.constant 0.000000e+00 : f32
    %401 = vector.broadcast %cst_135 : f32 to vector<16x256xf32>
    %402 = arith.maximumf %400, %401 : vector<16x256xf32>
    %403 = arith.truncf %396 : vector<16x256xf32> to vector<16x256xbf16>
    %404 = arith.truncf %402 : vector<16x256xf32> to vector<16x256xbf16>
    %405 = tpu.iota {dimensions = array<i32: 0>} : vector<32x16xi32>
    %406 = tpu.iota {dimensions = array<i32: 1>} : vector<32x16xi32>
    %c2_i32_136 = arith.constant 2 : i32
    %407 = vector.broadcast %c2_i32_136 : i32 to vector<32x16xi32>
    %408 = arith.muli %407, %406 : vector<32x16xi32>
    %c0_i32_137 = arith.constant 0 : i32
    %409 = vector.broadcast %c0_i32_137 : i32 to vector<32x16xi32>
    %410 = arith.addi %408, %409 : vector<32x16xi32>
    %411 = arith.cmpi eq, %405, %410 : vector<32x16xi32>
    %412 = arith.extui %411 : vector<32x16xi1> to vector<32x16xi32>
    %413 = arith.sitofp %412 : vector<32x16xi32> to vector<32x16xf32>
    %414 = arith.truncf %413 : vector<32x16xf32> to vector<32x16xbf16>
    %415 = tpu.iota {dimensions = array<i32: 0>} : vector<32x16xi32>
    %416 = tpu.iota {dimensions = array<i32: 1>} : vector<32x16xi32>
    %c2_i32_138 = arith.constant 2 : i32
    %417 = vector.broadcast %c2_i32_138 : i32 to vector<32x16xi32>
    %418 = arith.muli %417, %416 : vector<32x16xi32>
    %c1_i32_139 = arith.constant 1 : i32
    %419 = vector.broadcast %c1_i32_139 : i32 to vector<32x16xi32>
    %420 = arith.addi %418, %419 : vector<32x16xi32>
    %421 = arith.cmpi eq, %415, %420 : vector<32x16xi32>
    %422 = arith.extui %421 : vector<32x16xi1> to vector<32x16xi32>
    %423 = arith.sitofp %422 : vector<32x16xi32> to vector<32x16xf32>
    %424 = arith.truncf %423 : vector<32x16xf32> to vector<32x16xbf16>
    %cst_140 = arith.constant dense<0.000000e+00> : vector<32x256xf32>
    %425 = tpu.matmul %414, %403, %cst_140 {dimension_numbers = #tpu.dot_dimension_numbers<[1], [0], [0], [1], [0, 0, 1, 1], [], []>} : vector<32x16xbf16>, vector<16x256xbf16>, vector<32x256xf32> -> vector<32x256xf32>
    %cst_141 = arith.constant dense<0.000000e+00> : vector<32x256xf32>
    %426 = tpu.matmul %424, %404, %cst_141 {dimension_numbers = #tpu.dot_dimension_numbers<[1], [0], [0], [1], [0, 0, 1, 1], [], []>} : vector<32x16xbf16>, vector<16x256xbf16>, vector<32x256xf32> -> vector<32x256xf32>
    %427 = arith.addf %425, %426 : vector<32x256xf32>
    %428 = arith.truncf %427 : vector<32x256xf32> to vector<32x256xbf16>
    %c0_142 = arith.constant 0 : index
    %c0_143 = arith.constant 0 : index
    %429 = vector.load %arg12[%c0_142, %c0_143] : memref<512x256xbf16, #tpu.memory_space<vmem>>, vector<512x256xbf16>
    %c0_144 = arith.constant 0 : index
    %c0_145 = arith.constant 0 : index
    %430 = vector.load %arg13[%c0_144, %c0_145] : memref<512x256xbf16, #tpu.memory_space<vmem>>, vector<512x256xbf16>
    %cst_146 = arith.constant 0.000000e+00 : bf16
    %431 = vector.broadcast %cst_146 : bf16 to vector<1x256xbf16>
    %432 = vector.extract_strided_slice %428 {offsets = [0, 0], sizes = [31, 256], strides = [1, 1]} : vector<32x256xbf16> to vector<31x256xbf16>
    %433 = tpu.concatenate %431, %432 in 0 : vector<1x256xbf16>, vector<31x256xbf16> -> vector<32x256xbf16>
    %434 = vector.extract_strided_slice %428 {offsets = [1, 0], sizes = [31, 256], strides = [1, 1]} : vector<32x256xbf16> to vector<31x256xbf16>
    %435 = tpu.concatenate %434, %431 in 0 : vector<31x256xbf16>, vector<1x256xbf16> -> vector<32x256xbf16>
    %436 = tpu.iota {dimensions = array<i32: 0>} : vector<32x256xi32>
    %c16_i32_147 = arith.constant 16 : i32
    %c0_i32_148 = arith.constant 0 : i32
    %437 = arith.cmpi eq, %c16_i32_147, %c0_i32_148 : i32
    %c1_i32_149 = arith.constant 1 : i32
    %438 = arith.select %437, %c1_i32_149, %c16_i32_147 : i32
    %439 = vector.broadcast %438 : i32 to vector<32x256xi32>
    %440 = arith.remsi %436, %439 : vector<32x256xi32>
    %c0_i32_150 = arith.constant 0 : i32
    %441 = vector.broadcast %c0_i32_150 : i32 to vector<32x256xi32>
    %442 = arith.cmpi ne, %440, %441 : vector<32x256xi32>
    %c0_i32_151 = arith.constant 0 : i32
    %443 = vector.broadcast %c0_i32_151 : i32 to vector<32x256xi32>
    %444 = arith.cmpi slt, %440, %443 : vector<32x256xi32>
    %c0_i32_152 = arith.constant 0 : i32
    %445 = arith.cmpi slt, %438, %c0_i32_152 : i32
    %446 = vector.broadcast %445 : i1 to vector<32x256xi1>
    %447 = vector.broadcast %446 : vector<32x256xi1> to vector<32x256xi1>
    %448 = arith.xori %444, %447 : vector<32x256xi1>
    %449 = arith.andi %448, %442 : vector<32x256xi1>
    %450 = vector.broadcast %438 : i32 to vector<32x256xi32>
    %451 = arith.addi %440, %450 : vector<32x256xi32>
    %452 = arith.select %449, %451, %440 : vector<32x256xi1>, vector<32x256xi32>
    %c0_i32_153 = arith.constant 0 : i32
    %453 = vector.broadcast %c0_i32_153 : i32 to vector<32x256xi32>
    %454 = arith.cmpi eq, %452, %453 : vector<32x256xi32>
    %cst_154 = arith.constant 0.000000e+00 : bf16
    %455 = vector.broadcast %cst_154 : bf16 to vector<32x256xbf16>
    %456 = arith.select %454, %455, %433 : vector<32x256xi1>, vector<32x256xbf16>
    %c15_i32 = arith.constant 15 : i32
    %457 = vector.broadcast %c15_i32 : i32 to vector<32x256xi32>
    %458 = arith.cmpi eq, %452, %457 : vector<32x256xi32>
    %cst_155 = arith.constant 0.000000e+00 : bf16
    %459 = vector.broadcast %cst_155 : bf16 to vector<32x256xbf16>
    %460 = arith.select %458, %459, %435 : vector<32x256xi1>, vector<32x256xbf16>
    %461 = tpu.concatenate %456, %428 in 1 : vector<32x256xbf16>, vector<32x256xbf16> -> vector<32x512xbf16>
    %462 = tpu.concatenate %428, %460 in 1 : vector<32x256xbf16>, vector<32x256xbf16> -> vector<32x512xbf16>
    %cst_156 = arith.constant dense<0.000000e+00> : vector<32x256xf32>
    %463 = tpu.matmul %461, %429, %cst_156 {dimension_numbers = #tpu.dot_dimension_numbers<[1], [0], [0], [1], [0, 0, 1, 1], [], []>} : vector<32x512xbf16>, vector<512x256xbf16>, vector<32x256xf32> -> vector<32x256xf32>
    %cst_157 = arith.constant dense<0.000000e+00> : vector<32x256xf32>
    %464 = tpu.matmul %462, %430, %cst_157 {dimension_numbers = #tpu.dot_dimension_numbers<[1], [0], [0], [1], [0, 0, 1, 1], [], []>} : vector<32x512xbf16>, vector<512x256xbf16>, vector<32x256xf32> -> vector<32x256xf32>
    %c0_158 = arith.constant 0 : index
    %c0_159 = arith.constant 0 : index
    %465 = vector.load %arg14[%c0_158, %c0_159] : memref<1x8xf32, #tpu.memory_space<vmem>>, vector<1x8xf32>
    %c0_160 = arith.constant 0 : index
    %c0_161 = arith.constant 0 : index
    %466 = vector.load %arg15[%c0_160, %c0_161] : memref<1x8xf32, #tpu.memory_space<vmem>>, vector<1x8xf32>
    %467 = tpu.iota {dimensions = array<i32: 0>} : vector<256x8xi32>
    %c8_i32_162 = arith.constant 8 : i32
    %c0_i32_163 = arith.constant 0 : i32
    %468 = arith.cmpi eq, %c8_i32_162, %c0_i32_163 : i32
    %c1_i32_164 = arith.constant 1 : i32
    %469 = arith.select %468, %c1_i32_164, %c8_i32_162 : i32
    %470 = vector.broadcast %469 : i32 to vector<256x8xi32>
    %471 = arith.remsi %467, %470 : vector<256x8xi32>
    %c0_i32_165 = arith.constant 0 : i32
    %472 = vector.broadcast %c0_i32_165 : i32 to vector<256x8xi32>
    %473 = arith.cmpi ne, %471, %472 : vector<256x8xi32>
    %c0_i32_166 = arith.constant 0 : i32
    %474 = vector.broadcast %c0_i32_166 : i32 to vector<256x8xi32>
    %475 = arith.cmpi slt, %471, %474 : vector<256x8xi32>
    %c0_i32_167 = arith.constant 0 : i32
    %476 = arith.cmpi slt, %469, %c0_i32_167 : i32
    %477 = vector.broadcast %476 : i1 to vector<256x8xi1>
    %478 = vector.broadcast %477 : vector<256x8xi1> to vector<256x8xi1>
    %479 = arith.xori %475, %478 : vector<256x8xi1>
    %480 = arith.andi %479, %473 : vector<256x8xi1>
    %481 = vector.broadcast %469 : i32 to vector<256x8xi32>
    %482 = arith.addi %471, %481 : vector<256x8xi32>
    %483 = arith.select %480, %482, %471 : vector<256x8xi1>, vector<256x8xi32>
    %484 = tpu.iota {dimensions = array<i32: 1>} : vector<256x8xi32>
    %485 = arith.cmpi eq, %483, %484 : vector<256x8xi32>
    %486 = arith.extui %485 : vector<256x8xi1> to vector<256x8xi32>
    %487 = arith.sitofp %486 : vector<256x8xi32> to vector<256x8xf32>
    %488 = tpu.iota {dimensions = array<i32: 1>} : vector<8x256xi32>
    %c8_i32_168 = arith.constant 8 : i32
    %c0_i32_169 = arith.constant 0 : i32
    %489 = arith.cmpi eq, %c8_i32_168, %c0_i32_169 : i32
    %c1_i32_170 = arith.constant 1 : i32
    %490 = arith.select %489, %c1_i32_170, %c8_i32_168 : i32
    %491 = vector.broadcast %490 : i32 to vector<8x256xi32>
    %492 = arith.remsi %488, %491 : vector<8x256xi32>
    %c0_i32_171 = arith.constant 0 : i32
    %493 = vector.broadcast %c0_i32_171 : i32 to vector<8x256xi32>
    %494 = arith.cmpi ne, %492, %493 : vector<8x256xi32>
    %c0_i32_172 = arith.constant 0 : i32
    %495 = vector.broadcast %c0_i32_172 : i32 to vector<8x256xi32>
    %496 = arith.cmpi slt, %492, %495 : vector<8x256xi32>
    %c0_i32_173 = arith.constant 0 : i32
    %497 = arith.cmpi slt, %490, %c0_i32_173 : i32
    %498 = vector.broadcast %497 : i1 to vector<8x256xi1>
    %499 = vector.broadcast %498 : vector<8x256xi1> to vector<8x256xi1>
    %500 = arith.xori %496, %499 : vector<8x256xi1>
    %501 = arith.andi %500, %494 : vector<8x256xi1>
    %502 = vector.broadcast %490 : i32 to vector<8x256xi32>
    %503 = arith.addi %492, %502 : vector<8x256xi32>
    %504 = arith.select %501, %503, %492 : vector<8x256xi1>, vector<8x256xi32>
    %505 = tpu.iota {dimensions = array<i32: 0>} : vector<8x256xi32>
    %506 = arith.cmpi eq, %504, %505 : vector<8x256xi32>
    %507 = arith.extui %506 : vector<8x256xi1> to vector<8x256xi32>
    %508 = arith.sitofp %507 : vector<8x256xi32> to vector<8x256xf32>
    %cst_174 = arith.constant dense<0.000000e+00> : vector<256xf32>
    %509 = vector.multi_reduction <add>, %463, %cst_174 [0] : vector<32x256xf32> to vector<256xf32>
    %510 = vector.shape_cast %509 : vector<256xf32> to vector<1x256xf32>
    %cst_175 = arith.constant dense<0.000000e+00> : vector<256xf32>
    %511 = vector.multi_reduction <add>, %464, %cst_175 [0] : vector<32x256xf32> to vector<256xf32>
    %512 = vector.shape_cast %511 : vector<256xf32> to vector<1x256xf32>
    %cst_176 = arith.constant 0.000000e+00 : f32
    %513 = vector.broadcast %cst_176 : f32 to vector<1x256xf32>
    %514 = arith.addf %513, %510 : vector<1x256xf32>
    %515 = arith.addf %514, %512 : vector<1x256xf32>
    %516 = arith.mulf %463, %463 : vector<32x256xf32>
    %cst_177 = arith.constant dense<0.000000e+00> : vector<256xf32>
    %517 = vector.multi_reduction <add>, %516, %cst_177 [0] : vector<32x256xf32> to vector<256xf32>
    %518 = vector.shape_cast %517 : vector<256xf32> to vector<1x256xf32>
    %519 = arith.mulf %464, %464 : vector<32x256xf32>
    %cst_178 = arith.constant dense<0.000000e+00> : vector<256xf32>
    %520 = vector.multi_reduction <add>, %519, %cst_178 [0] : vector<32x256xf32> to vector<256xf32>
    %521 = vector.shape_cast %520 : vector<256xf32> to vector<1x256xf32>
    %cst_179 = arith.constant 0.000000e+00 : f32
    %522 = vector.broadcast %cst_179 : f32 to vector<1x256xf32>
    %523 = arith.addf %522, %518 : vector<1x256xf32>
    %524 = arith.addf %523, %521 : vector<1x256xf32>
    %cst_180 = arith.constant dense<0.000000e+00> : vector<1x8xf32>
    %525 = tpu.matmul %515, %487, %cst_180 {dimension_numbers = #tpu.dot_dimension_numbers<[1], [0], [0], [1], [0, 0, 1, 1], [], []>} : vector<1x256xf32>, vector<256x8xf32>, vector<1x8xf32> -> vector<1x8xf32>
    %cst_181 = arith.constant dense<0.000000e+00> : vector<1x8xf32>
    %526 = tpu.matmul %524, %487, %cst_181 {dimension_numbers = #tpu.dot_dimension_numbers<[1], [0], [0], [1], [0, 0, 1, 1], [], []>} : vector<1x256xf32>, vector<256x8xf32>, vector<1x8xf32> -> vector<1x8xf32>
    %cst_182 = arith.constant 2.048000e+03 : f32
    %527 = vector.broadcast %cst_182 : f32 to vector<1x8xf32>
    %528 = arith.divf %525, %527 : vector<1x8xf32>
    %cst_183 = arith.constant 2.048000e+03 : f32
    %529 = vector.broadcast %cst_183 : f32 to vector<1x8xf32>
    %530 = arith.divf %526, %529 : vector<1x8xf32>
    %531 = arith.mulf %528, %528 : vector<1x8xf32>
    %532 = arith.subf %530, %531 : vector<1x8xf32>
    %cst_184 = arith.constant 9.99999974E-6 : f32
    %533 = vector.broadcast %cst_184 : f32 to vector<1x8xf32>
    %534 = arith.addf %532, %533 : vector<1x8xf32>
    %535 = math.rsqrt %534 : vector<1x8xf32>
    %536 = arith.mulf %465, %535 : vector<1x8xf32>
    %537 = arith.mulf %528, %536 : vector<1x8xf32>
    %538 = arith.subf %466, %537 : vector<1x8xf32>
    %cst_185 = arith.constant dense<0.000000e+00> : vector<1x256xf32>
    %539 = tpu.matmul %536, %508, %cst_185 {dimension_numbers = #tpu.dot_dimension_numbers<[1], [0], [0], [1], [0, 0, 1, 1], [], []>} : vector<1x8xf32>, vector<8x256xf32>, vector<1x256xf32> -> vector<1x256xf32>
    %cst_186 = arith.constant dense<0.000000e+00> : vector<1x256xf32>
    %540 = tpu.matmul %538, %508, %cst_186 {dimension_numbers = #tpu.dot_dimension_numbers<[1], [0], [0], [1], [0, 0, 1, 1], [], []>} : vector<1x8xf32>, vector<8x256xf32>, vector<1x256xf32> -> vector<1x256xf32>
    %541 = vector.broadcast %539 : vector<1x256xf32> to vector<32x256xf32>
    %542 = arith.mulf %463, %541 : vector<32x256xf32>
    %543 = vector.broadcast %540 : vector<1x256xf32> to vector<32x256xf32>
    %544 = arith.addf %542, %543 : vector<32x256xf32>
    %cst_187 = arith.constant 0.000000e+00 : f32
    %545 = vector.broadcast %cst_187 : f32 to vector<32x256xf32>
    %546 = arith.maximumf %544, %545 : vector<32x256xf32>
    %547 = vector.broadcast %539 : vector<1x256xf32> to vector<32x256xf32>
    %548 = arith.mulf %464, %547 : vector<32x256xf32>
    %549 = vector.broadcast %540 : vector<1x256xf32> to vector<32x256xf32>
    %550 = arith.addf %548, %549 : vector<32x256xf32>
    %cst_188 = arith.constant 0.000000e+00 : f32
    %551 = vector.broadcast %cst_188 : f32 to vector<32x256xf32>
    %552 = arith.maximumf %550, %551 : vector<32x256xf32>
    %553 = arith.truncf %546 : vector<32x256xf32> to vector<32x256xbf16>
    %554 = arith.truncf %552 : vector<32x256xf32> to vector<32x256xbf16>
    %555 = tpu.iota {dimensions = array<i32: 0>} : vector<64x32xi32>
    %556 = tpu.iota {dimensions = array<i32: 1>} : vector<64x32xi32>
    %c2_i32_189 = arith.constant 2 : i32
    %557 = vector.broadcast %c2_i32_189 : i32 to vector<64x32xi32>
    %558 = arith.muli %557, %556 : vector<64x32xi32>
    %c0_i32_190 = arith.constant 0 : i32
    %559 = vector.broadcast %c0_i32_190 : i32 to vector<64x32xi32>
    %560 = arith.addi %558, %559 : vector<64x32xi32>
    %561 = arith.cmpi eq, %555, %560 : vector<64x32xi32>
    %562 = arith.extui %561 : vector<64x32xi1> to vector<64x32xi32>
    %563 = arith.sitofp %562 : vector<64x32xi32> to vector<64x32xf32>
    %564 = arith.truncf %563 : vector<64x32xf32> to vector<64x32xbf16>
    %565 = tpu.iota {dimensions = array<i32: 0>} : vector<64x32xi32>
    %566 = tpu.iota {dimensions = array<i32: 1>} : vector<64x32xi32>
    %c2_i32_191 = arith.constant 2 : i32
    %567 = vector.broadcast %c2_i32_191 : i32 to vector<64x32xi32>
    %568 = arith.muli %567, %566 : vector<64x32xi32>
    %c1_i32_192 = arith.constant 1 : i32
    %569 = vector.broadcast %c1_i32_192 : i32 to vector<64x32xi32>
    %570 = arith.addi %568, %569 : vector<64x32xi32>
    %571 = arith.cmpi eq, %565, %570 : vector<64x32xi32>
    %572 = arith.extui %571 : vector<64x32xi1> to vector<64x32xi32>
    %573 = arith.sitofp %572 : vector<64x32xi32> to vector<64x32xf32>
    %574 = arith.truncf %573 : vector<64x32xf32> to vector<64x32xbf16>
    %cst_193 = arith.constant dense<0.000000e+00> : vector<64x256xf32>
    %575 = tpu.matmul %564, %553, %cst_193 {dimension_numbers = #tpu.dot_dimension_numbers<[1], [0], [0], [1], [0, 0, 1, 1], [], []>} : vector<64x32xbf16>, vector<32x256xbf16>, vector<64x256xf32> -> vector<64x256xf32>
    %cst_194 = arith.constant dense<0.000000e+00> : vector<64x256xf32>
    %576 = tpu.matmul %574, %554, %cst_194 {dimension_numbers = #tpu.dot_dimension_numbers<[1], [0], [0], [1], [0, 0, 1, 1], [], []>} : vector<64x32xbf16>, vector<32x256xbf16>, vector<64x256xf32> -> vector<64x256xf32>
    %577 = arith.addf %575, %576 : vector<64x256xf32>
    %578 = arith.truncf %577 : vector<64x256xf32> to vector<64x256xbf16>
    %c0_195 = arith.constant 0 : index
    %c0_196 = arith.constant 0 : index
    %579 = vector.load %arg16[%c0_195, %c0_196] : memref<512x192xbf16, #tpu.memory_space<vmem>>, vector<512x192xbf16>
    %c0_197 = arith.constant 0 : index
    %c0_198 = arith.constant 0 : index
    %580 = vector.load %arg17[%c0_197, %c0_198] : memref<512x192xbf16, #tpu.memory_space<vmem>>, vector<512x192xbf16>
    %cst_199 = arith.constant 0.000000e+00 : bf16
    %581 = vector.broadcast %cst_199 : bf16 to vector<1x256xbf16>
    %582 = vector.extract_strided_slice %578 {offsets = [0, 0], sizes = [63, 256], strides = [1, 1]} : vector<64x256xbf16> to vector<63x256xbf16>
    %583 = tpu.concatenate %581, %582 in 0 : vector<1x256xbf16>, vector<63x256xbf16> -> vector<64x256xbf16>
    %584 = vector.extract_strided_slice %578 {offsets = [1, 0], sizes = [63, 256], strides = [1, 1]} : vector<64x256xbf16> to vector<63x256xbf16>
    %585 = tpu.concatenate %584, %581 in 0 : vector<63x256xbf16>, vector<1x256xbf16> -> vector<64x256xbf16>
    %586 = tpu.iota {dimensions = array<i32: 0>} : vector<64x256xi32>
    %c32_i32_200 = arith.constant 32 : i32
    %c0_i32_201 = arith.constant 0 : i32
    %587 = arith.cmpi eq, %c32_i32_200, %c0_i32_201 : i32
    %c1_i32_202 = arith.constant 1 : i32
    %588 = arith.select %587, %c1_i32_202, %c32_i32_200 : i32
    %589 = vector.broadcast %588 : i32 to vector<64x256xi32>
    %590 = arith.remsi %586, %589 : vector<64x256xi32>
    %c0_i32_203 = arith.constant 0 : i32
    %591 = vector.broadcast %c0_i32_203 : i32 to vector<64x256xi32>
    %592 = arith.cmpi ne, %590, %591 : vector<64x256xi32>
    %c0_i32_204 = arith.constant 0 : i32
    %593 = vector.broadcast %c0_i32_204 : i32 to vector<64x256xi32>
    %594 = arith.cmpi slt, %590, %593 : vector<64x256xi32>
    %c0_i32_205 = arith.constant 0 : i32
    %595 = arith.cmpi slt, %588, %c0_i32_205 : i32
    %596 = vector.broadcast %595 : i1 to vector<64x256xi1>
    %597 = vector.broadcast %596 : vector<64x256xi1> to vector<64x256xi1>
    %598 = arith.xori %594, %597 : vector<64x256xi1>
    %599 = arith.andi %598, %592 : vector<64x256xi1>
    %600 = vector.broadcast %588 : i32 to vector<64x256xi32>
    %601 = arith.addi %590, %600 : vector<64x256xi32>
    %602 = arith.select %599, %601, %590 : vector<64x256xi1>, vector<64x256xi32>
    %c0_i32_206 = arith.constant 0 : i32
    %603 = vector.broadcast %c0_i32_206 : i32 to vector<64x256xi32>
    %604 = arith.cmpi eq, %602, %603 : vector<64x256xi32>
    %cst_207 = arith.constant 0.000000e+00 : bf16
    %605 = vector.broadcast %cst_207 : bf16 to vector<64x256xbf16>
    %606 = arith.select %604, %605, %583 : vector<64x256xi1>, vector<64x256xbf16>
    %c31_i32 = arith.constant 31 : i32
    %607 = vector.broadcast %c31_i32 : i32 to vector<64x256xi32>
    %608 = arith.cmpi eq, %602, %607 : vector<64x256xi32>
    %cst_208 = arith.constant 0.000000e+00 : bf16
    %609 = vector.broadcast %cst_208 : bf16 to vector<64x256xbf16>
    %610 = arith.select %608, %609, %585 : vector<64x256xi1>, vector<64x256xbf16>
    %611 = tpu.concatenate %606, %578 in 1 : vector<64x256xbf16>, vector<64x256xbf16> -> vector<64x512xbf16>
    %612 = tpu.concatenate %578, %610 in 1 : vector<64x256xbf16>, vector<64x256xbf16> -> vector<64x512xbf16>
    %cst_209 = arith.constant dense<0.000000e+00> : vector<64x192xf32>
    %613 = tpu.matmul %611, %579, %cst_209 {dimension_numbers = #tpu.dot_dimension_numbers<[1], [0], [0], [1], [0, 0, 1, 1], [], []>} : vector<64x512xbf16>, vector<512x192xbf16>, vector<64x192xf32> -> vector<64x192xf32>
    %cst_210 = arith.constant dense<0.000000e+00> : vector<64x192xf32>
    %614 = tpu.matmul %612, %580, %cst_210 {dimension_numbers = #tpu.dot_dimension_numbers<[1], [0], [0], [1], [0, 0, 1, 1], [], []>} : vector<64x512xbf16>, vector<512x192xbf16>, vector<64x192xf32> -> vector<64x192xf32>
    %c0_211 = arith.constant 0 : index
    %c0_212 = arith.constant 0 : index
    %615 = vector.load %arg18[%c0_211, %c0_212] : memref<1x192xf32, #tpu.memory_space<vmem>>, vector<1x192xf32>
    %616 = vector.broadcast %615 : vector<1x192xf32> to vector<64x192xf32>
    %617 = arith.addf %613, %616 : vector<64x192xf32>
    %618 = math.tanh %617 : vector<64x192xf32>
    %619 = vector.broadcast %615 : vector<1x192xf32> to vector<64x192xf32>
    %620 = arith.addf %614, %619 : vector<64x192xf32>
    %621 = math.tanh %620 : vector<64x192xf32>
    %622 = tpu.iota {dimensions = array<i32: 0>} : vector<128x64xi32>
    %623 = tpu.iota {dimensions = array<i32: 1>} : vector<128x64xi32>
    %c2_i32_213 = arith.constant 2 : i32
    %624 = vector.broadcast %c2_i32_213 : i32 to vector<128x64xi32>
    %625 = arith.muli %624, %623 : vector<128x64xi32>
    %c0_i32_214 = arith.constant 0 : i32
    %626 = vector.broadcast %c0_i32_214 : i32 to vector<128x64xi32>
    %627 = arith.addi %625, %626 : vector<128x64xi32>
    %628 = arith.cmpi eq, %622, %627 : vector<128x64xi32>
    %629 = arith.extui %628 : vector<128x64xi1> to vector<128x64xi32>
    %630 = arith.sitofp %629 : vector<128x64xi32> to vector<128x64xf32>
    %631 = tpu.iota {dimensions = array<i32: 0>} : vector<128x64xi32>
    %632 = tpu.iota {dimensions = array<i32: 1>} : vector<128x64xi32>
    %c2_i32_215 = arith.constant 2 : i32
    %633 = vector.broadcast %c2_i32_215 : i32 to vector<128x64xi32>
    %634 = arith.muli %633, %632 : vector<128x64xi32>
    %c1_i32_216 = arith.constant 1 : i32
    %635 = vector.broadcast %c1_i32_216 : i32 to vector<128x64xi32>
    %636 = arith.addi %634, %635 : vector<128x64xi32>
    %637 = arith.cmpi eq, %631, %636 : vector<128x64xi32>
    %638 = arith.extui %637 : vector<128x64xi1> to vector<128x64xi32>
    %639 = arith.sitofp %638 : vector<128x64xi32> to vector<128x64xf32>
    %cst_217 = arith.constant dense<0.000000e+00> : vector<128x192xf32>
    %640 = tpu.matmul %630, %618, %cst_217 {dimension_numbers = #tpu.dot_dimension_numbers<[1], [0], [0], [1], [0, 0, 1, 1], [], []>} : vector<128x64xf32>, vector<64x192xf32>, vector<128x192xf32> -> vector<128x192xf32>
    %cst_218 = arith.constant dense<0.000000e+00> : vector<128x192xf32>
    %641 = tpu.matmul %639, %621, %cst_218 {dimension_numbers = #tpu.dot_dimension_numbers<[1], [0], [0], [1], [0, 0, 1, 1], [], []>} : vector<128x64xf32>, vector<64x192xf32>, vector<128x192xf32> -> vector<128x192xf32>
    %642 = arith.addf %640, %641 : vector<128x192xf32>
    %643 = vector.extract_strided_slice %642 {offsets = [0, 0], sizes = [64, 64], strides = [1, 1]} : vector<128x192xf32> to vector<64x64xf32>
    %c0_219 = arith.constant 0 : index
    %c0_220 = arith.constant 0 : index
    %c0_221 = arith.constant 0 : index
    %c0_222 = arith.constant 0 : index
    %644 = vector.load %arg19[%c0_219, %c0_220, %c0_221, %c0_222] : memref<2x3x64x64xf32, #tpu.memory_space<vmem>>, vector<1x1x64x64xf32>
    %645 = vector.shape_cast %644 : vector<1x1x64x64xf32> to vector<64x64xf32>
    %646 = vector.shape_cast %643 : vector<64x64xf32> to vector<1x1x64x64xf32>
    tpu.vector_store %arg19[%c0_219, %c0_220, %c0_221, %c0_222], %646 {strides = array<i32>} : memref<2x3x64x64xf32, #tpu.memory_space<vmem>>, vector<1x1x64x64xf32>,
    %647 = vector.extract_strided_slice %642 {offsets = [0, 64], sizes = [64, 64], strides = [1, 1]} : vector<128x192xf32> to vector<64x64xf32>
    %c0_223 = arith.constant 0 : index
    %c1 = arith.constant 1 : index
    %c0_224 = arith.constant 0 : index
    %c0_225 = arith.constant 0 : index
    %648 = vector.load %arg19[%c0_223, %c1, %c0_224, %c0_225] : memref<2x3x64x64xf32, #tpu.memory_space<vmem>>, vector<1x1x64x64xf32>
    %649 = vector.shape_cast %648 : vector<1x1x64x64xf32> to vector<64x64xf32>
    %650 = vector.shape_cast %647 : vector<64x64xf32> to vector<1x1x64x64xf32>
    tpu.vector_store %arg19[%c0_223, %c1, %c0_224, %c0_225], %650 {strides = array<i32>} : memref<2x3x64x64xf32, #tpu.memory_space<vmem>>, vector<1x1x64x64xf32>,
    %651 = vector.extract_strided_slice %642 {offsets = [0, 128], sizes = [64, 64], strides = [1, 1]} : vector<128x192xf32> to vector<64x64xf32>
    %c0_226 = arith.constant 0 : index
    %c2 = arith.constant 2 : index
    %c0_227 = arith.constant 0 : index
    %c0_228 = arith.constant 0 : index
    %652 = vector.load %arg19[%c0_226, %c2, %c0_227, %c0_228] : memref<2x3x64x64xf32, #tpu.memory_space<vmem>>, vector<1x1x64x64xf32>
    %653 = vector.shape_cast %652 : vector<1x1x64x64xf32> to vector<64x64xf32>
    %654 = vector.shape_cast %651 : vector<64x64xf32> to vector<1x1x64x64xf32>
    tpu.vector_store %arg19[%c0_226, %c2, %c0_227, %c0_228], %654 {strides = array<i32>} : memref<2x3x64x64xf32, #tpu.memory_space<vmem>>, vector<1x1x64x64xf32>,
    %655 = vector.extract_strided_slice %642 {offsets = [64, 0], sizes = [64, 64], strides = [1, 1]} : vector<128x192xf32> to vector<64x64xf32>
    %c1_229 = arith.constant 1 : index
    %c0_230 = arith.constant 0 : index
    %c0_231 = arith.constant 0 : index
    %c0_232 = arith.constant 0 : index
    %656 = vector.load %arg19[%c1_229, %c0_230, %c0_231, %c0_232] : memref<2x3x64x64xf32, #tpu.memory_space<vmem>>, vector<1x1x64x64xf32>
    %657 = vector.shape_cast %656 : vector<1x1x64x64xf32> to vector<64x64xf32>
    %658 = vector.shape_cast %655 : vector<64x64xf32> to vector<1x1x64x64xf32>
    tpu.vector_store %arg19[%c1_229, %c0_230, %c0_231, %c0_232], %658 {strides = array<i32>} : memref<2x3x64x64xf32, #tpu.memory_space<vmem>>, vector<1x1x64x64xf32>,
    %659 = vector.extract_strided_slice %642 {offsets = [64, 64], sizes = [64, 64], strides = [1, 1]} : vector<128x192xf32> to vector<64x64xf32>
    %c1_233 = arith.constant 1 : index
    %c1_234 = arith.constant 1 : index
    %c0_235 = arith.constant 0 : index
    %c0_236 = arith.constant 0 : index
    %660 = vector.load %arg19[%c1_233, %c1_234, %c0_235, %c0_236] : memref<2x3x64x64xf32, #tpu.memory_space<vmem>>, vector<1x1x64x64xf32>
    %661 = vector.shape_cast %660 : vector<1x1x64x64xf32> to vector<64x64xf32>
    %662 = vector.shape_cast %659 : vector<64x64xf32> to vector<1x1x64x64xf32>
    tpu.vector_store %arg19[%c1_233, %c1_234, %c0_235, %c0_236], %662 {strides = array<i32>} : memref<2x3x64x64xf32, #tpu.memory_space<vmem>>, vector<1x1x64x64xf32>,
    %663 = vector.extract_strided_slice %642 {offsets = [64, 128], sizes = [64, 64], strides = [1, 1]} : vector<128x192xf32> to vector<64x64xf32>
    %c1_237 = arith.constant 1 : index
    %c2_238 = arith.constant 2 : index
    %c0_239 = arith.constant 0 : index
    %c0_240 = arith.constant 0 : index
    %664 = vector.load %arg19[%c1_237, %c2_238, %c0_239, %c0_240] : memref<2x3x64x64xf32, #tpu.memory_space<vmem>>, vector<1x1x64x64xf32>
    %665 = vector.shape_cast %664 : vector<1x1x64x64xf32> to vector<64x64xf32>
    %666 = vector.shape_cast %663 : vector<64x64xf32> to vector<1x1x64x64xf32>
    tpu.vector_store %arg19[%c1_237, %c2_238, %c0_239, %c0_240], %666 {strides = array<i32>} : memref<2x3x64x64xf32, #tpu.memory_space<vmem>>, vector<1x1x64x64xf32>,
    return
  }
}

</mosaic_0001>

<llo_original>
// kernel: generator_forward.1
$region0: #{generator_forward.1}
  #allocation0 [shape = 'u32[]', space=smem, size = 0x4, offset = 0x4, fixed_abs, tag = 'smem constant byte address 0x4 - core index']
  #allocation1 [shape = 'u32[144,128]{1,0:T(1,128)}', space=vmem, size = 0x12000, scoped, tag = 'internal scratch']
  %s0 = inlined_call_operand.vmem [shape: f32[2,16], index: 0, kind: input, shape index: {}]
  %s1 = inlined_call_operand.vmem [shape: bf16[16,1024], index: 1, kind: input, shape index: {}]
  %s2 = inlined_call_operand.vmem [shape: f32[1,64], index: 2, kind: input, shape index: {}]
  %s3 = inlined_call_operand.vmem [shape: f32[1,64], index: 3, kind: input, shape index: {}]
  %s4 = inlined_call_operand.vmem [shape: bf16[512,256], index: 4, kind: input, shape index: {}]
  %s5 = inlined_call_operand.vmem [shape: bf16[512,256], index: 5, kind: input, shape index: {}]
  %s6 = inlined_call_operand.vmem [shape: f32[1,32], index: 6, kind: input, shape index: {}]
  %s7 = inlined_call_operand.vmem [shape: f32[1,32], index: 7, kind: input, shape index: {}]
  %s8 = inlined_call_operand.vmem [shape: bf16[512,256], index: 8, kind: input, shape index: {}]
  %s9 = inlined_call_operand.hbm [shape: bf16[512,256], index: 9, kind: input, shape index: {}]
  %s10 = inlined_call_operand.vmem [shape: f32[1,16], index: 10, kind: input, shape index: {}]
  %s11 = inlined_call_operand.vmem [shape: f32[1,16], index: 11, kind: input, shape index: {}]
  %s12 = inlined_call_operand.hbm [shape: bf16[512,256], index: 12, kind: input, shape index: {}]
  %s13 = inlined_call_operand.hbm [shape: bf16[512,256], index: 13, kind: input, shape index: {}]
  %s14 = inlined_call_operand.vmem [shape: f32[1,8], index: 14, kind: input, shape index: {}]
  %s15 = inlined_call_operand.vmem [shape: f32[1,8], index: 15, kind: input, shape index: {}]
  %s16 = inlined_call_operand.vmem [shape: bf16[512,192], index: 16, kind: input, shape index: {}]
  %s17 = inlined_call_operand.vmem [shape: bf16[512,192], index: 17, kind: input, shape index: {}]
  %s18 = inlined_call_operand.vmem [shape: f32[1,192], index: 18, kind: input, shape index: {}]
  %s19 = inlined_call_operand.hbm [shape: f32[2,3,64,64], index: 19, kind: output, shape index: {}]
  %s20 = sld [smem:[#allocation0]]
  $region98: #{generator_forward.1} parent=0
    _
  %s22 = ssub.s32 1, %s20
  %s23 = scalar_select 0, %s22, %s20
  $region1: #{generator_forward.1} parent=0
    #allocation2 [shape = 'u8[262144]{0}', space=vmem, size = 0x40000, scoped, tag = 'input window, operand 9, single buffered']
    #allocation3 [shape = 's32[1]{0}', space=sflag, size = 0x4, scoped, tag = 'scoped memory for generator_forward.1']
    #allocation4 [shape = 's32[1]{0}', space=sflag, size = 0x4, scoped, tag = 'scoped memory for generator_forward.1']
    #allocation5 [shape = 'u8[262144]{0}', space=vmem, size = 0x40000, scoped, tag = 'input window, operand 12, single buffered']
    #allocation6 [shape = 's32[1]{0}', space=sflag, size = 0x4, scoped, tag = 'scoped memory for generator_forward.1']
    #allocation7 [shape = 'u8[262144]{0}', space=vmem, size = 0x40000, scoped, tag = 'input window, operand 13, single buffered']
    #allocation8 [shape = 'u8[196608]{0}', space=vmem, size = 0x30000, scoped, tag = 'output window, operand 0, single buffered']
    %24 = vsyncpa [#allocation3], 0
    %25 = vsyncpa [#allocation6], 0
    %26 = vsyncpa [#allocation4], 0
    // Predicated region
    $region2: #{generator_forward.1} parent=1 // pred_check
      _
    $region3: #{generator_forward.1} parent=1 // pred_check_branch
      %28 = sbr.rel (0) target = $region5
    $region4: #{generator_forward.1} parent=1 // pred_region
      _
    $region5: #{generator_forward.1} parent=1 // pred_fallthru
      _
    // Predicated region
    $region6: #{generator_forward.1} parent=1 // pred_check
      _
    $region7: #{generator_forward.1} parent=1 // pred_check_branch
      %30 = sbr.rel (0) target = $region9
    $region8: #{generator_forward.1} parent=1 // pred_region
      _
    $region9: #{generator_forward.1} parent=1 // pred_fallthru
      _
    // Predicated region
    $region10: #{generator_forward.1} parent=1 // pred_check
      _
    $region11: #{generator_forward.1} parent=1 // pred_check_branch
      %32 = sbr.rel (0) target = $region13
    $region12: #{generator_forward.1} parent=1 // pred_region
      _
    $region13: #{generator_forward.1} parent=1 // pred_fallthru
      _
    // Predicated region
    $region14: #{generator_forward.1} parent=1 // pred_check
      _
    $region15: #{generator_forward.1} parent=1 // pred_check_branch
      %34 = sbr.rel (0) target = $region17
    $region16: #{generator_forward.1} parent=1 // pred_region
      _
    $region17: #{generator_forward.1} parent=1 // pred_fallthru
      _
    // Predicated region
    $region18: #{generator_forward.1} parent=1 // pred_check
      _
    $region19: #{generator_forward.1} parent=1 // pred_check_branch
      %36 = sbr.rel (0) target = $region21
    $region20: #{generator_forward.1} parent=1 // pred_region
      _
    $region21: #{generator_forward.1} parent=1 // pred_fallthru
      _
    // Predicated region
    $region22: #{generator_forward.1} parent=1 // pred_check
      _
    $region23: #{generator_forward.1} parent=1 // pred_check_branch
      %38 = sbr.rel (0) target = $region25
    $region24: #{generator_forward.1} parent=1 // pred_region
      _
    $region25: #{generator_forward.1} parent=1 // pred_fallthru
      _
    // Predicated region
    $region26: #{generator_forward.1} parent=1 // pred_check
      _
    $region27: #{generator_forward.1} parent=1 // pred_check_branch
      %40 = sbr.rel (0) target = $region29
    $region28: #{generator_forward.1} parent=1 // pred_region
      _
    $region29: #{generator_forward.1} parent=1 // pred_fallthru
      _
    // Predicated region
    $region30: #{generator_forward.1} parent=1 // pred_check
      _
    $region31: #{generator_forward.1} parent=1 // pred_check_branch
      %42 = sbr.rel (0) target = $region33
    $region32: #{generator_forward.1} parent=1 // pred_region
      _
    $region33: #{generator_forward.1} parent=1 // pred_fallthru
      _
    // Predicated region
    $region34: #{generator_forward.1} parent=1 // pred_check
      _
    $region35: #{generator_forward.1} parent=1 // pred_check_branch
      %44 = sbr.rel (0) target = $region37
    $region36: #{generator_forward.1} parent=1 // pred_region
      _
    $region37: #{generator_forward.1} parent=1 // pred_fallthru
      _
    // Predicated region
    $region38: #{generator_forward.1} parent=1 // pred_check
      _
    $region39: #{generator_forward.1} parent=1 // pred_check_branch
      %46 = sbr.rel (0) target = $region41
    $region40: #{generator_forward.1} parent=1 // pred_region
      %s48 = ssub.s32 8192, 8192
      %49 = vsyncadd [#allocation3], %s48
      %s50 = sshll.u32 [#allocation2], 4
      %s51 = int_to_ptr.vmem [resolvable:$true] %s50
      %56 = dma.hbm_to_vmem [thread:$0]  %s9, 8192, %s51, [#allocation3], 128, 128, 8
    $region41: #{generator_forward.1} parent=1 // pred_fallthru
      _
    // Predicated region
    $region42: #{generator_forward.1} parent=1 // pred_check
      _
    $region43: #{generator_forward.1} parent=1 // pred_check_branch
      %58 = sbr.rel (0) target = $region45
    $region44: #{generator_forward.1} parent=1 // pred_region
      _
    $region45: #{generator_forward.1} parent=1 // pred_fallthru
      _
    // Predicated region
    $region46: #{generator_forward.1} parent=1 // pred_check
      _
    $region47: #{generator_forward.1} parent=1 // pred_check_branch
      %60 = sbr.rel (0) target = $region49
    $region48: #{generator_forward.1} parent=1 // pred_region
      _
    $region49: #{generator_forward.1} parent=1 // pred_fallthru
      _
    // Predicated region
    $region50: #{generator_forward.1} parent=1 // pred_check
      _
    $region51: #{generator_forward.1} parent=1 // pred_check_branch
      %62 = sbr.rel (0) target = $region53
    $region52: #{generator_forward.1} parent=1 // pred_region
      %s64 = ssub.s32 8192, 8192
      %65 = vsyncadd [#allocation6], %s64
      %s66 = sshll.u32 [#allocation5], 4
      %s67 = int_to_ptr.vmem [resolvable:$true] %s66
      %72 = dma.hbm_to_vmem [thread:$0]  %s12, 8192, %s67, [#allocation6], 128, 128, 8
    $region53: #{generator_forward.1} parent=1 // pred_fallthru
      _
    // Predicated region
    $region54: #{generator_forward.1} parent=1 // pred_check
      _
    $region55: #{generator_forward.1} parent=1 // pred_check_branch
      %74 = sbr.rel (0) target = $region57
    $region56: #{generator_forward.1} parent=1 // pred_region
      %s76 = ssub.s32 8192, 8192
      %77 = vsyncadd [#allocation6], %s76
      %s78 = sshll.u32 [#allocation7], 4
      %s79 = int_to_ptr.vmem [resolvable:$true] %s78
      %84 = dma.hbm_to_vmem [thread:$0]  %s13, 8192, %s79, [#allocation6], 128, 128, 8
    $region57: #{generator_forward.1} parent=1 // pred_fallthru
      _
    // Predicated region
    $region58: #{generator_forward.1} parent=1 // pred_check
      _
    $region59: #{generator_forward.1} parent=1 // pred_check_branch
      %86 = sbr.rel (0) target = $region61
    $region60: #{generator_forward.1} parent=1 // pred_region
      _
    $region61: #{generator_forward.1} parent=1 // pred_fallthru
      _
    // Predicated region
    $region62: #{generator_forward.1} parent=1 // pred_check
      _
    $region63: #{generator_forward.1} parent=1 // pred_check_branch
      %88 = sbr.rel (0) target = $region65
    $region64: #{generator_forward.1} parent=1 // pred_region
      _
    $region65: #{generator_forward.1} parent=1 // pred_fallthru
      _
    // Predicated region
    $region66: #{generator_forward.1} parent=1 // pred_check
      _
    $region67: #{generator_forward.1} parent=1 // pred_check_branch
      %90 = sbr.rel (0) target = $region69
    $region68: #{generator_forward.1} parent=1 // pred_region
      _
    $region69: #{generator_forward.1} parent=1 // pred_fallthru
      _
    // Predicated region
    $region70: #{generator_forward.1} parent=1 // pred_check
      _
    $region71: #{generator_forward.1} parent=1 // pred_check_branch
      %92 = sbr.rel (0) target = $region73
    $region72: #{generator_forward.1} parent=1 // pred_region
      _
    $region73: #{generator_forward.1} parent=1 // pred_fallthru
      _
    // Predicated region
    $region74: #{generator_forward.1} parent=1 // pred_check
      _
    $region75: #{generator_forward.1} parent=1 // pred_check_branch
      %94 = sbr.rel (0) target = $region77
    $region76: #{generator_forward.1} parent=1 // pred_region
      _
    $region77: #{generator_forward.1} parent=1 // pred_fallthru
      _
    // Predicated region
    $region78: #{generator_forward.1} parent=1 // pred_check
      _
    $region79: #{generator_forward.1} parent=1 // pred_check_branch
      %96 = sbr.rel (0) target = $region81
    $region80: #{generator_forward.1} parent=1 // pred_region
      %97 = dma.done [#allocation3], 8192
    $region81: #{generator_forward.1} parent=1 // pred_fallthru
      _
    // Predicated region
    $region82: #{generator_forward.1} parent=1 // pred_check
      _
    $region83: #{generator_forward.1} parent=1 // pred_check_branch
      %99 = sbr.rel (0) target = $region85
    $region84: #{generator_forward.1} parent=1 // pred_region
      %100 = dma.done [#allocation6], 8192
    $region85: #{generator_forward.1} parent=1 // pred_fallthru
      _
    // Predicated region
    $region86: #{generator_forward.1} parent=1 // pred_check
      _
    $region87: #{generator_forward.1} parent=1 // pred_check_branch
      %102 = sbr.rel (0) target = $region89
    $region88: #{generator_forward.1} parent=1 // pred_region
      %103 = dma.done [#allocation6], 8192
    $region89: #{generator_forward.1} parent=1 // pred_fallthru
      _
    %v107 = vld [vmem:[%s0] sm:$0x3]
    %v108 = vpack.c.bf16 %v107, %v107
    %v109 = vld [vmem:[%s1] sm:$0xff]
    %v110 = vld [vmem:[%s1 + $0x8] sm:$0xff]
    %v111 = vld [vmem:[%s1 + $0x10] sm:$0xff]
    %v112 = vld [vmem:[%s1 + $0x18] sm:$0xff]
    %v113 = vld [vmem:[%s1 + $0x20] sm:$0xff]
    %v114 = vld [vmem:[%s1 + $0x28] sm:$0xff]
    %v115 = vld [vmem:[%s1 + $0x30] sm:$0xff]
    %v116 = vld [vmem:[%s1 + $0x38] sm:$0xff]
    %v125 = vunpack.c.l.b16 %v109
    %v126 = vunpack.c.h.b16 %v109
    %v127 = vunpack.c.l.b16 %v110
    %v128 = vunpack.c.h.b16 %v110
    %v129 = vunpack.c.l.b16 %v111
    %v130 = vunpack.c.h.b16 %v111
    %v131 = vunpack.c.l.b16 %v112
    %v132 = vunpack.c.h.b16 %v112
    %v133 = vunpack.c.l.b16 %v113
    %v134 = vunpack.c.h.b16 %v113
    %v135 = vunpack.c.l.b16 %v114
    %v136 = vunpack.c.h.b16 %v114
    %v137 = vunpack.c.l.b16 %v115
    %v138 = vunpack.c.h.b16 %v115
    %v139 = vunpack.c.l.b16 %v116
    %v140 = vunpack.c.h.b16 %v116
    %v141 = vpack.c.b16 %v133, %v125
    %v142 = vpack.c.b16 %v134, %v126
    %v143 = vpack.c.b16 %v135, %v127
    %v144 = vpack.c.b16 %v136, %v128
    %v145 = vpack.c.b16 %v137, %v129
    %v146 = vpack.c.b16 %v138, %v130
    %v147 = vpack.c.b16 %v139, %v131
    %v148 = vpack.c.b16 %v140, %v132
    %vm157 = vcmask 130048
    %v159 = vsel %vm157, %v108, 0
    %161 = vmatprep.subr.bf16.mxu0 0
    %162 = vmatpush1.bf16.msra.mxu0 0
    %163 = vmatprep.subr.bf16.mxu0 0
    %164 = vmatpush1.bf16.msra.mxu0 0
    %165 = vmatprep.subr.bf16.mxu0 0
    %166 = vmatpush1.bf16.msra.mxu0 0
    %167 = vmatprep.subr.bf16.mxu0 0
    %168 = vmatpush1.bf16.msra.mxu0 0
    %169 = vmatprep.subr.bf16.mxu0 0
    %170 = vmatpush1.bf16.msra.mxu0 0
    %171 = vmatprep.subr.bf16.mxu0 0
    %172 = vmatpush1.bf16.msra.mxu0 0
    %173 = vmatprep.subr.bf16.mxu0 0
    %174 = vmatpush1.bf16.msra.mxu0 0
    %175 = vmatprep.subr.bf16.mxu0 %v142
    %176 = vmatpush1.bf16.msra.mxu0 %v141
    %177 = vmatprep.subr.bf16.mxu0 0
    %178 = vmatpush2.bf16.msra.mxu0 0
    %179 = vmatprep.subr.bf16.mxu0 0
    %180 = vmatpush2.bf16.msra.mxu0 0
    %181 = vmatprep.subr.bf16.mxu0 0
    %182 = vmatpush2.bf16.msra.mxu0 0
    %183 = vmatprep.subr.bf16.mxu0 0
    %184 = vmatpush2.bf16.msra.mxu0 0
    %185 = vmatprep.subr.bf16.mxu0 0
    %186 = vmatpush2.bf16.msra.mxu0 0
    %187 = vmatprep.subr.bf16.mxu0 0
    %188 = vmatpush2.bf16.msra.mxu0 0
    %189 = vmatprep.subr.bf16.mxu0 0
    %190 = vmatpush2.bf16.msra.mxu0 0
    %191 = vmatprep.subr.bf16.mxu0 0
    %192 = vmatpush2.bf16.msra.mxu0 0
    %193 = vmatprep.mubr.bf16.mxu0 0
    %194 = vmatmul.mubr.bf16.gmra.mxu0 %v159
    %v195 = vpop.f32.mrf.mxu0
    %v196 = vadd.f32 0.0, %v195
    %v197 = vpop.f32.mrf.mxu0
    %v198 = vadd.f32 0.0, %v197
    %v199 = vpop.f32.mrf.mxu0
    %v200 = vpop.f32.mrf.mxu0
    %201 = vdwg.mxu0
    %202 = vmatprep.subr.bf16.mxu0 0
    %203 = vmatpush1.bf16.msra.mxu0 0
    %204 = vmatprep.subr.bf16.mxu0 0
    %205 = vmatpush1.bf16.msra.mxu0 0
    %206 = vmatprep.subr.bf16.mxu0 0
    %207 = vmatpush1.bf16.msra.mxu0 0
    %208 = vmatprep.subr.bf16.mxu0 0
    %209 = vmatpush1.bf16.msra.mxu0 0
    %210 = vmatprep.subr.bf16.mxu0 0
    %211 = vmatpush1.bf16.msra.mxu0 0
    %212 = vmatprep.subr.bf16.mxu0 0
    %213 = vmatpush1.bf16.msra.mxu0 0
    %214 = vmatprep.subr.bf16.mxu0 0
    %215 = vmatpush1.bf16.msra.mxu0 0
    %216 = vmatprep.subr.bf16.mxu0 %v144
    %217 = vmatpush1.bf16.msra.mxu0 %v143
    %218 = vmatprep.subr.bf16.mxu0 0
    %219 = vmatpush2.bf16.msra.mxu0 0
    %220 = vmatprep.subr.bf16.mxu0 0
    %221 = vmatpush2.bf16.msra.mxu0 0
    %222 = vmatprep.subr.bf16.mxu0 0
    %223 = vmatpush2.bf16.msra.mxu0 0
    %224 = vmatprep.subr.bf16.mxu0 0
    %225 = vmatpush2.bf16.msra.mxu0 0
    %226 = vmatprep.subr.bf16.mxu0 0
    %227 = vmatpush2.bf16.msra.mxu0 0
    %228 = vmatprep.subr.bf16.mxu0 0
    %229 = vmatpush2.bf16.msra.mxu0 0
    %230 = vmatprep.subr.bf16.mxu0 0
    %231 = vmatpush2.bf16.msra.mxu0 0
    %232 = vmatprep.subr.bf16.mxu0 0
    %233 = vmatpush2.bf16.msra.mxu0 0
    %234 = vmatprep.mubr.bf16.mxu0 0
    %235 = vmatmul.mubr.bf16.gmra.mxu0 %v159
    %v236 = vpop.f32.mrf.mxu0
    %v237 = vadd.f32 0.0, %v236
    %v238 = vpop.f32.mrf.mxu0
    %v239 = vadd.f32 0.0, %v238
    %v240 = vpop.f32.mrf.mxu0
    %v241 = vpop.f32.mrf.mxu0
    %242 = vdwg.mxu0
    %243 = vmatprep.subr.bf16.mxu0 0
    %244 = vmatpush1.bf16.msra.mxu0 0
    %245 = vmatprep.subr.bf16.mxu0 0
    %246 = vmatpush1.bf16.msra.mxu0 0
    %247 = vmatprep.subr.bf16.mxu0 0
    %248 = vmatpush1.bf16.msra.mxu0 0
    %249 = vmatprep.subr.bf16.mxu0 0
    %250 = vmatpush1.bf16.msra.mxu0 0
    %251 = vmatprep.subr.bf16.mxu0 0
    %252 = vmatpush1.bf16.msra.mxu0 0
    %253 = vmatprep.subr.bf16.mxu0 0
    %254 = vmatpush1.bf16.msra.mxu0 0
    %255 = vmatprep.subr.bf16.mxu0 0
    %256 = vmatpush1.bf16.msra.mxu0 0
    %257 = vmatprep.subr.bf16.mxu0 %v146
    %258 = vmatpush1.bf16.msra.mxu0 %v145
    %259 = vmatprep.subr.bf16.mxu0 0
    %260 = vmatpush2.bf16.msra.mxu0 0
    %261 = vmatprep.subr.bf16.mxu0 0
    %262 = vmatpush2.bf16.msra.mxu0 0
    %263 = vmatprep.subr.bf16.mxu0 0
    %264 = vmatpush2.bf16.msra.mxu0 0
    %265 = vmatprep.subr.bf16.mxu0 0
    %266 = vmatpush2.bf16.msra.mxu0 0
    %267 = vmatprep.subr.bf16.mxu0 0
    %268 = vmatpush2.bf16.msra.mxu0 0
    %269 = vmatprep.subr.bf16.mxu0 0
    %270 = vmatpush2.bf16.msra.mxu0 0
    %271 = vmatprep.subr.bf16.mxu0 0
    %272 = vmatpush2.bf16.msra.mxu0 0
    %273 = vmatprep.subr.bf16.mxu0 0
    %274 = vmatpush2.bf16.msra.mxu0 0
    %275 = vmatprep.mubr.bf16.mxu0 0
    %276 = vmatmul.mubr.bf16.gmra.mxu0 %v159
    %v277 = vpop.f32.mrf.mxu0
    %v278 = vadd.f32 0.0, %v277
    %v279 = vpop.f32.mrf.mxu0
    %v280 = vadd.f32 0.0, %v279
    %v281 = vpop.f32.mrf.mxu0
    %v282 = vpop.f32.mrf.mxu0
    %283 = vdwg.mxu0
    %284 = vmatprep.subr.bf16.mxu0 0
    %285 = vmatpush1.bf16.msra.mxu0 0
    %286 = vmatprep.subr.bf16.mxu0 0
    %287 = vmatpush1.bf16.msra.mxu0 0
    %288 = vmatprep.subr.bf16.mxu0 0
    %289 = vmatpush1.bf16.msra.mxu0 0
    %290 = vmatprep.subr.bf16.mxu0 0
    %291 = vmatpush1.bf16.msra.mxu0 0
    %292 = vmatprep.subr.bf16.mxu0 0
    %293 = vmatpush1.bf16.msra.mxu0 0
    %294 = vmatprep.subr.bf16.mxu0 0
    %295 = vmatpush1.bf16.msra.mxu0 0
    %296 = vmatprep.subr.bf16.mxu0 0
    %297 = vmatpush1.bf16.msra.mxu0 0
    %298 = vmatprep.subr.bf16.mxu0 %v148
    %299 = vmatpush1.bf16.msra.mxu0 %v147
    %300 = vmatprep.subr.bf16.mxu0 0
    %301 = vmatpush2.bf16.msra.mxu0 0
    %302 = vmatprep.subr.bf16.mxu0 0
    %303 = vmatpush2.bf16.msra.mxu0 0
    %304 = vmatprep.subr.bf16.mxu0 0
    %305 = vmatpush2.bf16.msra.mxu0 0
    %306 = vmatprep.subr.bf16.mxu0 0
    %307 = vmatpush2.bf16.msra.mxu0 0
    %308 = vmatprep.subr.bf16.mxu0 0
    %309 = vmatpush2.bf16.msra.mxu0 0
    %310 = vmatprep.subr.bf16.mxu0 0
    %311 = vmatpush2.bf16.msra.mxu0 0
    %312 = vmatprep.subr.bf16.mxu0 0
    %313 = vmatpush2.bf16.msra.mxu0 0
    %314 = vmatprep.subr.bf16.mxu0 0
    %315 = vmatpush2.bf16.msra.mxu0 0
    %316 = vmatprep.mubr.bf16.mxu0 0
    %317 = vmatmul.mubr.bf16.gmra.mxu0 %v159
    %v318 = vpop.f32.mrf.mxu0
    %v319 = vadd.f32 0.0, %v318
    %v320 = vpop.f32.mrf.mxu0
    %v321 = vadd.f32 0.0, %v320
    %v322 = vpop.f32.mrf.mxu0
    %v323 = vpop.f32.mrf.mxu0
    %324 = vdwg.mxu0
    %v325 = vlaneseq
    %v326 = vshrl.u32 %v325, 7
    %v327 = vlaneseq
    %v328 = vand.u32 %v327, 127
    %v329 = vmul.u32 %v328, 4
    %vm330 = vcmp.eq.s32.totalorder %v326, %v329
    %v331 = vsel %vm330, 1, 0
    %v332 = vcvt.s32.f32 %v331
    %v333 = vadd.s32 %v329, 1
    %vm334 = vcmp.eq.s32.totalorder %v326, %v333
    %v335 = vsel %vm334, 1, 0
    %v336 = vcvt.s32.f32 %v335
    %vm337 = vcmask 15360
    %v339 = vsel %vm337, %v336, 0
    %vm341 = vcmask 1041408
    %v343 = vsel %vm341, %v237, 0
    %v346 = vsel %vm341, %v239, 0
    %348 = vmatprep.subr.mxu0 0.0
    %349 = vmatpush1.msra.mxu0 0.0
    %350 = vmatprep.subr.mxu0 0.0
    %351 = vmatpush1.msra.mxu0 0.0
    %352 = vmatprep.subr.mxu0 0.0
    %353 = vmatpush1.msra.mxu0 0.0
    %354 = vmatprep.subr.mxu0 0.0
    %355 = vmatpush1.msra.mxu0 0.0
    %356 = vmatprep.subr.mxu0 0.0
    %357 = vmatpush1.msra.mxu0 0.0
    %358 = vmatprep.subr.mxu0 0.0
    %359 = vmatpush1.msra.mxu0 0.0
    %360 = vmatprep.subr.mxu0 0.0
    %361 = vmatpush1.msra.mxu0 0.0
    %362 = vmatprep.subr.mxu0 0.0
    %363 = vmatpush1.msra.mxu0 0.0
    %364 = vmatprep.subr.mxu0 0.0
    %365 = vmatpush1.msra.mxu0 0.0
    %366 = vmatprep.subr.mxu0 0.0
    %367 = vmatpush1.msra.mxu0 0.0
    %368 = vmatprep.subr.mxu0 0.0
    %369 = vmatpush1.msra.mxu0 0.0
    %370 = vmatprep.subr.mxu0 0.0
    %371 = vmatpush1.msra.mxu0 0.0
    %372 = vmatprep.subr.mxu0 0.0
    %373 = vmatpush1.msra.mxu0 0.0
    %374 = vmatprep.subr.mxu0 0.0
    %375 = vmatpush1.msra.mxu0 0.0
    %376 = vmatprep.subr.mxu0 0.0
    %377 = vmatpush1.msra.mxu0 0.0
    %378 = vmatprep.subr.mxu0 %v346
    %379 = vmatpush1.msra.mxu0 %v343
    %380 = vmatprep.subr.mxu0 0.0
    %381 = vmatpush2.msra.mxu0 0.0
    %382 = vmatprep.subr.mxu0 0.0
    %383 = vmatpush2.msra.mxu0 0.0
    %384 = vmatprep.subr.mxu0 0.0
    %385 = vmatpush2.msra.mxu0 0.0
    %386 = vmatprep.subr.mxu0 0.0
    %387 = vmatpush2.msra.mxu0 0.0
    %388 = vmatprep.subr.mxu0 0.0
    %389 = vmatpush2.msra.mxu0 0.0
    %390 = vmatprep.subr.mxu0 0.0
    %391 = vmatpush2.msra.mxu0 0.0
    %392 = vmatprep.subr.mxu0 0.0
    %393 = vmatpush2.msra.mxu0 0.0
    %394 = vmatprep.subr.mxu0 0.0
    %395 = vmatpush2.msra.mxu0 0.0
    %396 = vmatprep.subr.mxu0 0.0
    %397 = vmatpush2.msra.mxu0 0.0
    %398 = vmatprep.subr.mxu0 0.0
    %399 = vmatpush2.msra.mxu0 0.0
    %400 = vmatprep.subr.mxu0 0.0
    %401 = vmatpush2.msra.mxu0 0.0
    %402 = vmatprep.subr.mxu0 0.0
    %403 = vmatpush2.msra.mxu0 0.0
    %404 = vmatprep.subr.mxu0 0.0
    %405 = vmatpush2.msra.mxu0 0.0
    %406 = vmatprep.subr.mxu0 0.0
    %407 = vmatpush2.msra.mxu0 0.0
    %408 = vmatprep.subr.mxu0 0.0
    %409 = vmatpush2.msra.mxu0 0.0
    %410 = vmatprep.subr.mxu0 0.0
    %411 = vmatpush2.msra.mxu0 0.0
    %412 = vmatprep.mubr.f32.mxu0 0.0
    %413 = vmatmul.mubr.f32.gmra.mxu0 %v339
    %v414 = vpop.f32.mrf.mxu0
    %v415 = vadd.f32 0.0, %v414
    %v416 = vpop.f32.mrf.mxu0
    %v417 = vadd.f32 0.0, %v416
    %418 = vdwg.mxu0
    %v419 = vadd.s32 %v329, 2
    %vm420 = vcmp.eq.s32.totalorder %v326, %v419
    %v421 = vsel %vm420, 1, 0
    %v422 = vcvt.s32.f32 %v421
    %v424 = vsel %vm337, %v422, 0
    %v427 = vsel %vm341, %v278, 0
    %v430 = vsel %vm341, %v280, 0
    %432 = vmatprep.subr.mxu0 0.0
    %433 = vmatpush1.msra.mxu0 0.0
    %434 = vmatprep.subr.mxu0 0.0
    %435 = vmatpush1.msra.mxu0 0.0
    %436 = vmatprep.subr.mxu0 0.0
    %437 = vmatpush1.msra.mxu0 0.0
    %438 = vmatprep.subr.mxu0 0.0
    %439 = vmatpush1.msra.mxu0 0.0
    %440 = vmatprep.subr.mxu0 0.0
    %441 = vmatpush1.msra.mxu0 0.0
    %442 = vmatprep.subr.mxu0 0.0
    %443 = vmatpush1.msra.mxu0 0.0
    %444 = vmatprep.subr.mxu0 0.0
    %445 = vmatpush1.msra.mxu0 0.0
    %446 = vmatprep.subr.mxu0 0.0
    %447 = vmatpush1.msra.mxu0 0.0
    %448 = vmatprep.subr.mxu0 0.0
    %449 = vmatpush1.msra.mxu0 0.0
    %450 = vmatprep.subr.mxu0 0.0
    %451 = vmatpush1.msra.mxu0 0.0
    %452 = vmatprep.subr.mxu0 0.0
    %453 = vmatpush1.msra.mxu0 0.0
    %454 = vmatprep.subr.mxu0 0.0
    %455 = vmatpush1.msra.mxu0 0.0
    %456 = vmatprep.subr.mxu0 0.0
    %457 = vmatpush1.msra.mxu0 0.0
    %458 = vmatprep.subr.mxu0 0.0
    %459 = vmatpush1.msra.mxu0 0.0
    %460 = vmatprep.subr.mxu0 0.0
    %461 = vmatpush1.msra.mxu0 0.0
    %462 = vmatprep.subr.mxu0 %v430
    %463 = vmatpush1.msra.mxu0 %v427
    %464 = vmatprep.subr.mxu0 0.0
    %465 = vmatpush2.msra.mxu0 0.0
    %466 = vmatprep.subr.mxu0 0.0
    %467 = vmatpush2.msra.mxu0 0.0
    %468 = vmatprep.subr.mxu0 0.0
    %469 = vmatpush2.msra.mxu0 0.0
    %470 = vmatprep.subr.mxu0 0.0
    %471 = vmatpush2.msra.mxu0 0.0
    %472 = vmatprep.subr.mxu0 0.0
    %473 = vmatpush2.msra.mxu0 0.0
    %474 = vmatprep.subr.mxu0 0.0
    %475 = vmatpush2.msra.mxu0 0.0
    %476 = vmatprep.subr.mxu0 0.0
    %477 = vmatpush2.msra.mxu0 0.0
    %478 = vmatprep.subr.mxu0 0.0
    %479 = vmatpush2.msra.mxu0 0.0
    %480 = vmatprep.subr.mxu0 0.0
    %481 = vmatpush2.msra.mxu0 0.0
    %482 = vmatprep.subr.mxu0 0.0
    %483 = vmatpush2.msra.mxu0 0.0
    %484 = vmatprep.subr.mxu0 0.0
    %485 = vmatpush2.msra.mxu0 0.0
    %486 = vmatprep.subr.mxu0 0.0
    %487 = vmatpush2.msra.mxu0 0.0
    %488 = vmatprep.subr.mxu0 0.0
    %489 = vmatpush2.msra.mxu0 0.0
    %490 = vmatprep.subr.mxu0 0.0
    %491 = vmatpush2.msra.mxu0 0.0
    %492 = vmatprep.subr.mxu0 0.0
    %493 = vmatpush2.msra.mxu0 0.0
    %494 = vmatprep.subr.mxu0 0.0
    %495 = vmatpush2.msra.mxu0 0.0
    %496 = vmatprep.mubr.f32.mxu0 0.0
    %497 = vmatmul.mubr.f32.gmra.mxu0 %v424
    %v498 = vpop.f32.mrf.mxu0
    %v499 = vadd.f32 0.0, %v498
    %v500 = vpop.f32.mrf.mxu0
    %v501 = vadd.f32 0.0, %v500
    %502 = vdwg.mxu0
    %v503 = vadd.s32 %v329, 3
    %vm504 = vcmp.eq.s32.totalorder %v326, %v503
    %v505 = vsel %vm504, 1, 0
    %v506 = vcvt.s32.f32 %v505
    %v508 = vsel %vm337, %v506, 0
    %v511 = vsel %vm341, %v319, 0
    %v514 = vsel %vm341, %v321, 0
    %516 = vmatprep.subr.mxu0 0.0
    %517 = vmatpush1.msra.mxu0 0.0
    %518 = vmatprep.subr.mxu0 0.0
    %519 = vmatpush1.msra.mxu0 0.0
    %520 = vmatprep.subr.mxu0 0.0
    %521 = vmatpush1.msra.mxu0 0.0
    %522 = vmatprep.subr.mxu0 0.0
    %523 = vmatpush1.msra.mxu0 0.0
    %524 = vmatprep.subr.mxu0 0.0
    %525 = vmatpush1.msra.mxu0 0.0
    %526 = vmatprep.subr.mxu0 0.0
    %527 = vmatpush1.msra.mxu0 0.0
    %528 = vmatprep.subr.mxu0 0.0
    %529 = vmatpush1.msra.mxu0 0.0
    %530 = vmatprep.subr.mxu0 0.0
    %531 = vmatpush1.msra.mxu0 0.0
    %532 = vmatprep.subr.mxu0 0.0
    %533 = vmatpush1.msra.mxu0 0.0
    %534 = vmatprep.subr.mxu0 0.0
    %535 = vmatpush1.msra.mxu0 0.0
    %536 = vmatprep.subr.mxu0 0.0
    %537 = vmatpush1.msra.mxu0 0.0
    %538 = vmatprep.subr.mxu0 0.0
    %539 = vmatpush1.msra.mxu0 0.0
    %540 = vmatprep.subr.mxu0 0.0
    %541 = vmatpush1.msra.mxu0 0.0
    %542 = vmatprep.subr.mxu0 0.0
    %543 = vmatpush1.msra.mxu0 0.0
    %544 = vmatprep.subr.mxu0 0.0
    %545 = vmatpush1.msra.mxu0 0.0
    %546 = vmatprep.subr.mxu0 %v514
    %547 = vmatpush1.msra.mxu0 %v511
    %548 = vmatprep.subr.mxu0 0.0
    %549 = vmatpush2.msra.mxu0 0.0
    %550 = vmatprep.subr.mxu0 0.0
    %551 = vmatpush2.msra.mxu0 0.0
    %552 = vmatprep.subr.mxu0 0.0
    %553 = vmatpush2.msra.mxu0 0.0
    %554 = vmatprep.subr.mxu0 0.0
    %555 = vmatpush2.msra.mxu0 0.0
    %556 = vmatprep.subr.mxu0 0.0
    %557 = vmatpush2.msra.mxu0 0.0
    %558 = vmatprep.subr.mxu0 0.0
    %559 = vmatpush2.msra.mxu0 0.0
    %560 = vmatprep.subr.mxu0 0.0
    %561 = vmatpush2.msra.mxu0 0.0
    %562 = vmatprep.subr.mxu0 0.0
    %563 = vmatpush2.msra.mxu0 0.0
    %564 = vmatprep.subr.mxu0 0.0
    %565 = vmatpush2.msra.mxu0 0.0
    %566 = vmatprep.subr.mxu0 0.0
    %567 = vmatpush2.msra.mxu0 0.0
    %568 = vmatprep.subr.mxu0 0.0
    %569 = vmatpush2.msra.mxu0 0.0
    %570 = vmatprep.subr.mxu0 0.0
    %571 = vmatpush2.msra.mxu0 0.0
    %572 = vmatprep.subr.mxu0 0.0
    %573 = vmatpush2.msra.mxu0 0.0
    %574 = vmatprep.subr.mxu0 0.0
    %575 = vmatpush2.msra.mxu0 0.0
    %576 = vmatprep.subr.mxu0 0.0
    %577 = vmatpush2.msra.mxu0 0.0
    %578 = vmatprep.subr.mxu0 0.0
    %579 = vmatpush2.msra.mxu0 0.0
    %580 = vmatprep.mubr.f32.mxu0 0.0
    %581 = vmatmul.mubr.f32.gmra.mxu0 %v508
    %v582 = vpop.f32.mrf.mxu0
    %v583 = vadd.f32 0.0, %v582
    %v584 = vpop.f32.mrf.mxu0
    %v585 = vadd.f32 0.0, %v584
    %586 = vdwg.mxu0
    %v588 = vsel %vm337, %v332, 0
    %v591 = vsel %vm341, %v196, 0
    %v594 = vsel %vm341, %v198, 0
    %596 = vmatprep.subr.mxu0 0.0
    %597 = vmatpush1.msra.mxu0 0.0
    %598 = vmatprep.subr.mxu0 0.0
    %599 = vmatpush1.msra.mxu0 0.0
    %600 = vmatprep.subr.mxu0 0.0
    %601 = vmatpush1.msra.mxu0 0.0
    %602 = vmatprep.subr.mxu0 0.0
    %603 = vmatpush1.msra.mxu0 0.0
    %604 = vmatprep.subr.mxu0 0.0
    %605 = vmatpush1.msra.mxu0 0.0
    %606 = vmatprep.subr.mxu0 0.0
    %607 = vmatpush1.msra.mxu0 0.0
    %608 = vmatprep.subr.mxu0 0.0
    %609 = vmatpush1.msra.mxu0 0.0
    %610 = vmatprep.subr.mxu0 0.0
    %611 = vmatpush1.msra.mxu0 0.0
    %612 = vmatprep.subr.mxu0 0.0
    %613 = vmatpush1.msra.mxu0 0.0
    %614 = vmatprep.subr.mxu0 0.0
    %615 = vmatpush1.msra.mxu0 0.0
    %616 = vmatprep.subr.mxu0 0.0
    %617 = vmatpush1.msra.mxu0 0.0
    %618 = vmatprep.subr.mxu0 0.0
    %619 = vmatpush1.msra.mxu0 0.0
    %620 = vmatprep.subr.mxu0 0.0
    %621 = vmatpush1.msra.mxu0 0.0
    %622 = vmatprep.subr.mxu0 0.0
    %623 = vmatpush1.msra.mxu0 0.0
    %624 = vmatprep.subr.mxu0 0.0
    %625 = vmatpush1.msra.mxu0 0.0
    %626 = vmatprep.subr.mxu0 %v594
    %627 = vmatpush1.msra.mxu0 %v591
    %628 = vmatprep.subr.mxu0 0.0
    %629 = vmatpush2.msra.mxu0 0.0
    %630 = vmatprep.subr.mxu0 0.0
    %631 = vmatpush2.msra.mxu0 0.0
    %632 = vmatprep.subr.mxu0 0.0
    %633 = vmatpush2.msra.mxu0 0.0
    %634 = vmatprep.subr.mxu0 0.0
    %635 = vmatpush2.msra.mxu0 0.0
    %636 = vmatprep.subr.mxu0 0.0
    %637 = vmatpush2.msra.mxu0 0.0
    %638 = vmatprep.subr.mxu0 0.0
    %639 = vmatpush2.msra.mxu0 0.0
    %640 = vmatprep.subr.mxu0 0.0
    %641 = vmatpush2.msra.mxu0 0.0
    %642 = vmatprep.subr.mxu0 0.0
    %643 = vmatpush2.msra.mxu0 0.0
    %644 = vmatprep.subr.mxu0 0.0
    %645 = vmatpush2.msra.mxu0 0.0
    %646 = vmatprep.subr.mxu0 0.0
    %647 = vmatpush2.msra.mxu0 0.0
    %648 = vmatprep.subr.mxu0 0.0
    %649 = vmatpush2.msra.mxu0 0.0
    %650 = vmatprep.subr.mxu0 0.0
    %651 = vmatpush2.msra.mxu0 0.0
    %652 = vmatprep.subr.mxu0 0.0
    %653 = vmatpush2.msra.mxu0 0.0
    %654 = vmatprep.subr.mxu0 0.0
    %655 = vmatpush2.msra.mxu0 0.0
    %656 = vmatprep.subr.mxu0 0.0
    %657 = vmatpush2.msra.mxu0 0.0
    %658 = vmatprep.subr.mxu0 0.0
    %659 = vmatpush2.msra.mxu0 0.0
    %660 = vmatprep.mubr.f32.mxu0 0.0
    %661 = vmatmul.mubr.f32.gmra.mxu0 %v588
    %v662 = vpop.f32.mrf.mxu0
    %v663 = vadd.f32 %v415, %v662
    %v664 = vpop.f32.mrf.mxu0
    %v665 = vadd.f32 %v417, %v664
    %666 = vdwg.mxu0
    %v667 = vadd.f32 %v663, %v499
    %v668 = vadd.f32 %v665, %v501
    %v669 = vadd.f32 %v667, %v583
    %v670 = vadd.f32 %v668, %v585
    %v671 = vld [vmem:[%s2] sm:$0x1]
    %v672 = vld [vmem:[%s3] sm:$0x1]
    %v673 = vadd.s32 %v326, 8
    %v674 = vadd.s32 %v326, 16
    %v675 = vadd.s32 %v326, 24
    %v676 = vadd.s32 %v326, 32
    %v677 = vadd.s32 %v326, 40
    %v678 = vadd.s32 %v326, 48
    %v679 = vadd.s32 %v326, 56
    %v680 = vadd.s32 %v326, 64
    %v681 = vadd.s32 %v326, 72
    %v682 = vadd.s32 %v326, 80
    %v683 = vadd.s32 %v326, 88
    %v684 = vadd.s32 %v326, 96
    %v685 = vadd.s32 %v326, 104
    %v686 = vadd.s32 %v326, 112
    %v687 = vadd.s32 %v326, 120
    %v688 = vadd.s32 %v326, 128
    %v689 = vadd.s32 %v326, 136
    %v690 = vadd.s32 %v326, 144
    %v691 = vadd.s32 %v326, 152
    %v692 = vadd.s32 %v326, 160
    %v693 = vadd.s32 %v326, 168
    %v694 = vadd.s32 %v326, 176
    %v695 = vadd.s32 %v326, 184
    %v696 = vadd.s32 %v326, 192
    %v697 = vadd.s32 %v326, 200
    %v698 = vadd.s32 %v326, 208
    %v699 = vadd.s32 %v326, 216
    %v700 = vadd.s32 %v326, 224
    %v701 = vadd.s32 %v326, 232
    %v702 = vadd.s32 %v326, 240
    %v703 = vadd.s32 %v326, 248
    %vm704 = vcmp.lt.s32.totalorder %v326, 0
    %v705 = vsub.s32 0, %v326
    %v706 = vsel %vm704, %v705, %v326
    %v707 = vshrl.u32 %v706, 6
    %v708 = vand.u32 %v706, 63
    %v709 = vsub.s32 0, %v708
    %v710 = vsel %vm704, %v709, %v708
    %vm711 = vcmp.lt.s32.totalorder %v673, 0
    %v712 = vsub.s32 0, %v673
    %v713 = vsel %vm711, %v712, %v673
    %v714 = vshrl.u32 %v713, 6
    %v715 = vand.u32 %v713, 63
    %v716 = vsub.s32 0, %v715
    %v717 = vsel %vm711, %v716, %v715
    %vm718 = vcmp.lt.s32.totalorder %v674, 0
    %v719 = vsub.s32 0, %v674
    %v720 = vsel %vm718, %v719, %v674
    %v721 = vshrl.u32 %v720, 6
    %v722 = vand.u32 %v720, 63
    %v723 = vsub.s32 0, %v722
    %v724 = vsel %vm718, %v723, %v722
    %vm725 = vcmp.lt.s32.totalorder %v675, 0
    %v726 = vsub.s32 0, %v675
    %v727 = vsel %vm725, %v726, %v675
    %v728 = vshrl.u32 %v727, 6
    %v729 = vand.u32 %v727, 63
    %v730 = vsub.s32 0, %v729
    %v731 = vsel %vm725, %v730, %v729
    %vm732 = vcmp.lt.s32.totalorder %v676, 0
    %v733 = vsub.s32 0, %v676
    %v734 = vsel %vm732, %v733, %v676
    %v735 = vshrl.u32 %v734, 6
    %v736 = vand.u32 %v734, 63
    %v737 = vsub.s32 0, %v736
    %v738 = vsel %vm732, %v737, %v736
    %vm739 = vcmp.lt.s32.totalorder %v677, 0
    %v740 = vsub.s32 0, %v677
    %v741 = vsel %vm739, %v740, %v677
    %v742 = vshrl.u32 %v741, 6
    %v743 = vand.u32 %v741, 63
    %v744 = vsub.s32 0, %v743
    %v745 = vsel %vm739, %v744, %v743
    %vm746 = vcmp.lt.s32.totalorder %v678, 0
    %v747 = vsub.s32 0, %v678
    %v748 = vsel %vm746, %v747, %v678
    %v749 = vshrl.u32 %v748, 6
    %v750 = vand.u32 %v748, 63
    %v751 = vsub.s32 0, %v750
    %v752 = vsel %vm746, %v751, %v750
    %vm753 = vcmp.lt.s32.totalorder %v679, 0
    %v754 = vsub.s32 0, %v679
    %v755 = vsel %vm753, %v754, %v679
    %v756 = vshrl.u32 %v755, 6
    %v757 = vand.u32 %v755, 63
    %v758 = vsub.s32 0, %v757
    %v759 = vsel %vm753, %v758, %v757
    %vm760 = vcmp.lt.s32.totalorder %v680, 0
    %v761 = vsub.s32 0, %v680
    %v762 = vsel %vm760, %v761, %v680
    %v763 = vshrl.u32 %v762, 6
    %v764 = vand.u32 %v762, 63
    %v765 = vsub.s32 0, %v764
    %v766 = vsel %vm760, %v765, %v764
    %vm767 = vcmp.lt.s32.totalorder %v681, 0
    %v768 = vsub.s32 0, %v681
    %v769 = vsel %vm767, %v768, %v681
    %v770 = vshrl.u32 %v769, 6
    %v771 = vand.u32 %v769, 63
    %v772 = vsub.s32 0, %v771
    %v773 = vsel %vm767, %v772, %v771
    %vm774 = vcmp.lt.s32.totalorder %v682, 0
    %v775 = vsub.s32 0, %v682
    %v776 = vsel %vm774, %v775, %v682
    %v777 = vshrl.u32 %v776, 6
    %v778 = vand.u32 %v776, 63
    %v779 = vsub.s32 0, %v778
    %v780 = vsel %vm774, %v779, %v778
    %vm781 = vcmp.lt.s32.totalorder %v683, 0
    %v782 = vsub.s32 0, %v683
    %v783 = vsel %vm781, %v782, %v683
    %v784 = vshrl.u32 %v783, 6
    %v785 = vand.u32 %v783, 63
    %v786 = vsub.s32 0, %v785
    %v787 = vsel %vm781, %v786, %v785
    %vm788 = vcmp.lt.s32.totalorder %v684, 0
    %v789 = vsub.s32 0, %v684
    %v790 = vsel %vm788, %v789, %v684
    %v791 = vshrl.u32 %v790, 6
    %v792 = vand.u32 %v790, 63
    %v793 = vsub.s32 0, %v792
    %v794 = vsel %vm788, %v793, %v792
    %vm795 = vcmp.lt.s32.totalorder %v685, 0
    %v796 = vsub.s32 0, %v685
    %v797 = vsel %vm795, %v796, %v685
    %v798 = vshrl.u32 %v797, 6
    %v799 = vand.u32 %v797, 63
    %v800 = vsub.s32 0, %v799
    %v801 = vsel %vm795, %v800, %v799
    %vm802 = vcmp.lt.s32.totalorder %v686, 0
    %v803 = vsub.s32 0, %v686
    %v804 = vsel %vm802, %v803, %v686
    %v805 = vshrl.u32 %v804, 6
    %v806 = vand.u32 %v804, 63
    %v807 = vsub.s32 0, %v806
    %v808 = vsel %vm802, %v807, %v806
    %vm809 = vcmp.lt.s32.totalorder %v687, 0
    %v810 = vsub.s32 0, %v687
    %v811 = vsel %vm809, %v810, %v687
    %v812 = vshrl.u32 %v811, 6
    %v813 = vand.u32 %v811, 63
    %v814 = vsub.s32 0, %v813
    %v815 = vsel %vm809, %v814, %v813
    %vm816 = vcmp.lt.s32.totalorder %v688, 0
    %v817 = vsub.s32 0, %v688
    %v818 = vsel %vm816, %v817, %v688
    %v819 = vshrl.u32 %v818, 6
    %v820 = vand.u32 %v818, 63
    %v821 = vsub.s32 0, %v820
    %v822 = vsel %vm816, %v821, %v820
    %vm823 = vcmp.lt.s32.totalorder %v689, 0
    %v824 = vsub.s32 0, %v689
    %v825 = vsel %vm823, %v824, %v689
    %v826 = vshrl.u32 %v825, 6
    %v827 = vand.u32 %v825, 63
    %v828 = vsub.s32 0, %v827
    %v829 = vsel %vm823, %v828, %v827
    %vm830 = vcmp.lt.s32.totalorder %v690, 0
    %v831 = vsub.s32 0, %v690
    %v832 = vsel %vm830, %v831, %v690
    %v833 = vshrl.u32 %v832, 6
    %v834 = vand.u32 %v832, 63
    %v835 = vsub.s32 0, %v834
    %v836 = vsel %vm830, %v835, %v834
    %vm837 = vcmp.lt.s32.totalorder %v691, 0
    %v838 = vsub.s32 0, %v691
    %v839 = vsel %vm837, %v838, %v691
    %v840 = vshrl.u32 %v839, 6
    %v841 = vand.u32 %v839, 63
    %v842 = vsub.s32 0, %v841
    %v843 = vsel %vm837, %v842, %v841
    %vm844 = vcmp.lt.s32.totalorder %v692, 0
    %v845 = vsub.s32 0, %v692
    %v846 = vsel %vm844, %v845, %v692
    %v847 = vshrl.u32 %v846, 6
    %v848 = vand.u32 %v846, 63
    %v849 = vsub.s32 0, %v848
    %v850 = vsel %vm844, %v849, %v848
    %vm851 = vcmp.lt.s32.totalorder %v693, 0
    %v852 = vsub.s32 0, %v693
    %v853 = vsel %vm851, %v852, %v693
    %v854 = vshrl.u32 %v853, 6
    %v855 = vand.u32 %v853, 63
    %v856 = vsub.s32 0, %v855
    %v857 = vsel %vm851, %v856, %v855
    %vm858 = vcmp.lt.s32.totalorder %v694, 0
    %v859 = vsub.s32 0, %v694
    %v860 = vsel %vm858, %v859, %v694
    %v861 = vshrl.u32 %v860, 6
    %v862 = vand.u32 %v860, 63
    %v863 = vsub.s32 0, %v862
    %v864 = vsel %vm858, %v863, %v862
    %vm865 = vcmp.lt.s32.totalorder %v695, 0
    %v866 = vsub.s32 0, %v695
    %v867 = vsel %vm865, %v866, %v695
    %v868 = vshrl.u32 %v867, 6
    %v869 = vand.u32 %v867, 63
    %v870 = vsub.s32 0, %v869
    %v871 = vsel %vm865, %v870, %v869
    %vm872 = vcmp.lt.s32.totalorder %v696, 0
    %v873 = vsub.s32 0, %v696
    %v874 = vsel %vm872, %v873, %v696
    %v875 = vshrl.u32 %v874, 6
    %v876 = vand.u32 %v874, 63
    %v877 = vsub.s32 0, %v876
    %v878 = vsel %vm872, %v877, %v876
    %vm879 = vcmp.lt.s32.totalorder %v697, 0
    %v880 = vsub.s32 0, %v697
    %v881 = vsel %vm879, %v880, %v697
    %v882 = vshrl.u32 %v881, 6
    %v883 = vand.u32 %v881, 63
    %v884 = vsub.s32 0, %v883
    %v885 = vsel %vm879, %v884, %v883
    %vm886 = vcmp.lt.s32.totalorder %v698, 0
    %v887 = vsub.s32 0, %v698
    %v888 = vsel %vm886, %v887, %v698
    %v889 = vshrl.u32 %v888, 6
    %v890 = vand.u32 %v888, 63
    %v891 = vsub.s32 0, %v890
    %v892 = vsel %vm886, %v891, %v890
    %vm893 = vcmp.lt.s32.totalorder %v699, 0
    %v894 = vsub.s32 0, %v699
    %v895 = vsel %vm893, %v894, %v699
    %v896 = vshrl.u32 %v895, 6
    %v897 = vand.u32 %v895, 63
    %v898 = vsub.s32 0, %v897
    %v899 = vsel %vm893, %v898, %v897
    %vm900 = vcmp.lt.s32.totalorder %v700, 0
    %v901 = vsub.s32 0, %v700
    %v902 = vsel %vm900, %v901, %v700
    %v903 = vshrl.u32 %v902, 6
    %v904 = vand.u32 %v902, 63
    %v905 = vsub.s32 0, %v904
    %v906 = vsel %vm900, %v905, %v904
    %vm907 = vcmp.lt.s32.totalorder %v701, 0
    %v908 = vsub.s32 0, %v701
    %v909 = vsel %vm907, %v908, %v701
    %v910 = vshrl.u32 %v909, 6
    %v911 = vand.u32 %v909, 63
    %v912 = vsub.s32 0, %v911
    %v913 = vsel %vm907, %v912, %v911
    %vm914 = vcmp.lt.s32.totalorder %v702, 0
    %v915 = vsub.s32 0, %v702
    %v916 = vsel %vm914, %v915, %v702
    %v917 = vshrl.u32 %v916, 6
    %v918 = vand.u32 %v916, 63
    %v919 = vsub.s32 0, %v918
    %v920 = vsel %vm914, %v919, %v918
    %vm921 = vcmp.lt.s32.totalorder %v703, 0
    %v922 = vsub.s32 0, %v703
    %v923 = vsel %vm921, %v922, %v703
    %v924 = vshrl.u32 %v923, 6
    %v925 = vand.u32 %v923, 63
    %v926 = vsub.s32 0, %v925
    %v927 = vsel %vm921, %v926, %v925
    %vm928 = vcmp.ne.s32.totalorder %v710, 0
    %vm929 = vcmp.ne.s32.totalorder %v717, 0
    %vm930 = vcmp.ne.s32.totalorder %v724, 0
    %vm931 = vcmp.ne.s32.totalorder %v731, 0
    %vm932 = vcmp.ne.s32.totalorder %v738, 0
    %vm933 = vcmp.ne.s32.totalorder %v745, 0
    %vm934 = vcmp.ne.s32.totalorder %v752, 0
    %vm935 = vcmp.ne.s32.totalorder %v759, 0
    %vm936 = vcmp.ne.s32.totalorder %v766, 0
    %vm937 = vcmp.ne.s32.totalorder %v773, 0
    %vm938 = vcmp.ne.s32.totalorder %v780, 0
    %vm939 = vcmp.ne.s32.totalorder %v787, 0
    %vm940 = vcmp.ne.s32.totalorder %v794, 0
    %vm941 = vcmp.ne.s32.totalorder %v801, 0
    %vm942 = vcmp.ne.s32.totalorder %v808, 0
    %vm943 = vcmp.ne.s32.totalorder %v815, 0
    %vm944 = vcmp.ne.s32.totalorder %v822, 0
    %vm945 = vcmp.ne.s32.totalorder %v829, 0
    %vm946 = vcmp.ne.s32.totalorder %v836, 0
    %vm947 = vcmp.ne.s32.totalorder %v843, 0
    %vm948 = vcmp.ne.s32.totalorder %v850, 0
    %vm949 = vcmp.ne.s32.totalorder %v857, 0
    %vm950 = vcmp.ne.s32.totalorder %v864, 0
    %vm951 = vcmp.ne.s32.totalorder %v871, 0
    %vm952 = vcmp.ne.s32.totalorder %v878, 0
    %vm953 = vcmp.ne.s32.totalorder %v885, 0
    %vm954 = vcmp.ne.s32.totalorder %v892, 0
    %vm955 = vcmp.ne.s32.totalorder %v899, 0
    %vm956 = vcmp.ne.s32.totalorder %v906, 0
    %vm957 = vcmp.ne.s32.totalorder %v913, 0
    %vm958 = vcmp.ne.s32.totalorder %v920, 0
    %vm959 = vcmp.ne.s32.totalorder %v927, 0
    %vm960 = vcmp.lt.s32.totalorder %v710, 0
    %vm961 = vcmp.lt.s32.totalorder %v717, 0
    %vm962 = vcmp.lt.s32.totalorder %v724, 0
    %vm963 = vcmp.lt.s32.totalorder %v731, 0
    %vm964 = vcmp.lt.s32.totalorder %v738, 0
    %vm965 = vcmp.lt.s32.totalorder %v745, 0
    %vm966 = vcmp.lt.s32.totalorder %v752, 0
    %vm967 = vcmp.lt.s32.totalorder %v759, 0
    %vm968 = vcmp.lt.s32.totalorder %v766, 0
    %vm969 = vcmp.lt.s32.totalorder %v773, 0
    %vm970 = vcmp.lt.s32.totalorder %v780, 0
    %vm971 = vcmp.lt.s32.totalorder %v787, 0
    %vm972 = vcmp.lt.s32.totalorder %v794, 0
    %vm973 = vcmp.lt.s32.totalorder %v801, 0
    %vm974 = vcmp.lt.s32.totalorder %v808, 0
    %vm975 = vcmp.lt.s32.totalorder %v815, 0
    %vm976 = vcmp.lt.s32.totalorder %v822, 0
    %vm977 = vcmp.lt.s32.totalorder %v829, 0
    %vm978 = vcmp.lt.s32.totalorder %v836, 0
    %vm979 = vcmp.lt.s32.totalorder %v843, 0
    %vm980 = vcmp.lt.s32.totalorder %v850, 0
    %vm981 = vcmp.lt.s32.totalorder %v857, 0
    %vm982 = vcmp.lt.s32.totalorder %v864, 0
    %vm983 = vcmp.lt.s32.totalorder %v871, 0
    %vm984 = vcmp.lt.s32.totalorder %v878, 0
    %vm985 = vcmp.lt.s32.totalorder %v885, 0
    %vm986 = vcmp.lt.s32.totalorder %v892, 0
    %vm987 = vcmp.lt.s32.totalorder %v899, 0
    %vm988 = vcmp.lt.s32.totalorder %v906, 0
    %vm989 = vcmp.lt.s32.totalorder %v913, 0
    %vm990 = vcmp.lt.s32.totalorder %v920, 0
    %vm991 = vcmp.lt.s32.totalorder %v927, 0
    %vm992 = vmand %vm960, %vm928
    %vm993 = vmand %vm961, %vm929
    %vm994 = vmand %vm962, %vm930
    %vm995 = vmand %vm963, %vm931
    %vm996 = vmand %vm964, %vm932
    %vm997 = vmand %vm965, %vm933
    %vm998 = vmand %vm966, %vm934
    %vm999 = vmand %vm967, %vm935
    %vm1000 = vmand %vm968, %vm936
    %vm1001 = vmand %vm969, %vm937
    %vm1002 = vmand %vm970, %vm938
    %vm1003 = vmand %vm971, %vm939
    %vm1004 = vmand %vm972, %vm940
    %vm1005 = vmand %vm973, %vm941
    %vm1006 = vmand %vm974, %vm942
    %vm1007 = vmand %vm975, %vm943
    %vm1008 = vmand %vm976, %vm944
    %vm1009 = vmand %vm977, %vm945
    %vm1010 = vmand %vm978, %vm946
    %vm1011 = vmand %vm979, %vm947
    %vm1012 = vmand %vm980, %vm948
    %vm1013 = vmand %vm981, %vm949
    %vm1014 = vmand %vm982, %vm950
    %vm1015 = vmand %vm983, %vm951
    %vm1016 = vmand %vm984, %vm952
    %vm1017 = vmand %vm985, %vm953
    %vm1018 = vmand %vm986, %vm954
    %vm1019 = vmand %vm987, %vm955
    %vm1020 = vmand %vm988, %vm956
    %vm1021 = vmand %vm989, %vm957
    %vm1022 = vmand %vm990, %vm958
    %vm1023 = vmand %vm991, %vm959
    %v1024 = vadd.s32 %v710, 64
    %v1025 = vadd.s32 %v717, 64
    %v1026 = vadd.s32 %v724, 64
    %v1027 = vadd.s32 %v731, 64
    %v1028 = vadd.s32 %v738, 64
    %v1029 = vadd.s32 %v745, 64
    %v1030 = vadd.s32 %v752, 64
    %v1031 = vadd.s32 %v759, 64
    %v1032 = vadd.s32 %v766, 64
    %v1033 = vadd.s32 %v773, 64
    %v1034 = vadd.s32 %v780, 64
    %v1035 = vadd.s32 %v787, 64
    %v1036 = vadd.s32 %v794, 64
    %v1037 = vadd.s32 %v801, 64
    %v1038 = vadd.s32 %v808, 64
    %v1039 = vadd.s32 %v815, 64
    %v1040 = vadd.s32 %v822, 64
    %v1041 = vadd.s32 %v829, 64
    %v1042 = vadd.s32 %v836, 64
    %v1043 = vadd.s32 %v843, 64
    %v1044 = vadd.s32 %v850, 64
    %v1045 = vadd.s32 %v857, 64
    %v1046 = vadd.s32 %v864, 64
    %v1047 = vadd.s32 %v871, 64
    %v1048 = vadd.s32 %v878, 64
    %v1049 = vadd.s32 %v885, 64
    %v1050 = vadd.s32 %v892, 64
    %v1051 = vadd.s32 %v899, 64
    %v1052 = vadd.s32 %v906, 64
    %v1053 = vadd.s32 %v913, 64
    %v1054 = vadd.s32 %v920, 64
    %v1055 = vadd.s32 %v927, 64
    %v1056 = vsel %vm992, %v1024, %v710
    %v1057 = vsel %vm993, %v1025, %v717
    %v1058 = vsel %vm994, %v1026, %v724
    %v1059 = vsel %vm995, %v1027, %v731
    %v1060 = vsel %vm996, %v1028, %v738
    %v1061 = vsel %vm997, %v1029, %v745
    %v1062 = vsel %vm998, %v1030, %v752
    %v1063 = vsel %vm999, %v1031, %v759
    %v1064 = vsel %vm1000, %v1032, %v766
    %v1065 = vsel %vm1001, %v1033, %v773
    %v1066 = vsel %vm1002, %v1034, %v780
    %v1067 = vsel %vm1003, %v1035, %v787
    %v1068 = vsel %vm1004, %v1036, %v794
    %v1069 = vsel %vm1005, %v1037, %v801
    %v1070 = vsel %vm1006, %v1038, %v808
    %v1071 = vsel %vm1007, %v1039, %v815
    %v1072 = vsel %vm1008, %v1040, %v822
    %v1073 = vsel %vm1009, %v1041, %v829
    %v1074 = vsel %vm1010, %v1042, %v836
    %v1075 = vsel %vm1011, %v1043, %v843
    %v1076 = vsel %vm1012, %v1044, %v850
    %v1077 = vsel %vm1013, %v1045, %v857
    %v1078 = vsel %vm1014, %v1046, %v864
    %v1079 = vsel %vm1015, %v1047, %v871
    %v1080 = vsel %vm1016, %v1048, %v878
    %v1081 = vsel %vm1017, %v1049, %v885
    %v1082 = vsel %vm1018, %v1050, %v892
    %v1083 = vsel %vm1019, %v1051, %v899
    %v1084 = vsel %vm1020, %v1052, %v906
    %v1085 = vsel %vm1021, %v1053, %v913
    %v1086 = vsel %vm1022, %v1054, %v920
    %v1087 = vsel %vm1023, %v1055, %v927
    %vm1088 = vcmp.eq.s32.totalorder %v1056, %v328
    %vm1089 = vcmp.eq.s32.totalorder %v1057, %v328
    %vm1090 = vcmp.eq.s32.totalorder %v1058, %v328
    %vm1091 = vcmp.eq.s32.totalorder %v1059, %v328
    %vm1092 = vcmp.eq.s32.totalorder %v1060, %v328
    %vm1093 = vcmp.eq.s32.totalorder %v1061, %v328
    %vm1094 = vcmp.eq.s32.totalorder %v1062, %v328
    %vm1095 = vcmp.eq.s32.totalorder %v1063, %v328
    %vm1096 = vcmp.eq.s32.totalorder %v1064, %v328
    %vm1097 = vcmp.eq.s32.totalorder %v1065, %v328
    %vm1098 = vcmp.eq.s32.totalorder %v1066, %v328
    %vm1099 = vcmp.eq.s32.totalorder %v1067, %v328
    %vm1100 = vcmp.eq.s32.totalorder %v1068, %v328
    %vm1101 = vcmp.eq.s32.totalorder %v1069, %v328
    %vm1102 = vcmp.eq.s32.totalorder %v1070, %v328
    %vm1103 = vcmp.eq.s32.totalorder %v1071, %v328
    %vm1104 = vcmp.eq.s32.totalorder %v1072, %v328
    %vm1105 = vcmp.eq.s32.totalorder %v1073, %v328
    %vm1106 = vcmp.eq.s32.totalorder %v1074, %v328
    %vm1107 = vcmp.eq.s32.totalorder %v1075, %v328
    %vm1108 = vcmp.eq.s32.totalorder %v1076, %v328
    %vm1109 = vcmp.eq.s32.totalorder %v1077, %v328
    %vm1110 = vcmp.eq.s32.totalorder %v1078, %v328
    %vm1111 = vcmp.eq.s32.totalorder %v1079, %v328
    %vm1112 = vcmp.eq.s32.totalorder %v1080, %v328
    %vm1113 = vcmp.eq.s32.totalorder %v1081, %v328
    %vm1114 = vcmp.eq.s32.totalorder %v1082, %v328
    %vm1115 = vcmp.eq.s32.totalorder %v1083, %v328
    %vm1116 = vcmp.eq.s32.totalorder %v1084, %v328
    %vm1117 = vcmp.eq.s32.totalorder %v1085, %v328
    %vm1118 = vcmp.eq.s32.totalorder %v1086, %v328
    %vm1119 = vcmp.eq.s32.totalorder %v1087, %v328
    %v1120 = vsel %vm1088, 1, 0
    %v1121 = vsel %vm1089, 1, 0
    %v1122 = vsel %vm1090, 1, 0
    %v1123 = vsel %vm1091, 1, 0
    %v1124 = vsel %vm1092, 1, 0
    %v1125 = vsel %vm1093, 1, 0
    %v1126 = vsel %vm1094, 1, 0
    %v1127 = vsel %vm1095, 1, 0
    %v1128 = vsel %vm1096, 1, 0
    %v1129 = vsel %vm1097, 1, 0
    %v1130 = vsel %vm1098, 1, 0
    %v1131 = vsel %vm1099, 1, 0
    %v1132 = vsel %vm1100, 1, 0
    %v1133 = vsel %vm1101, 1, 0
    %v1134 = vsel %vm1102, 1, 0
    %v1135 = vsel %vm1103, 1, 0
    %v1136 = vsel %vm1104, 1, 0
    %v1137 = vsel %vm1105, 1, 0
    %v1138 = vsel %vm1106, 1, 0
    %v1139 = vsel %vm1107, 1, 0
    %v1140 = vsel %vm1108, 1, 0
    %v1141 = vsel %vm1109, 1, 0
    %v1142 = vsel %vm1110, 1, 0
    %v1143 = vsel %vm1111, 1, 0
    %v1144 = vsel %vm1112, 1, 0
    %v1145 = vsel %vm1113, 1, 0
    %v1146 = vsel %vm1114, 1, 0
    %v1147 = vsel %vm1115, 1, 0
    %v1148 = vsel %vm1116, 1, 0
    %v1149 = vsel %vm1117, 1, 0
    %v1150 = vsel %vm1118, 1, 0
    %v1151 = vsel %vm1119, 1, 0
    %v1152 = vcvt.s32.f32 %v1120
    %v1153 = vcvt.s32.f32 %v1121
    %v1154 = vcvt.s32.f32 %v1122
    %v1155 = vcvt.s32.f32 %v1123
    %v1156 = vcvt.s32.f32 %v1124
    %v1157 = vcvt.s32.f32 %v1125
    %v1158 = vcvt.s32.f32 %v1126
    %v1159 = vcvt.s32.f32 %v1127
    %v1160 = vcvt.s32.f32 %v1128
    %v1161 = vcvt.s32.f32 %v1129
    %v1162 = vcvt.s32.f32 %v1130
    %v1163 = vcvt.s32.f32 %v1131
    %v1164 = vcvt.s32.f32 %v1132
    %v1165 = vcvt.s32.f32 %v1133
    %v1166 = vcvt.s32.f32 %v1134
    %v1167 = vcvt.s32.f32 %v1135
    %v1168 = vcvt.s32.f32 %v1136
    %v1169 = vcvt.s32.f32 %v1137
    %v1170 = vcvt.s32.f32 %v1138
    %v1171 = vcvt.s32.f32 %v1139
    %v1172 = vcvt.s32.f32 %v1140
    %v1173 = vcvt.s32.f32 %v1141
    %v1174 = vcvt.s32.f32 %v1142
    %v1175 = vcvt.s32.f32 %v1143
    %v1176 = vcvt.s32.f32 %v1144
    %v1177 = vcvt.s32.f32 %v1145
    %v1178 = vcvt.s32.f32 %v1146
    %v1179 = vcvt.s32.f32 %v1147
    %v1180 = vcvt.s32.f32 %v1148
    %v1181 = vcvt.s32.f32 %v1149
    %v1182 = vcvt.s32.f32 %v1150
    %v1183 = vcvt.s32.f32 %v1151
    %v1184 = vadd.s32 %v328, 128
    %vm1185 = vcmp.lt.s32.totalorder %v328, 0
    %v1186 = vsub.s32 0, %v328
    %v1187 = vsel %vm1185, %v1186, %v328
    %v1188 = vshrl.u32 %v1187, 6
    %v1189 = vand.u32 %v1187, 63
    %v1190 = vsub.s32 0, %v1189
    %v1191 = vsel %vm1185, %v1190, %v1189
    %vm1192 = vcmp.lt.s32.totalorder %v1184, 0
    %v1193 = vsub.s32 0, %v1184
    %v1194 = vsel %vm1192, %v1193, %v1184
    %v1195 = vshrl.u32 %v1194, 6
    %v1196 = vand.u32 %v1194, 63
    %v1197 = vsub.s32 0, %v1196
    %v1198 = vsel %vm1192, %v1197, %v1196
    %vm1199 = vcmp.ne.s32.totalorder %v1191, 0
    %vm1200 = vcmp.ne.s32.totalorder %v1198, 0
    %vm1201 = vcmp.lt.s32.totalorder %v1191, 0
    %vm1202 = vcmp.lt.s32.totalorder %v1198, 0
    %vm1203 = vmand %vm1201, %vm1199
    %vm1204 = vmand %vm1202, %vm1200
    %v1205 = vadd.s32 %v1191, 64
    %v1206 = vadd.s32 %v1198, 64
    %v1207 = vsel %vm1203, %v1205, %v1191
    %v1208 = vsel %vm1204, %v1206, %v1198
    %vm1209 = vcmp.eq.s32.totalorder %v1207, %v326
    %vm1210 = vcmp.eq.s32.totalorder %v1208, %v326
    %vm1211 = vcmp.eq.s32.totalorder %v1207, %v673
    %vm1212 = vcmp.eq.s32.totalorder %v1208, %v673
    %vm1213 = vcmp.eq.s32.totalorder %v1207, %v674
    %vm1214 = vcmp.eq.s32.totalorder %v1208, %v674
    %vm1215 = vcmp.eq.s32.totalorder %v1207, %v675
    %vm1216 = vcmp.eq.s32.totalorder %v1208, %v675
    %vm1217 = vcmp.eq.s32.totalorder %v1207, %v676
    %vm1218 = vcmp.eq.s32.totalorder %v1208, %v676
    %vm1219 = vcmp.eq.s32.totalorder %v1207, %v677
    %vm1220 = vcmp.eq.s32.totalorder %v1208, %v677
    %vm1221 = vcmp.eq.s32.totalorder %v1207, %v678
    %vm1222 = vcmp.eq.s32.totalorder %v1208, %v678
    %vm1223 = vcmp.eq.s32.totalorder %v1207, %v679
    %vm1224 = vcmp.eq.s32.totalorder %v1208, %v679
    %v1225 = vsel %vm1209, 1, 0
    %v1226 = vsel %vm1210, 1, 0
    %v1227 = vsel %vm1211, 1, 0
    %v1228 = vsel %vm1212, 1, 0
    %v1229 = vsel %vm1213, 1, 0
    %v1230 = vsel %vm1214, 1, 0
    %v1231 = vsel %vm1215, 1, 0
    %v1232 = vsel %vm1216, 1, 0
    %v1233 = vsel %vm1217, 1, 0
    %v1234 = vsel %vm1218, 1, 0
    %v1235 = vsel %vm1219, 1, 0
    %v1236 = vsel %vm1220, 1, 0
    %v1237 = vsel %vm1221, 1, 0
    %v1238 = vsel %vm1222, 1, 0
    %v1239 = vsel %vm1223, 1, 0
    %v1240 = vsel %vm1224, 1, 0
    %v1241 = vcvt.s32.f32 %v1225
    %v1242 = vcvt.s32.f32 %v1226
    %v1243 = vcvt.s32.f32 %v1227
    %v1244 = vcvt.s32.f32 %v1228
    %v1245 = vcvt.s32.f32 %v1229
    %v1246 = vcvt.s32.f32 %v1230
    %v1247 = vcvt.s32.f32 %v1231
    %v1248 = vcvt.s32.f32 %v1232
    %v1249 = vcvt.s32.f32 %v1233
    %v1250 = vcvt.s32.f32 %v1234
    %v1251 = vcvt.s32.f32 %v1235
    %v1252 = vcvt.s32.f32 %v1236
    %v1253 = vcvt.s32.f32 %v1237
    %v1254 = vcvt.s32.f32 %v1238
    %v1255 = vcvt.s32.f32 %v1239
    %v1256 = vcvt.s32.f32 %v1240
    %v1257 = vrot.slane %v669, 4
    %v1258 = vadd.f32 %v669, %v1257
    %v1259 = vrot.slane %v1258, 2
    %v1260 = vadd.f32 %v1258, %v1259
    %v1261 = vrot.slane %v1260, 1
    %v1262 = vadd.f32 %v1260, %v1261
    %v1263 = vrot.slane %v670, 4
    %v1264 = vadd.f32 %v670, %v1263
    %v1265 = vrot.slane %v1264, 2
    %v1266 = vadd.f32 %v1264, %v1265
    %v1267 = vrot.slane %v1266, 1
    %v1268 = vadd.f32 %v1266, %v1267
    %v1269 = vadd.f32 %v1262, 0.0
    %v1270 = vadd.f32 %v1268, 0.0
    %v1271 = vmul.f32 %v669, %v669
    %v1272 = vmul.f32 %v670, %v670
    %v1273 = vrot.slane %v1271, 4
    %v1274 = vadd.f32 %v1271, %v1273
    %v1275 = vrot.slane %v1274, 2
    %v1276 = vadd.f32 %v1274, %v1275
    %v1277 = vrot.slane %v1276, 1
    %v1278 = vadd.f32 %v1276, %v1277
    %v1279 = vrot.slane %v1272, 4
    %v1280 = vadd.f32 %v1272, %v1279
    %v1281 = vrot.slane %v1280, 2
    %v1282 = vadd.f32 %v1280, %v1281
    %v1283 = vrot.slane %v1282, 1
    %v1284 = vadd.f32 %v1282, %v1283
    %v1285 = vadd.f32 %v1278, 0.0
    %v1286 = vadd.f32 %v1284, 0.0
    %1287 = vmatprep.subr.mxu0 0.0
    %1288 = vmatpush1.msra.mxu0 %v1167
    %1289 = vmatprep.subr.mxu0 0.0
    %1290 = vmatpush1.msra.mxu0 %v1166
    %1291 = vmatprep.subr.mxu0 0.0
    %1292 = vmatpush1.msra.mxu0 %v1165
    %1293 = vmatprep.subr.mxu0 0.0
    %1294 = vmatpush1.msra.mxu0 %v1164
    %1295 = vmatprep.subr.mxu0 0.0
    %1296 = vmatpush1.msra.mxu0 %v1163
    %1297 = vmatprep.subr.mxu0 0.0
    %1298 = vmatpush1.msra.mxu0 %v1162
    %1299 = vmatprep.subr.mxu0 0.0
    %1300 = vmatpush1.msra.mxu0 %v1161
    %1301 = vmatprep.subr.mxu0 0.0
    %1302 = vmatpush1.msra.mxu0 %v1160
    %1303 = vmatprep.subr.mxu0 0.0
    %1304 = vmatpush1.msra.mxu0 %v1159
    %1305 = vmatprep.subr.mxu0 0.0
    %1306 = vmatpush1.msra.mxu0 %v1158
    %1307 = vmatprep.subr.mxu0 0.0
    %1308 = vmatpush1.msra.mxu0 %v1157
    %1309 = vmatprep.subr.mxu0 0.0
    %1310 = vmatpush1.msra.mxu0 %v1156
    %1311 = vmatprep.subr.mxu0 0.0
    %1312 = vmatpush1.msra.mxu0 %v1155
    %1313 = vmatprep.subr.mxu0 0.0
    %1314 = vmatpush1.msra.mxu0 %v1154
    %1315 = vmatprep.subr.mxu0 0.0
    %1316 = vmatpush1.msra.mxu0 %v1153
    %1317 = vmatprep.subr.mxu0 0.0
    %1318 = vmatpush1.msra.mxu0 %v1152
    %1319 = vmatprep.subr.mxu0 0.0
    %1320 = vmatpush2.msra.mxu0 %v1183
    %1321 = vmatprep.subr.mxu0 0.0
    %1322 = vmatpush2.msra.mxu0 %v1182
    %1323 = vmatprep.subr.mxu0 0.0
    %1324 = vmatpush2.msra.mxu0 %v1181
    %1325 = vmatprep.subr.mxu0 0.0
    %1326 = vmatpush2.msra.mxu0 %v1180
    %1327 = vmatprep.subr.mxu0 0.0
    %1328 = vmatpush2.msra.mxu0 %v1179
    %1329 = vmatprep.subr.mxu0 0.0
    %1330 = vmatpush2.msra.mxu0 %v1178
    %1331 = vmatprep.subr.mxu0 0.0
    %1332 = vmatpush2.msra.mxu0 %v1177
    %1333 = vmatprep.subr.mxu0 0.0
    %1334 = vmatpush2.msra.mxu0 %v1176
    %1335 = vmatprep.subr.mxu0 0.0
    %1336 = vmatpush2.msra.mxu0 %v1175
    %1337 = vmatprep.subr.mxu0 0.0
    %1338 = vmatpush2.msra.mxu0 %v1174
    %1339 = vmatprep.subr.mxu0 0.0
    %1340 = vmatpush2.msra.mxu0 %v1173
    %1341 = vmatprep.subr.mxu0 0.0
    %1342 = vmatpush2.msra.mxu0 %v1172
    %1343 = vmatprep.subr.mxu0 0.0
    %1344 = vmatpush2.msra.mxu0 %v1171
    %1345 = vmatprep.subr.mxu0 0.0
    %1346 = vmatpush2.msra.mxu0 %v1170
    %1347 = vmatprep.subr.mxu0 0.0
    %1348 = vmatpush2.msra.mxu0 %v1169
    %1349 = vmatprep.subr.mxu0 0.0
    %1350 = vmatpush2.msra.mxu0 %v1168
    %1351 = vmatprep.mubr.f32.mxu0 %v1270
    %1352 = vmatmul.mubr.f32.gmra.mxu0 %v1269
    %v1353 = vpop.f32.mrf.mxu0
    %v1354 = vadd.f32 0.0, %v1353
    %v1355 = vpop.f32.mrf.mxu0
    %1356 = vdwg.mxu0
    %1357 = vmatprep.subr.mxu0 0.0
    %1358 = vmatpush1.msra.mxu0 %v1167
    %1359 = vmatprep.subr.mxu0 0.0
    %1360 = vmatpush1.msra.mxu0 %v1166
    %1361 = vmatprep.subr.mxu0 0.0
    %1362 = vmatpush1.msra.mxu0 %v1165
    %1363 = vmatprep.subr.mxu0 0.0
    %1364 = vmatpush1.msra.mxu0 %v1164
    %1365 = vmatprep.subr.mxu0 0.0
    %1366 = vmatpush1.msra.mxu0 %v1163
    %1367 = vmatprep.subr.mxu0 0.0
    %1368 = vmatpush1.msra.mxu0 %v1162
    %1369 = vmatprep.subr.mxu0 0.0
    %1370 = vmatpush1.msra.mxu0 %v1161
    %1371 = vmatprep.subr.mxu0 0.0
    %1372 = vmatpush1.msra.mxu0 %v1160
    %1373 = vmatprep.subr.mxu0 0.0
    %1374 = vmatpush1.msra.mxu0 %v1159
    %1375 = vmatprep.subr.mxu0 0.0
    %1376 = vmatpush1.msra.mxu0 %v1158
    %1377 = vmatprep.subr.mxu0 0.0
    %1378 = vmatpush1.msra.mxu0 %v1157
    %1379 = vmatprep.subr.mxu0 0.0
    %1380 = vmatpush1.msra.mxu0 %v1156
    %1381 = vmatprep.subr.mxu0 0.0
    %1382 = vmatpush1.msra.mxu0 %v1155
    %1383 = vmatprep.subr.mxu0 0.0
    %1384 = vmatpush1.msra.mxu0 %v1154
    %1385 = vmatprep.subr.mxu0 0.0
    %1386 = vmatpush1.msra.mxu0 %v1153
    %1387 = vmatprep.subr.mxu0 0.0
    %1388 = vmatpush1.msra.mxu0 %v1152
    %1389 = vmatprep.subr.mxu0 0.0
    %1390 = vmatpush2.msra.mxu0 %v1183
    %1391 = vmatprep.subr.mxu0 0.0
    %1392 = vmatpush2.msra.mxu0 %v1182
    %1393 = vmatprep.subr.mxu0 0.0
    %1394 = vmatpush2.msra.mxu0 %v1181
    %1395 = vmatprep.subr.mxu0 0.0
    %1396 = vmatpush2.msra.mxu0 %v1180
    %1397 = vmatprep.subr.mxu0 0.0
    %1398 = vmatpush2.msra.mxu0 %v1179
    %1399 = vmatprep.subr.mxu0 0.0
    %1400 = vmatpush2.msra.mxu0 %v1178
    %1401 = vmatprep.subr.mxu0 0.0
    %1402 = vmatpush2.msra.mxu0 %v1177
    %1403 = vmatprep.subr.mxu0 0.0
    %1404 = vmatpush2.msra.mxu0 %v1176
    %1405 = vmatprep.subr.mxu0 0.0
    %1406 = vmatpush2.msra.mxu0 %v1175
    %1407 = vmatprep.subr.mxu0 0.0
    %1408 = vmatpush2.msra.mxu0 %v1174
    %1409 = vmatprep.subr.mxu0 0.0
    %1410 = vmatpush2.msra.mxu0 %v1173
    %1411 = vmatprep.subr.mxu0 0.0
    %1412 = vmatpush2.msra.mxu0 %v1172
    %1413 = vmatprep.subr.mxu0 0.0
    %1414 = vmatpush2.msra.mxu0 %v1171
    %1415 = vmatprep.subr.mxu0 0.0
    %1416 = vmatpush2.msra.mxu0 %v1170
    %1417 = vmatprep.subr.mxu0 0.0
    %1418 = vmatpush2.msra.mxu0 %v1169
    %1419 = vmatprep.subr.mxu0 0.0
    %1420 = vmatpush2.msra.mxu0 %v1168
    %1421 = vmatprep.mubr.f32.mxu0 %v1286
    %1422 = vmatmul.mubr.f32.gmra.mxu0 %v1285
    %v1423 = vpop.f32.mrf.mxu0
    %v1424 = vadd.f32 0.0, %v1423
    %v1425 = vpop.f32.mrf.mxu0
    %1426 = vdwg.mxu0
    %v1427 = vrcp.pop 32.0
    %v1428 = vmul.f32 %v1354, %v1427
    %v1429 = vmul.f32 %v1424, %v1427
    %v1430 = vmul.f32 %v1428, %v1428
    %v1431 = vsub.f32 %v1429, %v1430
    %v1432 = vadd.f32 %v1431, 1e-05
    %v1433 = vrsqrt.pop %v1432
    %v1434 = vmul.f32 %v671, %v1433
    %v1435 = vmul.f32 %v1428, %v1434
    %v1436 = vsub.f32 %v672, %v1435
    %vm1437 = vcmask 523264
    %v1439 = vsel %vm1437, %v1434, 0
    %1441 = vmatprep.subr.mxu0 0.0
    %1442 = vmatpush1.msra.mxu0 0.0
    %1443 = vmatprep.subr.mxu0 0.0
    %1444 = vmatpush1.msra.mxu0 0.0
    %1445 = vmatprep.subr.mxu0 0.0
    %1446 = vmatpush1.msra.mxu0 0.0
    %1447 = vmatprep.subr.mxu0 0.0
    %1448 = vmatpush1.msra.mxu0 0.0
    %1449 = vmatprep.subr.mxu0 0.0
    %1450 = vmatpush1.msra.mxu0 0.0
    %1451 = vmatprep.subr.mxu0 0.0
    %1452 = vmatpush1.msra.mxu0 0.0
    %1453 = vmatprep.subr.mxu0 0.0
    %1454 = vmatpush1.msra.mxu0 0.0
    %1455 = vmatprep.subr.mxu0 0.0
    %1456 = vmatpush1.msra.mxu0 0.0
    %1457 = vmatprep.subr.mxu0 %v1256
    %1458 = vmatpush1.msra.mxu0 %v1255
    %1459 = vmatprep.subr.mxu0 %v1254
    %1460 = vmatpush1.msra.mxu0 %v1253
    %1461 = vmatprep.subr.mxu0 %v1252
    %1462 = vmatpush1.msra.mxu0 %v1251
    %1463 = vmatprep.subr.mxu0 %v1250
    %1464 = vmatpush1.msra.mxu0 %v1249
    %1465 = vmatprep.subr.mxu0 %v1248
    %1466 = vmatpush1.msra.mxu0 %v1247
    %1467 = vmatprep.subr.mxu0 %v1246
    %1468 = vmatpush1.msra.mxu0 %v1245
    %1469 = vmatprep.subr.mxu0 %v1244
    %1470 = vmatpush1.msra.mxu0 %v1243
    %1471 = vmatprep.subr.mxu0 %v1242
    %1472 = vmatpush1.msra.mxu0 %v1241
    %1473 = vmatprep.subr.mxu0 0.0
    %1474 = vmatpush2.msra.mxu0 0.0
    %1475 = vmatprep.subr.mxu0 0.0
    %1476 = vmatpush2.msra.mxu0 0.0
    %1477 = vmatprep.subr.mxu0 0.0
    %1478 = vmatpush2.msra.mxu0 0.0
    %1479 = vmatprep.subr.mxu0 0.0
    %1480 = vmatpush2.msra.mxu0 0.0
    %1481 = vmatprep.subr.mxu0 0.0
    %1482 = vmatpush2.msra.mxu0 0.0
    %1483 = vmatprep.subr.mxu0 0.0
    %1484 = vmatpush2.msra.mxu0 0.0
    %1485 = vmatprep.subr.mxu0 0.0
    %1486 = vmatpush2.msra.mxu0 0.0
    %1487 = vmatprep.subr.mxu0 0.0
    %1488 = vmatpush2.msra.mxu0 0.0
    %1489 = vmatprep.subr.mxu0 0.0
    %1490 = vmatpush2.msra.mxu0 0.0
    %1491 = vmatprep.subr.mxu0 0.0
    %1492 = vmatpush2.msra.mxu0 0.0
    %1493 = vmatprep.subr.mxu0 0.0
    %1494 = vmatpush2.msra.mxu0 0.0
    %1495 = vmatprep.subr.mxu0 0.0
    %1496 = vmatpush2.msra.mxu0 0.0
    %1497 = vmatprep.subr.mxu0 0.0
    %1498 = vmatpush2.msra.mxu0 0.0
    %1499 = vmatprep.subr.mxu0 0.0
    %1500 = vmatpush2.msra.mxu0 0.0
    %1501 = vmatprep.subr.mxu0 0.0
    %1502 = vmatpush2.msra.mxu0 0.0
    %1503 = vmatprep.subr.mxu0 0.0
    %1504 = vmatpush2.msra.mxu0 0.0
    %1505 = vmatprep.mubr.f32.mxu0 0.0
    %1506 = vmatmul.mubr.f32.gmra.mxu0 %v1439
    %v1507 = vpop.f32.mrf.mxu0
    %v1508 = vadd.f32 0.0, %v1507
    %v1509 = vpop.f32.mrf.mxu0
    %v1510 = vadd.f32 0.0, %v1509
    %1511 = vdwg.mxu0
    %v1513 = vsel %vm1437, %v1436, 0
    %1515 = vmatprep.subr.mxu0 0.0
    %1516 = vmatpush1.msra.mxu0 0.0
    %1517 = vmatprep.subr.mxu0 0.0
    %1518 = vmatpush1.msra.mxu0 0.0
    %1519 = vmatprep.subr.mxu0 0.0
    %1520 = vmatpush1.msra.mxu0 0.0
    %1521 = vmatprep.subr.mxu0 0.0
    %1522 = vmatpush1.msra.mxu0 0.0
    %1523 = vmatprep.subr.mxu0 0.0
    %1524 = vmatpush1.msra.mxu0 0.0
    %1525 = vmatprep.subr.mxu0 0.0
    %1526 = vmatpush1.msra.mxu0 0.0
    %1527 = vmatprep.subr.mxu0 0.0
    %1528 = vmatpush1.msra.mxu0 0.0
    %1529 = vmatprep.subr.mxu0 0.0
    %1530 = vmatpush1.msra.mxu0 0.0
    %1531 = vmatprep.subr.mxu0 %v1256
    %1532 = vmatpush1.msra.mxu0 %v1255
    %1533 = vmatprep.subr.mxu0 %v1254
    %1534 = vmatpush1.msra.mxu0 %v1253
    %1535 = vmatprep.subr.mxu0 %v1252
    %1536 = vmatpush1.msra.mxu0 %v1251
    %1537 = vmatprep.subr.mxu0 %v1250
    %1538 = vmatpush1.msra.mxu0 %v1249
    %1539 = vmatprep.subr.mxu0 %v1248
    %1540 = vmatpush1.msra.mxu0 %v1247
    %1541 = vmatprep.subr.mxu0 %v1246
    %1542 = vmatpush1.msra.mxu0 %v1245
    %1543 = vmatprep.subr.mxu0 %v1244
    %1544 = vmatpush1.msra.mxu0 %v1243
    %1545 = vmatprep.subr.mxu0 %v1242
    %1546 = vmatpush1.msra.mxu0 %v1241
    %1547 = vmatprep.subr.mxu0 0.0
    %1548 = vmatpush2.msra.mxu0 0.0
    %1549 = vmatprep.subr.mxu0 0.0
    %1550 = vmatpush2.msra.mxu0 0.0
    %1551 = vmatprep.subr.mxu0 0.0
    %1552 = vmatpush2.msra.mxu0 0.0
    %1553 = vmatprep.subr.mxu0 0.0
    %1554 = vmatpush2.msra.mxu0 0.0
    %1555 = vmatprep.subr.mxu0 0.0
    %1556 = vmatpush2.msra.mxu0 0.0
    %1557 = vmatprep.subr.mxu0 0.0
    %1558 = vmatpush2.msra.mxu0 0.0
    %1559 = vmatprep.subr.mxu0 0.0
    %1560 = vmatpush2.msra.mxu0 0.0
    %1561 = vmatprep.subr.mxu0 0.0
    %1562 = vmatpush2.msra.mxu0 0.0
    %1563 = vmatprep.subr.mxu0 0.0
    %1564 = vmatpush2.msra.mxu0 0.0
    %1565 = vmatprep.subr.mxu0 0.0
    %1566 = vmatpush2.msra.mxu0 0.0
    %1567 = vmatprep.subr.mxu0 0.0
    %1568 = vmatpush2.msra.mxu0 0.0
    %1569 = vmatprep.subr.mxu0 0.0
    %1570 = vmatpush2.msra.mxu0 0.0
    %1571 = vmatprep.subr.mxu0 0.0
    %1572 = vmatpush2.msra.mxu0 0.0
    %1573 = vmatprep.subr.mxu0 0.0
    %1574 = vmatpush2.msra.mxu0 0.0
    %1575 = vmatprep.subr.mxu0 0.0
    %1576 = vmatpush2.msra.mxu0 0.0
    %1577 = vmatprep.subr.mxu0 0.0
    %1578 = vmatpush2.msra.mxu0 0.0
    %1579 = vmatprep.mubr.f32.mxu0 0.0
    %1580 = vmatmul.mubr.f32.gmra.mxu0 %v1513
    %v1581 = vpop.f32.mrf.mxu0
    %v1582 = vadd.f32 0.0, %v1581
    %v1583 = vpop.f32.mrf.mxu0
    %v1584 = vadd.f32 0.0, %v1583
    %1585 = vdwg.mxu0
    %v1586 = vlaneseq
    %v1587 = vshrl.u32 %v1586, 7
    %v1588 = vsub.s32 0, %v1587
    %v1589 = vrot.slane %v1508, %v1588
    %v1590 = vlaneseq
    %v1591 = vshrl.u32 %v1590, 7
    %v1592 = vsub.s32 0, %v1591
    %v1593 = vrot.slane %v1510, %v1592
    %v1594 = vmul.f32 %v669, %v1589
    %v1595 = vmul.f32 %v670, %v1593
    %v1596 = vlaneseq
    %v1597 = vshrl.u32 %v1596, 7
    %v1598 = vsub.s32 0, %v1597
    %v1599 = vrot.slane %v1582, %v1598
    %v1600 = vlaneseq
    %v1601 = vshrl.u32 %v1600, 7
    %v1602 = vsub.s32 0, %v1601
    %v1603 = vrot.slane %v1584, %v1602
    %v1604 = vadd.f32 %v1594, %v1599
    %v1605 = vadd.f32 %v1595, %v1603
    %v1606 = vmax.f32 %v1604, 0.0
    %v1607 = vmax.f32 %v1605, 0.0
    %v1608 = vpack.c.bf16 %v1606, %v1606
    %v1609 = vpack.c.bf16 %v1607, %v1607
    %v1610 = vld [vmem:[%s4] sm:$0xff]
    %v1611 = vld [vmem:[%s4 + $0x8] sm:$0xff]
    %v1612 = vld [vmem:[%s4 + $0x10] sm:$0xff]
    %v1613 = vld [vmem:[%s4 + $0x18] sm:$0xff]
    %v1614 = vld [vmem:[%s4 + $0x20] sm:$0xff]
    %v1615 = vld [vmem:[%s4 + $0x28] sm:$0xff]
    %v1616 = vld [vmem:[%s4 + $0x30] sm:$0xff]
    %v1617 = vld [vmem:[%s4 + $0x38] sm:$0xff]
    %v1618 = vld [vmem:[%s4 + $0x40] sm:$0xff]
    %v1619 = vld [vmem:[%s4 + $0x48] sm:$0xff]
    %v1620 = vld [vmem:[%s4 + $0x50] sm:$0xff]
    %v1621 = vld [vmem:[%s4 + $0x58] sm:$0xff]
    %v1622 = vld [vmem:[%s4 + $0x60] sm:$0xff]
    %v1623 = vld [vmem:[%s4 + $0x68] sm:$0xff]
    %v1624 = vld [vmem:[%s4 + $0x70] sm:$0xff]
    %v1625 = vld [vmem:[%s4 + $0x78] sm:$0xff]
    %v1626 = vld [vmem:[%s4 + $0x80] sm:$0xff]
    %v1627 = vld [vmem:[%s4 + $0x88] sm:$0xff]
    %v1628 = vld [vmem:[%s4 + $0x90] sm:$0xff]
    %v1629 = vld [vmem:[%s4 + $0x98] sm:$0xff]
    %v1630 = vld [vmem:[%s4 + $0xa0] sm:$0xff]
    %v1631 = vld [vmem:[%s4 + $0xa8] sm:$0xff]
    %v1632 = vld [vmem:[%s4 + $0xb0] sm:$0xff]
    %v1633 = vld [vmem:[%s4 + $0xb8] sm:$0xff]
    %v1634 = vld [vmem:[%s4 + $0xc0] sm:$0xff]
    %v1635 = vld [vmem:[%s4 + $0xc8] sm:$0xff]
    %v1636 = vld [vmem:[%s4 + $0xd0] sm:$0xff]
    %v1637 = vld [vmem:[%s4 + $0xd8] sm:$0xff]
    %v1638 = vld [vmem:[%s4 + $0xe0] sm:$0xff]
    %v1639 = vld [vmem:[%s4 + $0xe8] sm:$0xff]
    %v1640 = vld [vmem:[%s4 + $0xf0] sm:$0xff]
    %v1641 = vld [vmem:[%s4 + $0xf8] sm:$0xff]
    %v1642 = vld [vmem:[%s4 + $0x100] sm:$0xff]
    %v1643 = vld [vmem:[%s4 + $0x108] sm:$0xff]
    %v1644 = vld [vmem:[%s4 + $0x110] sm:$0xff]
    %v1645 = vld [vmem:[%s4 + $0x118] sm:$0xff]
    %v1646 = vld [vmem:[%s4 + $0x120] sm:$0xff]
    %v1647 = vld [vmem:[%s4 + $0x128] sm:$0xff]
    %v1648 = vld [vmem:[%s4 + $0x130] sm:$0xff]
    %v1649 = vld [vmem:[%s4 + $0x138] sm:$0xff]
    %v1650 = vld [vmem:[%s4 + $0x140] sm:$0xff]
    %v1651 = vld [vmem:[%s4 + $0x148] sm:$0xff]
    %v1652 = vld [vmem:[%s4 + $0x150] sm:$0xff]
    %v1653 = vld [vmem:[%s4 + $0x158] sm:$0xff]
    %v1654 = vld [vmem:[%s4 + $0x160] sm:$0xff]
    %v1655 = vld [vmem:[%s4 + $0x168] sm:$0xff]
    %v1656 = vld [vmem:[%s4 + $0x170] sm:$0xff]
    %v1657 = vld [vmem:[%s4 + $0x178] sm:$0xff]
    %v1658 = vld [vmem:[%s4 + $0x180] sm:$0xff]
    %v1659 = vld [vmem:[%s4 + $0x188] sm:$0xff]
    %v1660 = vld [vmem:[%s4 + $0x190] sm:$0xff]
    %v1661 = vld [vmem:[%s4 + $0x198] sm:$0xff]
    %v1662 = vld [vmem:[%s4 + $0x1a0] sm:$0xff]
    %v1663 = vld [vmem:[%s4 + $0x1a8] sm:$0xff]
    %v1664 = vld [vmem:[%s4 + $0x1b0] sm:$0xff]
    %v1665 = vld [vmem:[%s4 + $0x1b8] sm:$0xff]
    %v1666 = vld [vmem:[%s4 + $0x1c0] sm:$0xff]
    %v1667 = vld [vmem:[%s4 + $0x1c8] sm:$0xff]
    %v1668 = vld [vmem:[%s4 + $0x1d0] sm:$0xff]
    %v1669 = vld [vmem:[%s4 + $0x1d8] sm:$0xff]
    %v1670 = vld [vmem:[%s4 + $0x1e0] sm:$0xff]
    %v1671 = vld [vmem:[%s4 + $0x1e8] sm:$0xff]
    %v1672 = vld [vmem:[%s4 + $0x1f0] sm:$0xff]
    %v1673 = vld [vmem:[%s4 + $0x1f8] sm:$0xff]
    %v1674 = vld [vmem:[%s5] sm:$0xff]
    %v1675 = vld [vmem:[%s5 + $0x8] sm:$0xff]
    %v1676 = vld [vmem:[%s5 + $0x10] sm:$0xff]
    %v1677 = vld [vmem:[%s5 + $0x18] sm:$0xff]
    %v1678 = vld [vmem:[%s5 + $0x20] sm:$0xff]
    %v1679 = vld [vmem:[%s5 + $0x28] sm:$0xff]
    %v1680 = vld [vmem:[%s5 + $0x30] sm:$0xff]
    %v1681 = vld [vmem:[%s5 + $0x38] sm:$0xff]
    %v1682 = vld [vmem:[%s5 + $0x40] sm:$0xff]
    %v1683 = vld [vmem:[%s5 + $0x48] sm:$0xff]
    %v1684 = vld [vmem:[%s5 + $0x50] sm:$0xff]
    %v1685 = vld [vmem:[%s5 + $0x58] sm:$0xff]
    %v1686 = vld [vmem:[%s5 + $0x60] sm:$0xff]
    %v1687 = vld [vmem:[%s5 + $0x68] sm:$0xff]
    %v1688 = vld [vmem:[%s5 + $0x70] sm:$0xff]
    %v1689 = vld [vmem:[%s5 + $0x78] sm:$0xff]
    %v1690 = vld [vmem:[%s5 + $0x80] sm:$0xff]
    %v1691 = vld [vmem:[%s5 + $0x88] sm:$0xff]
    %v1692 = vld [vmem:[%s5 + $0x90] sm:$0xff]
    %v1693 = vld [vmem:[%s5 + $0x98] sm:$0xff]
    %v1694 = vld [vmem:[%s5 + $0xa0] sm:$0xff]
    %v1695 = vld [vmem:[%s5 + $0xa8] sm:$0xff]
    %v1696 = vld [vmem:[%s5 + $0xb0] sm:$0xff]
    %v1697 = vld [vmem:[%s5 + $0xb8] sm:$0xff]
    %v1698 = vld [vmem:[%s5 + $0xc0] sm:$0xff]
    %v1699 = vld [vmem:[%s5 + $0xc8] sm:$0xff]
    %v1700 = vld [vmem:[%s5 + $0xd0] sm:$0xff]
    %v1701 = vld [vmem:[%s5 + $0xd8] sm:$0xff]
    %v1702 = vld [vmem:[%s5 + $0xe0] sm:$0xff]
    %v1703 = vld [vmem:[%s5 + $0xe8] sm:$0xff]
    %v1704 = vld [vmem:[%s5 + $0xf0] sm:$0xff]
    %v1705 = vld [vmem:[%s5 + $0xf8] sm:$0xff]
    %v1706 = vld [vmem:[%s5 + $0x100] sm:$0xff]
    %v1707 = vld [vmem:[%s5 + $0x108] sm:$0xff]
    %v1708 = vld [vmem:[%s5 + $0x110] sm:$0xff]
    %v1709 = vld [vmem:[%s5 + $0x118] sm:$0xff]
    %v1710 = vld [vmem:[%s5 + $0x120] sm:$0xff]
    %v1711 = vld [vmem:[%s5 + $0x128] sm:$0xff]
    %v1712 = vld [vmem:[%s5 + $0x130] sm:$0xff]
    %v1713 = vld [vmem:[%s5 + $0x138] sm:$0xff]
    %v1714 = vld [vmem:[%s5 + $0x140] sm:$0xff]
    %v1715 = vld [vmem:[%s5 + $0x148] sm:$0xff]
    %v1716 = vld [vmem:[%s5 + $0x150] sm:$0xff]
    %v1717 = vld [vmem:[%s5 + $0x158] sm:$0xff]
    %v1718 = vld [vmem:[%s5 + $0x160] sm:$0xff]
    %v1719 = vld [vmem:[%s5 + $0x168] sm:$0xff]
    %v1720 = vld [vmem:[%s5 + $0x170] sm:$0xff]
    %v1721 = vld [vmem:[%s5 + $0x178] sm:$0xff]
    %v1722 = vld [vmem:[%s5 + $0x180] sm:$0xff]
    %v1723 = vld [vmem:[%s5 + $0x188] sm:$0xff]
    %v1724 = vld [vmem:[%s5 + $0x190] sm:$0xff]
    %v1725 = vld [vmem:[%s5 + $0x198] sm:$0xff]
    %v1726 = vld [vmem:[%s5 + $0x1a0] sm:$0xff]
    %v1727 = vld [vmem:[%s5 + $0x1a8] sm:$0xff]
    %v1728 = vld [vmem:[%s5 + $0x1b0] sm:$0xff]
    %v1729 = vld [vmem:[%s5 + $0x1b8] sm:$0xff]
    %v1730 = vld [vmem:[%s5 + $0x1c0] sm:$0xff]
    %v1731 = vld [vmem:[%s5 + $0x1c8] sm:$0xff]
    %v1732 = vld [vmem:[%s5 + $0x1d0] sm:$0xff]
    %v1733 = vld [vmem:[%s5 + $0x1d8] sm:$0xff]
    %v1734 = vld [vmem:[%s5 + $0x1e0] sm:$0xff]
    %v1735 = vld [vmem:[%s5 + $0x1e8] sm:$0xff]
    %v1736 = vld [vmem:[%s5 + $0x1f0] sm:$0xff]
    %v1737 = vld [vmem:[%s5 + $0x1f8] sm:$0xff]
    %v1739 = vshrl.u32 %v1608, 16
    %v1741 = vrot.slane %v1739, 7
    %v1742 = vshll.u32 %v1608, 16
    %v1744 = vor.u32 %v1741, %v1742
    %v1746 = vshrl.u32 %v1609, 16
    %v1748 = vrot.slane %v1746, 7
    %v1749 = vshll.u32 %v1609, 16
    %v1751 = vor.u32 %v1748, %v1749
    %vm1754 = vcmask 1040384
    %vm1755 = vsmask.f32 256
    %vm1756 = vmand %vm1754, %vm1755
    %v1757 = vsel %vm1756, 0, %v1744
    %v1758 = vsel %vm1756, 0, %v1751
    %v1759 = vrot.slane %v1742, 1
    %v1760 = vor.u32 %v1739, %v1759
    %v1761 = vrot.slane %v1749, 1
    %v1762 = vor.u32 %v1746, %v1761
    %vm1765 = vcmask 1043456
    %vm1766 = vsmask.f32 3328
    %vm1767 = vmand %vm1765, %vm1766
    %v1768 = vsel %vm1767, %v1760, 0
    %v1769 = vsel %vm1767, %v1762, 0
    %vm1770 = vcmp.lt.s32.totalorder %v326, 0
    %v1771 = vsub.s32 0, %v326
    %v1772 = vsel %vm1770, %v1771, %v326
    %v1773 = vshrl.u32 %v1772, 2
    %v1774 = vand.u32 %v1772, 3
    %v1775 = vsub.s32 0, %v1774
    %v1776 = vsel %vm1770, %v1775, %v1774
    %vm1777 = vcmp.ne.s32.totalorder %v1776, 0
    %vm1778 = vcmp.lt.s32.totalorder %v1776, 0
    %vm1779 = vmand %vm1778, %vm1777
    %v1780 = vadd.s32 %v1776, 4
    %v1781 = vsel %vm1779, %v1780, %v1776
    %vm1782 = vcmp.eq.s32.totalorder %v1781, 0
    %vm1783 = vmpackc.low %vm1782, %vm1782
    %v1784 = vsel %vm1783, 65537, 0
    %v1785 = vunpack.c.l.b16 %v1784
    %v1786 = vpack.c.b16 %v1785, %v1785
    %vm1787 = vcmp.ne.s16.totalorder %v1786, 0
    %v1788 = vsel %vm1787, 0, %v1757
    %v1789 = vsel %vm1787, 0, %v1758
    %vm1790 = vcmp.eq.s32.totalorder %v1781, 3
    %vm1791 = vmpackc.low %vm1790, %vm1790
    %v1792 = vsel %vm1791, 65537, 0
    %v1793 = vunpack.c.l.b16 %v1792
    %v1794 = vpack.c.b16 %v1793, %v1793
    %vm1795 = vcmp.ne.s16.totalorder %v1794, 0
    %v1796 = vsel %vm1795, 0, %v1768
    %v1797 = vsel %vm1795, 0, %v1769
    %v1862 = vunpack.c.l.b16 %v1610
    %v1863 = vunpack.c.h.b16 %v1610
    %v1864 = vunpack.c.l.b16 %v1611
    %v1865 = vunpack.c.h.b16 %v1611
    %v1866 = vunpack.c.l.b16 %v1612
    %v1867 = vunpack.c.h.b16 %v1612
    %v1868 = vunpack.c.l.b16 %v1613
    %v1869 = vunpack.c.h.b16 %v1613
    %v1870 = vunpack.c.l.b16 %v1614
    %v1871 = vunpack.c.h.b16 %v1614
    %v1872 = vunpack.c.l.b16 %v1615
    %v1873 = vunpack.c.h.b16 %v1615
    %v1874 = vunpack.c.l.b16 %v1616
    %v1875 = vunpack.c.h.b16 %v1616
    %v1876 = vunpack.c.l.b16 %v1617
    %v1877 = vunpack.c.h.b16 %v1617
    %v1878 = vunpack.c.l.b16 %v1618
    %v1879 = vunpack.c.h.b16 %v1618
    %v1880 = vunpack.c.l.b16 %v1619
    %v1881 = vunpack.c.h.b16 %v1619
    %v1882 = vunpack.c.l.b16 %v1620
    %v1883 = vunpack.c.h.b16 %v1620
    %v1884 = vunpack.c.l.b16 %v1621
    %v1885 = vunpack.c.h.b16 %v1621
    %v1886 = vunpack.c.l.b16 %v1622
    %v1887 = vunpack.c.h.b16 %v1622
    %v1888 = vunpack.c.l.b16 %v1623
    %v1889 = vunpack.c.h.b16 %v1623
    %v1890 = vunpack.c.l.b16 %v1624
    %v1891 = vunpack.c.h.b16 %v1624
    %v1892 = vunpack.c.l.b16 %v1625
    %v1893 = vunpack.c.h.b16 %v1625
    %v1894 = vunpack.c.l.b16 %v1626
    %v1895 = vunpack.c.h.b16 %v1626
    %v1896 = vunpack.c.l.b16 %v1627
    %v1897 = vunpack.c.h.b16 %v1627
    %v1898 = vunpack.c.l.b16 %v1628
    %v1899 = vunpack.c.h.b16 %v1628
    %v1900 = vunpack.c.l.b16 %v1629
    %v1901 = vunpack.c.h.b16 %v1629
    %v1902 = vunpack.c.l.b16 %v1630
    %v1903 = vunpack.c.h.b16 %v1630
    %v1904 = vunpack.c.l.b16 %v1631
    %v1905 = vunpack.c.h.b16 %v1631
    %v1906 = vunpack.c.l.b16 %v1632
    %v1907 = vunpack.c.h.b16 %v1632
    %v1908 = vunpack.c.l.b16 %v1633
    %v1909 = vunpack.c.h.b16 %v1633
    %v1910 = vunpack.c.l.b16 %v1634
    %v1911 = vunpack.c.h.b16 %v1634
    %v1912 = vunpack.c.l.b16 %v1635
    %v1913 = vunpack.c.h.b16 %v1635
    %v1914 = vunpack.c.l.b16 %v1636
    %v1915 = vunpack.c.h.b16 %v1636
    %v1916 = vunpack.c.l.b16 %v1637
    %v1917 = vunpack.c.h.b16 %v1637
    %v1918 = vunpack.c.l.b16 %v1638
    %v1919 = vunpack.c.h.b16 %v1638
    %v1920 = vunpack.c.l.b16 %v1639
    %v1921 = vunpack.c.h.b16 %v1639
    %v1922 = vunpack.c.l.b16 %v1640
    %v1923 = vunpack.c.h.b16 %v1640
    %v1924 = vunpack.c.l.b16 %v1641
    %v1925 = vunpack.c.h.b16 %v1641
    %v1926 = vunpack.c.l.b16 %v1642
    %v1927 = vunpack.c.h.b16 %v1642
    %v1928 = vunpack.c.l.b16 %v1643
    %v1929 = vunpack.c.h.b16 %v1643
    %v1930 = vunpack.c.l.b16 %v1644
    %v1931 = vunpack.c.h.b16 %v1644
    %v1932 = vunpack.c.l.b16 %v1645
    %v1933 = vunpack.c.h.b16 %v1645
    %v1934 = vunpack.c.l.b16 %v1646
    %v1935 = vunpack.c.h.b16 %v1646
    %v1936 = vunpack.c.l.b16 %v1647
    %v1937 = vunpack.c.h.b16 %v1647
    %v1938 = vunpack.c.l.b16 %v1648
    %v1939 = vunpack.c.h.b16 %v1648
    %v1940 = vunpack.c.l.b16 %v1649
    %v1941 = vunpack.c.h.b16 %v1649
    %v1942 = vunpack.c.l.b16 %v1650
    %v1943 = vunpack.c.h.b16 %v1650
    %v1944 = vunpack.c.l.b16 %v1651
    %v1945 = vunpack.c.h.b16 %v1651
    %v1946 = vunpack.c.l.b16 %v1652
    %v1947 = vunpack.c.h.b16 %v1652
    %v1948 = vunpack.c.l.b16 %v1653
    %v1949 = vunpack.c.h.b16 %v1653
    %v1950 = vunpack.c.l.b16 %v1654
    %v1951 = vunpack.c.h.b16 %v1654
    %v1952 = vunpack.c.l.b16 %v1655
    %v1953 = vunpack.c.h.b16 %v1655
    %v1954 = vunpack.c.l.b16 %v1656
    %v1955 = vunpack.c.h.b16 %v1656
    %v1956 = vunpack.c.l.b16 %v1657
    %v1957 = vunpack.c.h.b16 %v1657
    %v1958 = vunpack.c.l.b16 %v1658
    %v1959 = vunpack.c.h.b16 %v1658
    %v1960 = vunpack.c.l.b16 %v1659
    %v1961 = vunpack.c.h.b16 %v1659
    %v1962 = vunpack.c.l.b16 %v1660
    %v1963 = vunpack.c.h.b16 %v1660
    %v1964 = vunpack.c.l.b16 %v1661
    %v1965 = vunpack.c.h.b16 %v1661
    %v1966 = vunpack.c.l.b16 %v1662
    %v1967 = vunpack.c.h.b16 %v1662
    %v1968 = vunpack.c.l.b16 %v1663
    %v1969 = vunpack.c.h.b16 %v1663
    %v1970 = vunpack.c.l.b16 %v1664
    %v1971 = vunpack.c.h.b16 %v1664
    %v1972 = vunpack.c.l.b16 %v1665
    %v1973 = vunpack.c.h.b16 %v1665
    %v1974 = vunpack.c.l.b16 %v1666
    %v1975 = vunpack.c.h.b16 %v1666
    %v1976 = vunpack.c.l.b16 %v1667
    %v1977 = vunpack.c.h.b16 %v1667
    %v1978 = vunpack.c.l.b16 %v1668
    %v1979 = vunpack.c.h.b16 %v1668
    %v1980 = vunpack.c.l.b16 %v1669
    %v1981 = vunpack.c.h.b16 %v1669
    %v1982 = vunpack.c.l.b16 %v1670
    %v1983 = vunpack.c.h.b16 %v1670
    %v1984 = vunpack.c.l.b16 %v1671
    %v1985 = vunpack.c.h.b16 %v1671
    %v1986 = vunpack.c.l.b16 %v1672
    %v1987 = vunpack.c.h.b16 %v1672
    %v1988 = vunpack.c.l.b16 %v1673
    %v1989 = vunpack.c.h.b16 %v1673
    %v1990 = vpack.c.b16 %v1864, %v1862
    %v1991 = vpack.c.b16 %v1865, %v1863
    %v1992 = vpack.c.b16 %v1868, %v1866
    %v1993 = vpack.c.b16 %v1869, %v1867
    %v1994 = vpack.c.b16 %v1872, %v1870
    %v1995 = vpack.c.b16 %v1873, %v1871
    %v1996 = vpack.c.b16 %v1876, %v1874
    %v1997 = vpack.c.b16 %v1877, %v1875
    %v1998 = vpack.c.b16 %v1880, %v1878
    %v1999 = vpack.c.b16 %v1881, %v1879
    %v2000 = vpack.c.b16 %v1884, %v1882
    %v2001 = vpack.c.b16 %v1885, %v1883
    %v2002 = vpack.c.b16 %v1888, %v1886
    %v2003 = vpack.c.b16 %v1889, %v1887
    %v2004 = vpack.c.b16 %v1892, %v1890
    %v2005 = vpack.c.b16 %v1893, %v1891
    %v2006 = vpack.c.b16 %v1896, %v1894
    %v2007 = vpack.c.b16 %v1897, %v1895
    %v2008 = vpack.c.b16 %v1900, %v1898
    %v2009 = vpack.c.b16 %v1901, %v1899
    %v2010 = vpack.c.b16 %v1904, %v1902
    %v2011 = vpack.c.b16 %v1905, %v1903
    %v2012 = vpack.c.b16 %v1908, %v1906
    %v2013 = vpack.c.b16 %v1909, %v1907
    %v2014 = vpack.c.b16 %v1912, %v1910
    %v2015 = vpack.c.b16 %v1913, %v1911
    %v2016 = vpack.c.b16 %v1916, %v1914
    %v2017 = vpack.c.b16 %v1917, %v1915
    %v2018 = vpack.c.b16 %v1920, %v1918
    %v2019 = vpack.c.b16 %v1921, %v1919
    %v2020 = vpack.c.b16 %v1924, %v1922
    %v2021 = vpack.c.b16 %v1925, %v1923
    %v2022 = vpack.c.b16 %v1928, %v1926
    %v2023 = vpack.c.b16 %v1929, %v1927
    %v2024 = vpack.c.b16 %v1932, %v1930
    %v2025 = vpack.c.b16 %v1933, %v1931
    %v2026 = vpack.c.b16 %v1936, %v1934
    %v2027 = vpack.c.b16 %v1937, %v1935
    %v2028 = vpack.c.b16 %v1940, %v1938
    %v2029 = vpack.c.b16 %v1941, %v1939
    %v2030 = vpack.c.b16 %v1944, %v1942
    %v2031 = vpack.c.b16 %v1945, %v1943
    %v2032 = vpack.c.b16 %v1948, %v1946
    %v2033 = vpack.c.b16 %v1949, %v1947
    %v2034 = vpack.c.b16 %v1952, %v1950
    %v2035 = vpack.c.b16 %v1953, %v1951
    %v2036 = vpack.c.b16 %v1956, %v1954
    %v2037 = vpack.c.b16 %v1957, %v1955
    %v2038 = vpack.c.b16 %v1960, %v1958
    %v2039 = vpack.c.b16 %v1961, %v1959
    %v2040 = vpack.c.b16 %v1964, %v1962
    %v2041 = vpack.c.b16 %v1965, %v1963
    %v2042 = vpack.c.b16 %v1968, %v1966
    %v2043 = vpack.c.b16 %v1969, %v1967
    %v2044 = vpack.c.b16 %v1972, %v1970
    %v2045 = vpack.c.b16 %v1973, %v1971
    %v2046 = vpack.c.b16 %v1976, %v1974
    %v2047 = vpack.c.b16 %v1977, %v1975
    %v2048 = vpack.c.b16 %v1980, %v1978
    %v2049 = vpack.c.b16 %v1981, %v1979
    %v2050 = vpack.c.b16 %v1984, %v1982
    %v2051 = vpack.c.b16 %v1985, %v1983
    %v2052 = vpack.c.b16 %v1988, %v1986
    %v2053 = vpack.c.b16 %v1989, %v1987
    %2118 = vmatprep.subr.bf16.mxu0 %v2005
    %2119 = vmatpush1.bf16.msra.mxu0 %v2004
    %2120 = vmatprep.subr.bf16.mxu0 %v2003
    %2121 = vmatpush1.bf16.msra.mxu0 %v2002
    %2122 = vmatprep.subr.bf16.mxu0 %v2001
    %2123 = vmatpush1.bf16.msra.mxu0 %v2000
    %2124 = vmatprep.subr.bf16.mxu0 %v1999
    %2125 = vmatpush1.bf16.msra.mxu0 %v1998
    %2126 = vmatprep.subr.bf16.mxu0 %v1997
    %2127 = vmatpush1.bf16.msra.mxu0 %v1996
    %2128 = vmatprep.subr.bf16.mxu0 %v1995
    %2129 = vmatpush1.bf16.msra.mxu0 %v1994
    %2130 = vmatprep.subr.bf16.mxu0 %v1993
    %2131 = vmatpush1.bf16.msra.mxu0 %v1992
    %2132 = vmatprep.subr.bf16.mxu0 %v1991
    %2133 = vmatpush1.bf16.msra.mxu0 %v1990
    %2134 = vmatprep.subr.bf16.mxu0 %v2021
    %2135 = vmatpush2.bf16.msra.mxu0 %v2020
    %2136 = vmatprep.subr.bf16.mxu0 %v2019
    %2137 = vmatpush2.bf16.msra.mxu0 %v2018
    %2138 = vmatprep.subr.bf16.mxu0 %v2017
    %2139 = vmatpush2.bf16.msra.mxu0 %v2016
    %2140 = vmatprep.subr.bf16.mxu0 %v2015
    %2141 = vmatpush2.bf16.msra.mxu0 %v2014
    %2142 = vmatprep.subr.bf16.mxu0 %v2013
    %2143 = vmatpush2.bf16.msra.mxu0 %v2012
    %2144 = vmatprep.subr.bf16.mxu0 %v2011
    %2145 = vmatpush2.bf16.msra.mxu0 %v2010
    %2146 = vmatprep.subr.bf16.mxu0 %v2009
    %2147 = vmatpush2.bf16.msra.mxu0 %v2008
    %2148 = vmatprep.subr.bf16.mxu0 %v2007
    %2149 = vmatpush2.bf16.msra.mxu0 %v2006
    %2150 = vmatprep.mubr.bf16.mxu0 %v1789
    %2151 = vmatmul.mubr.bf16.gmra.mxu0 %v1788
    %v2152 = vpop.f32.mrf.mxu0
    %v2153 = vadd.f32 0.0, %v2152
    %v2154 = vpop.f32.mrf.mxu0
    %v2155 = vadd.f32 0.0, %v2154
    %v2156 = vpop.f32.mrf.mxu0
    %v2157 = vpop.f32.mrf.mxu0
    %2158 = vdwg.mxu0
    %2159 = vmatprep.subr.bf16.mxu0 %v2037
    %2160 = vmatpush1.bf16.msra.mxu0 %v2036
    %2161 = vmatprep.subr.bf16.mxu0 %v2035
    %2162 = vmatpush1.bf16.msra.mxu0 %v2034
    %2163 = vmatprep.subr.bf16.mxu0 %v2033
    %2164 = vmatpush1.bf16.msra.mxu0 %v2032
    %2165 = vmatprep.subr.bf16.mxu0 %v2031
    %2166 = vmatpush1.bf16.msra.mxu0 %v2030
    %2167 = vmatprep.subr.bf16.mxu0 %v2029
    %2168 = vmatpush1.bf16.msra.mxu0 %v2028
    %2169 = vmatprep.subr.bf16.mxu0 %v2027
    %2170 = vmatpush1.bf16.msra.mxu0 %v2026
    %2171 = vmatprep.subr.bf16.mxu0 %v2025
    %2172 = vmatpush1.bf16.msra.mxu0 %v2024
    %2173 = vmatprep.subr.bf16.mxu0 %v2023
    %2174 = vmatpush1.bf16.msra.mxu0 %v2022
    %2175 = vmatprep.subr.bf16.mxu0 %v2053
    %2176 = vmatpush2.bf16.msra.mxu0 %v2052
    %2177 = vmatprep.subr.bf16.mxu0 %v2051
    %2178 = vmatpush2.bf16.msra.mxu0 %v2050
    %2179 = vmatprep.subr.bf16.mxu0 %v2049
    %2180 = vmatpush2.bf16.msra.mxu0 %v2048
    %2181 = vmatprep.subr.bf16.mxu0 %v2047
    %2182 = vmatpush2.bf16.msra.mxu0 %v2046
    %2183 = vmatprep.subr.bf16.mxu0 %v2045
    %2184 = vmatpush2.bf16.msra.mxu0 %v2044
    %2185 = vmatprep.subr.bf16.mxu0 %v2043
    %2186 = vmatpush2.bf16.msra.mxu0 %v2042
    %2187 = vmatprep.subr.bf16.mxu0 %v2041
    %2188 = vmatpush2.bf16.msra.mxu0 %v2040
    %2189 = vmatprep.subr.bf16.mxu0 %v2039
    %2190 = vmatpush2.bf16.msra.mxu0 %v2038
    %2191 = vmatprep.mubr.bf16.mxu0 %v1609
    %2192 = vmatmul.mubr.bf16.gmra.mxu0 %v1608
    %v2193 = vpop.f32.mrf.mxu0
    %v2194 = vadd.f32 %v2153, %v2193
    %v2195 = vpop.f32.mrf.mxu0
    %v2196 = vadd.f32 %v2155, %v2195
    %v2197 = vpop.f32.mrf.mxu0
    %v2198 = vpop.f32.mrf.mxu0
    %2199 = vdwg.mxu0
    %v2264 = vunpack.c.l.b16 %v1674
    %v2265 = vunpack.c.h.b16 %v1674
    %v2266 = vunpack.c.l.b16 %v1675
    %v2267 = vunpack.c.h.b16 %v1675
    %v2268 = vunpack.c.l.b16 %v1676
    %v2269 = vunpack.c.h.b16 %v1676
    %v2270 = vunpack.c.l.b16 %v1677
    %v2271 = vunpack.c.h.b16 %v1677
    %v2272 = vunpack.c.l.b16 %v1678
    %v2273 = vunpack.c.h.b16 %v1678
    %v2274 = vunpack.c.l.b16 %v1679
    %v2275 = vunpack.c.h.b16 %v1679
    %v2276 = vunpack.c.l.b16 %v1680
    %v2277 = vunpack.c.h.b16 %v1680
    %v2278 = vunpack.c.l.b16 %v1681
    %v2279 = vunpack.c.h.b16 %v1681
    %v2280 = vunpack.c.l.b16 %v1682
    %v2281 = vunpack.c.h.b16 %v1682
    %v2282 = vunpack.c.l.b16 %v1683
    %v2283 = vunpack.c.h.b16 %v1683
    %v2284 = vunpack.c.l.b16 %v1684
    %v2285 = vunpack.c.h.b16 %v1684
    %v2286 = vunpack.c.l.b16 %v1685
    %v2287 = vunpack.c.h.b16 %v1685
    %v2288 = vunpack.c.l.b16 %v1686
    %v2289 = vunpack.c.h.b16 %v1686
    %v2290 = vunpack.c.l.b16 %v1687
    %v2291 = vunpack.c.h.b16 %v1687
    %v2292 = vunpack.c.l.b16 %v1688
    %v2293 = vunpack.c.h.b16 %v1688
    %v2294 = vunpack.c.l.b16 %v1689
    %v2295 = vunpack.c.h.b16 %v1689
    %v2296 = vunpack.c.l.b16 %v1690
    %v2297 = vunpack.c.h.b16 %v1690
    %v2298 = vunpack.c.l.b16 %v1691
    %v2299 = vunpack.c.h.b16 %v1691
    %v2300 = vunpack.c.l.b16 %v1692
    %v2301 = vunpack.c.h.b16 %v1692
    %v2302 = vunpack.c.l.b16 %v1693
    %v2303 = vunpack.c.h.b16 %v1693
    %v2304 = vunpack.c.l.b16 %v1694
    %v2305 = vunpack.c.h.b16 %v1694
    %v2306 = vunpack.c.l.b16 %v1695
    %v2307 = vunpack.c.h.b16 %v1695
    %v2308 = vunpack.c.l.b16 %v1696
    %v2309 = vunpack.c.h.b16 %v1696
    %v2310 = vunpack.c.l.b16 %v1697
    %v2311 = vunpack.c.h.b16 %v1697
    %v2312 = vunpack.c.l.b16 %v1698
    %v2313 = vunpack.c.h.b16 %v1698
    %v2314 = vunpack.c.l.b16 %v1699
    %v2315 = vunpack.c.h.b16 %v1699
    %v2316 = vunpack.c.l.b16 %v1700
    %v2317 = vunpack.c.h.b16 %v1700
    %v2318 = vunpack.c.l.b16 %v1701
    %v2319 = vunpack.c.h.b16 %v1701
    %v2320 = vunpack.c.l.b16 %v1702
    %v2321 = vunpack.c.h.b16 %v1702
    %v2322 = vunpack.c.l.b16 %v1703
    %v2323 = vunpack.c.h.b16 %v1703
    %v2324 = vunpack.c.l.b16 %v1704
    %v2325 = vunpack.c.h.b16 %v1704
    %v2326 = vunpack.c.l.b16 %v1705
    %v2327 = vunpack.c.h.b16 %v1705
    %v2328 = vunpack.c.l.b16 %v1706
    %v2329 = vunpack.c.h.b16 %v1706
    %v2330 = vunpack.c.l.b16 %v1707
    %v2331 = vunpack.c.h.b16 %v1707
    %v2332 = vunpack.c.l.b16 %v1708
    %v2333 = vunpack.c.h.b16 %v1708
    %v2334 = vunpack.c.l.b16 %v1709
    %v2335 = vunpack.c.h.b16 %v1709
    %v2336 = vunpack.c.l.b16 %v1710
    %v2337 = vunpack.c.h.b16 %v1710
    %v2338 = vunpack.c.l.b16 %v1711
    %v2339 = vunpack.c.h.b16 %v1711
    %v2340 = vunpack.c.l.b16 %v1712
    %v2341 = vunpack.c.h.b16 %v1712
    %v2342 = vunpack.c.l.b16 %v1713
    %v2343 = vunpack.c.h.b16 %v1713
    %v2344 = vunpack.c.l.b16 %v1714
    %v2345 = vunpack.c.h.b16 %v1714
    %v2346 = vunpack.c.l.b16 %v1715
    %v2347 = vunpack.c.h.b16 %v1715
    %v2348 = vunpack.c.l.b16 %v1716
    %v2349 = vunpack.c.h.b16 %v1716
    %v2350 = vunpack.c.l.b16 %v1717
    %v2351 = vunpack.c.h.b16 %v1717
    %v2352 = vunpack.c.l.b16 %v1718
    %v2353 = vunpack.c.h.b16 %v1718
    %v2354 = vunpack.c.l.b16 %v1719
    %v2355 = vunpack.c.h.b16 %v1719
    %v2356 = vunpack.c.l.b16 %v1720
    %v2357 = vunpack.c.h.b16 %v1720
    %v2358 = vunpack.c.l.b16 %v1721
    %v2359 = vunpack.c.h.b16 %v1721
    %v2360 = vunpack.c.l.b16 %v1722
    %v2361 = vunpack.c.h.b16 %v1722
    %v2362 = vunpack.c.l.b16 %v1723
    %v2363 = vunpack.c.h.b16 %v1723
    %v2364 = vunpack.c.l.b16 %v1724
    %v2365 = vunpack.c.h.b16 %v1724
    %v2366 = vunpack.c.l.b16 %v1725
    %v2367 = vunpack.c.h.b16 %v1725
    %v2368 = vunpack.c.l.b16 %v1726
    %v2369 = vunpack.c.h.b16 %v1726
    %v2370 = vunpack.c.l.b16 %v1727
    %v2371 = vunpack.c.h.b16 %v1727
    %v2372 = vunpack.c.l.b16 %v1728
    %v2373 = vunpack.c.h.b16 %v1728
    %v2374 = vunpack.c.l.b16 %v1729
    %v2375 = vunpack.c.h.b16 %v1729
    %v2376 = vunpack.c.l.b16 %v1730
    %v2377 = vunpack.c.h.b16 %v1730
    %v2378 = vunpack.c.l.b16 %v1731
    %v2379 = vunpack.c.h.b16 %v1731
    %v2380 = vunpack.c.l.b16 %v1732
    %v2381 = vunpack.c.h.b16 %v1732
    %v2382 = vunpack.c.l.b16 %v1733
    %v2383 = vunpack.c.h.b16 %v1733
    %v2384 = vunpack.c.l.b16 %v1734
    %v2385 = vunpack.c.h.b16 %v1734
    %v2386 = vunpack.c.l.b16 %v1735
    %v2387 = vunpack.c.h.b16 %v1735
    %v2388 = vunpack.c.l.b16 %v1736
    %v2389 = vunpack.c.h.b16 %v1736
    %v2390 = vunpack.c.l.b16 %v1737
    %v2391 = vunpack.c.h.b16 %v1737
    %v2392 = vpack.c.b16 %v2266, %v2264
    %v2393 = vpack.c.b16 %v2267, %v2265
    %v2394 = vpack.c.b16 %v2270, %v2268
    %v2395 = vpack.c.b16 %v2271, %v2269
    %v2396 = vpack.c.b16 %v2274, %v2272
    %v2397 = vpack.c.b16 %v2275, %v2273
    %v2398 = vpack.c.b16 %v2278, %v2276
    %v2399 = vpack.c.b16 %v2279, %v2277
    %v2400 = vpack.c.b16 %v2282, %v2280
    %v2401 = vpack.c.b16 %v2283, %v2281
    %v2402 = vpack.c.b16 %v2286, %v2284
    %v2403 = vpack.c.b16 %v2287, %v2285
    %v2404 = vpack.c.b16 %v2290, %v2288
    %v2405 = vpack.c.b16 %v2291, %v2289
    %v2406 = vpack.c.b16 %v2294, %v2292
    %v2407 = vpack.c.b16 %v2295, %v2293
    %v2408 = vpack.c.b16 %v2298, %v2296
    %v2409 = vpack.c.b16 %v2299, %v2297
    %v2410 = vpack.c.b16 %v2302, %v2300
    %v2411 = vpack.c.b16 %v2303, %v2301
    %v2412 = vpack.c.b16 %v2306, %v2304
    %v2413 = vpack.c.b16 %v2307, %v2305
    %v2414 = vpack.c.b16 %v2310, %v2308
    %v2415 = vpack.c.b16 %v2311, %v2309
    %v2416 = vpack.c.b16 %v2314, %v2312
    %v2417 = vpack.c.b16 %v2315, %v2313
    %v2418 = vpack.c.b16 %v2318, %v2316
    %v2419 = vpack.c.b16 %v2319, %v2317
    %v2420 = vpack.c.b16 %v2322, %v2320
    %v2421 = vpack.c.b16 %v2323, %v2321
    %v2422 = vpack.c.b16 %v2326, %v2324
    %v2423 = vpack.c.b16 %v2327, %v2325
    %v2424 = vpack.c.b16 %v2330, %v2328
    %v2425 = vpack.c.b16 %v2331, %v2329
    %v2426 = vpack.c.b16 %v2334, %v2332
    %v2427 = vpack.c.b16 %v2335, %v2333
    %v2428 = vpack.c.b16 %v2338, %v2336
    %v2429 = vpack.c.b16 %v2339, %v2337
    %v2430 = vpack.c.b16 %v2342, %v2340
    %v2431 = vpack.c.b16 %v2343, %v2341
    %v2432 = vpack.c.b16 %v2346, %v2344
    %v2433 = vpack.c.b16 %v2347, %v2345
    %v2434 = vpack.c.b16 %v2350, %v2348
    %v2435 = vpack.c.b16 %v2351, %v2349
    %v2436 = vpack.c.b16 %v2354, %v2352
    %v2437 = vpack.c.b16 %v2355, %v2353
    %v2438 = vpack.c.b16 %v2358, %v2356
    %v2439 = vpack.c.b16 %v2359, %v2357
    %v2440 = vpack.c.b16 %v2362, %v2360
    %v2441 = vpack.c.b16 %v2363, %v2361
    %v2442 = vpack.c.b16 %v2366, %v2364
    %v2443 = vpack.c.b16 %v2367, %v2365
    %v2444 = vpack.c.b16 %v2370, %v2368
    %v2445 = vpack.c.b16 %v2371, %v2369
    %v2446 = vpack.c.b16 %v2374, %v2372
    %v2447 = vpack.c.b16 %v2375, %v2373
    %v2448 = vpack.c.b16 %v2378, %v2376
    %v2449 = vpack.c.b16 %v2379, %v2377
    %v2450 = vpack.c.b16 %v2382, %v2380
    %v2451 = vpack.c.b16 %v2383, %v2381
    %v2452 = vpack.c.b16 %v2386, %v2384
    %v2453 = vpack.c.b16 %v2387, %v2385
    %v2454 = vpack.c.b16 %v2390, %v2388
    %v2455 = vpack.c.b16 %v2391, %v2389
    %2520 = vmatprep.subr.bf16.mxu0 %v2407
    %2521 = vmatpush1.bf16.msra.mxu0 %v2406
    %2522 = vmatprep.subr.bf16.mxu0 %v2405
    %2523 = vmatpush1.bf16.msra.mxu0 %v2404
    %2524 = vmatprep.subr.bf16.mxu0 %v2403
    %2525 = vmatpush1.bf16.msra.mxu0 %v2402
    %2526 = vmatprep.subr.bf16.mxu0 %v2401
    %2527 = vmatpush1.bf16.msra.mxu0 %v2400
    %2528 = vmatprep.subr.bf16.mxu0 %v2399
    %2529 = vmatpush1.bf16.msra.mxu0 %v2398
    %2530 = vmatprep.subr.bf16.mxu0 %v2397
    %2531 = vmatpush1.bf16.msra.mxu0 %v2396
    %2532 = vmatprep.subr.bf16.mxu0 %v2395
    %2533 = vmatpush1.bf16.msra.mxu0 %v2394
    %2534 = vmatprep.subr.bf16.mxu0 %v2393
    %2535 = vmatpush1.bf16.msra.mxu0 %v2392
    %2536 = vmatprep.subr.bf16.mxu0 %v2423
    %2537 = vmatpush2.bf16.msra.mxu0 %v2422
    %2538 = vmatprep.subr.bf16.mxu0 %v2421
    %2539 = vmatpush2.bf16.msra.mxu0 %v2420
    %2540 = vmatprep.subr.bf16.mxu0 %v2419
    %2541 = vmatpush2.bf16.msra.mxu0 %v2418
    %2542 = vmatprep.subr.bf16.mxu0 %v2417
    %2543 = vmatpush2.bf16.msra.mxu0 %v2416
    %2544 = vmatprep.subr.bf16.mxu0 %v2415
    %2545 = vmatpush2.bf16.msra.mxu0 %v2414
    %2546 = vmatprep.subr.bf16.mxu0 %v2413
    %2547 = vmatpush2.bf16.msra.mxu0 %v2412
    %2548 = vmatprep.subr.bf16.mxu0 %v2411
    %2549 = vmatpush2.bf16.msra.mxu0 %v2410
    %2550 = vmatprep.subr.bf16.mxu0 %v2409
    %2551 = vmatpush2.bf16.msra.mxu0 %v2408
    %2552 = vmatprep.mubr.bf16.mxu0 %v1609
    %2553 = vmatmul.mubr.bf16.gmra.mxu0 %v1608
    %v2554 = vpop.f32.mrf.mxu0
    %v2555 = vadd.f32 0.0, %v2554
    %v2556 = vpop.f32.mrf.mxu0
    %v2557 = vadd.f32 0.0, %v2556
    %v2558 = vpop.f32.mrf.mxu0
    %v2559 = vpop.f32.mrf.mxu0
    %2560 = vdwg.mxu0
    %2561 = vmatprep.subr.bf16.mxu0 %v2439
    %2562 = vmatpush1.bf16.msra.mxu0 %v2438
    %2563 = vmatprep.subr.bf16.mxu0 %v2437
    %2564 = vmatpush1.bf16.msra.mxu0 %v2436
    %2565 = vmatprep.subr.bf16.mxu0 %v2435
    %2566 = vmatpush1.bf16.msra.mxu0 %v2434
    %2567 = vmatprep.subr.bf16.mxu0 %v2433
    %2568 = vmatpush1.bf16.msra.mxu0 %v2432
    %2569 = vmatprep.subr.bf16.mxu0 %v2431
    %2570 = vmatpush1.bf16.msra.mxu0 %v2430
    %2571 = vmatprep.subr.bf16.mxu0 %v2429
    %2572 = vmatpush1.bf16.msra.mxu0 %v2428
    %2573 = vmatprep.subr.bf16.mxu0 %v2427
    %2574 = vmatpush1.bf16.msra.mxu0 %v2426
    %2575 = vmatprep.subr.bf16.mxu0 %v2425
    %2576 = vmatpush1.bf16.msra.mxu0 %v2424
    %2577 = vmatprep.subr.bf16.mxu0 %v2455
    %2578 = vmatpush2.bf16.msra.mxu0 %v2454
    %2579 = vmatprep.subr.bf16.mxu0 %v2453
    %2580 = vmatpush2.bf16.msra.mxu0 %v2452
    %2581 = vmatprep.subr.bf16.mxu0 %v2451
    %2582 = vmatpush2.bf16.msra.mxu0 %v2450
    %2583 = vmatprep.subr.bf16.mxu0 %v2449
    %2584 = vmatpush2.bf16.msra.mxu0 %v2448
    %2585 = vmatprep.subr.bf16.mxu0 %v2447
    %2586 = vmatpush2.bf16.msra.mxu0 %v2446
    %2587 = vmatprep.subr.bf16.mxu0 %v2445
    %2588 = vmatpush2.bf16.msra.mxu0 %v2444
    %2589 = vmatprep.subr.bf16.mxu0 %v2443
    %2590 = vmatpush2.bf16.msra.mxu0 %v2442
    %2591 = vmatprep.subr.bf16.mxu0 %v2441
    %2592 = vmatpush2.bf16.msra.mxu0 %v2440
    %2593 = vmatprep.mubr.bf16.mxu0 %v1797
    %2594 = vmatmul.mubr.bf16.gmra.mxu0 %v1796
    %v2595 = vpop.f32.mrf.mxu0
    %v2596 = vadd.f32 %v2555, %v2595
    %v2597 = vpop.f32.mrf.mxu0
    %v2598 = vadd.f32 %v2557, %v2597
    %v2599 = vpop.f32.mrf.mxu0
    %v2600 = vpop.f32.mrf.mxu0
    %2601 = vdwg.mxu0
    %v2602 = vld [vmem:[%s6] sm:$0x1]
    %v2603 = vld [vmem:[%s7] sm:$0x1]
    %vm2604 = vcmp.lt.s32.totalorder %v326, 0
    %v2605 = vsub.s32 0, %v326
    %v2606 = vsel %vm2604, %v2605, %v326
    %v2607 = vshrl.u32 %v2606, 5
    %v2608 = vand.u32 %v2606, 31
    %v2609 = vsub.s32 0, %v2608
    %v2610 = vsel %vm2604, %v2609, %v2608
    %vm2611 = vcmp.lt.s32.totalorder %v673, 0
    %v2612 = vsub.s32 0, %v673
    %v2613 = vsel %vm2611, %v2612, %v673
    %v2614 = vshrl.u32 %v2613, 5
    %v2615 = vand.u32 %v2613, 31
    %v2616 = vsub.s32 0, %v2615
    %v2617 = vsel %vm2611, %v2616, %v2615
    %vm2618 = vcmp.lt.s32.totalorder %v674, 0
    %v2619 = vsub.s32 0, %v674
    %v2620 = vsel %vm2618, %v2619, %v674
    %v2621 = vshrl.u32 %v2620, 5
    %v2622 = vand.u32 %v2620, 31
    %v2623 = vsub.s32 0, %v2622
    %v2624 = vsel %vm2618, %v2623, %v2622
    %vm2625 = vcmp.lt.s32.totalorder %v675, 0
    %v2626 = vsub.s32 0, %v675
    %v2627 = vsel %vm2625, %v2626, %v675
    %v2628 = vshrl.u32 %v2627, 5
    %v2629 = vand.u32 %v2627, 31
    %v2630 = vsub.s32 0, %v2629
    %v2631 = vsel %vm2625, %v2630, %v2629
    %vm2632 = vcmp.lt.s32.totalorder %v676, 0
    %v2633 = vsub.s32 0, %v676
    %v2634 = vsel %vm2632, %v2633, %v676
    %v2635 = vshrl.u32 %v2634, 5
    %v2636 = vand.u32 %v2634, 31
    %v2637 = vsub.s32 0, %v2636
    %v2638 = vsel %vm2632, %v2637, %v2636
    %vm2639 = vcmp.lt.s32.totalorder %v677, 0
    %v2640 = vsub.s32 0, %v677
    %v2641 = vsel %vm2639, %v2640, %v677
    %v2642 = vshrl.u32 %v2641, 5
    %v2643 = vand.u32 %v2641, 31
    %v2644 = vsub.s32 0, %v2643
    %v2645 = vsel %vm2639, %v2644, %v2643
    %vm2646 = vcmp.lt.s32.totalorder %v678, 0
    %v2647 = vsub.s32 0, %v678
    %v2648 = vsel %vm2646, %v2647, %v678
    %v2649 = vshrl.u32 %v2648, 5
    %v2650 = vand.u32 %v2648, 31
    %v2651 = vsub.s32 0, %v2650
    %v2652 = vsel %vm2646, %v2651, %v2650
    %vm2653 = vcmp.lt.s32.totalorder %v679, 0
    %v2654 = vsub.s32 0, %v679
    %v2655 = vsel %vm2653, %v2654, %v679
    %v2656 = vshrl.u32 %v2655, 5
    %v2657 = vand.u32 %v2655, 31
    %v2658 = vsub.s32 0, %v2657
    %v2659 = vsel %vm2653, %v2658, %v2657
    %vm2660 = vcmp.lt.s32.totalorder %v680, 0
    %v2661 = vsub.s32 0, %v680
    %v2662 = vsel %vm2660, %v2661, %v680
    %v2663 = vshrl.u32 %v2662, 5
    %v2664 = vand.u32 %v2662, 31
    %v2665 = vsub.s32 0, %v2664
    %v2666 = vsel %vm2660, %v2665, %v2664
    %vm2667 = vcmp.lt.s32.totalorder %v681, 0
    %v2668 = vsub.s32 0, %v681
    %v2669 = vsel %vm2667, %v2668, %v681
    %v2670 = vshrl.u32 %v2669, 5
    %v2671 = vand.u32 %v2669, 31
    %v2672 = vsub.s32 0, %v2671
    %v2673 = vsel %vm2667, %v2672, %v2671
    %vm2674 = vcmp.lt.s32.totalorder %v682, 0
    %v2675 = vsub.s32 0, %v682
    %v2676 = vsel %vm2674, %v2675, %v682
    %v2677 = vshrl.u32 %v2676, 5
    %v2678 = vand.u32 %v2676, 31
    %v2679 = vsub.s32 0, %v2678
    %v2680 = vsel %vm2674, %v2679, %v2678
    %vm2681 = vcmp.lt.s32.totalorder %v683, 0
    %v2682 = vsub.s32 0, %v683
    %v2683 = vsel %vm2681, %v2682, %v683
    %v2684 = vshrl.u32 %v2683, 5
    %v2685 = vand.u32 %v2683, 31
    %v2686 = vsub.s32 0, %v2685
    %v2687 = vsel %vm2681, %v2686, %v2685
    %vm2688 = vcmp.lt.s32.totalorder %v684, 0
    %v2689 = vsub.s32 0, %v684
    %v2690 = vsel %vm2688, %v2689, %v684
    %v2691 = vshrl.u32 %v2690, 5
    %v2692 = vand.u32 %v2690, 31
    %v2693 = vsub.s32 0, %v2692
    %v2694 = vsel %vm2688, %v2693, %v2692
    %vm2695 = vcmp.lt.s32.totalorder %v685, 0
    %v2696 = vsub.s32 0, %v685
    %v2697 = vsel %vm2695, %v2696, %v685
    %v2698 = vshrl.u32 %v2697, 5
    %v2699 = vand.u32 %v2697, 31
    %v2700 = vsub.s32 0, %v2699
    %v2701 = vsel %vm2695, %v2700, %v2699
    %vm2702 = vcmp.lt.s32.totalorder %v686, 0
    %v2703 = vsub.s32 0, %v686
    %v2704 = vsel %vm2702, %v2703, %v686
    %v2705 = vshrl.u32 %v2704, 5
    %v2706 = vand.u32 %v2704, 31
    %v2707 = vsub.s32 0, %v2706
    %v2708 = vsel %vm2702, %v2707, %v2706
    %vm2709 = vcmp.lt.s32.totalorder %v687, 0
    %v2710 = vsub.s32 0, %v687
    %v2711 = vsel %vm2709, %v2710, %v687
    %v2712 = vshrl.u32 %v2711, 5
    %v2713 = vand.u32 %v2711, 31
    %v2714 = vsub.s32 0, %v2713
    %v2715 = vsel %vm2709, %v2714, %v2713
    %vm2716 = vcmp.lt.s32.totalorder %v688, 0
    %v2717 = vsub.s32 0, %v688
    %v2718 = vsel %vm2716, %v2717, %v688
    %v2719 = vshrl.u32 %v2718, 5
    %v2720 = vand.u32 %v2718, 31
    %v2721 = vsub.s32 0, %v2720
    %v2722 = vsel %vm2716, %v2721, %v2720
    %vm2723 = vcmp.lt.s32.totalorder %v689, 0
    %v2724 = vsub.s32 0, %v689
    %v2725 = vsel %vm2723, %v2724, %v689
    %v2726 = vshrl.u32 %v2725, 5
    %v2727 = vand.u32 %v2725, 31
    %v2728 = vsub.s32 0, %v2727
    %v2729 = vsel %vm2723, %v2728, %v2727
    %vm2730 = vcmp.lt.s32.totalorder %v690, 0
    %v2731 = vsub.s32 0, %v690
    %v2732 = vsel %vm2730, %v2731, %v690
    %v2733 = vshrl.u32 %v2732, 5
    %v2734 = vand.u32 %v2732, 31
    %v2735 = vsub.s32 0, %v2734
    %v2736 = vsel %vm2730, %v2735, %v2734
    %vm2737 = vcmp.lt.s32.totalorder %v691, 0
    %v2738 = vsub.s32 0, %v691
    %v2739 = vsel %vm2737, %v2738, %v691
    %v2740 = vshrl.u32 %v2739, 5
    %v2741 = vand.u32 %v2739, 31
    %v2742 = vsub.s32 0, %v2741
    %v2743 = vsel %vm2737, %v2742, %v2741
    %vm2744 = vcmp.lt.s32.totalorder %v692, 0
    %v2745 = vsub.s32 0, %v692
    %v2746 = vsel %vm2744, %v2745, %v692
    %v2747 = vshrl.u32 %v2746, 5
    %v2748 = vand.u32 %v2746, 31
    %v2749 = vsub.s32 0, %v2748
    %v2750 = vsel %vm2744, %v2749, %v2748
    %vm2751 = vcmp.lt.s32.totalorder %v693, 0
    %v2752 = vsub.s32 0, %v693
    %v2753 = vsel %vm2751, %v2752, %v693
    %v2754 = vshrl.u32 %v2753, 5
    %v2755 = vand.u32 %v2753, 31
    %v2756 = vsub.s32 0, %v2755
    %v2757 = vsel %vm2751, %v2756, %v2755
    %vm2758 = vcmp.lt.s32.totalorder %v694, 0
    %v2759 = vsub.s32 0, %v694
    %v2760 = vsel %vm2758, %v2759, %v694
    %v2761 = vshrl.u32 %v2760, 5
    %v2762 = vand.u32 %v2760, 31
    %v2763 = vsub.s32 0, %v2762
    %v2764 = vsel %vm2758, %v2763, %v2762
    %vm2765 = vcmp.lt.s32.totalorder %v695, 0
    %v2766 = vsub.s32 0, %v695
    %v2767 = vsel %vm2765, %v2766, %v695
    %v2768 = vshrl.u32 %v2767, 5
    %v2769 = vand.u32 %v2767, 31
    %v2770 = vsub.s32 0, %v2769
    %v2771 = vsel %vm2765, %v2770, %v2769
    %vm2772 = vcmp.lt.s32.totalorder %v696, 0
    %v2773 = vsub.s32 0, %v696
    %v2774 = vsel %vm2772, %v2773, %v696
    %v2775 = vshrl.u32 %v2774, 5
    %v2776 = vand.u32 %v2774, 31
    %v2777 = vsub.s32 0, %v2776
    %v2778 = vsel %vm2772, %v2777, %v2776
    %vm2779 = vcmp.lt.s32.totalorder %v697, 0
    %v2780 = vsub.s32 0, %v697
    %v2781 = vsel %vm2779, %v2780, %v697
    %v2782 = vshrl.u32 %v2781, 5
    %v2783 = vand.u32 %v2781, 31
    %v2784 = vsub.s32 0, %v2783
    %v2785 = vsel %vm2779, %v2784, %v2783
    %vm2786 = vcmp.lt.s32.totalorder %v698, 0
    %v2787 = vsub.s32 0, %v698
    %v2788 = vsel %vm2786, %v2787, %v698
    %v2789 = vshrl.u32 %v2788, 5
    %v2790 = vand.u32 %v2788, 31
    %v2791 = vsub.s32 0, %v2790
    %v2792 = vsel %vm2786, %v2791, %v2790
    %vm2793 = vcmp.lt.s32.totalorder %v699, 0
    %v2794 = vsub.s32 0, %v699
    %v2795 = vsel %vm2793, %v2794, %v699
    %v2796 = vshrl.u32 %v2795, 5
    %v2797 = vand.u32 %v2795, 31
    %v2798 = vsub.s32 0, %v2797
    %v2799 = vsel %vm2793, %v2798, %v2797
    %vm2800 = vcmp.lt.s32.totalorder %v700, 0
    %v2801 = vsub.s32 0, %v700
    %v2802 = vsel %vm2800, %v2801, %v700
    %v2803 = vshrl.u32 %v2802, 5
    %v2804 = vand.u32 %v2802, 31
    %v2805 = vsub.s32 0, %v2804
    %v2806 = vsel %vm2800, %v2805, %v2804
    %vm2807 = vcmp.lt.s32.totalorder %v701, 0
    %v2808 = vsub.s32 0, %v701
    %v2809 = vsel %vm2807, %v2808, %v701
    %v2810 = vshrl.u32 %v2809, 5
    %v2811 = vand.u32 %v2809, 31
    %v2812 = vsub.s32 0, %v2811
    %v2813 = vsel %vm2807, %v2812, %v2811
    %vm2814 = vcmp.lt.s32.totalorder %v702, 0
    %v2815 = vsub.s32 0, %v702
    %v2816 = vsel %vm2814, %v2815, %v702
    %v2817 = vshrl.u32 %v2816, 5
    %v2818 = vand.u32 %v2816, 31
    %v2819 = vsub.s32 0, %v2818
    %v2820 = vsel %vm2814, %v2819, %v2818
    %vm2821 = vcmp.lt.s32.totalorder %v703, 0
    %v2822 = vsub.s32 0, %v703
    %v2823 = vsel %vm2821, %v2822, %v703
    %v2824 = vshrl.u32 %v2823, 5
    %v2825 = vand.u32 %v2823, 31
    %v2826 = vsub.s32 0, %v2825
    %v2827 = vsel %vm2821, %v2826, %v2825
    %vm2828 = vcmp.ne.s32.totalorder %v2610, 0
    %vm2829 = vcmp.ne.s32.totalorder %v2617, 0
    %vm2830 = vcmp.ne.s32.totalorder %v2624, 0
    %vm2831 = vcmp.ne.s32.totalorder %v2631, 0
    %vm2832 = vcmp.ne.s32.totalorder %v2638, 0
    %vm2833 = vcmp.ne.s32.totalorder %v2645, 0
    %vm2834 = vcmp.ne.s32.totalorder %v2652, 0
    %vm2835 = vcmp.ne.s32.totalorder %v2659, 0
    %vm2836 = vcmp.ne.s32.totalorder %v2666, 0
    %vm2837 = vcmp.ne.s32.totalorder %v2673, 0
    %vm2838 = vcmp.ne.s32.totalorder %v2680, 0
    %vm2839 = vcmp.ne.s32.totalorder %v2687, 0
    %vm2840 = vcmp.ne.s32.totalorder %v2694, 0
    %vm2841 = vcmp.ne.s32.totalorder %v2701, 0
    %vm2842 = vcmp.ne.s32.totalorder %v2708, 0
    %vm2843 = vcmp.ne.s32.totalorder %v2715, 0
    %vm2844 = vcmp.ne.s32.totalorder %v2722, 0
    %vm2845 = vcmp.ne.s32.totalorder %v2729, 0
    %vm2846 = vcmp.ne.s32.totalorder %v2736, 0
    %vm2847 = vcmp.ne.s32.totalorder %v2743, 0
    %vm2848 = vcmp.ne.s32.totalorder %v2750, 0
    %vm2849 = vcmp.ne.s32.totalorder %v2757, 0
    %vm2850 = vcmp.ne.s32.totalorder %v2764, 0
    %vm2851 = vcmp.ne.s32.totalorder %v2771, 0
    %vm2852 = vcmp.ne.s32.totalorder %v2778, 0
    %vm2853 = vcmp.ne.s32.totalorder %v2785, 0
    %vm2854 = vcmp.ne.s32.totalorder %v2792, 0
    %vm2855 = vcmp.ne.s32.totalorder %v2799, 0
    %vm2856 = vcmp.ne.s32.totalorder %v2806, 0
    %vm2857 = vcmp.ne.s32.totalorder %v2813, 0
    %vm2858 = vcmp.ne.s32.totalorder %v2820, 0
    %vm2859 = vcmp.ne.s32.totalorder %v2827, 0
    %vm2860 = vcmp.lt.s32.totalorder %v2610, 0
    %vm2861 = vcmp.lt.s32.totalorder %v2617, 0
    %vm2862 = vcmp.lt.s32.totalorder %v2624, 0
    %vm2863 = vcmp.lt.s32.totalorder %v2631, 0
    %vm2864 = vcmp.lt.s32.totalorder %v2638, 0
    %vm2865 = vcmp.lt.s32.totalorder %v2645, 0
    %vm2866 = vcmp.lt.s32.totalorder %v2652, 0
    %vm2867 = vcmp.lt.s32.totalorder %v2659, 0
    %vm2868 = vcmp.lt.s32.totalorder %v2666, 0
    %vm2869 = vcmp.lt.s32.totalorder %v2673, 0
    %vm2870 = vcmp.lt.s32.totalorder %v2680, 0
    %vm2871 = vcmp.lt.s32.totalorder %v2687, 0
    %vm2872 = vcmp.lt.s32.totalorder %v2694, 0
    %vm2873 = vcmp.lt.s32.totalorder %v2701, 0
    %vm2874 = vcmp.lt.s32.totalorder %v2708, 0
    %vm2875 = vcmp.lt.s32.totalorder %v2715, 0
    %vm2876 = vcmp.lt.s32.totalorder %v2722, 0
    %vm2877 = vcmp.lt.s32.totalorder %v2729, 0
    %vm2878 = vcmp.lt.s32.totalorder %v2736, 0
    %vm2879 = vcmp.lt.s32.totalorder %v2743, 0
    %vm2880 = vcmp.lt.s32.totalorder %v2750, 0
    %vm2881 = vcmp.lt.s32.totalorder %v2757, 0
    %vm2882 = vcmp.lt.s32.totalorder %v2764, 0
    %vm2883 = vcmp.lt.s32.totalorder %v2771, 0
    %vm2884 = vcmp.lt.s32.totalorder %v2778, 0
    %vm2885 = vcmp.lt.s32.totalorder %v2785, 0
    %vm2886 = vcmp.lt.s32.totalorder %v2792, 0
    %vm2887 = vcmp.lt.s32.totalorder %v2799, 0
    %vm2888 = vcmp.lt.s32.totalorder %v2806, 0
    %vm2889 = vcmp.lt.s32.totalorder %v2813, 0
    %vm2890 = vcmp.lt.s32.totalorder %v2820, 0
    %vm2891 = vcmp.lt.s32.totalorder %v2827, 0
    %vm2892 = vmand %vm2860, %vm2828
    %vm2893 = vmand %vm2861, %vm2829
    %vm2894 = vmand %vm2862, %vm2830
    %vm2895 = vmand %vm2863, %vm2831
    %vm2896 = vmand %vm2864, %vm2832
    %vm2897 = vmand %vm2865, %vm2833
    %vm2898 = vmand %vm2866, %vm2834
    %vm2899 = vmand %vm2867, %vm2835
    %vm2900 = vmand %vm2868, %vm2836
    %vm2901 = vmand %vm2869, %vm2837
    %vm2902 = vmand %vm2870, %vm2838
    %vm2903 = vmand %vm2871, %vm2839
    %vm2904 = vmand %vm2872, %vm2840
    %vm2905 = vmand %vm2873, %vm2841
    %vm2906 = vmand %vm2874, %vm2842
    %vm2907 = vmand %vm2875, %vm2843
    %vm2908 = vmand %vm2876, %vm2844
    %vm2909 = vmand %vm2877, %vm2845
    %vm2910 = vmand %vm2878, %vm2846
    %vm2911 = vmand %vm2879, %vm2847
    %vm2912 = vmand %vm2880, %vm2848
    %vm2913 = vmand %vm2881, %vm2849
    %vm2914 = vmand %vm2882, %vm2850
    %vm2915 = vmand %vm2883, %vm2851
    %vm2916 = vmand %vm2884, %vm2852
    %vm2917 = vmand %vm2885, %vm2853
    %vm2918 = vmand %vm2886, %vm2854
    %vm2919 = vmand %vm2887, %vm2855
    %vm2920 = vmand %vm2888, %vm2856
    %vm2921 = vmand %vm2889, %vm2857
    %vm2922 = vmand %vm2890, %vm2858
    %vm2923 = vmand %vm2891, %vm2859
    %v2924 = vadd.s32 %v2610, 32
    %v2925 = vadd.s32 %v2617, 32
    %v2926 = vadd.s32 %v2624, 32
    %v2927 = vadd.s32 %v2631, 32
    %v2928 = vadd.s32 %v2638, 32
    %v2929 = vadd.s32 %v2645, 32
    %v2930 = vadd.s32 %v2652, 32
    %v2931 = vadd.s32 %v2659, 32
    %v2932 = vadd.s32 %v2666, 32
    %v2933 = vadd.s32 %v2673, 32
    %v2934 = vadd.s32 %v2680, 32
    %v2935 = vadd.s32 %v2687, 32
    %v2936 = vadd.s32 %v2694, 32
    %v2937 = vadd.s32 %v2701, 32
    %v2938 = vadd.s32 %v2708, 32
    %v2939 = vadd.s32 %v2715, 32
    %v2940 = vadd.s32 %v2722, 32
    %v2941 = vadd.s32 %v2729, 32
    %v2942 = vadd.s32 %v2736, 32
    %v2943 = vadd.s32 %v2743, 32
    %v2944 = vadd.s32 %v2750, 32
    %v2945 = vadd.s32 %v2757, 32
    %v2946 = vadd.s32 %v2764, 32
    %v2947 = vadd.s32 %v2771, 32
    %v2948 = vadd.s32 %v2778, 32
    %v2949 = vadd.s32 %v2785, 32
    %v2950 = vadd.s32 %v2792, 32
    %v2951 = vadd.s32 %v2799, 32
    %v2952 = vadd.s32 %v2806, 32
    %v2953 = vadd.s32 %v2813, 32
    %v2954 = vadd.s32 %v2820, 32
    %v2955 = vadd.s32 %v2827, 32
    %v2956 = vsel %vm2892, %v2924, %v2610
    %v2957 = vsel %vm2893, %v2925, %v2617
    %v2958 = vsel %vm2894, %v2926, %v2624
    %v2959 = vsel %vm2895, %v2927, %v2631
    %v2960 = vsel %vm2896, %v2928, %v2638
    %v2961 = vsel %vm2897, %v2929, %v2645
    %v2962 = vsel %vm2898, %v2930, %v2652
    %v2963 = vsel %vm2899, %v2931, %v2659
    %v2964 = vsel %vm2900, %v2932, %v2666
    %v2965 = vsel %vm2901, %v2933, %v2673
    %v2966 = vsel %vm2902, %v2934, %v2680
    %v2967 = vsel %vm2903, %v2935, %v2687
    %v2968 = vsel %vm2904, %v2936, %v2694
    %v2969 = vsel %vm2905, %v2937, %v2701
    %v2970 = vsel %vm2906, %v2938, %v2708
    %v2971 = vsel %vm2907, %v2939, %v2715
    %v2972 = vsel %vm2908, %v2940, %v2722
    %v2973 = vsel %vm2909, %v2941, %v2729
    %v2974 = vsel %vm2910, %v2942, %v2736
    %v2975 = vsel %vm2911, %v2943, %v2743
    %v2976 = vsel %vm2912, %v2944, %v2750
    %v2977 = vsel %vm2913, %v2945, %v2757
    %v2978 = vsel %vm2914, %v2946, %v2764
    %v2979 = vsel %vm2915, %v2947, %v2771
    %v2980 = vsel %vm2916, %v2948, %v2778
    %v2981 = vsel %vm2917, %v2949, %v2785
    %v2982 = vsel %vm2918, %v2950, %v2792
    %v2983 = vsel %vm2919, %v2951, %v2799
    %v2984 = vsel %vm2920, %v2952, %v2806
    %v2985 = vsel %vm2921, %v2953, %v2813
    %v2986 = vsel %vm2922, %v2954, %v2820
    %v2987 = vsel %vm2923, %v2955, %v2827
    %vm2988 = vcmp.eq.s32.totalorder %v2956, %v328
    %vm2989 = vcmp.eq.s32.totalorder %v2957, %v328
    %vm2990 = vcmp.eq.s32.totalorder %v2958, %v328
    %vm2991 = vcmp.eq.s32.totalorder %v2959, %v328
    %vm2992 = vcmp.eq.s32.totalorder %v2960, %v328
    %vm2993 = vcmp.eq.s32.totalorder %v2961, %v328
    %vm2994 = vcmp.eq.s32.totalorder %v2962, %v328
    %vm2995 = vcmp.eq.s32.totalorder %v2963, %v328
    %vm2996 = vcmp.eq.s32.totalorder %v2964, %v328
    %vm2997 = vcmp.eq.s32.totalorder %v2965, %v328
    %vm2998 = vcmp.eq.s32.totalorder %v2966, %v328
    %vm2999 = vcmp.eq.s32.totalorder %v2967, %v328
    %vm3000 = vcmp.eq.s32.totalorder %v2968, %v328
    %vm3001 = vcmp.eq.s32.totalorder %v2969, %v328
    %vm3002 = vcmp.eq.s32.totalorder %v2970, %v328
    %vm3003 = vcmp.eq.s32.totalorder %v2971, %v328
    %vm3004 = vcmp.eq.s32.totalorder %v2972, %v328
    %vm3005 = vcmp.eq.s32.totalorder %v2973, %v328
    %vm3006 = vcmp.eq.s32.totalorder %v2974, %v328
    %vm3007 = vcmp.eq.s32.totalorder %v2975, %v328
    %vm3008 = vcmp.eq.s32.totalorder %v2976, %v328
    %vm3009 = vcmp.eq.s32.totalorder %v2977, %v328
    %vm3010 = vcmp.eq.s32.totalorder %v2978, %v328
    %vm3011 = vcmp.eq.s32.totalorder %v2979, %v328
    %vm3012 = vcmp.eq.s32.totalorder %v2980, %v328
    %vm3013 = vcmp.eq.s32.totalorder %v2981, %v328
    %vm3014 = vcmp.eq.s32.totalorder %v2982, %v328
    %vm3015 = vcmp.eq.s32.totalorder %v2983, %v328
    %vm3016 = vcmp.eq.s32.totalorder %v2984, %v328
    %vm3017 = vcmp.eq.s32.totalorder %v2985, %v328
    %vm3018 = vcmp.eq.s32.totalorder %v2986, %v328
    %vm3019 = vcmp.eq.s32.totalorder %v2987, %v328
    %v3020 = vsel %vm2988, 1, 0
    %v3021 = vsel %vm2989, 1, 0
    %v3022 = vsel %vm2990, 1, 0
    %v3023 = vsel %vm2991, 1, 0
    %v3024 = vsel %vm2992, 1, 0
    %v3025 = vsel %vm2993, 1, 0
    %v3026 = vsel %vm2994, 1, 0
    %v3027 = vsel %vm2995, 1, 0
    %v3028 = vsel %vm2996, 1, 0
    %v3029 = vsel %vm2997, 1, 0
    %v3030 = vsel %vm2998, 1, 0
    %v3031 = vsel %vm2999, 1, 0
    %v3032 = vsel %vm3000, 1, 0
    %v3033 = vsel %vm3001, 1, 0
    %v3034 = vsel %vm3002, 1, 0
    %v3035 = vsel %vm3003, 1, 0
    %v3036 = vsel %vm3004, 1, 0
    %v3037 = vsel %vm3005, 1, 0
    %v3038 = vsel %vm3006, 1, 0
    %v3039 = vsel %vm3007, 1, 0
    %v3040 = vsel %vm3008, 1, 0
    %v3041 = vsel %vm3009, 1, 0
    %v3042 = vsel %vm3010, 1, 0
    %v3043 = vsel %vm3011, 1, 0
    %v3044 = vsel %vm3012, 1, 0
    %v3045 = vsel %vm3013, 1, 0
    %v3046 = vsel %vm3014, 1, 0
    %v3047 = vsel %vm3015, 1, 0
    %v3048 = vsel %vm3016, 1, 0
    %v3049 = vsel %vm3017, 1, 0
    %v3050 = vsel %vm3018, 1, 0
    %v3051 = vsel %vm3019, 1, 0
    %v3052 = vcvt.s32.f32 %v3020
    %v3053 = vcvt.s32.f32 %v3021
    %v3054 = vcvt.s32.f32 %v3022
    %v3055 = vcvt.s32.f32 %v3023
    %v3056 = vcvt.s32.f32 %v3024
    %v3057 = vcvt.s32.f32 %v3025
    %v3058 = vcvt.s32.f32 %v3026
    %v3059 = vcvt.s32.f32 %v3027
    %v3060 = vcvt.s32.f32 %v3028
    %v3061 = vcvt.s32.f32 %v3029
    %v3062 = vcvt.s32.f32 %v3030
    %v3063 = vcvt.s32.f32 %v3031
    %v3064 = vcvt.s32.f32 %v3032
    %v3065 = vcvt.s32.f32 %v3033
    %v3066 = vcvt.s32.f32 %v3034
    %v3067 = vcvt.s32.f32 %v3035
    %v3068 = vcvt.s32.f32 %v3036
    %v3069 = vcvt.s32.f32 %v3037
    %v3070 = vcvt.s32.f32 %v3038
    %v3071 = vcvt.s32.f32 %v3039
    %v3072 = vcvt.s32.f32 %v3040
    %v3073 = vcvt.s32.f32 %v3041
    %v3074 = vcvt.s32.f32 %v3042
    %v3075 = vcvt.s32.f32 %v3043
    %v3076 = vcvt.s32.f32 %v3044
    %v3077 = vcvt.s32.f32 %v3045
    %v3078 = vcvt.s32.f32 %v3046
    %v3079 = vcvt.s32.f32 %v3047
    %v3080 = vcvt.s32.f32 %v3048
    %v3081 = vcvt.s32.f32 %v3049
    %v3082 = vcvt.s32.f32 %v3050
    %v3083 = vcvt.s32.f32 %v3051
    %vm3084 = vcmp.lt.s32.totalorder %v328, 0
    %v3085 = vsub.s32 0, %v328
    %v3086 = vsel %vm3084, %v3085, %v328
    %v3087 = vshrl.u32 %v3086, 5
    %v3088 = vand.u32 %v3086, 31
    %v3089 = vsub.s32 0, %v3088
    %v3090 = vsel %vm3084, %v3089, %v3088
    %vm3091 = vcmp.lt.s32.totalorder %v1184, 0
    %v3092 = vsub.s32 0, %v1184
    %v3093 = vsel %vm3091, %v3092, %v1184
    %v3094 = vshrl.u32 %v3093, 5
    %v3095 = vand.u32 %v3093, 31
    %v3096 = vsub.s32 0, %v3095
    %v3097 = vsel %vm3091, %v3096, %v3095
    %vm3098 = vcmp.ne.s32.totalorder %v3090, 0
    %vm3099 = vcmp.ne.s32.totalorder %v3097, 0
    %vm3100 = vcmp.lt.s32.totalorder %v3090, 0
    %vm3101 = vcmp.lt.s32.totalorder %v3097, 0
    %vm3102 = vmand %vm3100, %vm3098
    %vm3103 = vmand %vm3101, %vm3099
    %v3104 = vadd.s32 %v3090, 32
    %v3105 = vadd.s32 %v3097, 32
    %v3106 = vsel %vm3102, %v3104, %v3090
    %v3107 = vsel %vm3103, %v3105, %v3097
    %vm3108 = vcmp.eq.s32.totalorder %v3106, %v326
    %vm3109 = vcmp.eq.s32.totalorder %v3107, %v326
    %vm3110 = vcmp.eq.s32.totalorder %v3106, %v673
    %vm3111 = vcmp.eq.s32.totalorder %v3107, %v673
    %vm3112 = vcmp.eq.s32.totalorder %v3106, %v674
    %vm3113 = vcmp.eq.s32.totalorder %v3107, %v674
    %vm3114 = vcmp.eq.s32.totalorder %v3106, %v675
    %vm3115 = vcmp.eq.s32.totalorder %v3107, %v675
    %v3116 = vsel %vm3108, 1, 0
    %v3117 = vsel %vm3109, 1, 0
    %v3118 = vsel %vm3110, 1, 0
    %v3119 = vsel %vm3111, 1, 0
    %v3120 = vsel %vm3112, 1, 0
    %v3121 = vsel %vm3113, 1, 0
    %v3122 = vsel %vm3114, 1, 0
    %v3123 = vsel %vm3115, 1, 0
    %v3124 = vcvt.s32.f32 %v3116
    %v3125 = vcvt.s32.f32 %v3117
    %v3126 = vcvt.s32.f32 %v3118
    %v3127 = vcvt.s32.f32 %v3119
    %v3128 = vcvt.s32.f32 %v3120
    %v3129 = vcvt.s32.f32 %v3121
    %v3130 = vcvt.s32.f32 %v3122
    %v3131 = vcvt.s32.f32 %v3123
    %v3132 = vrot.slane %v2194, 4
    %v3133 = vadd.f32 %v2194, %v3132
    %v3134 = vrot.slane %v3133, 2
    %v3135 = vadd.f32 %v3133, %v3134
    %v3136 = vrot.slane %v3135, 1
    %v3137 = vadd.f32 %v3135, %v3136
    %v3138 = vrot.slane %v2196, 4
    %v3139 = vadd.f32 %v2196, %v3138
    %v3140 = vrot.slane %v3139, 2
    %v3141 = vadd.f32 %v3139, %v3140
    %v3142 = vrot.slane %v3141, 1
    %v3143 = vadd.f32 %v3141, %v3142
    %v3144 = vrot.slane %v2596, 4
    %v3145 = vadd.f32 %v2596, %v3144
    %v3146 = vrot.slane %v3145, 2
    %v3147 = vadd.f32 %v3145, %v3146
    %v3148 = vrot.slane %v3147, 1
    %v3149 = vadd.f32 %v3147, %v3148
    %v3150 = vrot.slane %v2598, 4
    %v3151 = vadd.f32 %v2598, %v3150
    %v3152 = vrot.slane %v3151, 2
    %v3153 = vadd.f32 %v3151, %v3152
    %v3154 = vrot.slane %v3153, 1
    %v3155 = vadd.f32 %v3153, %v3154
    %v3156 = vadd.f32 %v3137, 0.0
    %v3157 = vadd.f32 %v3143, 0.0
    %v3158 = vadd.f32 %v3156, %v3149
    %v3159 = vadd.f32 %v3157, %v3155
    %v3160 = vmul.f32 %v2194, %v2194
    %v3161 = vmul.f32 %v2196, %v2196
    %v3162 = vrot.slane %v3160, 4
    %v3163 = vadd.f32 %v3160, %v3162
    %v3164 = vrot.slane %v3163, 2
    %v3165 = vadd.f32 %v3163, %v3164
    %v3166 = vrot.slane %v3165, 1
    %v3167 = vadd.f32 %v3165, %v3166
    %v3168 = vrot.slane %v3161, 4
    %v3169 = vadd.f32 %v3161, %v3168
    %v3170 = vrot.slane %v3169, 2
    %v3171 = vadd.f32 %v3169, %v3170
    %v3172 = vrot.slane %v3171, 1
    %v3173 = vadd.f32 %v3171, %v3172
    %v3174 = vmul.f32 %v2596, %v2596
    %v3175 = vmul.f32 %v2598, %v2598
    %v3176 = vrot.slane %v3174, 4
    %v3177 = vadd.f32 %v3174, %v3176
    %v3178 = vrot.slane %v3177, 2
    %v3179 = vadd.f32 %v3177, %v3178
    %v3180 = vrot.slane %v3179, 1
    %v3181 = vadd.f32 %v3179, %v3180
    %v3182 = vrot.slane %v3175, 4
    %v3183 = vadd.f32 %v3175, %v3182
    %v3184 = vrot.slane %v3183, 2
    %v3185 = vadd.f32 %v3183, %v3184
    %v3186 = vrot.slane %v3185, 1
    %v3187 = vadd.f32 %v3185, %v3186
    %v3188 = vadd.f32 %v3167, 0.0
    %v3189 = vadd.f32 %v3173, 0.0
    %v3190 = vadd.f32 %v3188, %v3181
    %v3191 = vadd.f32 %v3189, %v3187
    %3192 = vmatprep.subr.mxu0 0.0
    %3193 = vmatpush1.msra.mxu0 %v3067
    %3194 = vmatprep.subr.mxu0 0.0
    %3195 = vmatpush1.msra.mxu0 %v3066
    %3196 = vmatprep.subr.mxu0 0.0
    %3197 = vmatpush1.msra.mxu0 %v3065
    %3198 = vmatprep.subr.mxu0 0.0
    %3199 = vmatpush1.msra.mxu0 %v3064
    %3200 = vmatprep.subr.mxu0 0.0
    %3201 = vmatpush1.msra.mxu0 %v3063
    %3202 = vmatprep.subr.mxu0 0.0
    %3203 = vmatpush1.msra.mxu0 %v3062
    %3204 = vmatprep.subr.mxu0 0.0
    %3205 = vmatpush1.msra.mxu0 %v3061
    %3206 = vmatprep.subr.mxu0 0.0
    %3207 = vmatpush1.msra.mxu0 %v3060
    %3208 = vmatprep.subr.mxu0 0.0
    %3209 = vmatpush1.msra.mxu0 %v3059
    %3210 = vmatprep.subr.mxu0 0.0
    %3211 = vmatpush1.msra.mxu0 %v3058
    %3212 = vmatprep.subr.mxu0 0.0
    %3213 = vmatpush1.msra.mxu0 %v3057
    %3214 = vmatprep.subr.mxu0 0.0
    %3215 = vmatpush1.msra.mxu0 %v3056
    %3216 = vmatprep.subr.mxu0 0.0
    %3217 = vmatpush1.msra.mxu0 %v3055
    %3218 = vmatprep.subr.mxu0 0.0
    %3219 = vmatpush1.msra.mxu0 %v3054
    %3220 = vmatprep.subr.mxu0 0.0
    %3221 = vmatpush1.msra.mxu0 %v3053
    %3222 = vmatprep.subr.mxu0 0.0
    %3223 = vmatpush1.msra.mxu0 %v3052
    %3224 = vmatprep.subr.mxu0 0.0
    %3225 = vmatpush2.msra.mxu0 %v3083
    %3226 = vmatprep.subr.mxu0 0.0
    %3227 = vmatpush2.msra.mxu0 %v3082
    %3228 = vmatprep.subr.mxu0 0.0
    %3229 = vmatpush2.msra.mxu0 %v3081
    %3230 = vmatprep.subr.mxu0 0.0
    %3231 = vmatpush2.msra.mxu0 %v3080
    %3232 = vmatprep.subr.mxu0 0.0
    %3233 = vmatpush2.msra.mxu0 %v3079
    %3234 = vmatprep.subr.mxu0 0.0
    %3235 = vmatpush2.msra.mxu0 %v3078
    %3236 = vmatprep.subr.mxu0 0.0
    %3237 = vmatpush2.msra.mxu0 %v3077
    %3238 = vmatprep.subr.mxu0 0.0
    %3239 = vmatpush2.msra.mxu0 %v3076
    %3240 = vmatprep.subr.mxu0 0.0
    %3241 = vmatpush2.msra.mxu0 %v3075
    %3242 = vmatprep.subr.mxu0 0.0
    %3243 = vmatpush2.msra.mxu0 %v3074
    %3244 = vmatprep.subr.mxu0 0.0
    %3245 = vmatpush2.msra.mxu0 %v3073
    %3246 = vmatprep.subr.mxu0 0.0
    %3247 = vmatpush2.msra.mxu0 %v3072
    %3248 = vmatprep.subr.mxu0 0.0
    %3249 = vmatpush2.msra.mxu0 %v3071
    %3250 = vmatprep.subr.mxu0 0.0
    %3251 = vmatpush2.msra.mxu0 %v3070
    %3252 = vmatprep.subr.mxu0 0.0
    %3253 = vmatpush2.msra.mxu0 %v3069
    %3254 = vmatprep.subr.mxu0 0.0
    %3255 = vmatpush2.msra.mxu0 %v3068
    %3256 = vmatprep.mubr.f32.mxu0 %v3159
    %3257 = vmatmul.mubr.f32.gmra.mxu0 %v3158
    %v3258 = vpop.f32.mrf.mxu0
    %v3259 = vadd.f32 0.0, %v3258
    %v3260 = vpop.f32.mrf.mxu0
    %3261 = vdwg.mxu0
    %3262 = vmatprep.subr.mxu0 0.0
    %3263 = vmatpush1.msra.mxu0 %v3067
    %3264 = vmatprep.subr.mxu0 0.0
    %3265 = vmatpush1.msra.mxu0 %v3066
    %3266 = vmatprep.subr.mxu0 0.0
    %3267 = vmatpush1.msra.mxu0 %v3065
    %3268 = vmatprep.subr.mxu0 0.0
    %3269 = vmatpush1.msra.mxu0 %v3064
    %3270 = vmatprep.subr.mxu0 0.0
    %3271 = vmatpush1.msra.mxu0 %v3063
    %3272 = vmatprep.subr.mxu0 0.0
    %3273 = vmatpush1.msra.mxu0 %v3062
    %3274 = vmatprep.subr.mxu0 0.0
    %3275 = vmatpush1.msra.mxu0 %v3061
    %3276 = vmatprep.subr.mxu0 0.0
    %3277 = vmatpush1.msra.mxu0 %v3060
    %3278 = vmatprep.subr.mxu0 0.0
    %3279 = vmatpush1.msra.mxu0 %v3059
    %3280 = vmatprep.subr.mxu0 0.0
    %3281 = vmatpush1.msra.mxu0 %v3058
    %3282 = vmatprep.subr.mxu0 0.0
    %3283 = vmatpush1.msra.mxu0 %v3057
    %3284 = vmatprep.subr.mxu0 0.0
    %3285 = vmatpush1.msra.mxu0 %v3056
    %3286 = vmatprep.subr.mxu0 0.0
    %3287 = vmatpush1.msra.mxu0 %v3055
    %3288 = vmatprep.subr.mxu0 0.0
    %3289 = vmatpush1.msra.mxu0 %v3054
    %3290 = vmatprep.subr.mxu0 0.0
    %3291 = vmatpush1.msra.mxu0 %v3053
    %3292 = vmatprep.subr.mxu0 0.0
    %3293 = vmatpush1.msra.mxu0 %v3052
    %3294 = vmatprep.subr.mxu0 0.0
    %3295 = vmatpush2.msra.mxu0 %v3083
    %3296 = vmatprep.subr.mxu0 0.0
    %3297 = vmatpush2.msra.mxu0 %v3082
    %3298 = vmatprep.subr.mxu0 0.0
    %3299 = vmatpush2.msra.mxu0 %v3081
    %3300 = vmatprep.subr.mxu0 0.0
    %3301 = vmatpush2.msra.mxu0 %v3080
    %3302 = vmatprep.subr.mxu0 0.0
    %3303 = vmatpush2.msra.mxu0 %v3079
    %3304 = vmatprep.subr.mxu0 0.0
    %3305 = vmatpush2.msra.mxu0 %v3078
    %3306 = vmatprep.subr.mxu0 0.0
    %3307 = vmatpush2.msra.mxu0 %v3077
    %3308 = vmatprep.subr.mxu0 0.0
    %3309 = vmatpush2.msra.mxu0 %v3076
    %3310 = vmatprep.subr.mxu0 0.0
    %3311 = vmatpush2.msra.mxu0 %v3075
    %3312 = vmatprep.subr.mxu0 0.0
    %3313 = vmatpush2.msra.mxu0 %v3074
    %3314 = vmatprep.subr.mxu0 0.0
    %3315 = vmatpush2.msra.mxu0 %v3073
    %3316 = vmatprep.subr.mxu0 0.0
    %3317 = vmatpush2.msra.mxu0 %v3072
    %3318 = vmatprep.subr.mxu0 0.0
    %3319 = vmatpush2.msra.mxu0 %v3071
    %3320 = vmatprep.subr.mxu0 0.0
    %3321 = vmatpush2.msra.mxu0 %v3070
    %3322 = vmatprep.subr.mxu0 0.0
    %3323 = vmatpush2.msra.mxu0 %v3069
    %3324 = vmatprep.subr.mxu0 0.0
    %3325 = vmatpush2.msra.mxu0 %v3068
    %3326 = vmatprep.mubr.f32.mxu0 %v3191
    %3327 = vmatmul.mubr.f32.gmra.mxu0 %v3190
    %v3328 = vpop.f32.mrf.mxu0
    %v3329 = vadd.f32 0.0, %v3328
    %v3330 = vpop.f32.mrf.mxu0
    %3331 = vdwg.mxu0
    %v3332 = vrcp.pop 128.0
    %v3333 = vmul.f32 %v3259, %v3332
    %v3334 = vmul.f32 %v3329, %v3332
    %v3335 = vmul.f32 %v3333, %v3333
    %v3336 = vsub.f32 %v3334, %v3335
    %v3337 = vadd.f32 %v3336, 1e-05
    %v3338 = vrsqrt.pop %v3337
    %v3339 = vmul.f32 %v2602, %v3338
    %v3340 = vmul.f32 %v3333, %v3339
    %v3341 = vsub.f32 %v2603, %v3340
    %vm3342 = vcmask 261120
    %v3344 = vsel %vm3342, %v3339, 0
    %3346 = vmatprep.subr.mxu0 0.0
    %3347 = vmatpush1.msra.mxu0 0.0
    %3348 = vmatprep.subr.mxu0 0.0
    %3349 = vmatpush1.msra.mxu0 0.0
    %3350 = vmatprep.subr.mxu0 0.0
    %3351 = vmatpush1.msra.mxu0 0.0
    %3352 = vmatprep.subr.mxu0 0.0
    %3353 = vmatpush1.msra.mxu0 0.0
    %3354 = vmatprep.subr.mxu0 0.0
    %3355 = vmatpush1.msra.mxu0 0.0
    %3356 = vmatprep.subr.mxu0 0.0
    %3357 = vmatpush1.msra.mxu0 0.0
    %3358 = vmatprep.subr.mxu0 0.0
    %3359 = vmatpush1.msra.mxu0 0.0
    %3360 = vmatprep.subr.mxu0 0.0
    %3361 = vmatpush1.msra.mxu0 0.0
    %3362 = vmatprep.subr.mxu0 0.0
    %3363 = vmatpush1.msra.mxu0 0.0
    %3364 = vmatprep.subr.mxu0 0.0
    %3365 = vmatpush1.msra.mxu0 0.0
    %3366 = vmatprep.subr.mxu0 0.0
    %3367 = vmatpush1.msra.mxu0 0.0
    %3368 = vmatprep.subr.mxu0 0.0
    %3369 = vmatpush1.msra.mxu0 0.0
    %3370 = vmatprep.subr.mxu0 %v3131
    %3371 = vmatpush1.msra.mxu0 %v3130
    %3372 = vmatprep.subr.mxu0 %v3129
    %3373 = vmatpush1.msra.mxu0 %v3128
    %3374 = vmatprep.subr.mxu0 %v3127
    %3375 = vmatpush1.msra.mxu0 %v3126
    %3376 = vmatprep.subr.mxu0 %v3125
    %3377 = vmatpush1.msra.mxu0 %v3124
    %3378 = vmatprep.subr.mxu0 0.0
    %3379 = vmatpush2.msra.mxu0 0.0
    %3380 = vmatprep.subr.mxu0 0.0
    %3381 = vmatpush2.msra.mxu0 0.0
    %3382 = vmatprep.subr.mxu0 0.0
    %3383 = vmatpush2.msra.mxu0 0.0
    %3384 = vmatprep.subr.mxu0 0.0
    %3385 = vmatpush2.msra.mxu0 0.0
    %3386 = vmatprep.subr.mxu0 0.0
    %3387 = vmatpush2.msra.mxu0 0.0
    %3388 = vmatprep.subr.mxu0 0.0
    %3389 = vmatpush2.msra.mxu0 0.0
    %3390 = vmatprep.subr.mxu0 0.0
    %3391 = vmatpush2.msra.mxu0 0.0
    %3392 = vmatprep.subr.mxu0 0.0
    %3393 = vmatpush2.msra.mxu0 0.0
    %3394 = vmatprep.subr.mxu0 0.0
    %3395 = vmatpush2.msra.mxu0 0.0
    %3396 = vmatprep.subr.mxu0 0.0
    %3397 = vmatpush2.msra.mxu0 0.0
    %3398 = vmatprep.subr.mxu0 0.0
    %3399 = vmatpush2.msra.mxu0 0.0
    %3400 = vmatprep.subr.mxu0 0.0
    %3401 = vmatpush2.msra.mxu0 0.0
    %3402 = vmatprep.subr.mxu0 0.0
    %3403 = vmatpush2.msra.mxu0 0.0
    %3404 = vmatprep.subr.mxu0 0.0
    %3405 = vmatpush2.msra.mxu0 0.0
    %3406 = vmatprep.subr.mxu0 0.0
    %3407 = vmatpush2.msra.mxu0 0.0
    %3408 = vmatprep.subr.mxu0 0.0
    %3409 = vmatpush2.msra.mxu0 0.0
    %3410 = vmatprep.mubr.f32.mxu0 0.0
    %3411 = vmatmul.mubr.f32.gmra.mxu0 %v3344
    %v3412 = vpop.f32.mrf.mxu0
    %v3413 = vadd.f32 0.0, %v3412
    %v3414 = vpop.f32.mrf.mxu0
    %v3415 = vadd.f32 0.0, %v3414
    %3416 = vdwg.mxu0
    %v3418 = vsel %vm3342, %v3341, 0
    %3420 = vmatprep.subr.mxu0 0.0
    %3421 = vmatpush1.msra.mxu0 0.0
    %3422 = vmatprep.subr.mxu0 0.0
    %3423 = vmatpush1.msra.mxu0 0.0
    %3424 = vmatprep.subr.mxu0 0.0
    %3425 = vmatpush1.msra.mxu0 0.0
    %3426 = vmatprep.subr.mxu0 0.0
    %3427 = vmatpush1.msra.mxu0 0.0
    %3428 = vmatprep.subr.mxu0 0.0
    %3429 = vmatpush1.msra.mxu0 0.0
    %3430 = vmatprep.subr.mxu0 0.0
    %3431 = vmatpush1.msra.mxu0 0.0
    %3432 = vmatprep.subr.mxu0 0.0
    %3433 = vmatpush1.msra.mxu0 0.0
    %3434 = vmatprep.subr.mxu0 0.0
    %3435 = vmatpush1.msra.mxu0 0.0
    %3436 = vmatprep.subr.mxu0 0.0
    %3437 = vmatpush1.msra.mxu0 0.0
    %3438 = vmatprep.subr.mxu0 0.0
    %3439 = vmatpush1.msra.mxu0 0.0
    %3440 = vmatprep.subr.mxu0 0.0
    %3441 = vmatpush1.msra.mxu0 0.0
    %3442 = vmatprep.subr.mxu0 0.0
    %3443 = vmatpush1.msra.mxu0 0.0
    %3444 = vmatprep.subr.mxu0 %v3131
    %3445 = vmatpush1.msra.mxu0 %v3130
    %3446 = vmatprep.subr.mxu0 %v3129
    %3447 = vmatpush1.msra.mxu0 %v3128
    %3448 = vmatprep.subr.mxu0 %v3127
    %3449 = vmatpush1.msra.mxu0 %v3126
    %3450 = vmatprep.subr.mxu0 %v3125
    %3451 = vmatpush1.msra.mxu0 %v3124
    %3452 = vmatprep.subr.mxu0 0.0
    %3453 = vmatpush2.msra.mxu0 0.0
    %3454 = vmatprep.subr.mxu0 0.0
    %3455 = vmatpush2.msra.mxu0 0.0
    %3456 = vmatprep.subr.mxu0 0.0
    %3457 = vmatpush2.msra.mxu0 0.0
    %3458 = vmatprep.subr.mxu0 0.0
    %3459 = vmatpush2.msra.mxu0 0.0
    %3460 = vmatprep.subr.mxu0 0.0
    %3461 = vmatpush2.msra.mxu0 0.0
    %3462 = vmatprep.subr.mxu0 0.0
    %3463 = vmatpush2.msra.mxu0 0.0
    %3464 = vmatprep.subr.mxu0 0.0
    %3465 = vmatpush2.msra.mxu0 0.0
    %3466 = vmatprep.subr.mxu0 0.0
    %3467 = vmatpush2.msra.mxu0 0.0
    %3468 = vmatprep.subr.mxu0 0.0
    %3469 = vmatpush2.msra.mxu0 0.0
    %3470 = vmatprep.subr.mxu0 0.0
    %3471 = vmatpush2.msra.mxu0 0.0
    %3472 = vmatprep.subr.mxu0 0.0
    %3473 = vmatpush2.msra.mxu0 0.0
    %3474 = vmatprep.subr.mxu0 0.0
    %3475 = vmatpush2.msra.mxu0 0.0
    %3476 = vmatprep.subr.mxu0 0.0
    %3477 = vmatpush2.msra.mxu0 0.0
    %3478 = vmatprep.subr.mxu0 0.0
    %3479 = vmatpush2.msra.mxu0 0.0
    %3480 = vmatprep.subr.mxu0 0.0
    %3481 = vmatpush2.msra.mxu0 0.0
    %3482 = vmatprep.subr.mxu0 0.0
    %3483 = vmatpush2.msra.mxu0 0.0
    %3484 = vmatprep.mubr.f32.mxu0 0.0
    %3485 = vmatmul.mubr.f32.gmra.mxu0 %v3418
    %v3486 = vpop.f32.mrf.mxu0
    %v3487 = vadd.f32 0.0, %v3486
    %v3488 = vpop.f32.mrf.mxu0
    %v3489 = vadd.f32 0.0, %v3488
    %3490 = vdwg.mxu0
    %v3491 = vlaneseq
    %v3492 = vshrl.u32 %v3491, 7
    %v3493 = vsub.s32 0, %v3492
    %v3494 = vrot.slane %v3413, %v3493
    %v3495 = vlaneseq
    %v3496 = vshrl.u32 %v3495, 7
    %v3497 = vsub.s32 0, %v3496
    %v3498 = vrot.slane %v3415, %v3497
    %v3499 = vmul.f32 %v2194, %v3494
    %v3500 = vmul.f32 %v2196, %v3498
    %v3501 = vlaneseq
    %v3502 = vshrl.u32 %v3501, 7
    %v3503 = vsub.s32 0, %v3502
    %v3504 = vrot.slane %v3487, %v3503
    %v3505 = vlaneseq
    %v3506 = vshrl.u32 %v3505, 7
    %v3507 = vsub.s32 0, %v3506
    %v3508 = vrot.slane %v3489, %v3507
    %v3509 = vadd.f32 %v3499, %v3504
    %v3510 = vadd.f32 %v3500, %v3508
    %v3511 = vmax.f32 %v3509, 0.0
    %v3512 = vmax.f32 %v3510, 0.0
    %v3513 = vmul.f32 %v2596, %v3494
    %v3514 = vmul.f32 %v2598, %v3498
    %v3515 = vadd.f32 %v3513, %v3504
    %v3516 = vadd.f32 %v3514, %v3508
    %v3517 = vmax.f32 %v3515, 0.0
    %v3518 = vmax.f32 %v3516, 0.0
    %v3519 = vpack.c.bf16 %v3511, %v3511
    %v3520 = vpack.c.bf16 %v3512, %v3512
    %v3521 = vpack.c.bf16 %v3517, %v3517
    %v3522 = vpack.c.bf16 %v3518, %v3518
    %v3523 = vmul.u32 %v328, 2
    %vm3524 = vcmp.eq.s32.totalorder %v326, %v3523
    %vm3525 = vcmp.eq.s32.totalorder %v673, %v3523
    %v3526 = vsel %vm3524, 1, 0
    %v3527 = vsel %vm3525, 1, 0
    %v3528 = vcvt.s32.f32 %v3526
    %v3529 = vcvt.s32.f32 %v3527
    %v3530 = vpack.c.bf16 %v3529, %v3528
    %v3531 = vadd.s32 %v3523, 1
    %vm3532 = vcmp.eq.s32.totalorder %v326, %v3531
    %vm3533 = vcmp.eq.s32.totalorder %v673, %v3531
    %v3534 = vsel %vm3532, 1, 0
    %v3535 = vsel %vm3533, 1, 0
    %v3536 = vcvt.s32.f32 %v3534
    %v3537 = vcvt.s32.f32 %v3535
    %v3538 = vpack.c.bf16 %v3537, %v3536
    %vm3539 = vcmask 64512
    %v3541 = vsel %vm3539, %v3538, 0
    %vm3543 = vcmask 1043456
    %v3545 = vsel %vm3543, %v3521, 0
    %v3548 = vsel %vm3543, %v3522, 0
    %3550 = vmatprep.subr.bf16.mxu0 0
    %3551 = vmatpush1.bf16.msra.mxu0 0
    %3552 = vmatprep.subr.bf16.mxu0 0
    %3553 = vmatpush1.bf16.msra.mxu0 0
    %3554 = vmatprep.subr.bf16.mxu0 0
    %3555 = vmatpush1.bf16.msra.mxu0 0
    %3556 = vmatprep.subr.bf16.mxu0 0
    %3557 = vmatpush1.bf16.msra.mxu0 0
    %3558 = vmatprep.subr.bf16.mxu0 0
    %3559 = vmatpush1.bf16.msra.mxu0 0
    %3560 = vmatprep.subr.bf16.mxu0 0
    %3561 = vmatpush1.bf16.msra.mxu0 0
    %3562 = vmatprep.subr.bf16.mxu0 0
    %3563 = vmatpush1.bf16.msra.mxu0 0
    %3564 = vmatprep.subr.bf16.mxu0 %v3548
    %3565 = vmatpush1.bf16.msra.mxu0 %v3545
    %3566 = vmatprep.subr.bf16.mxu0 0
    %3567 = vmatpush2.bf16.msra.mxu0 0
    %3568 = vmatprep.subr.bf16.mxu0 0
    %3569 = vmatpush2.bf16.msra.mxu0 0
    %3570 = vmatprep.subr.bf16.mxu0 0
    %3571 = vmatpush2.bf16.msra.mxu0 0
    %3572 = vmatprep.subr.bf16.mxu0 0
    %3573 = vmatpush2.bf16.msra.mxu0 0
    %3574 = vmatprep.subr.bf16.mxu0 0
    %3575 = vmatpush2.bf16.msra.mxu0 0
    %3576 = vmatprep.subr.bf16.mxu0 0
    %3577 = vmatpush2.bf16.msra.mxu0 0
    %3578 = vmatprep.subr.bf16.mxu0 0
    %3579 = vmatpush2.bf16.msra.mxu0 0
    %3580 = vmatprep.subr.bf16.mxu0 0
    %3581 = vmatpush2.bf16.msra.mxu0 0
    %3582 = vmatprep.mubr.bf16.mxu0 0
    %3583 = vmatmul.mubr.bf16.gmra.mxu0 %v3541
    %v3584 = vpop.f32.mrf.mxu0
    %v3585 = vadd.f32 0.0, %v3584
    %v3586 = vpop.f32.mrf.mxu0
    %v3587 = vadd.f32 0.0, %v3586
    %v3588 = vpop.f32.mrf.mxu0
    %v3589 = vadd.f32 0.0, %v3588
    %v3590 = vpop.f32.mrf.mxu0
    %v3591 = vadd.f32 0.0, %v3590
    %3592 = vdwg.mxu0
    %v3594 = vsel %vm3539, %v3530, 0
    %v3597 = vsel %vm3543, %v3519, 0
    %v3600 = vsel %vm3543, %v3520, 0
    %3602 = vmatprep.subr.bf16.mxu0 0
    %3603 = vmatpush1.bf16.msra.mxu0 0
    %3604 = vmatprep.subr.bf16.mxu0 0
    %3605 = vmatpush1.bf16.msra.mxu0 0
    %3606 = vmatprep.subr.bf16.mxu0 0
    %3607 = vmatpush1.bf16.msra.mxu0 0
    %3608 = vmatprep.subr.bf16.mxu0 0
    %3609 = vmatpush1.bf16.msra.mxu0 0
    %3610 = vmatprep.subr.bf16.mxu0 0
    %3611 = vmatpush1.bf16.msra.mxu0 0
    %3612 = vmatprep.subr.bf16.mxu0 0
    %3613 = vmatpush1.bf16.msra.mxu0 0
    %3614 = vmatprep.subr.bf16.mxu0 0
    %3615 = vmatpush1.bf16.msra.mxu0 0
    %3616 = vmatprep.subr.bf16.mxu0 %v3600
    %3617 = vmatpush1.bf16.msra.mxu0 %v3597
    %3618 = vmatprep.subr.bf16.mxu0 0
    %3619 = vmatpush2.bf16.msra.mxu0 0
    %3620 = vmatprep.subr.bf16.mxu0 0
    %3621 = vmatpush2.bf16.msra.mxu0 0
    %3622 = vmatprep.subr.bf16.mxu0 0
    %3623 = vmatpush2.bf16.msra.mxu0 0
    %3624 = vmatprep.subr.bf16.mxu0 0
    %3625 = vmatpush2.bf16.msra.mxu0 0
    %3626 = vmatprep.subr.bf16.mxu0 0
    %3627 = vmatpush2.bf16.msra.mxu0 0
    %3628 = vmatprep.subr.bf16.mxu0 0
    %3629 = vmatpush2.bf16.msra.mxu0 0
    %3630 = vmatprep.subr.bf16.mxu0 0
    %3631 = vmatpush2.bf16.msra.mxu0 0
    %3632 = vmatprep.subr.bf16.mxu0 0
    %3633 = vmatpush2.bf16.msra.mxu0 0
    %3634 = vmatprep.mubr.bf16.mxu0 0
    %3635 = vmatmul.mubr.bf16.gmra.mxu0 %v3594
    %v3636 = vpop.f32.mrf.mxu0
    %v3637 = vadd.f32 %v3585, %v3636
    %v3638 = vpop.f32.mrf.mxu0
    %v3639 = vadd.f32 %v3587, %v3638
    %v3640 = vpop.f32.mrf.mxu0
    %v3641 = vadd.f32 %v3589, %v3640
    %v3642 = vpop.f32.mrf.mxu0
    %v3643 = vadd.f32 %v3591, %v3642
    %3644 = vdwg.mxu0
    %v3645 = vpack.c.bf16 %v3641, %v3637
    %v3646 = vpack.c.bf16 %v3643, %v3639
    %v3647 = vld [vmem:[%s8] sm:$0xff]
    %v3648 = vld [vmem:[%s8 + $0x8] sm:$0xff]
    %v3649 = vld [vmem:[%s8 + $0x10] sm:$0xff]
    %v3650 = vld [vmem:[%s8 + $0x18] sm:$0xff]
    %v3651 = vld [vmem:[%s8 + $0x20] sm:$0xff]
    %v3652 = vld [vmem:[%s8 + $0x28] sm:$0xff]
    %v3653 = vld [vmem:[%s8 + $0x30] sm:$0xff]
    %v3654 = vld [vmem:[%s8 + $0x38] sm:$0xff]
    %v3655 = vld [vmem:[%s8 + $0x40] sm:$0xff]
    %v3656 = vld [vmem:[%s8 + $0x48] sm:$0xff]
    %v3657 = vld [vmem:[%s8 + $0x50] sm:$0xff]
    %v3658 = vld [vmem:[%s8 + $0x58] sm:$0xff]
    %v3659 = vld [vmem:[%s8 + $0x60] sm:$0xff]
    %v3660 = vld [vmem:[%s8 + $0x68] sm:$0xff]
    %v3661 = vld [vmem:[%s8 + $0x70] sm:$0xff]
    %v3662 = vld [vmem:[%s8 + $0x78] sm:$0xff]
    %v3663 = vld [vmem:[%s8 + $0x80] sm:$0xff]
    %v3664 = vld [vmem:[%s8 + $0x88] sm:$0xff]
    %v3665 = vld [vmem:[%s8 + $0x90] sm:$0xff]
    %v3666 = vld [vmem:[%s8 + $0x98] sm:$0xff]
    %v3667 = vld [vmem:[%s8 + $0xa0] sm:$0xff]
    %v3668 = vld [vmem:[%s8 + $0xa8] sm:$0xff]
    %v3669 = vld [vmem:[%s8 + $0xb0] sm:$0xff]
    %v3670 = vld [vmem:[%s8 + $0xb8] sm:$0xff]
    %v3671 = vld [vmem:[%s8 + $0xc0] sm:$0xff]
    %v3672 = vld [vmem:[%s8 + $0xc8] sm:$0xff]
    %v3673 = vld [vmem:[%s8 + $0xd0] sm:$0xff]
    %v3674 = vld [vmem:[%s8 + $0xd8] sm:$0xff]
    %v3675 = vld [vmem:[%s8 + $0xe0] sm:$0xff]
    %v3676 = vld [vmem:[%s8 + $0xe8] sm:$0xff]
    %v3677 = vld [vmem:[%s8 + $0xf0] sm:$0xff]
    %v3678 = vld [vmem:[%s8 + $0xf8] sm:$0xff]
    %v3679 = vld [vmem:[%s8 + $0x100] sm:$0xff]
    %v3680 = vld [vmem:[%s8 + $0x108] sm:$0xff]
    %v3681 = vld [vmem:[%s8 + $0x110] sm:$0xff]
    %v3682 = vld [vmem:[%s8 + $0x118] sm:$0xff]
    %v3683 = vld [vmem:[%s8 + $0x120] sm:$0xff]
    %v3684 = vld [vmem:[%s8 + $0x128] sm:$0xff]
    %v3685 = vld [vmem:[%s8 + $0x130] sm:$0xff]
    %v3686 = vld [vmem:[%s8 + $0x138] sm:$0xff]
    %v3687 = vld [vmem:[%s8 + $0x140] sm:$0xff]
    %v3688 = vld [vmem:[%s8 + $0x148] sm:$0xff]
    %v3689 = vld [vmem:[%s8 + $0x150] sm:$0xff]
    %v3690 = vld [vmem:[%s8 + $0x158] sm:$0xff]
    %v3691 = vld [vmem:[%s8 + $0x160] sm:$0xff]
    %v3692 = vld [vmem:[%s8 + $0x168] sm:$0xff]
    %v3693 = vld [vmem:[%s8 + $0x170] sm:$0xff]
    %v3694 = vld [vmem:[%s8 + $0x178] sm:$0xff]
    %v3695 = vld [vmem:[%s8 + $0x180] sm:$0xff]
    %v3696 = vld [vmem:[%s8 + $0x188] sm:$0xff]
    %v3697 = vld [vmem:[%s8 + $0x190] sm:$0xff]
    %v3698 = vld [vmem:[%s8 + $0x198] sm:$0xff]
    %v3699 = vld [vmem:[%s8 + $0x1a0] sm:$0xff]
    %v3700 = vld [vmem:[%s8 + $0x1a8] sm:$0xff]
    %v3701 = vld [vmem:[%s8 + $0x1b0] sm:$0xff]
    %v3702 = vld [vmem:[%s8 + $0x1b8] sm:$0xff]
    %v3703 = vld [vmem:[%s8 + $0x1c0] sm:$0xff]
    %v3704 = vld [vmem:[%s8 + $0x1c8] sm:$0xff]
    %v3705 = vld [vmem:[%s8 + $0x1d0] sm:$0xff]
    %v3706 = vld [vmem:[%s8 + $0x1d8] sm:$0xff]
    %v3707 = vld [vmem:[%s8 + $0x1e0] sm:$0xff]
    %v3708 = vld [vmem:[%s8 + $0x1e8] sm:$0xff]
    %v3709 = vld [vmem:[%s8 + $0x1f0] sm:$0xff]
    %v3710 = vld [vmem:[%s8 + $0x1f8] sm:$0xff]
    %v3711 = vld [vmem:[#allocation2] sm:$0xff]
    %v3712 = vld [vmem:[#allocation2 + $0x8] sm:$0xff]
    %v3713 = vld [vmem:[#allocation2 + $0x10] sm:$0xff]
    %v3714 = vld [vmem:[#allocation2 + $0x18] sm:$0xff]
    %v3715 = vld [vmem:[#allocation2 + $0x20] sm:$0xff]
    %v3716 = vld [vmem:[#allocation2 + $0x28] sm:$0xff]
    %v3717 = vld [vmem:[#allocation2 + $0x30] sm:$0xff]
    %v3718 = vld [vmem:[#allocation2 + $0x38] sm:$0xff]
    %v3719 = vld [vmem:[#allocation2 + $0x40] sm:$0xff]
    %v3720 = vld [vmem:[#allocation2 + $0x48] sm:$0xff]
    %v3721 = vld [vmem:[#allocation2 + $0x50] sm:$0xff]
    %v3722 = vld [vmem:[#allocation2 + $0x58] sm:$0xff]
    %v3723 = vld [vmem:[#allocation2 + $0x60] sm:$0xff]
    %v3724 = vld [vmem:[#allocation2 + $0x68] sm:$0xff]
    %v3725 = vld [vmem:[#allocation2 + $0x70] sm:$0xff]
    %v3726 = vld [vmem:[#allocation2 + $0x78] sm:$0xff]
    %v3727 = vld [vmem:[#allocation2 + $0x80] sm:$0xff]
    %v3728 = vld [vmem:[#allocation2 + $0x88] sm:$0xff]
    %v3729 = vld [vmem:[#allocation2 + $0x90] sm:$0xff]
    %v3730 = vld [vmem:[#allocation2 + $0x98] sm:$0xff]
    %v3731 = vld [vmem:[#allocation2 + $0xa0] sm:$0xff]
    %v3732 = vld [vmem:[#allocation2 + $0xa8] sm:$0xff]
    %v3733 = vld [vmem:[#allocation2 + $0xb0] sm:$0xff]
    %v3734 = vld [vmem:[#allocation2 + $0xb8] sm:$0xff]
    %v3735 = vld [vmem:[#allocation2 + $0xc0] sm:$0xff]
    %v3736 = vld [vmem:[#allocation2 + $0xc8] sm:$0xff]
    %v3737 = vld [vmem:[#allocation2 + $0xd0] sm:$0xff]
    %v3738 = vld [vmem:[#allocation2 + $0xd8] sm:$0xff]
    %v3739 = vld [vmem:[#allocation2 + $0xe0] sm:$0xff]
    %v3740 = vld [vmem:[#allocation2 + $0xe8] sm:$0xff]
    %v3741 = vld [vmem:[#allocation2 + $0xf0] sm:$0xff]
    %v3742 = vld [vmem:[#allocation2 + $0xf8] sm:$0xff]
    %v3743 = vld [vmem:[#allocation2 + $0x100] sm:$0xff]
    %v3744 = vld [vmem:[#allocation2 + $0x108] sm:$0xff]
    %v3745 = vld [vmem:[#allocation2 + $0x110] sm:$0xff]
    %v3746 = vld [vmem:[#allocation2 + $0x118] sm:$0xff]
    %v3747 = vld [vmem:[#allocation2 + $0x120] sm:$0xff]
    %v3748 = vld [vmem:[#allocation2 + $0x128] sm:$0xff]
    %v3749 = vld [vmem:[#allocation2 + $0x130] sm:$0xff]
    %v3750 = vld [vmem:[#allocation2 + $0x138] sm:$0xff]
    %v3751 = vld [vmem:[#allocation2 + $0x140] sm:$0xff]
    %v3752 = vld [vmem:[#allocation2 + $0x148] sm:$0xff]
    %v3753 = vld [vmem:[#allocation2 + $0x150] sm:$0xff]
    %v3754 = vld [vmem:[#allocation2 + $0x158] sm:$0xff]
    %v3755 = vld [vmem:[#allocation2 + $0x160] sm:$0xff]
    %v3756 = vld [vmem:[#allocation2 + $0x168] sm:$0xff]
    %v3757 = vld [vmem:[#allocation2 + $0x170] sm:$0xff]
    %v3758 = vld [vmem:[#allocation2 + $0x178] sm:$0xff]
    %v3759 = vld [vmem:[#allocation2 + $0x180] sm:$0xff]
    %v3760 = vld [vmem:[#allocation2 + $0x188] sm:$0xff]
    %v3761 = vld [vmem:[#allocation2 + $0x190] sm:$0xff]
    %v3762 = vld [vmem:[#allocation2 + $0x198] sm:$0xff]
    %v3763 = vld [vmem:[#allocation2 + $0x1a0] sm:$0xff]
    %v3764 = vld [vmem:[#allocation2 + $0x1a8] sm:$0xff]
    %v3765 = vld [vmem:[#allocation2 + $0x1b0] sm:$0xff]
    %v3766 = vld [vmem:[#allocation2 + $0x1b8] sm:$0xff]
    %v3767 = vld [vmem:[#allocation2 + $0x1c0] sm:$0xff]
    %v3768 = vld [vmem:[#allocation2 + $0x1c8] sm:$0xff]
    %v3769 = vld [vmem:[#allocation2 + $0x1d0] sm:$0xff]
    %v3770 = vld [vmem:[#allocation2 + $0x1d8] sm:$0xff]
    %v3771 = vld [vmem:[#allocation2 + $0x1e0] sm:$0xff]
    %v3772 = vld [vmem:[#allocation2 + $0x1e8] sm:$0xff]
    %v3773 = vld [vmem:[#allocation2 + $0x1f0] sm:$0xff]
    %v3774 = vld [vmem:[#allocation2 + $0x1f8] sm:$0xff]
    %v3776 = vshrl.u32 %v3645, 16
    %v3778 = vrot.slane %v3776, 7
    %v3779 = vshll.u32 %v3645, 16
    %v3781 = vor.u32 %v3778, %v3779
    %v3783 = vshrl.u32 %v3646, 16
    %v3785 = vrot.slane %v3783, 7
    %v3786 = vshll.u32 %v3646, 16
    %v3788 = vor.u32 %v3785, %v3786
    %v3791 = vsel %vm1756, 0, %v3781
    %v3792 = vsel %vm1756, 0, %v3788
    %v3793 = vrot.slane %v3779, 1
    %v3794 = vor.u32 %v3776, %v3793
    %v3795 = vrot.slane %v3786, 1
    %v3796 = vor.u32 %v3783, %v3795
    %vm3799 = vcmask 1047552
    %vm3800 = vsmask.f32 7424
    %vm3801 = vmand %vm3799, %vm3800
    %v3802 = vsel %vm3801, %v3794, 0
    %v3803 = vsel %vm3801, %v3796, 0
    %vm3804 = vcmp.lt.s32.totalorder %v326, 0
    %v3805 = vsub.s32 0, %v326
    %v3806 = vsel %vm3804, %v3805, %v326
    %v3807 = vshrl.u32 %v3806, 3
    %v3808 = vand.u32 %v3806, 7
    %v3809 = vsub.s32 0, %v3808
    %v3810 = vsel %vm3804, %v3809, %v3808
    %vm3811 = vcmp.lt.s32.totalorder %v673, 0
    %v3812 = vsub.s32 0, %v673
    %v3813 = vsel %vm3811, %v3812, %v673
    %v3814 = vshrl.u32 %v3813, 3
    %v3815 = vand.u32 %v3813, 7
    %v3816 = vsub.s32 0, %v3815
    %v3817 = vsel %vm3811, %v3816, %v3815
    %vm3818 = vcmp.ne.s32.totalorder %v3810, 0
    %vm3819 = vcmp.ne.s32.totalorder %v3817, 0
    %vm3820 = vcmp.lt.s32.totalorder %v3810, 0
    %vm3821 = vcmp.lt.s32.totalorder %v3817, 0
    %vm3822 = vmand %vm3820, %vm3818
    %vm3823 = vmand %vm3821, %vm3819
    %v3824 = vadd.s32 %v3810, 8
    %v3825 = vadd.s32 %v3817, 8
    %v3826 = vsel %vm3822, %v3824, %v3810
    %v3827 = vsel %vm3823, %v3825, %v3817
    %vm3828 = vcmp.eq.s32.totalorder %v3826, 0
    %vm3829 = vcmp.eq.s32.totalorder %v3827, 0
    %vm3830 = vmpackc.low %vm3828, %vm3828
    %vm3831 = vmpackc.low %vm3829, %vm3829
    %v3832 = vsel %vm3830, 65537, 0
    %v3833 = vsel %vm3831, 65537, 0
    %v3834 = vunpack.c.l.b16 %v3832
    %v3835 = vunpack.c.l.b16 %v3833
    %v3836 = vpack.c.b16 %v3835, %v3834
    %vm3837 = vcmp.ne.s16.totalorder %v3836, 0
    %v3838 = vsel %vm3837, 0, %v3791
    %v3839 = vsel %vm3837, 0, %v3792
    %vm3840 = vcmp.eq.s32.totalorder %v3826, 7
    %vm3841 = vcmp.eq.s32.totalorder %v3827, 7
    %vm3842 = vmpackc.low %vm3840, %vm3840
    %vm3843 = vmpackc.low %vm3841, %vm3841
    %v3844 = vsel %vm3842, 65537, 0
    %v3845 = vsel %vm3843, 65537, 0
    %v3846 = vunpack.c.l.b16 %v3844
    %v3847 = vunpack.c.l.b16 %v3845
    %v3848 = vpack.c.b16 %v3847, %v3846
    %vm3849 = vcmp.ne.s16.totalorder %v3848, 0
    %v3850 = vsel %vm3849, 0, %v3802
    %v3851 = vsel %vm3849, 0, %v3803
    %v3916 = vunpack.c.l.b16 %v3647
    %v3917 = vunpack.c.h.b16 %v3647
    %v3918 = vunpack.c.l.b16 %v3648
    %v3919 = vunpack.c.h.b16 %v3648
    %v3920 = vunpack.c.l.b16 %v3649
    %v3921 = vunpack.c.h.b16 %v3649
    %v3922 = vunpack.c.l.b16 %v3650
    %v3923 = vunpack.c.h.b16 %v3650
    %v3924 = vunpack.c.l.b16 %v3651
    %v3925 = vunpack.c.h.b16 %v3651
    %v3926 = vunpack.c.l.b16 %v3652
    %v3927 = vunpack.c.h.b16 %v3652
    %v3928 = vunpack.c.l.b16 %v3653
    %v3929 = vunpack.c.h.b16 %v3653
    %v3930 = vunpack.c.l.b16 %v3654
    %v3931 = vunpack.c.h.b16 %v3654
    %v3932 = vunpack.c.l.b16 %v3655
    %v3933 = vunpack.c.h.b16 %v3655
    %v3934 = vunpack.c.l.b16 %v3656
    %v3935 = vunpack.c.h.b16 %v3656
    %v3936 = vunpack.c.l.b16 %v3657
    %v3937 = vunpack.c.h.b16 %v3657
    %v3938 = vunpack.c.l.b16 %v3658
    %v3939 = vunpack.c.h.b16 %v3658
    %v3940 = vunpack.c.l.b16 %v3659
    %v3941 = vunpack.c.h.b16 %v3659
    %v3942 = vunpack.c.l.b16 %v3660
    %v3943 = vunpack.c.h.b16 %v3660
    %v3944 = vunpack.c.l.b16 %v3661
    %v3945 = vunpack.c.h.b16 %v3661
    %v3946 = vunpack.c.l.b16 %v3662
    %v3947 = vunpack.c.h.b16 %v3662
    %v3948 = vunpack.c.l.b16 %v3663
    %v3949 = vunpack.c.h.b16 %v3663
    %v3950 = vunpack.c.l.b16 %v3664
    %v3951 = vunpack.c.h.b16 %v3664
    %v3952 = vunpack.c.l.b16 %v3665
    %v3953 = vunpack.c.h.b16 %v3665
    %v3954 = vunpack.c.l.b16 %v3666
    %v3955 = vunpack.c.h.b16 %v3666
    %v3956 = vunpack.c.l.b16 %v3667
    %v3957 = vunpack.c.h.b16 %v3667
    %v3958 = vunpack.c.l.b16 %v3668
    %v3959 = vunpack.c.h.b16 %v3668
    %v3960 = vunpack.c.l.b16 %v3669
    %v3961 = vunpack.c.h.b16 %v3669
    %v3962 = vunpack.c.l.b16 %v3670
    %v3963 = vunpack.c.h.b16 %v3670
    %v3964 = vunpack.c.l.b16 %v3671
    %v3965 = vunpack.c.h.b16 %v3671
    %v3966 = vunpack.c.l.b16 %v3672
    %v3967 = vunpack.c.h.b16 %v3672
    %v3968 = vunpack.c.l.b16 %v3673
    %v3969 = vunpack.c.h.b16 %v3673
    %v3970 = vunpack.c.l.b16 %v3674
    %v3971 = vunpack.c.h.b16 %v3674
    %v3972 = vunpack.c.l.b16 %v3675
    %v3973 = vunpack.c.h.b16 %v3675
    %v3974 = vunpack.c.l.b16 %v3676
    %v3975 = vunpack.c.h.b16 %v3676
    %v3976 = vunpack.c.l.b16 %v3677
    %v3977 = vunpack.c.h.b16 %v3677
    %v3978 = vunpack.c.l.b16 %v3678
    %v3979 = vunpack.c.h.b16 %v3678
    %v3980 = vunpack.c.l.b16 %v3679
    %v3981 = vunpack.c.h.b16 %v3679
    %v3982 = vunpack.c.l.b16 %v3680
    %v3983 = vunpack.c.h.b16 %v3680
    %v3984 = vunpack.c.l.b16 %v3681
    %v3985 = vunpack.c.h.b16 %v3681
    %v3986 = vunpack.c.l.b16 %v3682
    %v3987 = vunpack.c.h.b16 %v3682
    %v3988 = vunpack.c.l.b16 %v3683
    %v3989 = vunpack.c.h.b16 %v3683
    %v3990 = vunpack.c.l.b16 %v3684
    %v3991 = vunpack.c.h.b16 %v3684
    %v3992 = vunpack.c.l.b16 %v3685
    %v3993 = vunpack.c.h.b16 %v3685
    %v3994 = vunpack.c.l.b16 %v3686
    %v3995 = vunpack.c.h.b16 %v3686
    %v3996 = vunpack.c.l.b16 %v3687
    %v3997 = vunpack.c.h.b16 %v3687
    %v3998 = vunpack.c.l.b16 %v3688
    %v3999 = vunpack.c.h.b16 %v3688
    %v4000 = vunpack.c.l.b16 %v3689
    %v4001 = vunpack.c.h.b16 %v3689
    %v4002 = vunpack.c.l.b16 %v3690
    %v4003 = vunpack.c.h.b16 %v3690
    %v4004 = vunpack.c.l.b16 %v3691
    %v4005 = vunpack.c.h.b16 %v3691
    %v4006 = vunpack.c.l.b16 %v3692
    %v4007 = vunpack.c.h.b16 %v3692
    %v4008 = vunpack.c.l.b16 %v3693
    %v4009 = vunpack.c.h.b16 %v3693
    %v4010 = vunpack.c.l.b16 %v3694
    %v4011 = vunpack.c.h.b16 %v3694
    %v4012 = vunpack.c.l.b16 %v3695
    %v4013 = vunpack.c.h.b16 %v3695
    %v4014 = vunpack.c.l.b16 %v3696
    %v4015 = vunpack.c.h.b16 %v3696
    %v4016 = vunpack.c.l.b16 %v3697
    %v4017 = vunpack.c.h.b16 %v3697
    %v4018 = vunpack.c.l.b16 %v3698
    %v4019 = vunpack.c.h.b16 %v3698
    %v4020 = vunpack.c.l.b16 %v3699
    %v4021 = vunpack.c.h.b16 %v3699
    %v4022 = vunpack.c.l.b16 %v3700
    %v4023 = vunpack.c.h.b16 %v3700
    %v4024 = vunpack.c.l.b16 %v3701
    %v4025 = vunpack.c.h.b16 %v3701
    %v4026 = vunpack.c.l.b16 %v3702
    %v4027 = vunpack.c.h.b16 %v3702
    %v4028 = vunpack.c.l.b16 %v3703
    %v4029 = vunpack.c.h.b16 %v3703
    %v4030 = vunpack.c.l.b16 %v3704
    %v4031 = vunpack.c.h.b16 %v3704
    %v4032 = vunpack.c.l.b16 %v3705
    %v4033 = vunpack.c.h.b16 %v3705
    %v4034 = vunpack.c.l.b16 %v3706
    %v4035 = vunpack.c.h.b16 %v3706
    %v4036 = vunpack.c.l.b16 %v3707
    %v4037 = vunpack.c.h.b16 %v3707
    %v4038 = vunpack.c.l.b16 %v3708
    %v4039 = vunpack.c.h.b16 %v3708
    %v4040 = vunpack.c.l.b16 %v3709
    %v4041 = vunpack.c.h.b16 %v3709
    %v4042 = vunpack.c.l.b16 %v3710
    %v4043 = vunpack.c.h.b16 %v3710
    %v4044 = vpack.c.b16 %v3918, %v3916
    %v4045 = vpack.c.b16 %v3919, %v3917
    %v4046 = vpack.c.b16 %v3922, %v3920
    %v4047 = vpack.c.b16 %v3923, %v3921
    %v4048 = vpack.c.b16 %v3926, %v3924
    %v4049 = vpack.c.b16 %v3927, %v3925
    %v4050 = vpack.c.b16 %v3930, %v3928
    %v4051 = vpack.c.b16 %v3931, %v3929
    %v4052 = vpack.c.b16 %v3934, %v3932
    %v4053 = vpack.c.b16 %v3935, %v3933
    %v4054 = vpack.c.b16 %v3938, %v3936
    %v4055 = vpack.c.b16 %v3939, %v3937
    %v4056 = vpack.c.b16 %v3942, %v3940
    %v4057 = vpack.c.b16 %v3943, %v3941
    %v4058 = vpack.c.b16 %v3946, %v3944
    %v4059 = vpack.c.b16 %v3947, %v3945
    %v4060 = vpack.c.b16 %v3950, %v3948
    %v4061 = vpack.c.b16 %v3951, %v3949
    %v4062 = vpack.c.b16 %v3954, %v3952
    %v4063 = vpack.c.b16 %v3955, %v3953
    %v4064 = vpack.c.b16 %v3958, %v3956
    %v4065 = vpack.c.b16 %v3959, %v3957
    %v4066 = vpack.c.b16 %v3962, %v3960
    %v4067 = vpack.c.b16 %v3963, %v3961
    %v4068 = vpack.c.b16 %v3966, %v3964
    %v4069 = vpack.c.b16 %v3967, %v3965
    %v4070 = vpack.c.b16 %v3970, %v3968
    %v4071 = vpack.c.b16 %v3971, %v3969
    %v4072 = vpack.c.b16 %v3974, %v3972
    %v4073 = vpack.c.b16 %v3975, %v3973
    %v4074 = vpack.c.b16 %v3978, %v3976
    %v4075 = vpack.c.b16 %v3979, %v3977
    %v4076 = vpack.c.b16 %v3982, %v3980
    %v4077 = vpack.c.b16 %v3983, %v3981
    %v4078 = vpack.c.b16 %v3986, %v3984
    %v4079 = vpack.c.b16 %v3987, %v3985
    %v4080 = vpack.c.b16 %v3990, %v3988
    %v4081 = vpack.c.b16 %v3991, %v3989
    %v4082 = vpack.c.b16 %v3994, %v3992
    %v4083 = vpack.c.b16 %v3995, %v3993
    %v4084 = vpack.c.b16 %v3998, %v3996
    %v4085 = vpack.c.b16 %v3999, %v3997
    %v4086 = vpack.c.b16 %v4002, %v4000
    %v4087 = vpack.c.b16 %v4003, %v4001
    %v4088 = vpack.c.b16 %v4006, %v4004
    %v4089 = vpack.c.b16 %v4007, %v4005
    %v4090 = vpack.c.b16 %v4010, %v4008
    %v4091 = vpack.c.b16 %v4011, %v4009
    %v4092 = vpack.c.b16 %v4014, %v4012
    %v4093 = vpack.c.b16 %v4015, %v4013
    %v4094 = vpack.c.b16 %v4018, %v4016
    %v4095 = vpack.c.b16 %v4019, %v4017
    %v4096 = vpack.c.b16 %v4022, %v4020
    %v4097 = vpack.c.b16 %v4023, %v4021
    %v4098 = vpack.c.b16 %v4026, %v4024
    %v4099 = vpack.c.b16 %v4027, %v4025
    %v4100 = vpack.c.b16 %v4030, %v4028
    %v4101 = vpack.c.b16 %v4031, %v4029
    %v4102 = vpack.c.b16 %v4034, %v4032
    %v4103 = vpack.c.b16 %v4035, %v4033
    %v4104 = vpack.c.b16 %v4038, %v4036
    %v4105 = vpack.c.b16 %v4039, %v4037
    %v4106 = vpack.c.b16 %v4042, %v4040
    %v4107 = vpack.c.b16 %v4043, %v4041
    %4172 = vmatprep.subr.bf16.mxu0 %v4059
    %4173 = vmatpush1.bf16.msra.mxu0 %v4058
    %4174 = vmatprep.subr.bf16.mxu0 %v4057
    %4175 = vmatpush1.bf16.msra.mxu0 %v4056
    %4176 = vmatprep.subr.bf16.mxu0 %v4055
    %4177 = vmatpush1.bf16.msra.mxu0 %v4054
    %4178 = vmatprep.subr.bf16.mxu0 %v4053
    %4179 = vmatpush1.bf16.msra.mxu0 %v4052
    %4180 = vmatprep.subr.bf16.mxu0 %v4051
    %4181 = vmatpush1.bf16.msra.mxu0 %v4050
    %4182 = vmatprep.subr.bf16.mxu0 %v4049
    %4183 = vmatpush1.bf16.msra.mxu0 %v4048
    %4184 = vmatprep.subr.bf16.mxu0 %v4047
    %4185 = vmatpush1.bf16.msra.mxu0 %v4046
    %4186 = vmatprep.subr.bf16.mxu0 %v4045
    %4187 = vmatpush1.bf16.msra.mxu0 %v4044
    %4188 = vmatprep.subr.bf16.mxu0 %v4075
    %4189 = vmatpush2.bf16.msra.mxu0 %v4074
    %4190 = vmatprep.subr.bf16.mxu0 %v4073
    %4191 = vmatpush2.bf16.msra.mxu0 %v4072
    %4192 = vmatprep.subr.bf16.mxu0 %v4071
    %4193 = vmatpush2.bf16.msra.mxu0 %v4070
    %4194 = vmatprep.subr.bf16.mxu0 %v4069
    %4195 = vmatpush2.bf16.msra.mxu0 %v4068
    %4196 = vmatprep.subr.bf16.mxu0 %v4067
    %4197 = vmatpush2.bf16.msra.mxu0 %v4066
    %4198 = vmatprep.subr.bf16.mxu0 %v4065
    %4199 = vmatpush2.bf16.msra.mxu0 %v4064
    %4200 = vmatprep.subr.bf16.mxu0 %v4063
    %4201 = vmatpush2.bf16.msra.mxu0 %v4062
    %4202 = vmatprep.subr.bf16.mxu0 %v4061
    %4203 = vmatpush2.bf16.msra.mxu0 %v4060
    %4204 = vmatprep.mubr.bf16.mxu0 %v3839
    %4205 = vmatmul.mubr.bf16.gmra.mxu0 %v3838
    %v4206 = vpop.f32.mrf.mxu0
    %v4207 = vadd.f32 0.0, %v4206
    %v4208 = vpop.f32.mrf.mxu0
    %v4209 = vadd.f32 0.0, %v4208
    %v4210 = vpop.f32.mrf.mxu0
    %v4211 = vadd.f32 0.0, %v4210
    %v4212 = vpop.f32.mrf.mxu0
    %v4213 = vadd.f32 0.0, %v4212
    %4214 = vdwg.mxu0
    %4215 = vmatprep.subr.bf16.mxu0 %v4091
    %4216 = vmatpush1.bf16.msra.mxu0 %v4090
    %4217 = vmatprep.subr.bf16.mxu0 %v4089
    %4218 = vmatpush1.bf16.msra.mxu0 %v4088
    %4219 = vmatprep.subr.bf16.mxu0 %v4087
    %4220 = vmatpush1.bf16.msra.mxu0 %v4086
    %4221 = vmatprep.subr.bf16.mxu0 %v4085
    %4222 = vmatpush1.bf16.msra.mxu0 %v4084
    %4223 = vmatprep.subr.bf16.mxu0 %v4083
    %4224 = vmatpush1.bf16.msra.mxu0 %v4082
    %4225 = vmatprep.subr.bf16.mxu0 %v4081
    %4226 = vmatpush1.bf16.msra.mxu0 %v4080
    %4227 = vmatprep.subr.bf16.mxu0 %v4079
    %4228 = vmatpush1.bf16.msra.mxu0 %v4078
    %4229 = vmatprep.subr.bf16.mxu0 %v4077
    %4230 = vmatpush1.bf16.msra.mxu0 %v4076
    %4231 = vmatprep.subr.bf16.mxu0 %v4107
    %4232 = vmatpush2.bf16.msra.mxu0 %v4106
    %4233 = vmatprep.subr.bf16.mxu0 %v4105
    %4234 = vmatpush2.bf16.msra.mxu0 %v4104
    %4235 = vmatprep.subr.bf16.mxu0 %v4103
    %4236 = vmatpush2.bf16.msra.mxu0 %v4102
    %4237 = vmatprep.subr.bf16.mxu0 %v4101
    %4238 = vmatpush2.bf16.msra.mxu0 %v4100
    %4239 = vmatprep.subr.bf16.mxu0 %v4099
    %4240 = vmatpush2.bf16.msra.mxu0 %v4098
    %4241 = vmatprep.subr.bf16.mxu0 %v4097
    %4242 = vmatpush2.bf16.msra.mxu0 %v4096
    %4243 = vmatprep.subr.bf16.mxu0 %v4095
    %4244 = vmatpush2.bf16.msra.mxu0 %v4094
    %4245 = vmatprep.subr.bf16.mxu0 %v4093
    %4246 = vmatpush2.bf16.msra.mxu0 %v4092
    %4247 = vmatprep.mubr.bf16.mxu0 %v3646
    %4248 = vmatmul.mubr.bf16.gmra.mxu0 %v3645
    %v4249 = vpop.f32.mrf.mxu0
    %v4250 = vadd.f32 %v4207, %v4249
    %v4251 = vpop.f32.mrf.mxu0
    %v4252 = vadd.f32 %v4209, %v4251
    %v4253 = vpop.f32.mrf.mxu0
    %v4254 = vadd.f32 %v4211, %v4253
    %v4255 = vpop.f32.mrf.mxu0
    %v4256 = vadd.f32 %v4213, %v4255
    %4257 = vdwg.mxu0
    %v4322 = vunpack.c.l.b16 %v3711
    %v4323 = vunpack.c.h.b16 %v3711
    %v4324 = vunpack.c.l.b16 %v3712
    %v4325 = vunpack.c.h.b16 %v3712
    %v4326 = vunpack.c.l.b16 %v3713
    %v4327 = vunpack.c.h.b16 %v3713
    %v4328 = vunpack.c.l.b16 %v3714
    %v4329 = vunpack.c.h.b16 %v3714
    %v4330 = vunpack.c.l.b16 %v3715
    %v4331 = vunpack.c.h.b16 %v3715
    %v4332 = vunpack.c.l.b16 %v3716
    %v4333 = vunpack.c.h.b16 %v3716
    %v4334 = vunpack.c.l.b16 %v3717
    %v4335 = vunpack.c.h.b16 %v3717
    %v4336 = vunpack.c.l.b16 %v3718
    %v4337 = vunpack.c.h.b16 %v3718
    %v4338 = vunpack.c.l.b16 %v3719
    %v4339 = vunpack.c.h.b16 %v3719
    %v4340 = vunpack.c.l.b16 %v3720
    %v4341 = vunpack.c.h.b16 %v3720
    %v4342 = vunpack.c.l.b16 %v3721
    %v4343 = vunpack.c.h.b16 %v3721
    %v4344 = vunpack.c.l.b16 %v3722
    %v4345 = vunpack.c.h.b16 %v3722
    %v4346 = vunpack.c.l.b16 %v3723
    %v4347 = vunpack.c.h.b16 %v3723
    %v4348 = vunpack.c.l.b16 %v3724
    %v4349 = vunpack.c.h.b16 %v3724
    %v4350 = vunpack.c.l.b16 %v3725
    %v4351 = vunpack.c.h.b16 %v3725
    %v4352 = vunpack.c.l.b16 %v3726
    %v4353 = vunpack.c.h.b16 %v3726
    %v4354 = vunpack.c.l.b16 %v3727
    %v4355 = vunpack.c.h.b16 %v3727
    %v4356 = vunpack.c.l.b16 %v3728
    %v4357 = vunpack.c.h.b16 %v3728
    %v4358 = vunpack.c.l.b16 %v3729
    %v4359 = vunpack.c.h.b16 %v3729
    %v4360 = vunpack.c.l.b16 %v3730
    %v4361 = vunpack.c.h.b16 %v3730
    %v4362 = vunpack.c.l.b16 %v3731
    %v4363 = vunpack.c.h.b16 %v3731
    %v4364 = vunpack.c.l.b16 %v3732
    %v4365 = vunpack.c.h.b16 %v3732
    %v4366 = vunpack.c.l.b16 %v3733
    %v4367 = vunpack.c.h.b16 %v3733
    %v4368 = vunpack.c.l.b16 %v3734
    %v4369 = vunpack.c.h.b16 %v3734
    %v4370 = vunpack.c.l.b16 %v3735
    %v4371 = vunpack.c.h.b16 %v3735
    %v4372 = vunpack.c.l.b16 %v3736
    %v4373 = vunpack.c.h.b16 %v3736
    %v4374 = vunpack.c.l.b16 %v3737
    %v4375 = vunpack.c.h.b16 %v3737
    %v4376 = vunpack.c.l.b16 %v3738
    %v4377 = vunpack.c.h.b16 %v3738
    %v4378 = vunpack.c.l.b16 %v3739
    %v4379 = vunpack.c.h.b16 %v3739
    %v4380 = vunpack.c.l.b16 %v3740
    %v4381 = vunpack.c.h.b16 %v3740
    %v4382 = vunpack.c.l.b16 %v3741
    %v4383 = vunpack.c.h.b16 %v3741
    %v4384 = vunpack.c.l.b16 %v3742
    %v4385 = vunpack.c.h.b16 %v3742
    %v4386 = vunpack.c.l.b16 %v3743
    %v4387 = vunpack.c.h.b16 %v3743
    %v4388 = vunpack.c.l.b16 %v3744
    %v4389 = vunpack.c.h.b16 %v3744
    %v4390 = vunpack.c.l.b16 %v3745
    %v4391 = vunpack.c.h.b16 %v3745
    %v4392 = vunpack.c.l.b16 %v3746
    %v4393 = vunpack.c.h.b16 %v3746
    %v4394 = vunpack.c.l.b16 %v3747
    %v4395 = vunpack.c.h.b16 %v3747
    %v4396 = vunpack.c.l.b16 %v3748
    %v4397 = vunpack.c.h.b16 %v3748
    %v4398 = vunpack.c.l.b16 %v3749
    %v4399 = vunpack.c.h.b16 %v3749
    %v4400 = vunpack.c.l.b16 %v3750
    %v4401 = vunpack.c.h.b16 %v3750
    %v4402 = vunpack.c.l.b16 %v3751
    %v4403 = vunpack.c.h.b16 %v3751
    %v4404 = vunpack.c.l.b16 %v3752
    %v4405 = vunpack.c.h.b16 %v3752
    %v4406 = vunpack.c.l.b16 %v3753
    %v4407 = vunpack.c.h.b16 %v3753
    %v4408 = vunpack.c.l.b16 %v3754
    %v4409 = vunpack.c.h.b16 %v3754
    %v4410 = vunpack.c.l.b16 %v3755
    %v4411 = vunpack.c.h.b16 %v3755
    %v4412 = vunpack.c.l.b16 %v3756
    %v4413 = vunpack.c.h.b16 %v3756
    %v4414 = vunpack.c.l.b16 %v3757
    %v4415 = vunpack.c.h.b16 %v3757
    %v4416 = vunpack.c.l.b16 %v3758
    %v4417 = vunpack.c.h.b16 %v3758
    %v4418 = vunpack.c.l.b16 %v3759
    %v4419 = vunpack.c.h.b16 %v3759
    %v4420 = vunpack.c.l.b16 %v3760
    %v4421 = vunpack.c.h.b16 %v3760
    %v4422 = vunpack.c.l.b16 %v3761
    %v4423 = vunpack.c.h.b16 %v3761
    %v4424 = vunpack.c.l.b16 %v3762
    %v4425 = vunpack.c.h.b16 %v3762
    %v4426 = vunpack.c.l.b16 %v3763
    %v4427 = vunpack.c.h.b16 %v3763
    %v4428 = vunpack.c.l.b16 %v3764
    %v4429 = vunpack.c.h.b16 %v3764
    %v4430 = vunpack.c.l.b16 %v3765
    %v4431 = vunpack.c.h.b16 %v3765
    %v4432 = vunpack.c.l.b16 %v3766
    %v4433 = vunpack.c.h.b16 %v3766
    %v4434 = vunpack.c.l.b16 %v3767
    %v4435 = vunpack.c.h.b16 %v3767
    %v4436 = vunpack.c.l.b16 %v3768
    %v4437 = vunpack.c.h.b16 %v3768
    %v4438 = vunpack.c.l.b16 %v3769
    %v4439 = vunpack.c.h.b16 %v3769
    %v4440 = vunpack.c.l.b16 %v3770
    %v4441 = vunpack.c.h.b16 %v3770
    %v4442 = vunpack.c.l.b16 %v3771
    %v4443 = vunpack.c.h.b16 %v3771
    %v4444 = vunpack.c.l.b16 %v3772
    %v4445 = vunpack.c.h.b16 %v3772
    %v4446 = vunpack.c.l.b16 %v3773
    %v4447 = vunpack.c.h.b16 %v3773
    %v4448 = vunpack.c.l.b16 %v3774
    %v4449 = vunpack.c.h.b16 %v3774
    %v4450 = vpack.c.b16 %v4324, %v4322
    %v4451 = vpack.c.b16 %v4325, %v4323
    %v4452 = vpack.c.b16 %v4328, %v4326
    %v4453 = vpack.c.b16 %v4329, %v4327
    %v4454 = vpack.c.b16 %v4332, %v4330
    %v4455 = vpack.c.b16 %v4333, %v4331
    %v4456 = vpack.c.b16 %v4336, %v4334
    %v4457 = vpack.c.b16 %v4337, %v4335
    %v4458 = vpack.c.b16 %v4340, %v4338
    %v4459 = vpack.c.b16 %v4341, %v4339
    %v4460 = vpack.c.b16 %v4344, %v4342
    %v4461 = vpack.c.b16 %v4345, %v4343
    %v4462 = vpack.c.b16 %v4348, %v4346
    %v4463 = vpack.c.b16 %v4349, %v4347
    %v4464 = vpack.c.b16 %v4352, %v4350
    %v4465 = vpack.c.b16 %v4353, %v4351
    %v4466 = vpack.c.b16 %v4356, %v4354
    %v4467 = vpack.c.b16 %v4357, %v4355
    %v4468 = vpack.c.b16 %v4360, %v4358
    %v4469 = vpack.c.b16 %v4361, %v4359
    %v4470 = vpack.c.b16 %v4364, %v4362
    %v4471 = vpack.c.b16 %v4365, %v4363
    %v4472 = vpack.c.b16 %v4368, %v4366
    %v4473 = vpack.c.b16 %v4369, %v4367
    %v4474 = vpack.c.b16 %v4372, %v4370
    %v4475 = vpack.c.b16 %v4373, %v4371
    %v4476 = vpack.c.b16 %v4376, %v4374
    %v4477 = vpack.c.b16 %v4377, %v4375
    %v4478 = vpack.c.b16 %v4380, %v4378
    %v4479 = vpack.c.b16 %v4381, %v4379
    %v4480 = vpack.c.b16 %v4384, %v4382
    %v4481 = vpack.c.b16 %v4385, %v4383
    %v4482 = vpack.c.b16 %v4388, %v4386
    %v4483 = vpack.c.b16 %v4389, %v4387
    %v4484 = vpack.c.b16 %v4392, %v4390
    %v4485 = vpack.c.b16 %v4393, %v4391
    %v4486 = vpack.c.b16 %v4396, %v4394
    %v4487 = vpack.c.b16 %v4397, %v4395
    %v4488 = vpack.c.b16 %v4400, %v4398
    %v4489 = vpack.c.b16 %v4401, %v4399
    %v4490 = vpack.c.b16 %v4404, %v4402
    %v4491 = vpack.c.b16 %v4405, %v4403
    %v4492 = vpack.c.b16 %v4408, %v4406
    %v4493 = vpack.c.b16 %v4409, %v4407
    %v4494 = vpack.c.b16 %v4412, %v4410
    %v4495 = vpack.c.b16 %v4413, %v4411
    %v4496 = vpack.c.b16 %v4416, %v4414
    %v4497 = vpack.c.b16 %v4417, %v4415
    %v4498 = vpack.c.b16 %v4420, %v4418
    %v4499 = vpack.c.b16 %v4421, %v4419
    %v4500 = vpack.c.b16 %v4424, %v4422
    %v4501 = vpack.c.b16 %v4425, %v4423
    %v4502 = vpack.c.b16 %v4428, %v4426
    %v4503 = vpack.c.b16 %v4429, %v4427
    %v4504 = vpack.c.b16 %v4432, %v4430
    %v4505 = vpack.c.b16 %v4433, %v4431
    %v4506 = vpack.c.b16 %v4436, %v4434
    %v4507 = vpack.c.b16 %v4437, %v4435
    %v4508 = vpack.c.b16 %v4440, %v4438
    %v4509 = vpack.c.b16 %v4441, %v4439
    %v4510 = vpack.c.b16 %v4444, %v4442
    %v4511 = vpack.c.b16 %v4445, %v4443
    %v4512 = vpack.c.b16 %v4448, %v4446
    %v4513 = vpack.c.b16 %v4449, %v4447
    %4578 = vmatprep.subr.bf16.mxu0 %v4465
    %4579 = vmatpush1.bf16.msra.mxu0 %v4464
    %4580 = vmatprep.subr.bf16.mxu0 %v4463
    %4581 = vmatpush1.bf16.msra.mxu0 %v4462
    %4582 = vmatprep.subr.bf16.mxu0 %v4461
    %4583 = vmatpush1.bf16.msra.mxu0 %v4460
    %4584 = vmatprep.subr.bf16.mxu0 %v4459
    %4585 = vmatpush1.bf16.msra.mxu0 %v4458
    %4586 = vmatprep.subr.bf16.mxu0 %v4457
    %4587 = vmatpush1.bf16.msra.mxu0 %v4456
    %4588 = vmatprep.subr.bf16.mxu0 %v4455
    %4589 = vmatpush1.bf16.msra.mxu0 %v4454
    %4590 = vmatprep.subr.bf16.mxu0 %v4453
    %4591 = vmatpush1.bf16.msra.mxu0 %v4452
    %4592 = vmatprep.subr.bf16.mxu0 %v4451
    %4593 = vmatpush1.bf16.msra.mxu0 %v4450
    %4594 = vmatprep.subr.bf16.mxu0 %v4481
    %4595 = vmatpush2.bf16.msra.mxu0 %v4480
    %4596 = vmatprep.subr.bf16.mxu0 %v4479
    %4597 = vmatpush2.bf16.msra.mxu0 %v4478
    %4598 = vmatprep.subr.bf16.mxu0 %v4477
    %4599 = vmatpush2.bf16.msra.mxu0 %v4476
    %4600 = vmatprep.subr.bf16.mxu0 %v4475
    %4601 = vmatpush2.bf16.msra.mxu0 %v4474
    %4602 = vmatprep.subr.bf16.mxu0 %v4473
    %4603 = vmatpush2.bf16.msra.mxu0 %v4472
    %4604 = vmatprep.subr.bf16.mxu0 %v4471
    %4605 = vmatpush2.bf16.msra.mxu0 %v4470
    %4606 = vmatprep.subr.bf16.mxu0 %v4469
    %4607 = vmatpush2.bf16.msra.mxu0 %v4468
    %4608 = vmatprep.subr.bf16.mxu0 %v4467
    %4609 = vmatpush2.bf16.msra.mxu0 %v4466
    %4610 = vmatprep.mubr.bf16.mxu0 %v3646
    %4611 = vmatmul.mubr.bf16.gmra.mxu0 %v3645
    %v4612 = vpop.f32.mrf.mxu0
    %v4613 = vadd.f32 0.0, %v4612
    %v4614 = vpop.f32.mrf.mxu0
    %v4615 = vadd.f32 0.0, %v4614
    %v4616 = vpop.f32.mrf.mxu0
    %v4617 = vadd.f32 0.0, %v4616
    %v4618 = vpop.f32.mrf.mxu0
    %v4619 = vadd.f32 0.0, %v4618
    %4620 = vdwg.mxu0
    %4621 = vmatprep.subr.bf16.mxu0 %v4497
    %4622 = vmatpush1.bf16.msra.mxu0 %v4496
    %4623 = vmatprep.subr.bf16.mxu0 %v4495
    %4624 = vmatpush1.bf16.msra.mxu0 %v4494
    %4625 = vmatprep.subr.bf16.mxu0 %v4493
    %4626 = vmatpush1.bf16.msra.mxu0 %v4492
    %4627 = vmatprep.subr.bf16.mxu0 %v4491
    %4628 = vmatpush1.bf16.msra.mxu0 %v4490
    %4629 = vmatprep.subr.bf16.mxu0 %v4489
    %4630 = vmatpush1.bf16.msra.mxu0 %v4488
    %4631 = vmatprep.subr.bf16.mxu0 %v4487
    %4632 = vmatpush1.bf16.msra.mxu0 %v4486
    %4633 = vmatprep.subr.bf16.mxu0 %v4485
    %4634 = vmatpush1.bf16.msra.mxu0 %v4484
    %4635 = vmatprep.subr.bf16.mxu0 %v4483
    %4636 = vmatpush1.bf16.msra.mxu0 %v4482
    %4637 = vmatprep.subr.bf16.mxu0 %v4513
    %4638 = vmatpush2.bf16.msra.mxu0 %v4512
    %4639 = vmatprep.subr.bf16.mxu0 %v4511
    %4640 = vmatpush2.bf16.msra.mxu0 %v4510
    %4641 = vmatprep.subr.bf16.mxu0 %v4509
    %4642 = vmatpush2.bf16.msra.mxu0 %v4508
    %4643 = vmatprep.subr.bf16.mxu0 %v4507
    %4644 = vmatpush2.bf16.msra.mxu0 %v4506
    %4645 = vmatprep.subr.bf16.mxu0 %v4505
    %4646 = vmatpush2.bf16.msra.mxu0 %v4504
    %4647 = vmatprep.subr.bf16.mxu0 %v4503
    %4648 = vmatpush2.bf16.msra.mxu0 %v4502
    %4649 = vmatprep.subr.bf16.mxu0 %v4501
    %4650 = vmatpush2.bf16.msra.mxu0 %v4500
    %4651 = vmatprep.subr.bf16.mxu0 %v4499
    %4652 = vmatpush2.bf16.msra.mxu0 %v4498
    %4653 = vmatprep.mubr.bf16.mxu0 %v3851
    %4654 = vmatmul.mubr.bf16.gmra.mxu0 %v3850
    %v4655 = vpop.f32.mrf.mxu0
    %v4656 = vadd.f32 %v4613, %v4655
    %v4657 = vpop.f32.mrf.mxu0
    %v4658 = vadd.f32 %v4615, %v4657
    %v4659 = vpop.f32.mrf.mxu0
    %v4660 = vadd.f32 %v4617, %v4659
    %v4661 = vpop.f32.mrf.mxu0
    %v4662 = vadd.f32 %v4619, %v4661
    %4663 = vdwg.mxu0
    %v4664 = vld [vmem:[%s10] sm:$0x1]
    %v4665 = vld [vmem:[%s11] sm:$0x1]
    %vm4666 = vcmp.lt.s32.totalorder %v326, 0
    %v4667 = vsub.s32 0, %v326
    %v4668 = vsel %vm4666, %v4667, %v326
    %v4669 = vshrl.u32 %v4668, 4
    %v4670 = vand.u32 %v4668, 15
    %v4671 = vsub.s32 0, %v4670
    %v4672 = vsel %vm4666, %v4671, %v4670
    %vm4673 = vcmp.lt.s32.totalorder %v673, 0
    %v4674 = vsub.s32 0, %v673
    %v4675 = vsel %vm4673, %v4674, %v673
    %v4676 = vshrl.u32 %v4675, 4
    %v4677 = vand.u32 %v4675, 15
    %v4678 = vsub.s32 0, %v4677
    %v4679 = vsel %vm4673, %v4678, %v4677
    %vm4680 = vcmp.lt.s32.totalorder %v674, 0
    %v4681 = vsub.s32 0, %v674
    %v4682 = vsel %vm4680, %v4681, %v674
    %v4683 = vshrl.u32 %v4682, 4
    %v4684 = vand.u32 %v4682, 15
    %v4685 = vsub.s32 0, %v4684
    %v4686 = vsel %vm4680, %v4685, %v4684
    %vm4687 = vcmp.lt.s32.totalorder %v675, 0
    %v4688 = vsub.s32 0, %v675
    %v4689 = vsel %vm4687, %v4688, %v675
    %v4690 = vshrl.u32 %v4689, 4
    %v4691 = vand.u32 %v4689, 15
    %v4692 = vsub.s32 0, %v4691
    %v4693 = vsel %vm4687, %v4692, %v4691
    %vm4694 = vcmp.lt.s32.totalorder %v676, 0
    %v4695 = vsub.s32 0, %v676
    %v4696 = vsel %vm4694, %v4695, %v676
    %v4697 = vshrl.u32 %v4696, 4
    %v4698 = vand.u32 %v4696, 15
    %v4699 = vsub.s32 0, %v4698
    %v4700 = vsel %vm4694, %v4699, %v4698
    %vm4701 = vcmp.lt.s32.totalorder %v677, 0
    %v4702 = vsub.s32 0, %v677
    %v4703 = vsel %vm4701, %v4702, %v677
    %v4704 = vshrl.u32 %v4703, 4
    %v4705 = vand.u32 %v4703, 15
    %v4706 = vsub.s32 0, %v4705
    %v4707 = vsel %vm4701, %v4706, %v4705
    %vm4708 = vcmp.lt.s32.totalorder %v678, 0
    %v4709 = vsub.s32 0, %v678
    %v4710 = vsel %vm4708, %v4709, %v678
    %v4711 = vshrl.u32 %v4710, 4
    %v4712 = vand.u32 %v4710, 15
    %v4713 = vsub.s32 0, %v4712
    %v4714 = vsel %vm4708, %v4713, %v4712
    %vm4715 = vcmp.lt.s32.totalorder %v679, 0
    %v4716 = vsub.s32 0, %v679
    %v4717 = vsel %vm4715, %v4716, %v679
    %v4718 = vshrl.u32 %v4717, 4
    %v4719 = vand.u32 %v4717, 15
    %v4720 = vsub.s32 0, %v4719
    %v4721 = vsel %vm4715, %v4720, %v4719
    %vm4722 = vcmp.lt.s32.totalorder %v680, 0
    %v4723 = vsub.s32 0, %v680
    %v4724 = vsel %vm4722, %v4723, %v680
    %v4725 = vshrl.u32 %v4724, 4
    %v4726 = vand.u32 %v4724, 15
    %v4727 = vsub.s32 0, %v4726
    %v4728 = vsel %vm4722, %v4727, %v4726
    %vm4729 = vcmp.lt.s32.totalorder %v681, 0
    %v4730 = vsub.s32 0, %v681
    %v4731 = vsel %vm4729, %v4730, %v681
    %v4732 = vshrl.u32 %v4731, 4
    %v4733 = vand.u32 %v4731, 15
    %v4734 = vsub.s32 0, %v4733
    %v4735 = vsel %vm4729, %v4734, %v4733
    %vm4736 = vcmp.lt.s32.totalorder %v682, 0
    %v4737 = vsub.s32 0, %v682
    %v4738 = vsel %vm4736, %v4737, %v682
    %v4739 = vshrl.u32 %v4738, 4
    %v4740 = vand.u32 %v4738, 15
    %v4741 = vsub.s32 0, %v4740
    %v4742 = vsel %vm4736, %v4741, %v4740
    %vm4743 = vcmp.lt.s32.totalorder %v683, 0
    %v4744 = vsub.s32 0, %v683
    %v4745 = vsel %vm4743, %v4744, %v683
    %v4746 = vshrl.u32 %v4745, 4
    %v4747 = vand.u32 %v4745, 15
    %v4748 = vsub.s32 0, %v4747
    %v4749 = vsel %vm4743, %v4748, %v4747
    %vm4750 = vcmp.lt.s32.totalorder %v684, 0
    %v4751 = vsub.s32 0, %v684
    %v4752 = vsel %vm4750, %v4751, %v684
    %v4753 = vshrl.u32 %v4752, 4
    %v4754 = vand.u32 %v4752, 15
    %v4755 = vsub.s32 0, %v4754
    %v4756 = vsel %vm4750, %v4755, %v4754
    %vm4757 = vcmp.lt.s32.totalorder %v685, 0
    %v4758 = vsub.s32 0, %v685
    %v4759 = vsel %vm4757, %v4758, %v685
    %v4760 = vshrl.u32 %v4759, 4
    %v4761 = vand.u32 %v4759, 15
    %v4762 = vsub.s32 0, %v4761
    %v4763 = vsel %vm4757, %v4762, %v4761
    %vm4764 = vcmp.lt.s32.totalorder %v686, 0
    %v4765 = vsub.s32 0, %v686
    %v4766 = vsel %vm4764, %v4765, %v686
    %v4767 = vshrl.u32 %v4766, 4
    %v4768 = vand.u32 %v4766, 15
    %v4769 = vsub.s32 0, %v4768
    %v4770 = vsel %vm4764, %v4769, %v4768
    %vm4771 = vcmp.lt.s32.totalorder %v687, 0
    %v4772 = vsub.s32 0, %v687
    %v4773 = vsel %vm4771, %v4772, %v687
    %v4774 = vshrl.u32 %v4773, 4
    %v4775 = vand.u32 %v4773, 15
    %v4776 = vsub.s32 0, %v4775
    %v4777 = vsel %vm4771, %v4776, %v4775
    %vm4778 = vcmp.lt.s32.totalorder %v688, 0
    %v4779 = vsub.s32 0, %v688
    %v4780 = vsel %vm4778, %v4779, %v688
    %v4781 = vshrl.u32 %v4780, 4
    %v4782 = vand.u32 %v4780, 15
    %v4783 = vsub.s32 0, %v4782
    %v4784 = vsel %vm4778, %v4783, %v4782
    %vm4785 = vcmp.lt.s32.totalorder %v689, 0
    %v4786 = vsub.s32 0, %v689
    %v4787 = vsel %vm4785, %v4786, %v689
    %v4788 = vshrl.u32 %v4787, 4
    %v4789 = vand.u32 %v4787, 15
    %v4790 = vsub.s32 0, %v4789
    %v4791 = vsel %vm4785, %v4790, %v4789
    %vm4792 = vcmp.lt.s32.totalorder %v690, 0
    %v4793 = vsub.s32 0, %v690
    %v4794 = vsel %vm4792, %v4793, %v690
    %v4795 = vshrl.u32 %v4794, 4
    %v4796 = vand.u32 %v4794, 15
    %v4797 = vsub.s32 0, %v4796
    %v4798 = vsel %vm4792, %v4797, %v4796
    %vm4799 = vcmp.lt.s32.totalorder %v691, 0
    %v4800 = vsub.s32 0, %v691
    %v4801 = vsel %vm4799, %v4800, %v691
    %v4802 = vshrl.u32 %v4801, 4
    %v4803 = vand.u32 %v4801, 15
    %v4804 = vsub.s32 0, %v4803
    %v4805 = vsel %vm4799, %v4804, %v4803
    %vm4806 = vcmp.lt.s32.totalorder %v692, 0
    %v4807 = vsub.s32 0, %v692
    %v4808 = vsel %vm4806, %v4807, %v692
    %v4809 = vshrl.u32 %v4808, 4
    %v4810 = vand.u32 %v4808, 15
    %v4811 = vsub.s32 0, %v4810
    %v4812 = vsel %vm4806, %v4811, %v4810
    %vm4813 = vcmp.lt.s32.totalorder %v693, 0
    %v4814 = vsub.s32 0, %v693
    %v4815 = vsel %vm4813, %v4814, %v693
    %v4816 = vshrl.u32 %v4815, 4
    %v4817 = vand.u32 %v4815, 15
    %v4818 = vsub.s32 0, %v4817
    %v4819 = vsel %vm4813, %v4818, %v4817
    %vm4820 = vcmp.lt.s32.totalorder %v694, 0
    %v4821 = vsub.s32 0, %v694
    %v4822 = vsel %vm4820, %v4821, %v694
    %v4823 = vshrl.u32 %v4822, 4
    %v4824 = vand.u32 %v4822, 15
    %v4825 = vsub.s32 0, %v4824
    %v4826 = vsel %vm4820, %v4825, %v4824
    %vm4827 = vcmp.lt.s32.totalorder %v695, 0
    %v4828 = vsub.s32 0, %v695
    %v4829 = vsel %vm4827, %v4828, %v695
    %v4830 = vshrl.u32 %v4829, 4
    %v4831 = vand.u32 %v4829, 15
    %v4832 = vsub.s32 0, %v4831
    %v4833 = vsel %vm4827, %v4832, %v4831
    %vm4834 = vcmp.lt.s32.totalorder %v696, 0
    %v4835 = vsub.s32 0, %v696
    %v4836 = vsel %vm4834, %v4835, %v696
    %v4837 = vshrl.u32 %v4836, 4
    %v4838 = vand.u32 %v4836, 15
    %v4839 = vsub.s32 0, %v4838
    %v4840 = vsel %vm4834, %v4839, %v4838
    %vm4841 = vcmp.lt.s32.totalorder %v697, 0
    %v4842 = vsub.s32 0, %v697
    %v4843 = vsel %vm4841, %v4842, %v697
    %v4844 = vshrl.u32 %v4843, 4
    %v4845 = vand.u32 %v4843, 15
    %v4846 = vsub.s32 0, %v4845
    %v4847 = vsel %vm4841, %v4846, %v4845
    %vm4848 = vcmp.lt.s32.totalorder %v698, 0
    %v4849 = vsub.s32 0, %v698
    %v4850 = vsel %vm4848, %v4849, %v698
    %v4851 = vshrl.u32 %v4850, 4
    %v4852 = vand.u32 %v4850, 15
    %v4853 = vsub.s32 0, %v4852
    %v4854 = vsel %vm4848, %v4853, %v4852
    %vm4855 = vcmp.lt.s32.totalorder %v699, 0
    %v4856 = vsub.s32 0, %v699
    %v4857 = vsel %vm4855, %v4856, %v699
    %v4858 = vshrl.u32 %v4857, 4
    %v4859 = vand.u32 %v4857, 15
    %v4860 = vsub.s32 0, %v4859
    %v4861 = vsel %vm4855, %v4860, %v4859
    %vm4862 = vcmp.lt.s32.totalorder %v700, 0
    %v4863 = vsub.s32 0, %v700
    %v4864 = vsel %vm4862, %v4863, %v700
    %v4865 = vshrl.u32 %v4864, 4
    %v4866 = vand.u32 %v4864, 15
    %v4867 = vsub.s32 0, %v4866
    %v4868 = vsel %vm4862, %v4867, %v4866
    %vm4869 = vcmp.lt.s32.totalorder %v701, 0
    %v4870 = vsub.s32 0, %v701
    %v4871 = vsel %vm4869, %v4870, %v701
    %v4872 = vshrl.u32 %v4871, 4
    %v4873 = vand.u32 %v4871, 15
    %v4874 = vsub.s32 0, %v4873
    %v4875 = vsel %vm4869, %v4874, %v4873
    %vm4876 = vcmp.lt.s32.totalorder %v702, 0
    %v4877 = vsub.s32 0, %v702
    %v4878 = vsel %vm4876, %v4877, %v702
    %v4879 = vshrl.u32 %v4878, 4
    %v4880 = vand.u32 %v4878, 15
    %v4881 = vsub.s32 0, %v4880
    %v4882 = vsel %vm4876, %v4881, %v4880
    %vm4883 = vcmp.lt.s32.totalorder %v703, 0
    %v4884 = vsub.s32 0, %v703
    %v4885 = vsel %vm4883, %v4884, %v703
    %v4886 = vshrl.u32 %v4885, 4
    %v4887 = vand.u32 %v4885, 15
    %v4888 = vsub.s32 0, %v4887
    %v4889 = vsel %vm4883, %v4888, %v4887
    %vm4890 = vcmp.ne.s32.totalorder %v4672, 0
    %vm4891 = vcmp.ne.s32.totalorder %v4679, 0
    %vm4892 = vcmp.ne.s32.totalorder %v4686, 0
    %vm4893 = vcmp.ne.s32.totalorder %v4693, 0
    %vm4894 = vcmp.ne.s32.totalorder %v4700, 0
    %vm4895 = vcmp.ne.s32.totalorder %v4707, 0
    %vm4896 = vcmp.ne.s32.totalorder %v4714, 0
    %vm4897 = vcmp.ne.s32.totalorder %v4721, 0
    %vm4898 = vcmp.ne.s32.totalorder %v4728, 0
    %vm4899 = vcmp.ne.s32.totalorder %v4735, 0
    %vm4900 = vcmp.ne.s32.totalorder %v4742, 0
    %vm4901 = vcmp.ne.s32.totalorder %v4749, 0
    %vm4902 = vcmp.ne.s32.totalorder %v4756, 0
    %vm4903 = vcmp.ne.s32.totalorder %v4763, 0
    %vm4904 = vcmp.ne.s32.totalorder %v4770, 0
    %vm4905 = vcmp.ne.s32.totalorder %v4777, 0
    %vm4906 = vcmp.ne.s32.totalorder %v4784, 0
    %vm4907 = vcmp.ne.s32.totalorder %v4791, 0
    %vm4908 = vcmp.ne.s32.totalorder %v4798, 0
    %vm4909 = vcmp.ne.s32.totalorder %v4805, 0
    %vm4910 = vcmp.ne.s32.totalorder %v4812, 0
    %vm4911 = vcmp.ne.s32.totalorder %v4819, 0
    %vm4912 = vcmp.ne.s32.totalorder %v4826, 0
    %vm4913 = vcmp.ne.s32.totalorder %v4833, 0
    %vm4914 = vcmp.ne.s32.totalorder %v4840, 0
    %vm4915 = vcmp.ne.s32.totalorder %v4847, 0
    %vm4916 = vcmp.ne.s32.totalorder %v4854, 0
    %vm4917 = vcmp.ne.s32.totalorder %v4861, 0
    %vm4918 = vcmp.ne.s32.totalorder %v4868, 0
    %vm4919 = vcmp.ne.s32.totalorder %v4875, 0
    %vm4920 = vcmp.ne.s32.totalorder %v4882, 0
    %vm4921 = vcmp.ne.s32.totalorder %v4889, 0
    %vm4922 = vcmp.lt.s32.totalorder %v4672, 0
    %vm4923 = vcmp.lt.s32.totalorder %v4679, 0
    %vm4924 = vcmp.lt.s32.totalorder %v4686, 0
    %vm4925 = vcmp.lt.s32.totalorder %v4693, 0
    %vm4926 = vcmp.lt.s32.totalorder %v4700, 0
    %vm4927 = vcmp.lt.s32.totalorder %v4707, 0
    %vm4928 = vcmp.lt.s32.totalorder %v4714, 0
    %vm4929 = vcmp.lt.s32.totalorder %v4721, 0
    %vm4930 = vcmp.lt.s32.totalorder %v4728, 0
    %vm4931 = vcmp.lt.s32.totalorder %v4735, 0
    %vm4932 = vcmp.lt.s32.totalorder %v4742, 0
    %vm4933 = vcmp.lt.s32.totalorder %v4749, 0
    %vm4934 = vcmp.lt.s32.totalorder %v4756, 0
    %vm4935 = vcmp.lt.s32.totalorder %v4763, 0
    %vm4936 = vcmp.lt.s32.totalorder %v4770, 0
    %vm4937 = vcmp.lt.s32.totalorder %v4777, 0
    %vm4938 = vcmp.lt.s32.totalorder %v4784, 0
    %vm4939 = vcmp.lt.s32.totalorder %v4791, 0
    %vm4940 = vcmp.lt.s32.totalorder %v4798, 0
    %vm4941 = vcmp.lt.s32.totalorder %v4805, 0
    %vm4942 = vcmp.lt.s32.totalorder %v4812, 0
    %vm4943 = vcmp.lt.s32.totalorder %v4819, 0
    %vm4944 = vcmp.lt.s32.totalorder %v4826, 0
    %vm4945 = vcmp.lt.s32.totalorder %v4833, 0
    %vm4946 = vcmp.lt.s32.totalorder %v4840, 0
    %vm4947 = vcmp.lt.s32.totalorder %v4847, 0
    %vm4948 = vcmp.lt.s32.totalorder %v4854, 0
    %vm4949 = vcmp.lt.s32.totalorder %v4861, 0
    %vm4950 = vcmp.lt.s32.totalorder %v4868, 0
    %vm4951 = vcmp.lt.s32.totalorder %v4875, 0
    %vm4952 = vcmp.lt.s32.totalorder %v4882, 0
    %vm4953 = vcmp.lt.s32.totalorder %v4889, 0
    %vm4954 = vmand %vm4922, %vm4890
    %vm4955 = vmand %vm4923, %vm4891
    %vm4956 = vmand %vm4924, %vm4892
    %vm4957 = vmand %vm4925, %vm4893
    %vm4958 = vmand %vm4926, %vm4894
    %vm4959 = vmand %vm4927, %vm4895
    %vm4960 = vmand %vm4928, %vm4896
    %vm4961 = vmand %vm4929, %vm4897
    %vm4962 = vmand %vm4930, %vm4898
    %vm4963 = vmand %vm4931, %vm4899
    %vm4964 = vmand %vm4932, %vm4900
    %vm4965 = vmand %vm4933, %vm4901
    %vm4966 = vmand %vm4934, %vm4902
    %vm4967 = vmand %vm4935, %vm4903
    %vm4968 = vmand %vm4936, %vm4904
    %vm4969 = vmand %vm4937, %vm4905
    %vm4970 = vmand %vm4938, %vm4906
    %vm4971 = vmand %vm4939, %vm4907
    %vm4972 = vmand %vm4940, %vm4908
    %vm4973 = vmand %vm4941, %vm4909
    %vm4974 = vmand %vm4942, %vm4910
    %vm4975 = vmand %vm4943, %vm4911
    %vm4976 = vmand %vm4944, %vm4912
    %vm4977 = vmand %vm4945, %vm4913
    %vm4978 = vmand %vm4946, %vm4914
    %vm4979 = vmand %vm4947, %vm4915
    %vm4980 = vmand %vm4948, %vm4916
    %vm4981 = vmand %vm4949, %vm4917
    %vm4982 = vmand %vm4950, %vm4918
    %vm4983 = vmand %vm4951, %vm4919
    %vm4984 = vmand %vm4952, %vm4920
    %vm4985 = vmand %vm4953, %vm4921
    %v4986 = vadd.s32 %v4672, 16
    %v4987 = vadd.s32 %v4679, 16
    %v4988 = vadd.s32 %v4686, 16
    %v4989 = vadd.s32 %v4693, 16
    %v4990 = vadd.s32 %v4700, 16
    %v4991 = vadd.s32 %v4707, 16
    %v4992 = vadd.s32 %v4714, 16
    %v4993 = vadd.s32 %v4721, 16
    %v4994 = vadd.s32 %v4728, 16
    %v4995 = vadd.s32 %v4735, 16
    %v4996 = vadd.s32 %v4742, 16
    %v4997 = vadd.s32 %v4749, 16
    %v4998 = vadd.s32 %v4756, 16
    %v4999 = vadd.s32 %v4763, 16
    %v5000 = vadd.s32 %v4770, 16
    %v5001 = vadd.s32 %v4777, 16
    %v5002 = vadd.s32 %v4784, 16
    %v5003 = vadd.s32 %v4791, 16
    %v5004 = vadd.s32 %v4798, 16
    %v5005 = vadd.s32 %v4805, 16
    %v5006 = vadd.s32 %v4812, 16
    %v5007 = vadd.s32 %v4819, 16
    %v5008 = vadd.s32 %v4826, 16
    %v5009 = vadd.s32 %v4833, 16
    %v5010 = vadd.s32 %v4840, 16
    %v5011 = vadd.s32 %v4847, 16
    %v5012 = vadd.s32 %v4854, 16
    %v5013 = vadd.s32 %v4861, 16
    %v5014 = vadd.s32 %v4868, 16
    %v5015 = vadd.s32 %v4875, 16
    %v5016 = vadd.s32 %v4882, 16
    %v5017 = vadd.s32 %v4889, 16
    %v5018 = vsel %vm4954, %v4986, %v4672
    %v5019 = vsel %vm4955, %v4987, %v4679
    %v5020 = vsel %vm4956, %v4988, %v4686
    %v5021 = vsel %vm4957, %v4989, %v4693
    %v5022 = vsel %vm4958, %v4990, %v4700
    %v5023 = vsel %vm4959, %v4991, %v4707
    %v5024 = vsel %vm4960, %v4992, %v4714
    %v5025 = vsel %vm4961, %v4993, %v4721
    %v5026 = vsel %vm4962, %v4994, %v4728
    %v5027 = vsel %vm4963, %v4995, %v4735
    %v5028 = vsel %vm4964, %v4996, %v4742
    %v5029 = vsel %vm4965, %v4997, %v4749
    %v5030 = vsel %vm4966, %v4998, %v4756
    %v5031 = vsel %vm4967, %v4999, %v4763
    %v5032 = vsel %vm4968, %v5000, %v4770
    %v5033 = vsel %vm4969, %v5001, %v4777
    %v5034 = vsel %vm4970, %v5002, %v4784
    %v5035 = vsel %vm4971, %v5003, %v4791
    %v5036 = vsel %vm4972, %v5004, %v4798
    %v5037 = vsel %vm4973, %v5005, %v4805
    %v5038 = vsel %vm4974, %v5006, %v4812
    %v5039 = vsel %vm4975, %v5007, %v4819
    %v5040 = vsel %vm4976, %v5008, %v4826
    %v5041 = vsel %vm4977, %v5009, %v4833
    %v5042 = vsel %vm4978, %v5010, %v4840
    %v5043 = vsel %vm4979, %v5011, %v4847
    %v5044 = vsel %vm4980, %v5012, %v4854
    %v5045 = vsel %vm4981, %v5013, %v4861
    %v5046 = vsel %vm4982, %v5014, %v4868
    %v5047 = vsel %vm4983, %v5015, %v4875
    %v5048 = vsel %vm4984, %v5016, %v4882
    %v5049 = vsel %vm4985, %v5017, %v4889
    %vm5050 = vcmp.eq.s32.totalorder %v5018, %v328
    %vm5051 = vcmp.eq.s32.totalorder %v5019, %v328
    %vm5052 = vcmp.eq.s32.totalorder %v5020, %v328
    %vm5053 = vcmp.eq.s32.totalorder %v5021, %v328
    %vm5054 = vcmp.eq.s32.totalorder %v5022, %v328
    %vm5055 = vcmp.eq.s32.totalorder %v5023, %v328
    %vm5056 = vcmp.eq.s32.totalorder %v5024, %v328
    %vm5057 = vcmp.eq.s32.totalorder %v5025, %v328
    %vm5058 = vcmp.eq.s32.totalorder %v5026, %v328
    %vm5059 = vcmp.eq.s32.totalorder %v5027, %v328
    %vm5060 = vcmp.eq.s32.totalorder %v5028, %v328
    %vm5061 = vcmp.eq.s32.totalorder %v5029, %v328
    %vm5062 = vcmp.eq.s32.totalorder %v5030, %v328
    %vm5063 = vcmp.eq.s32.totalorder %v5031, %v328
    %vm5064 = vcmp.eq.s32.totalorder %v5032, %v328
    %vm5065 = vcmp.eq.s32.totalorder %v5033, %v328
    %vm5066 = vcmp.eq.s32.totalorder %v5034, %v328
    %vm5067 = vcmp.eq.s32.totalorder %v5035, %v328
    %vm5068 = vcmp.eq.s32.totalorder %v5036, %v328
    %vm5069 = vcmp.eq.s32.totalorder %v5037, %v328
    %vm5070 = vcmp.eq.s32.totalorder %v5038, %v328
    %vm5071 = vcmp.eq.s32.totalorder %v5039, %v328
    %vm5072 = vcmp.eq.s32.totalorder %v5040, %v328
    %vm5073 = vcmp.eq.s32.totalorder %v5041, %v328
    %vm5074 = vcmp.eq.s32.totalorder %v5042, %v328
    %vm5075 = vcmp.eq.s32.totalorder %v5043, %v328
    %vm5076 = vcmp.eq.s32.totalorder %v5044, %v328
    %vm5077 = vcmp.eq.s32.totalorder %v5045, %v328
    %vm5078 = vcmp.eq.s32.totalorder %v5046, %v328
    %vm5079 = vcmp.eq.s32.totalorder %v5047, %v328
    %vm5080 = vcmp.eq.s32.totalorder %v5048, %v328
    %vm5081 = vcmp.eq.s32.totalorder %v5049, %v328
    %v5082 = vsel %vm5050, 1, 0
    %v5083 = vsel %vm5051, 1, 0
    %v5084 = vsel %vm5052, 1, 0
    %v5085 = vsel %vm5053, 1, 0
    %v5086 = vsel %vm5054, 1, 0
    %v5087 = vsel %vm5055, 1, 0
    %v5088 = vsel %vm5056, 1, 0
    %v5089 = vsel %vm5057, 1, 0
    %v5090 = vsel %vm5058, 1, 0
    %v5091 = vsel %vm5059, 1, 0
    %v5092 = vsel %vm5060, 1, 0
    %v5093 = vsel %vm5061, 1, 0
    %v5094 = vsel %vm5062, 1, 0
    %v5095 = vsel %vm5063, 1, 0
    %v5096 = vsel %vm5064, 1, 0
    %v5097 = vsel %vm5065, 1, 0
    %v5098 = vsel %vm5066, 1, 0
    %v5099 = vsel %vm5067, 1, 0
    %v5100 = vsel %vm5068, 1, 0
    %v5101 = vsel %vm5069, 1, 0
    %v5102 = vsel %vm5070, 1, 0
    %v5103 = vsel %vm5071, 1, 0
    %v5104 = vsel %vm5072, 1, 0
    %v5105 = vsel %vm5073, 1, 0
    %v5106 = vsel %vm5074, 1, 0
    %v5107 = vsel %vm5075, 1, 0
    %v5108 = vsel %vm5076, 1, 0
    %v5109 = vsel %vm5077, 1, 0
    %v5110 = vsel %vm5078, 1, 0
    %v5111 = vsel %vm5079, 1, 0
    %v5112 = vsel %vm5080, 1, 0
    %v5113 = vsel %vm5081, 1, 0
    %v5114 = vcvt.s32.f32 %v5082
    %v5115 = vcvt.s32.f32 %v5083
    %v5116 = vcvt.s32.f32 %v5084
    %v5117 = vcvt.s32.f32 %v5085
    %v5118 = vcvt.s32.f32 %v5086
    %v5119 = vcvt.s32.f32 %v5087
    %v5120 = vcvt.s32.f32 %v5088
    %v5121 = vcvt.s32.f32 %v5089
    %v5122 = vcvt.s32.f32 %v5090
    %v5123 = vcvt.s32.f32 %v5091
    %v5124 = vcvt.s32.f32 %v5092
    %v5125 = vcvt.s32.f32 %v5093
    %v5126 = vcvt.s32.f32 %v5094
    %v5127 = vcvt.s32.f32 %v5095
    %v5128 = vcvt.s32.f32 %v5096
    %v5129 = vcvt.s32.f32 %v5097
    %v5130 = vcvt.s32.f32 %v5098
    %v5131 = vcvt.s32.f32 %v5099
    %v5132 = vcvt.s32.f32 %v5100
    %v5133 = vcvt.s32.f32 %v5101
    %v5134 = vcvt.s32.f32 %v5102
    %v5135 = vcvt.s32.f32 %v5103
    %v5136 = vcvt.s32.f32 %v5104
    %v5137 = vcvt.s32.f32 %v5105
    %v5138 = vcvt.s32.f32 %v5106
    %v5139 = vcvt.s32.f32 %v5107
    %v5140 = vcvt.s32.f32 %v5108
    %v5141 = vcvt.s32.f32 %v5109
    %v5142 = vcvt.s32.f32 %v5110
    %v5143 = vcvt.s32.f32 %v5111
    %v5144 = vcvt.s32.f32 %v5112
    %v5145 = vcvt.s32.f32 %v5113
    %vm5146 = vcmp.lt.s32.totalorder %v328, 0
    %v5147 = vsub.s32 0, %v328
    %v5148 = vsel %vm5146, %v5147, %v328
    %v5149 = vshrl.u32 %v5148, 4
    %v5150 = vand.u32 %v5148, 15
    %v5151 = vsub.s32 0, %v5150
    %v5152 = vsel %vm5146, %v5151, %v5150
    %vm5153 = vcmp.lt.s32.totalorder %v1184, 0
    %v5154 = vsub.s32 0, %v1184
    %v5155 = vsel %vm5153, %v5154, %v1184
    %v5156 = vshrl.u32 %v5155, 4
    %v5157 = vand.u32 %v5155, 15
    %v5158 = vsub.s32 0, %v5157
    %v5159 = vsel %vm5153, %v5158, %v5157
    %vm5160 = vcmp.ne.s32.totalorder %v5152, 0
    %vm5161 = vcmp.ne.s32.totalorder %v5159, 0
    %vm5162 = vcmp.lt.s32.totalorder %v5152, 0
    %vm5163 = vcmp.lt.s32.totalorder %v5159, 0
    %vm5164 = vmand %vm5162, %vm5160
    %vm5165 = vmand %vm5163, %vm5161
    %v5166 = vadd.s32 %v5152, 16
    %v5167 = vadd.s32 %v5159, 16
    %v5168 = vsel %vm5164, %v5166, %v5152
    %v5169 = vsel %vm5165, %v5167, %v5159
    %vm5170 = vcmp.eq.s32.totalorder %v5168, %v326
    %vm5171 = vcmp.eq.s32.totalorder %v5169, %v326
    %vm5172 = vcmp.eq.s32.totalorder %v5168, %v673
    %vm5173 = vcmp.eq.s32.totalorder %v5169, %v673
    %v5174 = vsel %vm5170, 1, 0
    %v5175 = vsel %vm5171, 1, 0
    %v5176 = vsel %vm5172, 1, 0
    %v5177 = vsel %vm5173, 1, 0
    %v5178 = vcvt.s32.f32 %v5174
    %v5179 = vcvt.s32.f32 %v5175
    %v5180 = vcvt.s32.f32 %v5176
    %v5181 = vcvt.s32.f32 %v5177
    %v5182 = vadd.f32 %v4250, %v4254
    %v5183 = vrot.slane %v5182, 4
    %v5184 = vadd.f32 %v5182, %v5183
    %v5185 = vrot.slane %v5184, 2
    %v5186 = vadd.f32 %v5184, %v5185
    %v5187 = vrot.slane %v5186, 1
    %v5188 = vadd.f32 %v5186, %v5187
    %v5189 = vadd.f32 %v4252, %v4256
    %v5190 = vrot.slane %v5189, 4
    %v5191 = vadd.f32 %v5189, %v5190
    %v5192 = vrot.slane %v5191, 2
    %v5193 = vadd.f32 %v5191, %v5192
    %v5194 = vrot.slane %v5193, 1
    %v5195 = vadd.f32 %v5193, %v5194
    %v5196 = vadd.f32 %v4656, %v4660
    %v5197 = vrot.slane %v5196, 4
    %v5198 = vadd.f32 %v5196, %v5197
    %v5199 = vrot.slane %v5198, 2
    %v5200 = vadd.f32 %v5198, %v5199
    %v5201 = vrot.slane %v5200, 1
    %v5202 = vadd.f32 %v5200, %v5201
    %v5203 = vadd.f32 %v4658, %v4662
    %v5204 = vrot.slane %v5203, 4
    %v5205 = vadd.f32 %v5203, %v5204
    %v5206 = vrot.slane %v5205, 2
    %v5207 = vadd.f32 %v5205, %v5206
    %v5208 = vrot.slane %v5207, 1
    %v5209 = vadd.f32 %v5207, %v5208
    %v5210 = vadd.f32 %v5188, 0.0
    %v5211 = vadd.f32 %v5195, 0.0
    %v5212 = vadd.f32 %v5210, %v5202
    %v5213 = vadd.f32 %v5211, %v5209
    %v5214 = vmul.f32 %v4250, %v4250
    %v5215 = vmul.f32 %v4252, %v4252
    %v5216 = vmul.f32 %v4254, %v4254
    %v5217 = vmul.f32 %v4256, %v4256
    %v5218 = vadd.f32 %v5214, %v5216
    %v5219 = vrot.slane %v5218, 4
    %v5220 = vadd.f32 %v5218, %v5219
    %v5221 = vrot.slane %v5220, 2
    %v5222 = vadd.f32 %v5220, %v5221
    %v5223 = vrot.slane %v5222, 1
    %v5224 = vadd.f32 %v5222, %v5223
    %v5225 = vadd.f32 %v5215, %v5217
    %v5226 = vrot.slane %v5225, 4
    %v5227 = vadd.f32 %v5225, %v5226
    %v5228 = vrot.slane %v5227, 2
    %v5229 = vadd.f32 %v5227, %v5228
    %v5230 = vrot.slane %v5229, 1
    %v5231 = vadd.f32 %v5229, %v5230
    %v5232 = vmul.f32 %v4656, %v4656
    %v5233 = vmul.f32 %v4658, %v4658
    %v5234 = vmul.f32 %v4660, %v4660
    %v5235 = vmul.f32 %v4662, %v4662
    %v5236 = vadd.f32 %v5232, %v5234
    %v5237 = vrot.slane %v5236, 4
    %v5238 = vadd.f32 %v5236, %v5237
    %v5239 = vrot.slane %v5238, 2
    %v5240 = vadd.f32 %v5238, %v5239
    %v5241 = vrot.slane %v5240, 1
    %v5242 = vadd.f32 %v5240, %v5241
    %v5243 = vadd.f32 %v5233, %v5235
    %v5244 = vrot.slane %v5243, 4
    %v5245 = vadd.f32 %v5243, %v5244
    %v5246 = vrot.slane %v5245, 2
    %v5247 = vadd.f32 %v5245, %v5246
    %v5248 = vrot.slane %v5247, 1
    %v5249 = vadd.f32 %v5247, %v5248
    %v5250 = vadd.f32 %v5224, 0.0
    %v5251 = vadd.f32 %v5231, 0.0
    %v5252 = vadd.f32 %v5250, %v5242
    %v5253 = vadd.f32 %v5251, %v5249
    %5254 = vmatprep.subr.mxu0 0.0
    %5255 = vmatpush1.msra.mxu0 %v5129
    %5256 = vmatprep.subr.mxu0 0.0
    %5257 = vmatpush1.msra.mxu0 %v5128
    %5258 = vmatprep.subr.mxu0 0.0
    %5259 = vmatpush1.msra.mxu0 %v5127
    %5260 = vmatprep.subr.mxu0 0.0
    %5261 = vmatpush1.msra.mxu0 %v5126
    %5262 = vmatprep.subr.mxu0 0.0
    %5263 = vmatpush1.msra.mxu0 %v5125
    %5264 = vmatprep.subr.mxu0 0.0
    %5265 = vmatpush1.msra.mxu0 %v5124
    %5266 = vmatprep.subr.mxu0 0.0
    %5267 = vmatpush1.msra.mxu0 %v5123
    %5268 = vmatprep.subr.mxu0 0.0
    %5269 = vmatpush1.msra.mxu0 %v5122
    %5270 = vmatprep.subr.mxu0 0.0
    %5271 = vmatpush1.msra.mxu0 %v5121
    %5272 = vmatprep.subr.mxu0 0.0
    %5273 = vmatpush1.msra.mxu0 %v5120
    %5274 = vmatprep.subr.mxu0 0.0
    %5275 = vmatpush1.msra.mxu0 %v5119
    %5276 = vmatprep.subr.mxu0 0.0
    %5277 = vmatpush1.msra.mxu0 %v5118
    %5278 = vmatprep.subr.mxu0 0.0
    %5279 = vmatpush1.msra.mxu0 %v5117
    %5280 = vmatprep.subr.mxu0 0.0
    %5281 = vmatpush1.msra.mxu0 %v5116
    %5282 = vmatprep.subr.mxu0 0.0
    %5283 = vmatpush1.msra.mxu0 %v5115
    %5284 = vmatprep.subr.mxu0 0.0
    %5285 = vmatpush1.msra.mxu0 %v5114
    %5286 = vmatprep.subr.mxu0 0.0
    %5287 = vmatpush2.msra.mxu0 %v5145
    %5288 = vmatprep.subr.mxu0 0.0
    %5289 = vmatpush2.msra.mxu0 %v5144
    %5290 = vmatprep.subr.mxu0 0.0
    %5291 = vmatpush2.msra.mxu0 %v5143
    %5292 = vmatprep.subr.mxu0 0.0
    %5293 = vmatpush2.msra.mxu0 %v5142
    %5294 = vmatprep.subr.mxu0 0.0
    %5295 = vmatpush2.msra.mxu0 %v5141
    %5296 = vmatprep.subr.mxu0 0.0
    %5297 = vmatpush2.msra.mxu0 %v5140
    %5298 = vmatprep.subr.mxu0 0.0
    %5299 = vmatpush2.msra.mxu0 %v5139
    %5300 = vmatprep.subr.mxu0 0.0
    %5301 = vmatpush2.msra.mxu0 %v5138
    %5302 = vmatprep.subr.mxu0 0.0
    %5303 = vmatpush2.msra.mxu0 %v5137
    %5304 = vmatprep.subr.mxu0 0.0
    %5305 = vmatpush2.msra.mxu0 %v5136
    %5306 = vmatprep.subr.mxu0 0.0
    %5307 = vmatpush2.msra.mxu0 %v5135
    %5308 = vmatprep.subr.mxu0 0.0
    %5309 = vmatpush2.msra.mxu0 %v5134
    %5310 = vmatprep.subr.mxu0 0.0
    %5311 = vmatpush2.msra.mxu0 %v5133
    %5312 = vmatprep.subr.mxu0 0.0
    %5313 = vmatpush2.msra.mxu0 %v5132
    %5314 = vmatprep.subr.mxu0 0.0
    %5315 = vmatpush2.msra.mxu0 %v5131
    %5316 = vmatprep.subr.mxu0 0.0
    %5317 = vmatpush2.msra.mxu0 %v5130
    %5318 = vmatprep.mubr.f32.mxu0 %v5213
    %5319 = vmatmul.mubr.f32.gmra.mxu0 %v5212
    %v5320 = vpop.f32.mrf.mxu0
    %v5321 = vadd.f32 0.0, %v5320
    %v5322 = vpop.f32.mrf.mxu0
    %5323 = vdwg.mxu0
    %5324 = vmatprep.subr.mxu0 0.0
    %5325 = vmatpush1.msra.mxu0 %v5129
    %5326 = vmatprep.subr.mxu0 0.0
    %5327 = vmatpush1.msra.mxu0 %v5128
    %5328 = vmatprep.subr.mxu0 0.0
    %5329 = vmatpush1.msra.mxu0 %v5127
    %5330 = vmatprep.subr.mxu0 0.0
    %5331 = vmatpush1.msra.mxu0 %v5126
    %5332 = vmatprep.subr.mxu0 0.0
    %5333 = vmatpush1.msra.mxu0 %v5125
    %5334 = vmatprep.subr.mxu0 0.0
    %5335 = vmatpush1.msra.mxu0 %v5124
    %5336 = vmatprep.subr.mxu0 0.0
    %5337 = vmatpush1.msra.mxu0 %v5123
    %5338 = vmatprep.subr.mxu0 0.0
    %5339 = vmatpush1.msra.mxu0 %v5122
    %5340 = vmatprep.subr.mxu0 0.0
    %5341 = vmatpush1.msra.mxu0 %v5121
    %5342 = vmatprep.subr.mxu0 0.0
    %5343 = vmatpush1.msra.mxu0 %v5120
    %5344 = vmatprep.subr.mxu0 0.0
    %5345 = vmatpush1.msra.mxu0 %v5119
    %5346 = vmatprep.subr.mxu0 0.0
    %5347 = vmatpush1.msra.mxu0 %v5118
    %5348 = vmatprep.subr.mxu0 0.0
    %5349 = vmatpush1.msra.mxu0 %v5117
    %5350 = vmatprep.subr.mxu0 0.0
    %5351 = vmatpush1.msra.mxu0 %v5116
    %5352 = vmatprep.subr.mxu0 0.0
    %5353 = vmatpush1.msra.mxu0 %v5115
    %5354 = vmatprep.subr.mxu0 0.0
    %5355 = vmatpush1.msra.mxu0 %v5114
    %5356 = vmatprep.subr.mxu0 0.0
    %5357 = vmatpush2.msra.mxu0 %v5145
    %5358 = vmatprep.subr.mxu0 0.0
    %5359 = vmatpush2.msra.mxu0 %v5144
    %5360 = vmatprep.subr.mxu0 0.0
    %5361 = vmatpush2.msra.mxu0 %v5143
    %5362 = vmatprep.subr.mxu0 0.0
    %5363 = vmatpush2.msra.mxu0 %v5142
    %5364 = vmatprep.subr.mxu0 0.0
    %5365 = vmatpush2.msra.mxu0 %v5141
    %5366 = vmatprep.subr.mxu0 0.0
    %5367 = vmatpush2.msra.mxu0 %v5140
    %5368 = vmatprep.subr.mxu0 0.0
    %5369 = vmatpush2.msra.mxu0 %v5139
    %5370 = vmatprep.subr.mxu0 0.0
    %5371 = vmatpush2.msra.mxu0 %v5138
    %5372 = vmatprep.subr.mxu0 0.0
    %5373 = vmatpush2.msra.mxu0 %v5137
    %5374 = vmatprep.subr.mxu0 0.0
    %5375 = vmatpush2.msra.mxu0 %v5136
    %5376 = vmatprep.subr.mxu0 0.0
    %5377 = vmatpush2.msra.mxu0 %v5135
    %5378 = vmatprep.subr.mxu0 0.0
    %5379 = vmatpush2.msra.mxu0 %v5134
    %5380 = vmatprep.subr.mxu0 0.0
    %5381 = vmatpush2.msra.mxu0 %v5133
    %5382 = vmatprep.subr.mxu0 0.0
    %5383 = vmatpush2.msra.mxu0 %v5132
    %5384 = vmatprep.subr.mxu0 0.0
    %5385 = vmatpush2.msra.mxu0 %v5131
    %5386 = vmatprep.subr.mxu0 0.0
    %5387 = vmatpush2.msra.mxu0 %v5130
    %5388 = vmatprep.mubr.f32.mxu0 %v5253
    %5389 = vmatmul.mubr.f32.gmra.mxu0 %v5252
    %v5390 = vpop.f32.mrf.mxu0
    %v5391 = vadd.f32 0.0, %v5390
    %v5392 = vpop.f32.mrf.mxu0
    %5393 = vdwg.mxu0
    %v5394 = vrcp.pop 512.0
    %v5395 = vmul.f32 %v5321, %v5394
    %v5396 = vmul.f32 %v5391, %v5394
    %v5397 = vmul.f32 %v5395, %v5395
    %v5398 = vsub.f32 %v5396, %v5397
    %v5399 = vadd.f32 %v5398, 1e-05
    %v5400 = vrsqrt.pop %v5399
    %v5401 = vmul.f32 %v4664, %v5400
    %v5402 = vmul.f32 %v5395, %v5401
    %v5403 = vsub.f32 %v4665, %v5402
    %v5405 = vsel %vm157, %v5401, 0
    %5407 = vmatprep.subr.mxu0 0.0
    %5408 = vmatpush1.msra.mxu0 0.0
    %5409 = vmatprep.subr.mxu0 0.0
    %5410 = vmatpush1.msra.mxu0 0.0
    %5411 = vmatprep.subr.mxu0 0.0
    %5412 = vmatpush1.msra.mxu0 0.0
    %5413 = vmatprep.subr.mxu0 0.0
    %5414 = vmatpush1.msra.mxu0 0.0
    %5415 = vmatprep.subr.mxu0 0.0
    %5416 = vmatpush1.msra.mxu0 0.0
    %5417 = vmatprep.subr.mxu0 0.0
    %5418 = vmatpush1.msra.mxu0 0.0
    %5419 = vmatprep.subr.mxu0 0.0
    %5420 = vmatpush1.msra.mxu0 0.0
    %5421 = vmatprep.subr.mxu0 0.0
    %5422 = vmatpush1.msra.mxu0 0.0
    %5423 = vmatprep.subr.mxu0 0.0
    %5424 = vmatpush1.msra.mxu0 0.0
    %5425 = vmatprep.subr.mxu0 0.0
    %5426 = vmatpush1.msra.mxu0 0.0
    %5427 = vmatprep.subr.mxu0 0.0
    %5428 = vmatpush1.msra.mxu0 0.0
    %5429 = vmatprep.subr.mxu0 0.0
    %5430 = vmatpush1.msra.mxu0 0.0
    %5431 = vmatprep.subr.mxu0 0.0
    %5432 = vmatpush1.msra.mxu0 0.0
    %5433 = vmatprep.subr.mxu0 0.0
    %5434 = vmatpush1.msra.mxu0 0.0
    %5435 = vmatprep.subr.mxu0 %v5181
    %5436 = vmatpush1.msra.mxu0 %v5180
    %5437 = vmatprep.subr.mxu0 %v5179
    %5438 = vmatpush1.msra.mxu0 %v5178
    %5439 = vmatprep.subr.mxu0 0.0
    %5440 = vmatpush2.msra.mxu0 0.0
    %5441 = vmatprep.subr.mxu0 0.0
    %5442 = vmatpush2.msra.mxu0 0.0
    %5443 = vmatprep.subr.mxu0 0.0
    %5444 = vmatpush2.msra.mxu0 0.0
    %5445 = vmatprep.subr.mxu0 0.0
    %5446 = vmatpush2.msra.mxu0 0.0
    %5447 = vmatprep.subr.mxu0 0.0
    %5448 = vmatpush2.msra.mxu0 0.0
    %5449 = vmatprep.subr.mxu0 0.0
    %5450 = vmatpush2.msra.mxu0 0.0
    %5451 = vmatprep.subr.mxu0 0.0
    %5452 = vmatpush2.msra.mxu0 0.0
    %5453 = vmatprep.subr.mxu0 0.0
    %5454 = vmatpush2.msra.mxu0 0.0
    %5455 = vmatprep.subr.mxu0 0.0
    %5456 = vmatpush2.msra.mxu0 0.0
    %5457 = vmatprep.subr.mxu0 0.0
    %5458 = vmatpush2.msra.mxu0 0.0
    %5459 = vmatprep.subr.mxu0 0.0
    %5460 = vmatpush2.msra.mxu0 0.0
    %5461 = vmatprep.subr.mxu0 0.0
    %5462 = vmatpush2.msra.mxu0 0.0
    %5463 = vmatprep.subr.mxu0 0.0
    %5464 = vmatpush2.msra.mxu0 0.0
    %5465 = vmatprep.subr.mxu0 0.0
    %5466 = vmatpush2.msra.mxu0 0.0
    %5467 = vmatprep.subr.mxu0 0.0
    %5468 = vmatpush2.msra.mxu0 0.0
    %5469 = vmatprep.subr.mxu0 0.0
    %5470 = vmatpush2.msra.mxu0 0.0
    %5471 = vmatprep.mubr.f32.mxu0 0.0
    %5472 = vmatmul.mubr.f32.gmra.mxu0 %v5405
    %v5473 = vpop.f32.mrf.mxu0
    %v5474 = vadd.f32 0.0, %v5473
    %v5475 = vpop.f32.mrf.mxu0
    %v5476 = vadd.f32 0.0, %v5475
    %5477 = vdwg.mxu0
    %v5479 = vsel %vm157, %v5403, 0
    %5481 = vmatprep.subr.mxu0 0.0
    %5482 = vmatpush1.msra.mxu0 0.0
    %5483 = vmatprep.subr.mxu0 0.0
    %5484 = vmatpush1.msra.mxu0 0.0
    %5485 = vmatprep.subr.mxu0 0.0
    %5486 = vmatpush1.msra.mxu0 0.0
    %5487 = vmatprep.subr.mxu0 0.0
    %5488 = vmatpush1.msra.mxu0 0.0
    %5489 = vmatprep.subr.mxu0 0.0
    %5490 = vmatpush1.msra.mxu0 0.0
    %5491 = vmatprep.subr.mxu0 0.0
    %5492 = vmatpush1.msra.mxu0 0.0
    %5493 = vmatprep.subr.mxu0 0.0
    %5494 = vmatpush1.msra.mxu0 0.0
    %5495 = vmatprep.subr.mxu0 0.0
    %5496 = vmatpush1.msra.mxu0 0.0
    %5497 = vmatprep.subr.mxu0 0.0
    %5498 = vmatpush1.msra.mxu0 0.0
    %5499 = vmatprep.subr.mxu0 0.0
    %5500 = vmatpush1.msra.mxu0 0.0
    %5501 = vmatprep.subr.mxu0 0.0
    %5502 = vmatpush1.msra.mxu0 0.0
    %5503 = vmatprep.subr.mxu0 0.0
    %5504 = vmatpush1.msra.mxu0 0.0
    %5505 = vmatprep.subr.mxu0 0.0
    %5506 = vmatpush1.msra.mxu0 0.0
    %5507 = vmatprep.subr.mxu0 0.0
    %5508 = vmatpush1.msra.mxu0 0.0
    %5509 = vmatprep.subr.mxu0 %v5181
    %5510 = vmatpush1.msra.mxu0 %v5180
    %5511 = vmatprep.subr.mxu0 %v5179
    %5512 = vmatpush1.msra.mxu0 %v5178
    %5513 = vmatprep.subr.mxu0 0.0
    %5514 = vmatpush2.msra.mxu0 0.0
    %5515 = vmatprep.subr.mxu0 0.0
    %5516 = vmatpush2.msra.mxu0 0.0
    %5517 = vmatprep.subr.mxu0 0.0
    %5518 = vmatpush2.msra.mxu0 0.0
    %5519 = vmatprep.subr.mxu0 0.0
    %5520 = vmatpush2.msra.mxu0 0.0
    %5521 = vmatprep.subr.mxu0 0.0
    %5522 = vmatpush2.msra.mxu0 0.0
    %5523 = vmatprep.subr.mxu0 0.0
    %5524 = vmatpush2.msra.mxu0 0.0
    %5525 = vmatprep.subr.mxu0 0.0
    %5526 = vmatpush2.msra.mxu0 0.0
    %5527 = vmatprep.subr.mxu0 0.0
    %5528 = vmatpush2.msra.mxu0 0.0
    %5529 = vmatprep.subr.mxu0 0.0
    %5530 = vmatpush2.msra.mxu0 0.0
    %5531 = vmatprep.subr.mxu0 0.0
    %5532 = vmatpush2.msra.mxu0 0.0
    %5533 = vmatprep.subr.mxu0 0.0
    %5534 = vmatpush2.msra.mxu0 0.0
    %5535 = vmatprep.subr.mxu0 0.0
    %5536 = vmatpush2.msra.mxu0 0.0
    %5537 = vmatprep.subr.mxu0 0.0
    %5538 = vmatpush2.msra.mxu0 0.0
    %5539 = vmatprep.subr.mxu0 0.0
    %5540 = vmatpush2.msra.mxu0 0.0
    %5541 = vmatprep.subr.mxu0 0.0
    %5542 = vmatpush2.msra.mxu0 0.0
    %5543 = vmatprep.subr.mxu0 0.0
    %5544 = vmatpush2.msra.mxu0 0.0
    %5545 = vmatprep.mubr.f32.mxu0 0.0
    %5546 = vmatmul.mubr.f32.gmra.mxu0 %v5479
    %v5547 = vpop.f32.mrf.mxu0
    %v5548 = vadd.f32 0.0, %v5547
    %v5549 = vpop.f32.mrf.mxu0
    %v5550 = vadd.f32 0.0, %v5549
    %5551 = vdwg.mxu0
    %v5552 = vlaneseq
    %v5553 = vshrl.u32 %v5552, 7
    %v5554 = vsub.s32 0, %v5553
    %v5555 = vrot.slane %v5474, %v5554
    %v5556 = vlaneseq
    %v5557 = vshrl.u32 %v5556, 7
    %v5558 = vsub.s32 0, %v5557
    %v5559 = vrot.slane %v5476, %v5558
    %v5560 = vmul.f32 %v4250, %v5555
    %v5561 = vmul.f32 %v4252, %v5559
    %v5562 = vmul.f32 %v4254, %v5555
    %v5563 = vmul.f32 %v4256, %v5559
    %v5564 = vlaneseq
    %v5565 = vshrl.u32 %v5564, 7
    %v5566 = vsub.s32 0, %v5565
    %v5567 = vrot.slane %v5548, %v5566
    %v5568 = vlaneseq
    %v5569 = vshrl.u32 %v5568, 7
    %v5570 = vsub.s32 0, %v5569
    %v5571 = vrot.slane %v5550, %v5570
    %v5572 = vadd.f32 %v5560, %v5567
    %v5573 = vadd.f32 %v5561, %v5571
    %v5574 = vadd.f32 %v5562, %v5567
    %v5575 = vadd.f32 %v5563, %v5571
    %v5576 = vmax.f32 %v5572, 0.0
    %v5577 = vmax.f32 %v5573, 0.0
    %v5578 = vmax.f32 %v5574, 0.0
    %v5579 = vmax.f32 %v5575, 0.0
    %v5580 = vmul.f32 %v4656, %v5555
    %v5581 = vmul.f32 %v4658, %v5559
    %v5582 = vmul.f32 %v4660, %v5555
    %v5583 = vmul.f32 %v4662, %v5559
    %v5584 = vadd.f32 %v5580, %v5567
    %v5585 = vadd.f32 %v5581, %v5571
    %v5586 = vadd.f32 %v5582, %v5567
    %v5587 = vadd.f32 %v5583, %v5571
    %v5588 = vmax.f32 %v5584, 0.0
    %v5589 = vmax.f32 %v5585, 0.0
    %v5590 = vmax.f32 %v5586, 0.0
    %v5591 = vmax.f32 %v5587, 0.0
    %v5592 = vpack.c.bf16 %v5578, %v5576
    %v5593 = vpack.c.bf16 %v5579, %v5577
    %v5594 = vpack.c.bf16 %v5590, %v5588
    %v5595 = vpack.c.bf16 %v5591, %v5589
    %vm5596 = vcmp.eq.s32.totalorder %v674, %v3523
    %vm5597 = vcmp.eq.s32.totalorder %v675, %v3523
    %v5598 = vsel %vm5596, 1, 0
    %v5599 = vsel %vm5597, 1, 0
    %v5600 = vcvt.s32.f32 %v5598
    %v5601 = vcvt.s32.f32 %v5599
    %v5602 = vpack.c.bf16 %v5601, %v5600
    %vm5603 = vcmp.eq.s32.totalorder %v674, %v3531
    %vm5604 = vcmp.eq.s32.totalorder %v675, %v3531
    %v5605 = vsel %vm5603, 1, 0
    %v5606 = vsel %vm5604, 1, 0
    %v5607 = vcvt.s32.f32 %v5605
    %v5608 = vcvt.s32.f32 %v5606
    %v5609 = vpack.c.bf16 %v5608, %v5607
    %v5610 = vsel %vm157, %v3538, 0
    %v5613 = vsel %vm157, %v5609, 0
    %5615 = vmatprep.subr.bf16.mxu0 0
    %5616 = vmatpush1.bf16.msra.mxu0 0
    %5617 = vmatprep.subr.bf16.mxu0 0
    %5618 = vmatpush1.bf16.msra.mxu0 0
    %5619 = vmatprep.subr.bf16.mxu0 0
    %5620 = vmatpush1.bf16.msra.mxu0 0
    %5621 = vmatprep.subr.bf16.mxu0 0
    %5622 = vmatpush1.bf16.msra.mxu0 0
    %5623 = vmatprep.subr.bf16.mxu0 0
    %5624 = vmatpush1.bf16.msra.mxu0 0
    %5625 = vmatprep.subr.bf16.mxu0 0
    %5626 = vmatpush1.bf16.msra.mxu0 0
    %5627 = vmatprep.subr.bf16.mxu0 0
    %5628 = vmatpush1.bf16.msra.mxu0 0
    %5629 = vmatprep.subr.bf16.mxu0 %v5595
    %5630 = vmatpush1.bf16.msra.mxu0 %v5594
    %5631 = vmatprep.subr.bf16.mxu0 0
    %5632 = vmatpush2.bf16.msra.mxu0 0
    %5633 = vmatprep.subr.bf16.mxu0 0
    %5634 = vmatpush2.bf16.msra.mxu0 0
    %5635 = vmatprep.subr.bf16.mxu0 0
    %5636 = vmatpush2.bf16.msra.mxu0 0
    %5637 = vmatprep.subr.bf16.mxu0 0
    %5638 = vmatpush2.bf16.msra.mxu0 0
    %5639 = vmatprep.subr.bf16.mxu0 0
    %5640 = vmatpush2.bf16.msra.mxu0 0
    %5641 = vmatprep.subr.bf16.mxu0 0
    %5642 = vmatpush2.bf16.msra.mxu0 0
    %5643 = vmatprep.subr.bf16.mxu0 0
    %5644 = vmatpush2.bf16.msra.mxu0 0
    %5645 = vmatprep.subr.bf16.mxu0 0
    %5646 = vmatpush2.bf16.msra.mxu0 0
    %5647 = vmatprep.mubr.bf16.mxu0 0
    %5648 = vmatmul.mubr.bf16.gmra.mxu0 %v5610
    %v5649 = vpop.f32.mrf.mxu0
    %v5650 = vadd.f32 0.0, %v5649
    %v5651 = vpop.f32.mrf.mxu0
    %v5652 = vadd.f32 0.0, %v5651
    %v5653 = vpop.f32.mrf.mxu0
    %v5654 = vadd.f32 0.0, %v5653
    %v5655 = vpop.f32.mrf.mxu0
    %v5656 = vadd.f32 0.0, %v5655
    %5657 = vmatprep.mubr.bf16.mxu0 0
    %5658 = vmatmul.mubr.bf16.gmra.mxu0 %v5613
    %v5659 = vpop.f32.mrf.mxu0
    %v5660 = vadd.f32 0.0, %v5659
    %v5661 = vpop.f32.mrf.mxu0
    %v5662 = vadd.f32 0.0, %v5661
    %v5663 = vpop.f32.mrf.mxu0
    %v5664 = vadd.f32 0.0, %v5663
    %v5665 = vpop.f32.mrf.mxu0
    %v5666 = vadd.f32 0.0, %v5665
    %5667 = vdwg.mxu0
    %v5668 = vsel %vm157, %v3530, 0
    %v5671 = vsel %vm157, %v5602, 0
    %5673 = vmatprep.subr.bf16.mxu0 0
    %5674 = vmatpush1.bf16.msra.mxu0 0
    %5675 = vmatprep.subr.bf16.mxu0 0
    %5676 = vmatpush1.bf16.msra.mxu0 0
    %5677 = vmatprep.subr.bf16.mxu0 0
    %5678 = vmatpush1.bf16.msra.mxu0 0
    %5679 = vmatprep.subr.bf16.mxu0 0
    %5680 = vmatpush1.bf16.msra.mxu0 0
    %5681 = vmatprep.subr.bf16.mxu0 0
    %5682 = vmatpush1.bf16.msra.mxu0 0
    %5683 = vmatprep.subr.bf16.mxu0 0
    %5684 = vmatpush1.bf16.msra.mxu0 0
    %5685 = vmatprep.subr.bf16.mxu0 0
    %5686 = vmatpush1.bf16.msra.mxu0 0
    %5687 = vmatprep.subr.bf16.mxu0 %v5593
    %5688 = vmatpush1.bf16.msra.mxu0 %v5592
    %5689 = vmatprep.subr.bf16.mxu0 0
    %5690 = vmatpush2.bf16.msra.mxu0 0
    %5691 = vmatprep.subr.bf16.mxu0 0
    %5692 = vmatpush2.bf16.msra.mxu0 0
    %5693 = vmatprep.subr.bf16.mxu0 0
    %5694 = vmatpush2.bf16.msra.mxu0 0
    %5695 = vmatprep.subr.bf16.mxu0 0
    %5696 = vmatpush2.bf16.msra.mxu0 0
    %5697 = vmatprep.subr.bf16.mxu0 0
    %5698 = vmatpush2.bf16.msra.mxu0 0
    %5699 = vmatprep.subr.bf16.mxu0 0
    %5700 = vmatpush2.bf16.msra.mxu0 0
    %5701 = vmatprep.subr.bf16.mxu0 0
    %5702 = vmatpush2.bf16.msra.mxu0 0
    %5703 = vmatprep.subr.bf16.mxu0 0
    %5704 = vmatpush2.bf16.msra.mxu0 0
    %5705 = vmatprep.mubr.bf16.mxu0 0
    %5706 = vmatmul.mubr.bf16.gmra.mxu0 %v5668
    %v5707 = vpop.f32.mrf.mxu0
    %v5708 = vadd.f32 %v5650, %v5707
    %v5709 = vpop.f32.mrf.mxu0
    %v5710 = vadd.f32 %v5652, %v5709
    %v5711 = vpop.f32.mrf.mxu0
    %v5712 = vadd.f32 %v5654, %v5711
    %v5713 = vpop.f32.mrf.mxu0
    %v5714 = vadd.f32 %v5656, %v5713
    %5715 = vmatprep.mubr.bf16.mxu0 0
    %5716 = vmatmul.mubr.bf16.gmra.mxu0 %v5671
    %v5717 = vpop.f32.mrf.mxu0
    %v5718 = vadd.f32 %v5660, %v5717
    %v5719 = vpop.f32.mrf.mxu0
    %v5720 = vadd.f32 %v5662, %v5719
    %v5721 = vpop.f32.mrf.mxu0
    %v5722 = vadd.f32 %v5664, %v5721
    %v5723 = vpop.f32.mrf.mxu0
    %v5724 = vadd.f32 %v5666, %v5723
    %5725 = vdwg.mxu0
    %v5726 = vpack.c.bf16 %v5712, %v5708
    %v5727 = vpack.c.bf16 %v5714, %v5710
    %v5728 = vpack.c.bf16 %v5722, %v5718
    %v5729 = vpack.c.bf16 %v5724, %v5720
    %v5730 = vld [vmem:[#allocation5] sm:$0xff]
    %v5731 = vld [vmem:[#allocation5 + $0x8] sm:$0xff]
    %v5732 = vld [vmem:[#allocation5 + $0x10] sm:$0xff]
    %v5733 = vld [vmem:[#allocation5 + $0x18] sm:$0xff]
    %v5734 = vld [vmem:[#allocation5 + $0x20] sm:$0xff]
    %v5735 = vld [vmem:[#allocation5 + $0x28] sm:$0xff]
    %v5736 = vld [vmem:[#allocation5 + $0x30] sm:$0xff]
    %v5737 = vld [vmem:[#allocation5 + $0x38] sm:$0xff]
    %v5738 = vld [vmem:[#allocation5 + $0x40] sm:$0xff]
    %v5739 = vld [vmem:[#allocation5 + $0x48] sm:$0xff]
    %v5740 = vld [vmem:[#allocation5 + $0x50] sm:$0xff]
    %v5741 = vld [vmem:[#allocation5 + $0x58] sm:$0xff]
    %v5742 = vld [vmem:[#allocation5 + $0x60] sm:$0xff]
    %v5743 = vld [vmem:[#allocation5 + $0x68] sm:$0xff]
    %v5744 = vld [vmem:[#allocation5 + $0x70] sm:$0xff]
    %v5745 = vld [vmem:[#allocation5 + $0x78] sm:$0xff]
    %v5746 = vld [vmem:[#allocation5 + $0x80] sm:$0xff]
    %v5747 = vld [vmem:[#allocation5 + $0x88] sm:$0xff]
    %v5748 = vld [vmem:[#allocation5 + $0x90] sm:$0xff]
    %v5749 = vld [vmem:[#allocation5 + $0x98] sm:$0xff]
    %v5750 = vld [vmem:[#allocation5 + $0xa0] sm:$0xff]
    %v5751 = vld [vmem:[#allocation5 + $0xa8] sm:$0xff]
    %v5752 = vld [vmem:[#allocation5 + $0xb0] sm:$0xff]
    %v5753 = vld [vmem:[#allocation5 + $0xb8] sm:$0xff]
    %v5754 = vld [vmem:[#allocation5 + $0xc0] sm:$0xff]
    %v5755 = vld [vmem:[#allocation5 + $0xc8] sm:$0xff]
    %v5756 = vld [vmem:[#allocation5 + $0xd0] sm:$0xff]
    %v5757 = vld [vmem:[#allocation5 + $0xd8] sm:$0xff]
    %v5758 = vld [vmem:[#allocation5 + $0xe0] sm:$0xff]
    %v5759 = vld [vmem:[#allocation5 + $0xe8] sm:$0xff]
    %v5760 = vld [vmem:[#allocation5 + $0xf0] sm:$0xff]
    %v5761 = vld [vmem:[#allocation5 + $0xf8] sm:$0xff]
    %v5762 = vld [vmem:[#allocation5 + $0x100] sm:$0xff]
    %v5763 = vld [vmem:[#allocation5 + $0x108] sm:$0xff]
    %v5764 = vld [vmem:[#allocation5 + $0x110] sm:$0xff]
    %v5765 = vld [vmem:[#allocation5 + $0x118] sm:$0xff]
    %v5766 = vld [vmem:[#allocation5 + $0x120] sm:$0xff]
    %v5767 = vld [vmem:[#allocation5 + $0x128] sm:$0xff]
    %v5768 = vld [vmem:[#allocation5 + $0x130] sm:$0xff]
    %v5769 = vld [vmem:[#allocation5 + $0x138] sm:$0xff]
    %v5770 = vld [vmem:[#allocation5 + $0x140] sm:$0xff]
    %v5771 = vld [vmem:[#allocation5 + $0x148] sm:$0xff]
    %v5772 = vld [vmem:[#allocation5 + $0x150] sm:$0xff]
    %v5773 = vld [vmem:[#allocation5 + $0x158] sm:$0xff]
    %v5774 = vld [vmem:[#allocation5 + $0x160] sm:$0xff]
    %v5775 = vld [vmem:[#allocation5 + $0x168] sm:$0xff]
    %v5776 = vld [vmem:[#allocation5 + $0x170] sm:$0xff]
    %v5777 = vld [vmem:[#allocation5 + $0x178] sm:$0xff]
    %v5778 = vld [vmem:[#allocation5 + $0x180] sm:$0xff]
    %v5779 = vld [vmem:[#allocation5 + $0x188] sm:$0xff]
    %v5780 = vld [vmem:[#allocation5 + $0x190] sm:$0xff]
    %v5781 = vld [vmem:[#allocation5 + $0x198] sm:$0xff]
    %v5782 = vld [vmem:[#allocation5 + $0x1a0] sm:$0xff]
    %v5783 = vld [vmem:[#allocation5 + $0x1a8] sm:$0xff]
    %v5784 = vld [vmem:[#allocation5 + $0x1b0] sm:$0xff]
    %v5785 = vld [vmem:[#allocation5 + $0x1b8] sm:$0xff]
    %v5786 = vld [vmem:[#allocation5 + $0x1c0] sm:$0xff]
    %v5787 = vld [vmem:[#allocation5 + $0x1c8] sm:$0xff]
    %v5788 = vld [vmem:[#allocation5 + $0x1d0] sm:$0xff]
    %v5789 = vld [vmem:[#allocation5 + $0x1d8] sm:$0xff]
    %v5790 = vld [vmem:[#allocation5 + $0x1e0] sm:$0xff]
    %v5791 = vld [vmem:[#allocation5 + $0x1e8] sm:$0xff]
    %v5792 = vld [vmem:[#allocation5 + $0x1f0] sm:$0xff]
    %v5793 = vld [vmem:[#allocation5 + $0x1f8] sm:$0xff]
    %v5794 = vld [vmem:[#allocation7] sm:$0xff]
    %v5795 = vld [vmem:[#allocation7 + $0x8] sm:$0xff]
    %v5796 = vld [vmem:[#allocation7 + $0x10] sm:$0xff]
    %v5797 = vld [vmem:[#allocation7 + $0x18] sm:$0xff]
    %v5798 = vld [vmem:[#allocation7 + $0x20] sm:$0xff]
    %v5799 = vld [vmem:[#allocation7 + $0x28] sm:$0xff]
    %v5800 = vld [vmem:[#allocation7 + $0x30] sm:$0xff]
    %v5801 = vld [vmem:[#allocation7 + $0x38] sm:$0xff]
    %v5802 = vld [vmem:[#allocation7 + $0x40] sm:$0xff]
    %v5803 = vld [vmem:[#allocation7 + $0x48] sm:$0xff]
    %v5804 = vld [vmem:[#allocation7 + $0x50] sm:$0xff]
    %v5805 = vld [vmem:[#allocation7 + $0x58] sm:$0xff]
    %v5806 = vld [vmem:[#allocation7 + $0x60] sm:$0xff]
    %v5807 = vld [vmem:[#allocation7 + $0x68] sm:$0xff]
    %v5808 = vld [vmem:[#allocation7 + $0x70] sm:$0xff]
    %v5809 = vld [vmem:[#allocation7 + $0x78] sm:$0xff]
    %v5810 = vld [vmem:[#allocation7 + $0x80] sm:$0xff]
    %v5811 = vld [vmem:[#allocation7 + $0x88] sm:$0xff]
    %v5812 = vld [vmem:[#allocation7 + $0x90] sm:$0xff]
    %v5813 = vld [vmem:[#allocation7 + $0x98] sm:$0xff]
    %v5814 = vld [vmem:[#allocation7 + $0xa0] sm:$0xff]
    %v5815 = vld [vmem:[#allocation7 + $0xa8] sm:$0xff]
    %v5816 = vld [vmem:[#allocation7 + $0xb0] sm:$0xff]
    %v5817 = vld [vmem:[#allocation7 + $0xb8] sm:$0xff]
    %v5818 = vld [vmem:[#allocation7 + $0xc0] sm:$0xff]
    %v5819 = vld [vmem:[#allocation7 + $0xc8] sm:$0xff]
    %v5820 = vld [vmem:[#allocation7 + $0xd0] sm:$0xff]
    %v5821 = vld [vmem:[#allocation7 + $0xd8] sm:$0xff]
    %v5822 = vld [vmem:[#allocation7 + $0xe0] sm:$0xff]
    %v5823 = vld [vmem:[#allocation7 + $0xe8] sm:$0xff]
    %v5824 = vld [vmem:[#allocation7 + $0xf0] sm:$0xff]
    %v5825 = vld [vmem:[#allocation7 + $0xf8] sm:$0xff]
    %v5826 = vld [vmem:[#allocation7 + $0x100] sm:$0xff]
    %v5827 = vld [vmem:[#allocation7 + $0x108] sm:$0xff]
    %v5828 = vld [vmem:[#allocation7 + $0x110] sm:$0xff]
    %v5829 = vld [vmem:[#allocation7 + $0x118] sm:$0xff]
    %v5830 = vld [vmem:[#allocation7 + $0x120] sm:$0xff]
    %v5831 = vld [vmem:[#allocation7 + $0x128] sm:$0xff]
    %v5832 = vld [vmem:[#allocation7 + $0x130] sm:$0xff]
    %v5833 = vld [vmem:[#allocation7 + $0x138] sm:$0xff]
    %v5834 = vld [vmem:[#allocation7 + $0x140] sm:$0xff]
    %v5835 = vld [vmem:[#allocation7 + $0x148] sm:$0xff]
    %v5836 = vld [vmem:[#allocation7 + $0x150] sm:$0xff]
    %v5837 = vld [vmem:[#allocation7 + $0x158] sm:$0xff]
    %v5838 = vld [vmem:[#allocation7 + $0x160] sm:$0xff]
    %v5839 = vld [vmem:[#allocation7 + $0x168] sm:$0xff]
    %v5840 = vld [vmem:[#allocation7 + $0x170] sm:$0xff]
    %v5841 = vld [vmem:[#allocation7 + $0x178] sm:$0xff]
    %v5842 = vld [vmem:[#allocation7 + $0x180] sm:$0xff]
    %v5843 = vld [vmem:[#allocation7 + $0x188] sm:$0xff]
    %v5844 = vld [vmem:[#allocation7 + $0x190] sm:$0xff]
    %v5845 = vld [vmem:[#allocation7 + $0x198] sm:$0xff]
    %v5846 = vld [vmem:[#allocation7 + $0x1a0] sm:$0xff]
    %v5847 = vld [vmem:[#allocation7 + $0x1a8] sm:$0xff]
    %v5848 = vld [vmem:[#allocation7 + $0x1b0] sm:$0xff]
    %v5849 = vld [vmem:[#allocation7 + $0x1b8] sm:$0xff]
    %v5850 = vld [vmem:[#allocation7 + $0x1c0] sm:$0xff]
    %v5851 = vld [vmem:[#allocation7 + $0x1c8] sm:$0xff]
    %v5852 = vld [vmem:[#allocation7 + $0x1d0] sm:$0xff]
    %v5853 = vld [vmem:[#allocation7 + $0x1d8] sm:$0xff]
    %v5854 = vld [vmem:[#allocation7 + $0x1e0] sm:$0xff]
    %v5855 = vld [vmem:[#allocation7 + $0x1e8] sm:$0xff]
    %v5856 = vld [vmem:[#allocation7 + $0x1f0] sm:$0xff]
    %v5857 = vld [vmem:[#allocation7 + $0x1f8] sm:$0xff]
    %v5859 = vshrl.u32 %v5726, 16
    %v5861 = vrot.slane %v5859, 7
    %v5862 = vshll.u32 %v5726, 16
    %v5864 = vor.u32 %v5861, %v5862
    %v5866 = vshrl.u32 %v5727, 16
    %v5868 = vrot.slane %v5866, 7
    %v5869 = vshll.u32 %v5727, 16
    %v5871 = vor.u32 %v5868, %v5869
    %v5873 = vshrl.u32 %v5728, 16
    %v5875 = vrot.slane %v5873, 7
    %v5876 = vshll.u32 %v5728, 16
    %v5878 = vor.u32 %v5875, %v5876
    %v5879 = vsel %vm1755, %v5861, %v5878
    %v5881 = vshrl.u32 %v5729, 16
    %v5883 = vrot.slane %v5881, 7
    %v5884 = vshll.u32 %v5729, 16
    %v5886 = vor.u32 %v5883, %v5884
    %v5887 = vsel %vm1755, %v5868, %v5886
    %v5892 = vsel %vm1756, 0, %v5864
    %v5893 = vsel %vm1756, 0, %v5871
    %v5894 = vrot.slane %v5862, 1
    %v5895 = vor.u32 %v5859, %v5894
    %v5896 = vrot.slane %v5876, 1
    %v5897 = vsel %vm3800, %v5895, %v5896
    %v5898 = vrot.slane %v5869, 1
    %v5899 = vor.u32 %v5866, %v5898
    %v5900 = vrot.slane %v5884, 1
    %v5901 = vsel %vm3800, %v5899, %v5900
    %v5902 = vor.u32 %v5873, %v5896
    %v5903 = vor.u32 %v5881, %v5900
    %v5908 = vsel %vm3801, %v5902, 0
    %v5909 = vsel %vm3801, %v5903, 0
    %vm5910 = vcmp.eq.s32.totalorder %v5018, 0
    %vm5911 = vcmp.eq.s32.totalorder %v5019, 0
    %vm5912 = vcmp.eq.s32.totalorder %v5020, 0
    %vm5913 = vcmp.eq.s32.totalorder %v5021, 0
    %vm5914 = vmpackc.low %vm5910, %vm5910
    %vm5915 = vmpackc.low %vm5911, %vm5911
    %vm5916 = vmpackc.low %vm5912, %vm5912
    %vm5917 = vmpackc.low %vm5913, %vm5913
    %v5918 = vsel %vm5914, 65537, 0
    %v5919 = vsel %vm5915, 65537, 0
    %v5920 = vsel %vm5916, 65537, 0
    %v5921 = vsel %vm5917, 65537, 0
    %v5922 = vunpack.c.l.b16 %v5918
    %v5923 = vunpack.c.l.b16 %v5919
    %v5924 = vunpack.c.l.b16 %v5920
    %v5925 = vunpack.c.l.b16 %v5921
    %v5926 = vpack.c.b16 %v5923, %v5922
    %v5927 = vpack.c.b16 %v5925, %v5924
    %vm5928 = vcmp.ne.s16.totalorder %v5926, 0
    %vm5929 = vcmp.ne.s16.totalorder %v5927, 0
    %v5930 = vsel %vm5928, 0, %v5892
    %v5931 = vsel %vm5928, 0, %v5893
    %v5932 = vsel %vm5929, 0, %v5879
    %v5933 = vsel %vm5929, 0, %v5887
    %vm5934 = vcmp.eq.s32.totalorder %v5018, 15
    %vm5935 = vcmp.eq.s32.totalorder %v5019, 15
    %vm5936 = vcmp.eq.s32.totalorder %v5020, 15
    %vm5937 = vcmp.eq.s32.totalorder %v5021, 15
    %vm5938 = vmpackc.low %vm5934, %vm5934
    %vm5939 = vmpackc.low %vm5935, %vm5935
    %vm5940 = vmpackc.low %vm5936, %vm5936
    %vm5941 = vmpackc.low %vm5937, %vm5937
    %v5942 = vsel %vm5938, 65537, 0
    %v5943 = vsel %vm5939, 65537, 0
    %v5944 = vsel %vm5940, 65537, 0
    %v5945 = vsel %vm5941, 65537, 0
    %v5946 = vunpack.c.l.b16 %v5942
    %v5947 = vunpack.c.l.b16 %v5943
    %v5948 = vunpack.c.l.b16 %v5944
    %v5949 = vunpack.c.l.b16 %v5945
    %v5950 = vpack.c.b16 %v5947, %v5946
    %v5951 = vpack.c.b16 %v5949, %v5948
    %vm5952 = vcmp.ne.s16.totalorder %v5950, 0
    %vm5953 = vcmp.ne.s16.totalorder %v5951, 0
    %v5954 = vsel %vm5952, 0, %v5897
    %v5955 = vsel %vm5952, 0, %v5901
    %v5956 = vsel %vm5953, 0, %v5908
    %v5957 = vsel %vm5953, 0, %v5909
    %v6022 = vunpack.c.l.b16 %v5730
    %v6023 = vunpack.c.h.b16 %v5730
    %v6024 = vunpack.c.l.b16 %v5731
    %v6025 = vunpack.c.h.b16 %v5731
    %v6026 = vunpack.c.l.b16 %v5732
    %v6027 = vunpack.c.h.b16 %v5732
    %v6028 = vunpack.c.l.b16 %v5733
    %v6029 = vunpack.c.h.b16 %v5733
    %v6030 = vunpack.c.l.b16 %v5734
    %v6031 = vunpack.c.h.b16 %v5734
    %v6032 = vunpack.c.l.b16 %v5735
    %v6033 = vunpack.c.h.b16 %v5735
    %v6034 = vunpack.c.l.b16 %v5736
    %v6035 = vunpack.c.h.b16 %v5736
    %v6036 = vunpack.c.l.b16 %v5737
    %v6037 = vunpack.c.h.b16 %v5737
    %v6038 = vunpack.c.l.b16 %v5738
    %v6039 = vunpack.c.h.b16 %v5738
    %v6040 = vunpack.c.l.b16 %v5739
    %v6041 = vunpack.c.h.b16 %v5739
    %v6042 = vunpack.c.l.b16 %v5740
    %v6043 = vunpack.c.h.b16 %v5740
    %v6044 = vunpack.c.l.b16 %v5741
    %v6045 = vunpack.c.h.b16 %v5741
    %v6046 = vunpack.c.l.b16 %v5742
    %v6047 = vunpack.c.h.b16 %v5742
    %v6048 = vunpack.c.l.b16 %v5743
    %v6049 = vunpack.c.h.b16 %v5743
    %v6050 = vunpack.c.l.b16 %v5744
    %v6051 = vunpack.c.h.b16 %v5744
    %v6052 = vunpack.c.l.b16 %v5745
    %v6053 = vunpack.c.h.b16 %v5745
    %v6054 = vunpack.c.l.b16 %v5746
    %v6055 = vunpack.c.h.b16 %v5746
    %v6056 = vunpack.c.l.b16 %v5747
    %v6057 = vunpack.c.h.b16 %v5747
    %v6058 = vunpack.c.l.b16 %v5748
    %v6059 = vunpack.c.h.b16 %v5748
    %v6060 = vunpack.c.l.b16 %v5749
    %v6061 = vunpack.c.h.b16 %v5749
    %v6062 = vunpack.c.l.b16 %v5750
    %v6063 = vunpack.c.h.b16 %v5750
    %v6064 = vunpack.c.l.b16 %v5751
    %v6065 = vunpack.c.h.b16 %v5751
    %v6066 = vunpack.c.l.b16 %v5752
    %v6067 = vunpack.c.h.b16 %v5752
    %v6068 = vunpack.c.l.b16 %v5753
    %v6069 = vunpack.c.h.b16 %v5753
    %v6070 = vunpack.c.l.b16 %v5754
    %v6071 = vunpack.c.h.b16 %v5754
    %v6072 = vunpack.c.l.b16 %v5755
    %v6073 = vunpack.c.h.b16 %v5755
    %v6074 = vunpack.c.l.b16 %v5756
    %v6075 = vunpack.c.h.b16 %v5756
    %v6076 = vunpack.c.l.b16 %v5757
    %v6077 = vunpack.c.h.b16 %v5757
    %v6078 = vunpack.c.l.b16 %v5758
    %v6079 = vunpack.c.h.b16 %v5758
    %v6080 = vunpack.c.l.b16 %v5759
    %v6081 = vunpack.c.h.b16 %v5759
    %v6082 = vunpack.c.l.b16 %v5760
    %v6083 = vunpack.c.h.b16 %v5760
    %v6084 = vunpack.c.l.b16 %v5761
    %v6085 = vunpack.c.h.b16 %v5761
    %v6086 = vunpack.c.l.b16 %v5762
    %v6087 = vunpack.c.h.b16 %v5762
    %v6088 = vunpack.c.l.b16 %v5763
    %v6089 = vunpack.c.h.b16 %v5763
    %v6090 = vunpack.c.l.b16 %v5764
    %v6091 = vunpack.c.h.b16 %v5764
    %v6092 = vunpack.c.l.b16 %v5765
    %v6093 = vunpack.c.h.b16 %v5765
    %v6094 = vunpack.c.l.b16 %v5766
    %v6095 = vunpack.c.h.b16 %v5766
    %v6096 = vunpack.c.l.b16 %v5767
    %v6097 = vunpack.c.h.b16 %v5767
    %v6098 = vunpack.c.l.b16 %v5768
    %v6099 = vunpack.c.h.b16 %v5768
    %v6100 = vunpack.c.l.b16 %v5769
    %v6101 = vunpack.c.h.b16 %v5769
    %v6102 = vunpack.c.l.b16 %v5770
    %v6103 = vunpack.c.h.b16 %v5770
    %v6104 = vunpack.c.l.b16 %v5771
    %v6105 = vunpack.c.h.b16 %v5771
    %v6106 = vunpack.c.l.b16 %v5772
    %v6107 = vunpack.c.h.b16 %v5772
    %v6108 = vunpack.c.l.b16 %v5773
    %v6109 = vunpack.c.h.b16 %v5773
    %v6110 = vunpack.c.l.b16 %v5774
    %v6111 = vunpack.c.h.b16 %v5774
    %v6112 = vunpack.c.l.b16 %v5775
    %v6113 = vunpack.c.h.b16 %v5775
    %v6114 = vunpack.c.l.b16 %v5776
    %v6115 = vunpack.c.h.b16 %v5776
    %v6116 = vunpack.c.l.b16 %v5777
    %v6117 = vunpack.c.h.b16 %v5777
    %v6118 = vunpack.c.l.b16 %v5778
    %v6119 = vunpack.c.h.b16 %v5778
    %v6120 = vunpack.c.l.b16 %v5779
    %v6121 = vunpack.c.h.b16 %v5779
    %v6122 = vunpack.c.l.b16 %v5780
    %v6123 = vunpack.c.h.b16 %v5780
    %v6124 = vunpack.c.l.b16 %v5781
    %v6125 = vunpack.c.h.b16 %v5781
    %v6126 = vunpack.c.l.b16 %v5782
    %v6127 = vunpack.c.h.b16 %v5782
    %v6128 = vunpack.c.l.b16 %v5783
    %v6129 = vunpack.c.h.b16 %v5783
    %v6130 = vunpack.c.l.b16 %v5784
    %v6131 = vunpack.c.h.b16 %v5784
    %v6132 = vunpack.c.l.b16 %v5785
    %v6133 = vunpack.c.h.b16 %v5785
    %v6134 = vunpack.c.l.b16 %v5786
    %v6135 = vunpack.c.h.b16 %v5786
    %v6136 = vunpack.c.l.b16 %v5787
    %v6137 = vunpack.c.h.b16 %v5787
    %v6138 = vunpack.c.l.b16 %v5788
    %v6139 = vunpack.c.h.b16 %v5788
    %v6140 = vunpack.c.l.b16 %v5789
    %v6141 = vunpack.c.h.b16 %v5789
    %v6142 = vunpack.c.l.b16 %v5790
    %v6143 = vunpack.c.h.b16 %v5790
    %v6144 = vunpack.c.l.b16 %v5791
    %v6145 = vunpack.c.h.b16 %v5791
    %v6146 = vunpack.c.l.b16 %v5792
    %v6147 = vunpack.c.h.b16 %v5792
    %v6148 = vunpack.c.l.b16 %v5793
    %v6149 = vunpack.c.h.b16 %v5793
    %v6150 = vpack.c.b16 %v6024, %v6022
    %v6151 = vpack.c.b16 %v6025, %v6023
    %v6152 = vpack.c.b16 %v6028, %v6026
    %v6153 = vpack.c.b16 %v6029, %v6027
    %v6154 = vpack.c.b16 %v6032, %v6030
    %v6155 = vpack.c.b16 %v6033, %v6031
    %v6156 = vpack.c.b16 %v6036, %v6034
    %v6157 = vpack.c.b16 %v6037, %v6035
    %v6158 = vpack.c.b16 %v6040, %v6038
    %v6159 = vpack.c.b16 %v6041, %v6039
    %v6160 = vpack.c.b16 %v6044, %v6042
    %v6161 = vpack.c.b16 %v6045, %v6043
    %v6162 = vpack.c.b16 %v6048, %v6046
    %v6163 = vpack.c.b16 %v6049, %v6047
    %v6164 = vpack.c.b16 %v6052, %v6050
    %v6165 = vpack.c.b16 %v6053, %v6051
    %v6166 = vpack.c.b16 %v6056, %v6054
    %v6167 = vpack.c.b16 %v6057, %v6055
    %v6168 = vpack.c.b16 %v6060, %v6058
    %v6169 = vpack.c.b16 %v6061, %v6059
    %v6170 = vpack.c.b16 %v6064, %v6062
    %v6171 = vpack.c.b16 %v6065, %v6063
    %v6172 = vpack.c.b16 %v6068, %v6066
    %v6173 = vpack.c.b16 %v6069, %v6067
    %v6174 = vpack.c.b16 %v6072, %v6070
    %v6175 = vpack.c.b16 %v6073, %v6071
    %v6176 = vpack.c.b16 %v6076, %v6074
    %v6177 = vpack.c.b16 %v6077, %v6075
    %v6178 = vpack.c.b16 %v6080, %v6078
    %v6179 = vpack.c.b16 %v6081, %v6079
    %v6180 = vpack.c.b16 %v6084, %v6082
    %v6181 = vpack.c.b16 %v6085, %v6083
    %v6182 = vpack.c.b16 %v6088, %v6086
    %v6183 = vpack.c.b16 %v6089, %v6087
    %v6184 = vpack.c.b16 %v6092, %v6090
    %v6185 = vpack.c.b16 %v6093, %v6091
    %v6186 = vpack.c.b16 %v6096, %v6094
    %v6187 = vpack.c.b16 %v6097, %v6095
    %v6188 = vpack.c.b16 %v6100, %v6098
    %v6189 = vpack.c.b16 %v6101, %v6099
    %v6190 = vpack.c.b16 %v6104, %v6102
    %v6191 = vpack.c.b16 %v6105, %v6103
    %v6192 = vpack.c.b16 %v6108, %v6106
    %v6193 = vpack.c.b16 %v6109, %v6107
    %v6194 = vpack.c.b16 %v6112, %v6110
    %v6195 = vpack.c.b16 %v6113, %v6111
    %v6196 = vpack.c.b16 %v6116, %v6114
    %v6197 = vpack.c.b16 %v6117, %v6115
    %v6198 = vpack.c.b16 %v6120, %v6118
    %v6199 = vpack.c.b16 %v6121, %v6119
    %v6200 = vpack.c.b16 %v6124, %v6122
    %v6201 = vpack.c.b16 %v6125, %v6123
    %v6202 = vpack.c.b16 %v6128, %v6126
    %v6203 = vpack.c.b16 %v6129, %v6127
    %v6204 = vpack.c.b16 %v6132, %v6130
    %v6205 = vpack.c.b16 %v6133, %v6131
    %v6206 = vpack.c.b16 %v6136, %v6134
    %v6207 = vpack.c.b16 %v6137, %v6135
    %v6208 = vpack.c.b16 %v6140, %v6138
    %v6209 = vpack.c.b16 %v6141, %v6139
    %v6210 = vpack.c.b16 %v6144, %v6142
    %v6211 = vpack.c.b16 %v6145, %v6143
    %v6212 = vpack.c.b16 %v6148, %v6146
    %v6213 = vpack.c.b16 %v6149, %v6147
    %6278 = vmatprep.subr.bf16.mxu0 %v6165
    %6279 = vmatpush1.bf16.msra.mxu0 %v6164
    %6280 = vmatprep.subr.bf16.mxu0 %v6163
    %6281 = vmatpush1.bf16.msra.mxu0 %v6162
    %6282 = vmatprep.subr.bf16.mxu0 %v6161
    %6283 = vmatpush1.bf16.msra.mxu0 %v6160
    %6284 = vmatprep.subr.bf16.mxu0 %v6159
    %6285 = vmatpush1.bf16.msra.mxu0 %v6158
    %6286 = vmatprep.subr.bf16.mxu0 %v6157
    %6287 = vmatpush1.bf16.msra.mxu0 %v6156
    %6288 = vmatprep.subr.bf16.mxu0 %v6155
    %6289 = vmatpush1.bf16.msra.mxu0 %v6154
    %6290 = vmatprep.subr.bf16.mxu0 %v6153
    %6291 = vmatpush1.bf16.msra.mxu0 %v6152
    %6292 = vmatprep.subr.bf16.mxu0 %v6151
    %6293 = vmatpush1.bf16.msra.mxu0 %v6150
    %6294 = vmatprep.subr.bf16.mxu0 %v6181
    %6295 = vmatpush2.bf16.msra.mxu0 %v6180
    %6296 = vmatprep.subr.bf16.mxu0 %v6179
    %6297 = vmatpush2.bf16.msra.mxu0 %v6178
    %6298 = vmatprep.subr.bf16.mxu0 %v6177
    %6299 = vmatpush2.bf16.msra.mxu0 %v6176
    %6300 = vmatprep.subr.bf16.mxu0 %v6175
    %6301 = vmatpush2.bf16.msra.mxu0 %v6174
    %6302 = vmatprep.subr.bf16.mxu0 %v6173
    %6303 = vmatpush2.bf16.msra.mxu0 %v6172
    %6304 = vmatprep.subr.bf16.mxu0 %v6171
    %6305 = vmatpush2.bf16.msra.mxu0 %v6170
    %6306 = vmatprep.subr.bf16.mxu0 %v6169
    %6307 = vmatpush2.bf16.msra.mxu0 %v6168
    %6308 = vmatprep.subr.bf16.mxu0 %v6167
    %6309 = vmatpush2.bf16.msra.mxu0 %v6166
    %6310 = vmatprep.mubr.bf16.mxu0 %v5931
    %6311 = vmatmul.mubr.bf16.gmra.mxu0 %v5930
    %v6312 = vpop.f32.mrf.mxu0
    %v6313 = vadd.f32 0.0, %v6312
    %v6314 = vpop.f32.mrf.mxu0
    %v6315 = vadd.f32 0.0, %v6314
    %v6316 = vpop.f32.mrf.mxu0
    %v6317 = vadd.f32 0.0, %v6316
    %v6318 = vpop.f32.mrf.mxu0
    %v6319 = vadd.f32 0.0, %v6318
    %6320 = vmatprep.mubr.bf16.mxu0 %v5933
    %6321 = vmatmul.mubr.bf16.gmra.mxu0 %v5932
    %v6322 = vpop.f32.mrf.mxu0
    %v6323 = vadd.f32 0.0, %v6322
    %v6324 = vpop.f32.mrf.mxu0
    %v6325 = vadd.f32 0.0, %v6324
    %v6326 = vpop.f32.mrf.mxu0
    %v6327 = vadd.f32 0.0, %v6326
    %v6328 = vpop.f32.mrf.mxu0
    %v6329 = vadd.f32 0.0, %v6328
    %6330 = vdwg.mxu0
    %6331 = vmatprep.subr.bf16.mxu0 %v6197
    %6332 = vmatpush1.bf16.msra.mxu0 %v6196
    %6333 = vmatprep.subr.bf16.mxu0 %v6195
    %6334 = vmatpush1.bf16.msra.mxu0 %v6194
    %6335 = vmatprep.subr.bf16.mxu0 %v6193
    %6336 = vmatpush1.bf16.msra.mxu0 %v6192
    %6337 = vmatprep.subr.bf16.mxu0 %v6191
    %6338 = vmatpush1.bf16.msra.mxu0 %v6190
    %6339 = vmatprep.subr.bf16.mxu0 %v6189
    %6340 = vmatpush1.bf16.msra.mxu0 %v6188
    %6341 = vmatprep.subr.bf16.mxu0 %v6187
    %6342 = vmatpush1.bf16.msra.mxu0 %v6186
    %6343 = vmatprep.subr.bf16.mxu0 %v6185
    %6344 = vmatpush1.bf16.msra.mxu0 %v6184
    %6345 = vmatprep.subr.bf16.mxu0 %v6183
    %6346 = vmatpush1.bf16.msra.mxu0 %v6182
    %6347 = vmatprep.subr.bf16.mxu0 %v6213
    %6348 = vmatpush2.bf16.msra.mxu0 %v6212
    %6349 = vmatprep.subr.bf16.mxu0 %v6211
    %6350 = vmatpush2.bf16.msra.mxu0 %v6210
    %6351 = vmatprep.subr.bf16.mxu0 %v6209
    %6352 = vmatpush2.bf16.msra.mxu0 %v6208
    %6353 = vmatprep.subr.bf16.mxu0 %v6207
    %6354 = vmatpush2.bf16.msra.mxu0 %v6206
    %6355 = vmatprep.subr.bf16.mxu0 %v6205
    %6356 = vmatpush2.bf16.msra.mxu0 %v6204
    %6357 = vmatprep.subr.bf16.mxu0 %v6203
    %6358 = vmatpush2.bf16.msra.mxu0 %v6202
    %6359 = vmatprep.subr.bf16.mxu0 %v6201
    %6360 = vmatpush2.bf16.msra.mxu0 %v6200
    %6361 = vmatprep.subr.bf16.mxu0 %v6199
    %6362 = vmatpush2.bf16.msra.mxu0 %v6198
    %6363 = vmatprep.mubr.bf16.mxu0 %v5727
    %6364 = vmatmul.mubr.bf16.gmra.mxu0 %v5726
    %v6365 = vpop.f32.mrf.mxu0
    %v6366 = vadd.f32 %v6313, %v6365
    %v6367 = vpop.f32.mrf.mxu0
    %v6368 = vadd.f32 %v6315, %v6367
    %v6369 = vpop.f32.mrf.mxu0
    %v6370 = vadd.f32 %v6317, %v6369
    %v6371 = vpop.f32.mrf.mxu0
    %v6372 = vadd.f32 %v6319, %v6371
    %6373 = vmatprep.mubr.bf16.mxu0 %v5729
    %6374 = vmatmul.mubr.bf16.gmra.mxu0 %v5728
    %v6375 = vpop.f32.mrf.mxu0
    %v6376 = vadd.f32 %v6323, %v6375
    %v6377 = vpop.f32.mrf.mxu0
    %v6378 = vadd.f32 %v6325, %v6377
    %v6379 = vpop.f32.mrf.mxu0
    %v6380 = vadd.f32 %v6327, %v6379
    %v6381 = vpop.f32.mrf.mxu0
    %v6382 = vadd.f32 %v6329, %v6381
    %6383 = vdwg.mxu0
    %v6448 = vunpack.c.l.b16 %v5794
    %v6449 = vunpack.c.h.b16 %v5794
    %v6450 = vunpack.c.l.b16 %v5795
    %v6451 = vunpack.c.h.b16 %v5795
    %v6452 = vunpack.c.l.b16 %v5796
    %v6453 = vunpack.c.h.b16 %v5796
    %v6454 = vunpack.c.l.b16 %v5797
    %v6455 = vunpack.c.h.b16 %v5797
    %v6456 = vunpack.c.l.b16 %v5798
    %v6457 = vunpack.c.h.b16 %v5798
    %v6458 = vunpack.c.l.b16 %v5799
    %v6459 = vunpack.c.h.b16 %v5799
    %v6460 = vunpack.c.l.b16 %v5800
    %v6461 = vunpack.c.h.b16 %v5800
    %v6462 = vunpack.c.l.b16 %v5801
    %v6463 = vunpack.c.h.b16 %v5801
    %v6464 = vunpack.c.l.b16 %v5802
    %v6465 = vunpack.c.h.b16 %v5802
    %v6466 = vunpack.c.l.b16 %v5803
    %v6467 = vunpack.c.h.b16 %v5803
    %v6468 = vunpack.c.l.b16 %v5804
    %v6469 = vunpack.c.h.b16 %v5804
    %v6470 = vunpack.c.l.b16 %v5805
    %v6471 = vunpack.c.h.b16 %v5805
    %v6472 = vunpack.c.l.b16 %v5806
    %v6473 = vunpack.c.h.b16 %v5806
    %v6474 = vunpack.c.l.b16 %v5807
    %v6475 = vunpack.c.h.b16 %v5807
    %v6476 = vunpack.c.l.b16 %v5808
    %v6477 = vunpack.c.h.b16 %v5808
    %v6478 = vunpack.c.l.b16 %v5809
    %v6479 = vunpack.c.h.b16 %v5809
    %v6480 = vunpack.c.l.b16 %v5810
    %v6481 = vunpack.c.h.b16 %v5810
    %v6482 = vunpack.c.l.b16 %v5811
    %v6483 = vunpack.c.h.b16 %v5811
    %v6484 = vunpack.c.l.b16 %v5812
    %v6485 = vunpack.c.h.b16 %v5812
    %v6486 = vunpack.c.l.b16 %v5813
    %v6487 = vunpack.c.h.b16 %v5813
    %v6488 = vunpack.c.l.b16 %v5814
    %v6489 = vunpack.c.h.b16 %v5814
    %v6490 = vunpack.c.l.b16 %v5815
    %v6491 = vunpack.c.h.b16 %v5815
    %v6492 = vunpack.c.l.b16 %v5816
    %v6493 = vunpack.c.h.b16 %v5816
    %v6494 = vunpack.c.l.b16 %v5817
    %v6495 = vunpack.c.h.b16 %v5817
    %v6496 = vunpack.c.l.b16 %v5818
    %v6497 = vunpack.c.h.b16 %v5818
    %v6498 = vunpack.c.l.b16 %v5819
    %v6499 = vunpack.c.h.b16 %v5819
    %v6500 = vunpack.c.l.b16 %v5820
    %v6501 = vunpack.c.h.b16 %v5820
    %v6502 = vunpack.c.l.b16 %v5821
    %v6503 = vunpack.c.h.b16 %v5821
    %v6504 = vunpack.c.l.b16 %v5822
    %v6505 = vunpack.c.h.b16 %v5822
    %v6506 = vunpack.c.l.b16 %v5823
    %v6507 = vunpack.c.h.b16 %v5823
    %v6508 = vunpack.c.l.b16 %v5824
    %v6509 = vunpack.c.h.b16 %v5824
    %v6510 = vunpack.c.l.b16 %v5825
    %v6511 = vunpack.c.h.b16 %v5825
    %v6512 = vunpack.c.l.b16 %v5826
    %v6513 = vunpack.c.h.b16 %v5826
    %v6514 = vunpack.c.l.b16 %v5827
    %v6515 = vunpack.c.h.b16 %v5827
    %v6516 = vunpack.c.l.b16 %v5828
    %v6517 = vunpack.c.h.b16 %v5828
    %v6518 = vunpack.c.l.b16 %v5829
    %v6519 = vunpack.c.h.b16 %v5829
    %v6520 = vunpack.c.l.b16 %v5830
    %v6521 = vunpack.c.h.b16 %v5830
    %v6522 = vunpack.c.l.b16 %v5831
    %v6523 = vunpack.c.h.b16 %v5831
    %v6524 = vunpack.c.l.b16 %v5832
    %v6525 = vunpack.c.h.b16 %v5832
    %v6526 = vunpack.c.l.b16 %v5833
    %v6527 = vunpack.c.h.b16 %v5833
    %v6528 = vunpack.c.l.b16 %v5834
    %v6529 = vunpack.c.h.b16 %v5834
    %v6530 = vunpack.c.l.b16 %v5835
    %v6531 = vunpack.c.h.b16 %v5835
    %v6532 = vunpack.c.l.b16 %v5836
    %v6533 = vunpack.c.h.b16 %v5836
    %v6534 = vunpack.c.l.b16 %v5837
    %v6535 = vunpack.c.h.b16 %v5837
    %v6536 = vunpack.c.l.b16 %v5838
    %v6537 = vunpack.c.h.b16 %v5838
    %v6538 = vunpack.c.l.b16 %v5839
    %v6539 = vunpack.c.h.b16 %v5839
    %v6540 = vunpack.c.l.b16 %v5840
    %v6541 = vunpack.c.h.b16 %v5840
    %v6542 = vunpack.c.l.b16 %v5841
    %v6543 = vunpack.c.h.b16 %v5841
    %v6544 = vunpack.c.l.b16 %v5842
    %v6545 = vunpack.c.h.b16 %v5842
    %v6546 = vunpack.c.l.b16 %v5843
    %v6547 = vunpack.c.h.b16 %v5843
    %v6548 = vunpack.c.l.b16 %v5844
    %v6549 = vunpack.c.h.b16 %v5844
    %v6550 = vunpack.c.l.b16 %v5845
    %v6551 = vunpack.c.h.b16 %v5845
    %v6552 = vunpack.c.l.b16 %v5846
    %v6553 = vunpack.c.h.b16 %v5846
    %v6554 = vunpack.c.l.b16 %v5847
    %v6555 = vunpack.c.h.b16 %v5847
    %v6556 = vunpack.c.l.b16 %v5848
    %v6557 = vunpack.c.h.b16 %v5848
    %v6558 = vunpack.c.l.b16 %v5849
    %v6559 = vunpack.c.h.b16 %v5849
    %v6560 = vunpack.c.l.b16 %v5850
    %v6561 = vunpack.c.h.b16 %v5850
    %v6562 = vunpack.c.l.b16 %v5851
    %v6563 = vunpack.c.h.b16 %v5851
    %v6564 = vunpack.c.l.b16 %v5852
    %v6565 = vunpack.c.h.b16 %v5852
    %v6566 = vunpack.c.l.b16 %v5853
    %v6567 = vunpack.c.h.b16 %v5853
    %v6568 = vunpack.c.l.b16 %v5854
    %v6569 = vunpack.c.h.b16 %v5854
    %v6570 = vunpack.c.l.b16 %v5855
    %v6571 = vunpack.c.h.b16 %v5855
    %v6572 = vunpack.c.l.b16 %v5856
    %v6573 = vunpack.c.h.b16 %v5856
    %v6574 = vunpack.c.l.b16 %v5857
    %v6575 = vunpack.c.h.b16 %v5857
    %v6576 = vpack.c.b16 %v6450, %v6448
    %v6577 = vpack.c.b16 %v6451, %v6449
    %v6578 = vpack.c.b16 %v6454, %v6452
    %v6579 = vpack.c.b16 %v6455, %v6453
    %v6580 = vpack.c.b16 %v6458, %v6456
    %v6581 = vpack.c.b16 %v6459, %v6457
    %v6582 = vpack.c.b16 %v6462, %v6460
    %v6583 = vpack.c.b16 %v6463, %v6461
    %v6584 = vpack.c.b16 %v6466, %v6464
    %v6585 = vpack.c.b16 %v6467, %v6465
    %v6586 = vpack.c.b16 %v6470, %v6468
    %v6587 = vpack.c.b16 %v6471, %v6469
    %v6588 = vpack.c.b16 %v6474, %v6472
    %v6589 = vpack.c.b16 %v6475, %v6473
    %v6590 = vpack.c.b16 %v6478, %v6476
    %v6591 = vpack.c.b16 %v6479, %v6477
    %v6592 = vpack.c.b16 %v6482, %v6480
    %v6593 = vpack.c.b16 %v6483, %v6481
    %v6594 = vpack.c.b16 %v6486, %v6484
    %v6595 = vpack.c.b16 %v6487, %v6485
    %v6596 = vpack.c.b16 %v6490, %v6488
    %v6597 = vpack.c.b16 %v6491, %v6489
    %v6598 = vpack.c.b16 %v6494, %v6492
    %v6599 = vpack.c.b16 %v6495, %v6493
    %v6600 = vpack.c.b16 %v6498, %v6496
    %v6601 = vpack.c.b16 %v6499, %v6497
    %v6602 = vpack.c.b16 %v6502, %v6500
    %v6603 = vpack.c.b16 %v6503, %v6501
    %v6604 = vpack.c.b16 %v6506, %v6504
    %v6605 = vpack.c.b16 %v6507, %v6505
    %v6606 = vpack.c.b16 %v6510, %v6508
    %v6607 = vpack.c.b16 %v6511, %v6509
    %v6608 = vpack.c.b16 %v6514, %v6512
    %v6609 = vpack.c.b16 %v6515, %v6513
    %v6610 = vpack.c.b16 %v6518, %v6516
    %v6611 = vpack.c.b16 %v6519, %v6517
    %v6612 = vpack.c.b16 %v6522, %v6520
    %v6613 = vpack.c.b16 %v6523, %v6521
    %v6614 = vpack.c.b16 %v6526, %v6524
    %v6615 = vpack.c.b16 %v6527, %v6525
    %v6616 = vpack.c.b16 %v6530, %v6528
    %v6617 = vpack.c.b16 %v6531, %v6529
    %v6618 = vpack.c.b16 %v6534, %v6532
    %v6619 = vpack.c.b16 %v6535, %v6533
    %v6620 = vpack.c.b16 %v6538, %v6536
    %v6621 = vpack.c.b16 %v6539, %v6537
    %v6622 = vpack.c.b16 %v6542, %v6540
    %v6623 = vpack.c.b16 %v6543, %v6541
    %v6624 = vpack.c.b16 %v6546, %v6544
    %v6625 = vpack.c.b16 %v6547, %v6545
    %v6626 = vpack.c.b16 %v6550, %v6548
    %v6627 = vpack.c.b16 %v6551, %v6549
    %v6628 = vpack.c.b16 %v6554, %v6552
    %v6629 = vpack.c.b16 %v6555, %v6553
    %v6630 = vpack.c.b16 %v6558, %v6556
    %v6631 = vpack.c.b16 %v6559, %v6557
    %v6632 = vpack.c.b16 %v6562, %v6560
    %v6633 = vpack.c.b16 %v6563, %v6561
    %v6634 = vpack.c.b16 %v6566, %v6564
    %v6635 = vpack.c.b16 %v6567, %v6565
    %v6636 = vpack.c.b16 %v6570, %v6568
    %v6637 = vpack.c.b16 %v6571, %v6569
    %v6638 = vpack.c.b16 %v6574, %v6572
    %v6639 = vpack.c.b16 %v6575, %v6573
    %6704 = vmatprep.subr.bf16.mxu0 %v6591
    %6705 = vmatpush1.bf16.msra.mxu0 %v6590
    %6706 = vmatprep.subr.bf16.mxu0 %v6589
    %6707 = vmatpush1.bf16.msra.mxu0 %v6588
    %6708 = vmatprep.subr.bf16.mxu0 %v6587
    %6709 = vmatpush1.bf16.msra.mxu0 %v6586
    %6710 = vmatprep.subr.bf16.mxu0 %v6585
    %6711 = vmatpush1.bf16.msra.mxu0 %v6584
    %6712 = vmatprep.subr.bf16.mxu0 %v6583
    %6713 = vmatpush1.bf16.msra.mxu0 %v6582
    %6714 = vmatprep.subr.bf16.mxu0 %v6581
    %6715 = vmatpush1.bf16.msra.mxu0 %v6580
    %6716 = vmatprep.subr.bf16.mxu0 %v6579
    %6717 = vmatpush1.bf16.msra.mxu0 %v6578
    %6718 = vmatprep.subr.bf16.mxu0 %v6577
    %6719 = vmatpush1.bf16.msra.mxu0 %v6576
    %6720 = vmatprep.subr.bf16.mxu0 %v6607
    %6721 = vmatpush2.bf16.msra.mxu0 %v6606
    %6722 = vmatprep.subr.bf16.mxu0 %v6605
    %6723 = vmatpush2.bf16.msra.mxu0 %v6604
    %6724 = vmatprep.subr.bf16.mxu0 %v6603
    %6725 = vmatpush2.bf16.msra.mxu0 %v6602
    %6726 = vmatprep.subr.bf16.mxu0 %v6601
    %6727 = vmatpush2.bf16.msra.mxu0 %v6600
    %6728 = vmatprep.subr.bf16.mxu0 %v6599
    %6729 = vmatpush2.bf16.msra.mxu0 %v6598
    %6730 = vmatprep.subr.bf16.mxu0 %v6597
    %6731 = vmatpush2.bf16.msra.mxu0 %v6596
    %6732 = vmatprep.subr.bf16.mxu0 %v6595
    %6733 = vmatpush2.bf16.msra.mxu0 %v6594
    %6734 = vmatprep.subr.bf16.mxu0 %v6593
    %6735 = vmatpush2.bf16.msra.mxu0 %v6592
    %6736 = vmatprep.mubr.bf16.mxu0 %v5727
    %6737 = vmatmul.mubr.bf16.gmra.mxu0 %v5726
    %v6738 = vpop.f32.mrf.mxu0
    %v6739 = vadd.f32 0.0, %v6738
    %v6740 = vpop.f32.mrf.mxu0
    %v6741 = vadd.f32 0.0, %v6740
    %v6742 = vpop.f32.mrf.mxu0
    %v6743 = vadd.f32 0.0, %v6742
    %v6744 = vpop.f32.mrf.mxu0
    %v6745 = vadd.f32 0.0, %v6744
    %6746 = vmatprep.mubr.bf16.mxu0 %v5729
    %6747 = vmatmul.mubr.bf16.gmra.mxu0 %v5728
    %v6748 = vpop.f32.mrf.mxu0
    %v6749 = vadd.f32 0.0, %v6748
    %v6750 = vpop.f32.mrf.mxu0
    %v6751 = vadd.f32 0.0, %v6750
    %v6752 = vpop.f32.mrf.mxu0
    %v6753 = vadd.f32 0.0, %v6752
    %v6754 = vpop.f32.mrf.mxu0
    %v6755 = vadd.f32 0.0, %v6754
    %6756 = vdwg.mxu0
    %6757 = vmatprep.subr.bf16.mxu0 %v6623
    %6758 = vmatpush1.bf16.msra.mxu0 %v6622
    %6759 = vmatprep.subr.bf16.mxu0 %v6621
    %6760 = vmatpush1.bf16.msra.mxu0 %v6620
    %6761 = vmatprep.subr.bf16.mxu0 %v6619
    %6762 = vmatpush1.bf16.msra.mxu0 %v6618
    %6763 = vmatprep.subr.bf16.mxu0 %v6617
    %6764 = vmatpush1.bf16.msra.mxu0 %v6616
    %6765 = vmatprep.subr.bf16.mxu0 %v6615
    %6766 = vmatpush1.bf16.msra.mxu0 %v6614
    %6767 = vmatprep.subr.bf16.mxu0 %v6613
    %6768 = vmatpush1.bf16.msra.mxu0 %v6612
    %6769 = vmatprep.subr.bf16.mxu0 %v6611
    %6770 = vmatpush1.bf16.msra.mxu0 %v6610
    %6771 = vmatprep.subr.bf16.mxu0 %v6609
    %6772 = vmatpush1.bf16.msra.mxu0 %v6608
    %6773 = vmatprep.subr.bf16.mxu0 %v6639
    %6774 = vmatpush2.bf16.msra.mxu0 %v6638
    %6775 = vmatprep.subr.bf16.mxu0 %v6637
    %6776 = vmatpush2.bf16.msra.mxu0 %v6636
    %6777 = vmatprep.subr.bf16.mxu0 %v6635
    %6778 = vmatpush2.bf16.msra.mxu0 %v6634
    %6779 = vmatprep.subr.bf16.mxu0 %v6633
    %6780 = vmatpush2.bf16.msra.mxu0 %v6632
    %6781 = vmatprep.subr.bf16.mxu0 %v6631
    %6782 = vmatpush2.bf16.msra.mxu0 %v6630
    %6783 = vmatprep.subr.bf16.mxu0 %v6629
    %6784 = vmatpush2.bf16.msra.mxu0 %v6628
    %6785 = vmatprep.subr.bf16.mxu0 %v6627
    %6786 = vmatpush2.bf16.msra.mxu0 %v6626
    %6787 = vmatprep.subr.bf16.mxu0 %v6625
    %6788 = vmatpush2.bf16.msra.mxu0 %v6624
    %6789 = vmatprep.mubr.bf16.mxu0 %v5955
    %6790 = vmatmul.mubr.bf16.gmra.mxu0 %v5954
    %v6791 = vpop.f32.mrf.mxu0
    %v6792 = vadd.f32 %v6739, %v6791
    %v6793 = vpop.f32.mrf.mxu0
    %v6794 = vadd.f32 %v6741, %v6793
    %v6795 = vpop.f32.mrf.mxu0
    %v6796 = vadd.f32 %v6743, %v6795
    %v6797 = vpop.f32.mrf.mxu0
    %v6798 = vadd.f32 %v6745, %v6797
    %6799 = vmatprep.mubr.bf16.mxu0 %v5957
    %6800 = vmatmul.mubr.bf16.gmra.mxu0 %v5956
    %v6801 = vpop.f32.mrf.mxu0
    %v6802 = vadd.f32 %v6749, %v6801
    %v6803 = vpop.f32.mrf.mxu0
    %v6804 = vadd.f32 %v6751, %v6803
    %v6805 = vpop.f32.mrf.mxu0
    %v6806 = vadd.f32 %v6753, %v6805
    %v6807 = vpop.f32.mrf.mxu0
    %v6808 = vadd.f32 %v6755, %v6807
    %6809 = vdwg.mxu0
    %v6810 = vld [vmem:[%s14] sm:$0x1]
    %v6811 = vld [vmem:[%s15] sm:$0x1]
    %vm6812 = vcmp.lt.s32.totalorder %v674, 0
    %v6813 = vsub.s32 0, %v674
    %v6814 = vsel %vm6812, %v6813, %v674
    %v6815 = vshrl.u32 %v6814, 3
    %v6816 = vand.u32 %v6814, 7
    %v6817 = vsub.s32 0, %v6816
    %v6818 = vsel %vm6812, %v6817, %v6816
    %vm6819 = vcmp.lt.s32.totalorder %v675, 0
    %v6820 = vsub.s32 0, %v675
    %v6821 = vsel %vm6819, %v6820, %v675
    %v6822 = vshrl.u32 %v6821, 3
    %v6823 = vand.u32 %v6821, 7
    %v6824 = vsub.s32 0, %v6823
    %v6825 = vsel %vm6819, %v6824, %v6823
    %vm6826 = vcmp.lt.s32.totalorder %v676, 0
    %v6827 = vsub.s32 0, %v676
    %v6828 = vsel %vm6826, %v6827, %v676
    %v6829 = vshrl.u32 %v6828, 3
    %v6830 = vand.u32 %v6828, 7
    %v6831 = vsub.s32 0, %v6830
    %v6832 = vsel %vm6826, %v6831, %v6830
    %vm6833 = vcmp.lt.s32.totalorder %v677, 0
    %v6834 = vsub.s32 0, %v677
    %v6835 = vsel %vm6833, %v6834, %v677
    %v6836 = vshrl.u32 %v6835, 3
    %v6837 = vand.u32 %v6835, 7
    %v6838 = vsub.s32 0, %v6837
    %v6839 = vsel %vm6833, %v6838, %v6837
    %vm6840 = vcmp.lt.s32.totalorder %v678, 0
    %v6841 = vsub.s32 0, %v678
    %v6842 = vsel %vm6840, %v6841, %v678
    %v6843 = vshrl.u32 %v6842, 3
    %v6844 = vand.u32 %v6842, 7
    %v6845 = vsub.s32 0, %v6844
    %v6846 = vsel %vm6840, %v6845, %v6844
    %vm6847 = vcmp.lt.s32.totalorder %v679, 0
    %v6848 = vsub.s32 0, %v679
    %v6849 = vsel %vm6847, %v6848, %v679
    %v6850 = vshrl.u32 %v6849, 3
    %v6851 = vand.u32 %v6849, 7
    %v6852 = vsub.s32 0, %v6851
    %v6853 = vsel %vm6847, %v6852, %v6851
    %vm6854 = vcmp.lt.s32.totalorder %v680, 0
    %v6855 = vsub.s32 0, %v680
    %v6856 = vsel %vm6854, %v6855, %v680
    %v6857 = vshrl.u32 %v6856, 3
    %v6858 = vand.u32 %v6856, 7
    %v6859 = vsub.s32 0, %v6858
    %v6860 = vsel %vm6854, %v6859, %v6858
    %vm6861 = vcmp.lt.s32.totalorder %v681, 0
    %v6862 = vsub.s32 0, %v681
    %v6863 = vsel %vm6861, %v6862, %v681
    %v6864 = vshrl.u32 %v6863, 3
    %v6865 = vand.u32 %v6863, 7
    %v6866 = vsub.s32 0, %v6865
    %v6867 = vsel %vm6861, %v6866, %v6865
    %vm6868 = vcmp.lt.s32.totalorder %v682, 0
    %v6869 = vsub.s32 0, %v682
    %v6870 = vsel %vm6868, %v6869, %v682
    %v6871 = vshrl.u32 %v6870, 3
    %v6872 = vand.u32 %v6870, 7
    %v6873 = vsub.s32 0, %v6872
    %v6874 = vsel %vm6868, %v6873, %v6872
    %vm6875 = vcmp.lt.s32.totalorder %v683, 0
    %v6876 = vsub.s32 0, %v683
    %v6877 = vsel %vm6875, %v6876, %v683
    %v6878 = vshrl.u32 %v6877, 3
    %v6879 = vand.u32 %v6877, 7
    %v6880 = vsub.s32 0, %v6879
    %v6881 = vsel %vm6875, %v6880, %v6879
    %vm6882 = vcmp.lt.s32.totalorder %v684, 0
    %v6883 = vsub.s32 0, %v684
    %v6884 = vsel %vm6882, %v6883, %v684
    %v6885 = vshrl.u32 %v6884, 3
    %v6886 = vand.u32 %v6884, 7
    %v6887 = vsub.s32 0, %v6886
    %v6888 = vsel %vm6882, %v6887, %v6886
    %vm6889 = vcmp.lt.s32.totalorder %v685, 0
    %v6890 = vsub.s32 0, %v685
    %v6891 = vsel %vm6889, %v6890, %v685
    %v6892 = vshrl.u32 %v6891, 3
    %v6893 = vand.u32 %v6891, 7
    %v6894 = vsub.s32 0, %v6893
    %v6895 = vsel %vm6889, %v6894, %v6893
    %vm6896 = vcmp.lt.s32.totalorder %v686, 0
    %v6897 = vsub.s32 0, %v686
    %v6898 = vsel %vm6896, %v6897, %v686
    %v6899 = vshrl.u32 %v6898, 3
    %v6900 = vand.u32 %v6898, 7
    %v6901 = vsub.s32 0, %v6900
    %v6902 = vsel %vm6896, %v6901, %v6900
    %vm6903 = vcmp.lt.s32.totalorder %v687, 0
    %v6904 = vsub.s32 0, %v687
    %v6905 = vsel %vm6903, %v6904, %v687
    %v6906 = vshrl.u32 %v6905, 3
    %v6907 = vand.u32 %v6905, 7
    %v6908 = vsub.s32 0, %v6907
    %v6909 = vsel %vm6903, %v6908, %v6907
    %vm6910 = vcmp.lt.s32.totalorder %v688, 0
    %v6911 = vsub.s32 0, %v688
    %v6912 = vsel %vm6910, %v6911, %v688
    %v6913 = vshrl.u32 %v6912, 3
    %v6914 = vand.u32 %v6912, 7
    %v6915 = vsub.s32 0, %v6914
    %v6916 = vsel %vm6910, %v6915, %v6914
    %vm6917 = vcmp.lt.s32.totalorder %v689, 0
    %v6918 = vsub.s32 0, %v689
    %v6919 = vsel %vm6917, %v6918, %v689
    %v6920 = vshrl.u32 %v6919, 3
    %v6921 = vand.u32 %v6919, 7
    %v6922 = vsub.s32 0, %v6921
    %v6923 = vsel %vm6917, %v6922, %v6921
    %vm6924 = vcmp.lt.s32.totalorder %v690, 0
    %v6925 = vsub.s32 0, %v690
    %v6926 = vsel %vm6924, %v6925, %v690
    %v6927 = vshrl.u32 %v6926, 3
    %v6928 = vand.u32 %v6926, 7
    %v6929 = vsub.s32 0, %v6928
    %v6930 = vsel %vm6924, %v6929, %v6928
    %vm6931 = vcmp.lt.s32.totalorder %v691, 0
    %v6932 = vsub.s32 0, %v691
    %v6933 = vsel %vm6931, %v6932, %v691
    %v6934 = vshrl.u32 %v6933, 3
    %v6935 = vand.u32 %v6933, 7
    %v6936 = vsub.s32 0, %v6935
    %v6937 = vsel %vm6931, %v6936, %v6935
    %vm6938 = vcmp.lt.s32.totalorder %v692, 0
    %v6939 = vsub.s32 0, %v692
    %v6940 = vsel %vm6938, %v6939, %v692
    %v6941 = vshrl.u32 %v6940, 3
    %v6942 = vand.u32 %v6940, 7
    %v6943 = vsub.s32 0, %v6942
    %v6944 = vsel %vm6938, %v6943, %v6942
    %vm6945 = vcmp.lt.s32.totalorder %v693, 0
    %v6946 = vsub.s32 0, %v693
    %v6947 = vsel %vm6945, %v6946, %v693
    %v6948 = vshrl.u32 %v6947, 3
    %v6949 = vand.u32 %v6947, 7
    %v6950 = vsub.s32 0, %v6949
    %v6951 = vsel %vm6945, %v6950, %v6949
    %vm6952 = vcmp.lt.s32.totalorder %v694, 0
    %v6953 = vsub.s32 0, %v694
    %v6954 = vsel %vm6952, %v6953, %v694
    %v6955 = vshrl.u32 %v6954, 3
    %v6956 = vand.u32 %v6954, 7
    %v6957 = vsub.s32 0, %v6956
    %v6958 = vsel %vm6952, %v6957, %v6956
    %vm6959 = vcmp.lt.s32.totalorder %v695, 0
    %v6960 = vsub.s32 0, %v695
    %v6961 = vsel %vm6959, %v6960, %v695
    %v6962 = vshrl.u32 %v6961, 3
    %v6963 = vand.u32 %v6961, 7
    %v6964 = vsub.s32 0, %v6963
    %v6965 = vsel %vm6959, %v6964, %v6963
    %vm6966 = vcmp.lt.s32.totalorder %v696, 0
    %v6967 = vsub.s32 0, %v696
    %v6968 = vsel %vm6966, %v6967, %v696
    %v6969 = vshrl.u32 %v6968, 3
    %v6970 = vand.u32 %v6968, 7
    %v6971 = vsub.s32 0, %v6970
    %v6972 = vsel %vm6966, %v6971, %v6970
    %vm6973 = vcmp.lt.s32.totalorder %v697, 0
    %v6974 = vsub.s32 0, %v697
    %v6975 = vsel %vm6973, %v6974, %v697
    %v6976 = vshrl.u32 %v6975, 3
    %v6977 = vand.u32 %v6975, 7
    %v6978 = vsub.s32 0, %v6977
    %v6979 = vsel %vm6973, %v6978, %v6977
    %vm6980 = vcmp.lt.s32.totalorder %v698, 0
    %v6981 = vsub.s32 0, %v698
    %v6982 = vsel %vm6980, %v6981, %v698
    %v6983 = vshrl.u32 %v6982, 3
    %v6984 = vand.u32 %v6982, 7
    %v6985 = vsub.s32 0, %v6984
    %v6986 = vsel %vm6980, %v6985, %v6984
    %vm6987 = vcmp.lt.s32.totalorder %v699, 0
    %v6988 = vsub.s32 0, %v699
    %v6989 = vsel %vm6987, %v6988, %v699
    %v6990 = vshrl.u32 %v6989, 3
    %v6991 = vand.u32 %v6989, 7
    %v6992 = vsub.s32 0, %v6991
    %v6993 = vsel %vm6987, %v6992, %v6991
    %vm6994 = vcmp.lt.s32.totalorder %v700, 0
    %v6995 = vsub.s32 0, %v700
    %v6996 = vsel %vm6994, %v6995, %v700
    %v6997 = vshrl.u32 %v6996, 3
    %v6998 = vand.u32 %v6996, 7
    %v6999 = vsub.s32 0, %v6998
    %v7000 = vsel %vm6994, %v6999, %v6998
    %vm7001 = vcmp.lt.s32.totalorder %v701, 0
    %v7002 = vsub.s32 0, %v701
    %v7003 = vsel %vm7001, %v7002, %v701
    %v7004 = vshrl.u32 %v7003, 3
    %v7005 = vand.u32 %v7003, 7
    %v7006 = vsub.s32 0, %v7005
    %v7007 = vsel %vm7001, %v7006, %v7005
    %vm7008 = vcmp.lt.s32.totalorder %v702, 0
    %v7009 = vsub.s32 0, %v702
    %v7010 = vsel %vm7008, %v7009, %v702
    %v7011 = vshrl.u32 %v7010, 3
    %v7012 = vand.u32 %v7010, 7
    %v7013 = vsub.s32 0, %v7012
    %v7014 = vsel %vm7008, %v7013, %v7012
    %vm7015 = vcmp.lt.s32.totalorder %v703, 0
    %v7016 = vsub.s32 0, %v703
    %v7017 = vsel %vm7015, %v7016, %v703
    %v7018 = vshrl.u32 %v7017, 3
    %v7019 = vand.u32 %v7017, 7
    %v7020 = vsub.s32 0, %v7019
    %v7021 = vsel %vm7015, %v7020, %v7019
    %vm7022 = vcmp.ne.s32.totalorder %v6818, 0
    %vm7023 = vcmp.ne.s32.totalorder %v6825, 0
    %vm7024 = vcmp.ne.s32.totalorder %v6832, 0
    %vm7025 = vcmp.ne.s32.totalorder %v6839, 0
    %vm7026 = vcmp.ne.s32.totalorder %v6846, 0
    %vm7027 = vcmp.ne.s32.totalorder %v6853, 0
    %vm7028 = vcmp.ne.s32.totalorder %v6860, 0
    %vm7029 = vcmp.ne.s32.totalorder %v6867, 0
    %vm7030 = vcmp.ne.s32.totalorder %v6874, 0
    %vm7031 = vcmp.ne.s32.totalorder %v6881, 0
    %vm7032 = vcmp.ne.s32.totalorder %v6888, 0
    %vm7033 = vcmp.ne.s32.totalorder %v6895, 0
    %vm7034 = vcmp.ne.s32.totalorder %v6902, 0
    %vm7035 = vcmp.ne.s32.totalorder %v6909, 0
    %vm7036 = vcmp.ne.s32.totalorder %v6916, 0
    %vm7037 = vcmp.ne.s32.totalorder %v6923, 0
    %vm7038 = vcmp.ne.s32.totalorder %v6930, 0
    %vm7039 = vcmp.ne.s32.totalorder %v6937, 0
    %vm7040 = vcmp.ne.s32.totalorder %v6944, 0
    %vm7041 = vcmp.ne.s32.totalorder %v6951, 0
    %vm7042 = vcmp.ne.s32.totalorder %v6958, 0
    %vm7043 = vcmp.ne.s32.totalorder %v6965, 0
    %vm7044 = vcmp.ne.s32.totalorder %v6972, 0
    %vm7045 = vcmp.ne.s32.totalorder %v6979, 0
    %vm7046 = vcmp.ne.s32.totalorder %v6986, 0
    %vm7047 = vcmp.ne.s32.totalorder %v6993, 0
    %vm7048 = vcmp.ne.s32.totalorder %v7000, 0
    %vm7049 = vcmp.ne.s32.totalorder %v7007, 0
    %vm7050 = vcmp.ne.s32.totalorder %v7014, 0
    %vm7051 = vcmp.ne.s32.totalorder %v7021, 0
    %vm7052 = vcmp.lt.s32.totalorder %v6818, 0
    %vm7053 = vcmp.lt.s32.totalorder %v6825, 0
    %vm7054 = vcmp.lt.s32.totalorder %v6832, 0
    %vm7055 = vcmp.lt.s32.totalorder %v6839, 0
    %vm7056 = vcmp.lt.s32.totalorder %v6846, 0
    %vm7057 = vcmp.lt.s32.totalorder %v6853, 0
    %vm7058 = vcmp.lt.s32.totalorder %v6860, 0
    %vm7059 = vcmp.lt.s32.totalorder %v6867, 0
    %vm7060 = vcmp.lt.s32.totalorder %v6874, 0
    %vm7061 = vcmp.lt.s32.totalorder %v6881, 0
    %vm7062 = vcmp.lt.s32.totalorder %v6888, 0
    %vm7063 = vcmp.lt.s32.totalorder %v6895, 0
    %vm7064 = vcmp.lt.s32.totalorder %v6902, 0
    %vm7065 = vcmp.lt.s32.totalorder %v6909, 0
    %vm7066 = vcmp.lt.s32.totalorder %v6916, 0
    %vm7067 = vcmp.lt.s32.totalorder %v6923, 0
    %vm7068 = vcmp.lt.s32.totalorder %v6930, 0
    %vm7069 = vcmp.lt.s32.totalorder %v6937, 0
    %vm7070 = vcmp.lt.s32.totalorder %v6944, 0
    %vm7071 = vcmp.lt.s32.totalorder %v6951, 0
    %vm7072 = vcmp.lt.s32.totalorder %v6958, 0
    %vm7073 = vcmp.lt.s32.totalorder %v6965, 0
    %vm7074 = vcmp.lt.s32.totalorder %v6972, 0
    %vm7075 = vcmp.lt.s32.totalorder %v6979, 0
    %vm7076 = vcmp.lt.s32.totalorder %v6986, 0
    %vm7077 = vcmp.lt.s32.totalorder %v6993, 0
    %vm7078 = vcmp.lt.s32.totalorder %v7000, 0
    %vm7079 = vcmp.lt.s32.totalorder %v7007, 0
    %vm7080 = vcmp.lt.s32.totalorder %v7014, 0
    %vm7081 = vcmp.lt.s32.totalorder %v7021, 0
    %vm7082 = vmand %vm7052, %vm7022
    %vm7083 = vmand %vm7053, %vm7023
    %vm7084 = vmand %vm7054, %vm7024
    %vm7085 = vmand %vm7055, %vm7025
    %vm7086 = vmand %vm7056, %vm7026
    %vm7087 = vmand %vm7057, %vm7027
    %vm7088 = vmand %vm7058, %vm7028
    %vm7089 = vmand %vm7059, %vm7029
    %vm7090 = vmand %vm7060, %vm7030
    %vm7091 = vmand %vm7061, %vm7031
    %vm7092 = vmand %vm7062, %vm7032
    %vm7093 = vmand %vm7063, %vm7033
    %vm7094 = vmand %vm7064, %vm7034
    %vm7095 = vmand %vm7065, %vm7035
    %vm7096 = vmand %vm7066, %vm7036
    %vm7097 = vmand %vm7067, %vm7037
    %vm7098 = vmand %vm7068, %vm7038
    %vm7099 = vmand %vm7069, %vm7039
    %vm7100 = vmand %vm7070, %vm7040
    %vm7101 = vmand %vm7071, %vm7041
    %vm7102 = vmand %vm7072, %vm7042
    %vm7103 = vmand %vm7073, %vm7043
    %vm7104 = vmand %vm7074, %vm7044
    %vm7105 = vmand %vm7075, %vm7045
    %vm7106 = vmand %vm7076, %vm7046
    %vm7107 = vmand %vm7077, %vm7047
    %vm7108 = vmand %vm7078, %vm7048
    %vm7109 = vmand %vm7079, %vm7049
    %vm7110 = vmand %vm7080, %vm7050
    %vm7111 = vmand %vm7081, %vm7051
    %v7112 = vadd.s32 %v6818, 8
    %v7113 = vadd.s32 %v6825, 8
    %v7114 = vadd.s32 %v6832, 8
    %v7115 = vadd.s32 %v6839, 8
    %v7116 = vadd.s32 %v6846, 8
    %v7117 = vadd.s32 %v6853, 8
    %v7118 = vadd.s32 %v6860, 8
    %v7119 = vadd.s32 %v6867, 8
    %v7120 = vadd.s32 %v6874, 8
    %v7121 = vadd.s32 %v6881, 8
    %v7122 = vadd.s32 %v6888, 8
    %v7123 = vadd.s32 %v6895, 8
    %v7124 = vadd.s32 %v6902, 8
    %v7125 = vadd.s32 %v6909, 8
    %v7126 = vadd.s32 %v6916, 8
    %v7127 = vadd.s32 %v6923, 8
    %v7128 = vadd.s32 %v6930, 8
    %v7129 = vadd.s32 %v6937, 8
    %v7130 = vadd.s32 %v6944, 8
    %v7131 = vadd.s32 %v6951, 8
    %v7132 = vadd.s32 %v6958, 8
    %v7133 = vadd.s32 %v6965, 8
    %v7134 = vadd.s32 %v6972, 8
    %v7135 = vadd.s32 %v6979, 8
    %v7136 = vadd.s32 %v6986, 8
    %v7137 = vadd.s32 %v6993, 8
    %v7138 = vadd.s32 %v7000, 8
    %v7139 = vadd.s32 %v7007, 8
    %v7140 = vadd.s32 %v7014, 8
    %v7141 = vadd.s32 %v7021, 8
    %v7142 = vsel %vm7082, %v7112, %v6818
    %v7143 = vsel %vm7083, %v7113, %v6825
    %v7144 = vsel %vm7084, %v7114, %v6832
    %v7145 = vsel %vm7085, %v7115, %v6839
    %v7146 = vsel %vm7086, %v7116, %v6846
    %v7147 = vsel %vm7087, %v7117, %v6853
    %v7148 = vsel %vm7088, %v7118, %v6860
    %v7149 = vsel %vm7089, %v7119, %v6867
    %v7150 = vsel %vm7090, %v7120, %v6874
    %v7151 = vsel %vm7091, %v7121, %v6881
    %v7152 = vsel %vm7092, %v7122, %v6888
    %v7153 = vsel %vm7093, %v7123, %v6895
    %v7154 = vsel %vm7094, %v7124, %v6902
    %v7155 = vsel %vm7095, %v7125, %v6909
    %v7156 = vsel %vm7096, %v7126, %v6916
    %v7157 = vsel %vm7097, %v7127, %v6923
    %v7158 = vsel %vm7098, %v7128, %v6930
    %v7159 = vsel %vm7099, %v7129, %v6937
    %v7160 = vsel %vm7100, %v7130, %v6944
    %v7161 = vsel %vm7101, %v7131, %v6951
    %v7162 = vsel %vm7102, %v7132, %v6958
    %v7163 = vsel %vm7103, %v7133, %v6965
    %v7164 = vsel %vm7104, %v7134, %v6972
    %v7165 = vsel %vm7105, %v7135, %v6979
    %v7166 = vsel %vm7106, %v7136, %v6986
    %v7167 = vsel %vm7107, %v7137, %v6993
    %v7168 = vsel %vm7108, %v7138, %v7000
    %v7169 = vsel %vm7109, %v7139, %v7007
    %v7170 = vsel %vm7110, %v7140, %v7014
    %v7171 = vsel %vm7111, %v7141, %v7021
    %vm7172 = vcmp.eq.s32.totalorder %v3826, %v328
    %vm7173 = vcmp.eq.s32.totalorder %v3827, %v328
    %vm7174 = vcmp.eq.s32.totalorder %v7142, %v328
    %vm7175 = vcmp.eq.s32.totalorder %v7143, %v328
    %vm7176 = vcmp.eq.s32.totalorder %v7144, %v328
    %vm7177 = vcmp.eq.s32.totalorder %v7145, %v328
    %vm7178 = vcmp.eq.s32.totalorder %v7146, %v328
    %vm7179 = vcmp.eq.s32.totalorder %v7147, %v328
    %vm7180 = vcmp.eq.s32.totalorder %v7148, %v328
    %vm7181 = vcmp.eq.s32.totalorder %v7149, %v328
    %vm7182 = vcmp.eq.s32.totalorder %v7150, %v328
    %vm7183 = vcmp.eq.s32.totalorder %v7151, %v328
    %vm7184 = vcmp.eq.s32.totalorder %v7152, %v328
    %vm7185 = vcmp.eq.s32.totalorder %v7153, %v328
    %vm7186 = vcmp.eq.s32.totalorder %v7154, %v328
    %vm7187 = vcmp.eq.s32.totalorder %v7155, %v328
    %vm7188 = vcmp.eq.s32.totalorder %v7156, %v328
    %vm7189 = vcmp.eq.s32.totalorder %v7157, %v328
    %vm7190 = vcmp.eq.s32.totalorder %v7158, %v328
    %vm7191 = vcmp.eq.s32.totalorder %v7159, %v328
    %vm7192 = vcmp.eq.s32.totalorder %v7160, %v328
    %vm7193 = vcmp.eq.s32.totalorder %v7161, %v328
    %vm7194 = vcmp.eq.s32.totalorder %v7162, %v328
    %vm7195 = vcmp.eq.s32.totalorder %v7163, %v328
    %vm7196 = vcmp.eq.s32.totalorder %v7164, %v328
    %vm7197 = vcmp.eq.s32.totalorder %v7165, %v328
    %vm7198 = vcmp.eq.s32.totalorder %v7166, %v328
    %vm7199 = vcmp.eq.s32.totalorder %v7167, %v328
    %vm7200 = vcmp.eq.s32.totalorder %v7168, %v328
    %vm7201 = vcmp.eq.s32.totalorder %v7169, %v328
    %vm7202 = vcmp.eq.s32.totalorder %v7170, %v328
    %vm7203 = vcmp.eq.s32.totalorder %v7171, %v328
    %v7204 = vsel %vm7172, 1, 0
    %v7205 = vsel %vm7173, 1, 0
    %v7206 = vsel %vm7174, 1, 0
    %v7207 = vsel %vm7175, 1, 0
    %v7208 = vsel %vm7176, 1, 0
    %v7209 = vsel %vm7177, 1, 0
    %v7210 = vsel %vm7178, 1, 0
    %v7211 = vsel %vm7179, 1, 0
    %v7212 = vsel %vm7180, 1, 0
    %v7213 = vsel %vm7181, 1, 0
    %v7214 = vsel %vm7182, 1, 0
    %v7215 = vsel %vm7183, 1, 0
    %v7216 = vsel %vm7184, 1, 0
    %v7217 = vsel %vm7185, 1, 0
    %v7218 = vsel %vm7186, 1, 0
    %v7219 = vsel %vm7187, 1, 0
    %v7220 = vsel %vm7188, 1, 0
    %v7221 = vsel %vm7189, 1, 0
    %v7222 = vsel %vm7190, 1, 0
    %v7223 = vsel %vm7191, 1, 0
    %v7224 = vsel %vm7192, 1, 0
    %v7225 = vsel %vm7193, 1, 0
    %v7226 = vsel %vm7194, 1, 0
    %v7227 = vsel %vm7195, 1, 0
    %v7228 = vsel %vm7196, 1, 0
    %v7229 = vsel %vm7197, 1, 0
    %v7230 = vsel %vm7198, 1, 0
    %v7231 = vsel %vm7199, 1, 0
    %v7232 = vsel %vm7200, 1, 0
    %v7233 = vsel %vm7201, 1, 0
    %v7234 = vsel %vm7202, 1, 0
    %v7235 = vsel %vm7203, 1, 0
    %v7236 = vcvt.s32.f32 %v7204
    %v7237 = vcvt.s32.f32 %v7205
    %v7238 = vcvt.s32.f32 %v7206
    %v7239 = vcvt.s32.f32 %v7207
    %v7240 = vcvt.s32.f32 %v7208
    %v7241 = vcvt.s32.f32 %v7209
    %v7242 = vcvt.s32.f32 %v7210
    %v7243 = vcvt.s32.f32 %v7211
    %v7244 = vcvt.s32.f32 %v7212
    %v7245 = vcvt.s32.f32 %v7213
    %v7246 = vcvt.s32.f32 %v7214
    %v7247 = vcvt.s32.f32 %v7215
    %v7248 = vcvt.s32.f32 %v7216
    %v7249 = vcvt.s32.f32 %v7217
    %v7250 = vcvt.s32.f32 %v7218
    %v7251 = vcvt.s32.f32 %v7219
    %v7252 = vcvt.s32.f32 %v7220
    %v7253 = vcvt.s32.f32 %v7221
    %v7254 = vcvt.s32.f32 %v7222
    %v7255 = vcvt.s32.f32 %v7223
    %v7256 = vcvt.s32.f32 %v7224
    %v7257 = vcvt.s32.f32 %v7225
    %v7258 = vcvt.s32.f32 %v7226
    %v7259 = vcvt.s32.f32 %v7227
    %v7260 = vcvt.s32.f32 %v7228
    %v7261 = vcvt.s32.f32 %v7229
    %v7262 = vcvt.s32.f32 %v7230
    %v7263 = vcvt.s32.f32 %v7231
    %v7264 = vcvt.s32.f32 %v7232
    %v7265 = vcvt.s32.f32 %v7233
    %v7266 = vcvt.s32.f32 %v7234
    %v7267 = vcvt.s32.f32 %v7235
    %vm7268 = vcmp.lt.s32.totalorder %v328, 0
    %v7269 = vsub.s32 0, %v328
    %v7270 = vsel %vm7268, %v7269, %v328
    %v7271 = vshrl.u32 %v7270, 3
    %v7272 = vand.u32 %v7270, 7
    %v7273 = vsub.s32 0, %v7272
    %v7274 = vsel %vm7268, %v7273, %v7272
    %vm7275 = vcmp.lt.s32.totalorder %v1184, 0
    %v7276 = vsub.s32 0, %v1184
    %v7277 = vsel %vm7275, %v7276, %v1184
    %v7278 = vshrl.u32 %v7277, 3
    %v7279 = vand.u32 %v7277, 7
    %v7280 = vsub.s32 0, %v7279
    %v7281 = vsel %vm7275, %v7280, %v7279
    %vm7282 = vcmp.ne.s32.totalorder %v7274, 0
    %vm7283 = vcmp.ne.s32.totalorder %v7281, 0
    %vm7284 = vcmp.lt.s32.totalorder %v7274, 0
    %vm7285 = vcmp.lt.s32.totalorder %v7281, 0
    %vm7286 = vmand %vm7284, %vm7282
    %vm7287 = vmand %vm7285, %vm7283
    %v7288 = vadd.s32 %v7274, 8
    %v7289 = vadd.s32 %v7281, 8
    %v7290 = vsel %vm7286, %v7288, %v7274
    %v7291 = vsel %vm7287, %v7289, %v7281
    %vm7292 = vcmp.eq.s32.totalorder %v7290, %v326
    %vm7293 = vcmp.eq.s32.totalorder %v7291, %v326
    %v7294 = vsel %vm7292, 1, 0
    %v7295 = vsel %vm7293, 1, 0
    %v7296 = vcvt.s32.f32 %v7294
    %v7297 = vcvt.s32.f32 %v7295
    %v7298 = vadd.f32 %v6366, %v6370
    %v7299 = vadd.f32 %v7298, %v6376
    %v7300 = vadd.f32 %v7299, %v6380
    %v7301 = vrot.slane %v7300, 4
    %v7302 = vadd.f32 %v7300, %v7301
    %v7303 = vrot.slane %v7302, 2
    %v7304 = vadd.f32 %v7302, %v7303
    %v7305 = vrot.slane %v7304, 1
    %v7306 = vadd.f32 %v7304, %v7305
    %v7307 = vadd.f32 %v6368, %v6372
    %v7308 = vadd.f32 %v7307, %v6378
    %v7309 = vadd.f32 %v7308, %v6382
    %v7310 = vrot.slane %v7309, 4
    %v7311 = vadd.f32 %v7309, %v7310
    %v7312 = vrot.slane %v7311, 2
    %v7313 = vadd.f32 %v7311, %v7312
    %v7314 = vrot.slane %v7313, 1
    %v7315 = vadd.f32 %v7313, %v7314
    %v7316 = vadd.f32 %v6792, %v6796
    %v7317 = vadd.f32 %v7316, %v6802
    %v7318 = vadd.f32 %v7317, %v6806
    %v7319 = vrot.slane %v7318, 4
    %v7320 = vadd.f32 %v7318, %v7319
    %v7321 = vrot.slane %v7320, 2
    %v7322 = vadd.f32 %v7320, %v7321
    %v7323 = vrot.slane %v7322, 1
    %v7324 = vadd.f32 %v7322, %v7323
    %v7325 = vadd.f32 %v6794, %v6798
    %v7326 = vadd.f32 %v7325, %v6804
    %v7327 = vadd.f32 %v7326, %v6808
    %v7328 = vrot.slane %v7327, 4
    %v7329 = vadd.f32 %v7327, %v7328
    %v7330 = vrot.slane %v7329, 2
    %v7331 = vadd.f32 %v7329, %v7330
    %v7332 = vrot.slane %v7331, 1
    %v7333 = vadd.f32 %v7331, %v7332
    %v7334 = vadd.f32 %v7306, 0.0
    %v7335 = vadd.f32 %v7315, 0.0
    %v7336 = vadd.f32 %v7334, %v7324
    %v7337 = vadd.f32 %v7335, %v7333
    %v7338 = vmul.f32 %v6366, %v6366
    %v7339 = vmul.f32 %v6368, %v6368
    %v7340 = vmul.f32 %v6370, %v6370
    %v7341 = vmul.f32 %v6372, %v6372
    %v7342 = vmul.f32 %v6376, %v6376
    %v7343 = vmul.f32 %v6378, %v6378
    %v7344 = vmul.f32 %v6380, %v6380
    %v7345 = vmul.f32 %v6382, %v6382
    %v7346 = vadd.f32 %v7338, %v7340
    %v7347 = vadd.f32 %v7346, %v7342
    %v7348 = vadd.f32 %v7347, %v7344
    %v7349 = vrot.slane %v7348, 4
    %v7350 = vadd.f32 %v7348, %v7349
    %v7351 = vrot.slane %v7350, 2
    %v7352 = vadd.f32 %v7350, %v7351
    %v7353 = vrot.slane %v7352, 1
    %v7354 = vadd.f32 %v7352, %v7353
    %v7355 = vadd.f32 %v7339, %v7341
    %v7356 = vadd.f32 %v7355, %v7343
    %v7357 = vadd.f32 %v7356, %v7345
    %v7358 = vrot.slane %v7357, 4
    %v7359 = vadd.f32 %v7357, %v7358
    %v7360 = vrot.slane %v7359, 2
    %v7361 = vadd.f32 %v7359, %v7360
    %v7362 = vrot.slane %v7361, 1
    %v7363 = vadd.f32 %v7361, %v7362
    %v7364 = vmul.f32 %v6792, %v6792
    %v7365 = vmul.f32 %v6794, %v6794
    %v7366 = vmul.f32 %v6796, %v6796
    %v7367 = vmul.f32 %v6798, %v6798
    %v7368 = vmul.f32 %v6802, %v6802
    %v7369 = vmul.f32 %v6804, %v6804
    %v7370 = vmul.f32 %v6806, %v6806
    %v7371 = vmul.f32 %v6808, %v6808
    %v7372 = vadd.f32 %v7364, %v7366
    %v7373 = vadd.f32 %v7372, %v7368
    %v7374 = vadd.f32 %v7373, %v7370
    %v7375 = vrot.slane %v7374, 4
    %v7376 = vadd.f32 %v7374, %v7375
    %v7377 = vrot.slane %v7376, 2
    %v7378 = vadd.f32 %v7376, %v7377
    %v7379 = vrot.slane %v7378, 1
    %v7380 = vadd.f32 %v7378, %v7379
    %v7381 = vadd.f32 %v7365, %v7367
    %v7382 = vadd.f32 %v7381, %v7369
    %v7383 = vadd.f32 %v7382, %v7371
    %v7384 = vrot.slane %v7383, 4
    %v7385 = vadd.f32 %v7383, %v7384
    %v7386 = vrot.slane %v7385, 2
    %v7387 = vadd.f32 %v7385, %v7386
    %v7388 = vrot.slane %v7387, 1
    %v7389 = vadd.f32 %v7387, %v7388
    %v7390 = vadd.f32 %v7354, 0.0
    %v7391 = vadd.f32 %v7363, 0.0
    %v7392 = vadd.f32 %v7390, %v7380
    %v7393 = vadd.f32 %v7391, %v7389
    %7394 = vmatprep.subr.mxu0 0.0
    %7395 = vmatpush1.msra.mxu0 %v7251
    %7396 = vmatprep.subr.mxu0 0.0
    %7397 = vmatpush1.msra.mxu0 %v7250
    %7398 = vmatprep.subr.mxu0 0.0
    %7399 = vmatpush1.msra.mxu0 %v7249
    %7400 = vmatprep.subr.mxu0 0.0
    %7401 = vmatpush1.msra.mxu0 %v7248
    %7402 = vmatprep.subr.mxu0 0.0
    %7403 = vmatpush1.msra.mxu0 %v7247
    %7404 = vmatprep.subr.mxu0 0.0
    %7405 = vmatpush1.msra.mxu0 %v7246
    %7406 = vmatprep.subr.mxu0 0.0
    %7407 = vmatpush1.msra.mxu0 %v7245
    %7408 = vmatprep.subr.mxu0 0.0
    %7409 = vmatpush1.msra.mxu0 %v7244
    %7410 = vmatprep.subr.mxu0 0.0
    %7411 = vmatpush1.msra.mxu0 %v7243
    %7412 = vmatprep.subr.mxu0 0.0
    %7413 = vmatpush1.msra.mxu0 %v7242
    %7414 = vmatprep.subr.mxu0 0.0
    %7415 = vmatpush1.msra.mxu0 %v7241
    %7416 = vmatprep.subr.mxu0 0.0
    %7417 = vmatpush1.msra.mxu0 %v7240
    %7418 = vmatprep.subr.mxu0 0.0
    %7419 = vmatpush1.msra.mxu0 %v7239
    %7420 = vmatprep.subr.mxu0 0.0
    %7421 = vmatpush1.msra.mxu0 %v7238
    %7422 = vmatprep.subr.mxu0 0.0
    %7423 = vmatpush1.msra.mxu0 %v7237
    %7424 = vmatprep.subr.mxu0 0.0
    %7425 = vmatpush1.msra.mxu0 %v7236
    %7426 = vmatprep.subr.mxu0 0.0
    %7427 = vmatpush2.msra.mxu0 %v7267
    %7428 = vmatprep.subr.mxu0 0.0
    %7429 = vmatpush2.msra.mxu0 %v7266
    %7430 = vmatprep.subr.mxu0 0.0
    %7431 = vmatpush2.msra.mxu0 %v7265
    %7432 = vmatprep.subr.mxu0 0.0
    %7433 = vmatpush2.msra.mxu0 %v7264
    %7434 = vmatprep.subr.mxu0 0.0
    %7435 = vmatpush2.msra.mxu0 %v7263
    %7436 = vmatprep.subr.mxu0 0.0
    %7437 = vmatpush2.msra.mxu0 %v7262
    %7438 = vmatprep.subr.mxu0 0.0
    %7439 = vmatpush2.msra.mxu0 %v7261
    %7440 = vmatprep.subr.mxu0 0.0
    %7441 = vmatpush2.msra.mxu0 %v7260
    %7442 = vmatprep.subr.mxu0 0.0
    %7443 = vmatpush2.msra.mxu0 %v7259
    %7444 = vmatprep.subr.mxu0 0.0
    %7445 = vmatpush2.msra.mxu0 %v7258
    %7446 = vmatprep.subr.mxu0 0.0
    %7447 = vmatpush2.msra.mxu0 %v7257
    %7448 = vmatprep.subr.mxu0 0.0
    %7449 = vmatpush2.msra.mxu0 %v7256
    %7450 = vmatprep.subr.mxu0 0.0
    %7451 = vmatpush2.msra.mxu0 %v7255
    %7452 = vmatprep.subr.mxu0 0.0
    %7453 = vmatpush2.msra.mxu0 %v7254
    %7454 = vmatprep.subr.mxu0 0.0
    %7455 = vmatpush2.msra.mxu0 %v7253
    %7456 = vmatprep.subr.mxu0 0.0
    %7457 = vmatpush2.msra.mxu0 %v7252
    %7458 = vmatprep.mubr.f32.mxu0 %v7337
    %7459 = vmatmul.mubr.f32.gmra.mxu0 %v7336
    %v7460 = vpop.f32.mrf.mxu0
    %v7461 = vadd.f32 0.0, %v7460
    %v7462 = vpop.f32.mrf.mxu0
    %7463 = vdwg.mxu0
    %7464 = vmatprep.subr.mxu0 0.0
    %7465 = vmatpush1.msra.mxu0 %v7251
    %7466 = vmatprep.subr.mxu0 0.0
    %7467 = vmatpush1.msra.mxu0 %v7250
    %7468 = vmatprep.subr.mxu0 0.0
    %7469 = vmatpush1.msra.mxu0 %v7249
    %7470 = vmatprep.subr.mxu0 0.0
    %7471 = vmatpush1.msra.mxu0 %v7248
    %7472 = vmatprep.subr.mxu0 0.0
    %7473 = vmatpush1.msra.mxu0 %v7247
    %7474 = vmatprep.subr.mxu0 0.0
    %7475 = vmatpush1.msra.mxu0 %v7246
    %7476 = vmatprep.subr.mxu0 0.0
    %7477 = vmatpush1.msra.mxu0 %v7245
    %7478 = vmatprep.subr.mxu0 0.0
    %7479 = vmatpush1.msra.mxu0 %v7244
    %7480 = vmatprep.subr.mxu0 0.0
    %7481 = vmatpush1.msra.mxu0 %v7243
    %7482 = vmatprep.subr.mxu0 0.0
    %7483 = vmatpush1.msra.mxu0 %v7242
    %7484 = vmatprep.subr.mxu0 0.0
    %7485 = vmatpush1.msra.mxu0 %v7241
    %7486 = vmatprep.subr.mxu0 0.0
    %7487 = vmatpush1.msra.mxu0 %v7240
    %7488 = vmatprep.subr.mxu0 0.0
    %7489 = vmatpush1.msra.mxu0 %v7239
    %7490 = vmatprep.subr.mxu0 0.0
    %7491 = vmatpush1.msra.mxu0 %v7238
    %7492 = vmatprep.subr.mxu0 0.0
    %7493 = vmatpush1.msra.mxu0 %v7237
    %7494 = vmatprep.subr.mxu0 0.0
    %7495 = vmatpush1.msra.mxu0 %v7236
    %7496 = vmatprep.subr.mxu0 0.0
    %7497 = vmatpush2.msra.mxu0 %v7267
    %7498 = vmatprep.subr.mxu0 0.0
    %7499 = vmatpush2.msra.mxu0 %v7266
    %7500 = vmatprep.subr.mxu0 0.0
    %7501 = vmatpush2.msra.mxu0 %v7265
    %7502 = vmatprep.subr.mxu0 0.0
    %7503 = vmatpush2.msra.mxu0 %v7264
    %7504 = vmatprep.subr.mxu0 0.0
    %7505 = vmatpush2.msra.mxu0 %v7263
    %7506 = vmatprep.subr.mxu0 0.0
    %7507 = vmatpush2.msra.mxu0 %v7262
    %7508 = vmatprep.subr.mxu0 0.0
    %7509 = vmatpush2.msra.mxu0 %v7261
    %7510 = vmatprep.subr.mxu0 0.0
    %7511 = vmatpush2.msra.mxu0 %v7260
    %7512 = vmatprep.subr.mxu0 0.0
    %7513 = vmatpush2.msra.mxu0 %v7259
    %7514 = vmatprep.subr.mxu0 0.0
    %7515 = vmatpush2.msra.mxu0 %v7258
    %7516 = vmatprep.subr.mxu0 0.0
    %7517 = vmatpush2.msra.mxu0 %v7257
    %7518 = vmatprep.subr.mxu0 0.0
    %7519 = vmatpush2.msra.mxu0 %v7256
    %7520 = vmatprep.subr.mxu0 0.0
    %7521 = vmatpush2.msra.mxu0 %v7255
    %7522 = vmatprep.subr.mxu0 0.0
    %7523 = vmatpush2.msra.mxu0 %v7254
    %7524 = vmatprep.subr.mxu0 0.0
    %7525 = vmatpush2.msra.mxu0 %v7253
    %7526 = vmatprep.subr.mxu0 0.0
    %7527 = vmatpush2.msra.mxu0 %v7252
    %7528 = vmatprep.mubr.f32.mxu0 %v7393
    %7529 = vmatmul.mubr.f32.gmra.mxu0 %v7392
    %v7530 = vpop.f32.mrf.mxu0
    %v7531 = vadd.f32 0.0, %v7530
    %v7532 = vpop.f32.mrf.mxu0
    %7533 = vdwg.mxu0
    %v7534 = vrcp.pop 2048.0
    %v7535 = vmul.f32 %v7461, %v7534
    %v7536 = vmul.f32 %v7531, %v7534
    %v7537 = vmul.f32 %v7535, %v7535
    %v7538 = vsub.f32 %v7536, %v7537
    %v7539 = vadd.f32 %v7538, 1e-05
    %v7540 = vrsqrt.pop %v7539
    %v7541 = vmul.f32 %v6810, %v7540
    %v7542 = vmul.f32 %v7535, %v7541
    %v7543 = vsub.f32 %v6811, %v7542
    %v7545 = vsel %vm3539, %v7541, 0
    %7547 = vmatprep.subr.mxu0 0.0
    %7548 = vmatpush1.msra.mxu0 0.0
    %7549 = vmatprep.subr.mxu0 0.0
    %7550 = vmatpush1.msra.mxu0 0.0
    %7551 = vmatprep.subr.mxu0 0.0
    %7552 = vmatpush1.msra.mxu0 0.0
    %7553 = vmatprep.subr.mxu0 0.0
    %7554 = vmatpush1.msra.mxu0 0.0
    %7555 = vmatprep.subr.mxu0 0.0
    %7556 = vmatpush1.msra.mxu0 0.0
    %7557 = vmatprep.subr.mxu0 0.0
    %7558 = vmatpush1.msra.mxu0 0.0
    %7559 = vmatprep.subr.mxu0 0.0
    %7560 = vmatpush1.msra.mxu0 0.0
    %7561 = vmatprep.subr.mxu0 0.0
    %7562 = vmatpush1.msra.mxu0 0.0
    %7563 = vmatprep.subr.mxu0 0.0
    %7564 = vmatpush1.msra.mxu0 0.0
    %7565 = vmatprep.subr.mxu0 0.0
    %7566 = vmatpush1.msra.mxu0 0.0
    %7567 = vmatprep.subr.mxu0 0.0
    %7568 = vmatpush1.msra.mxu0 0.0
    %7569 = vmatprep.subr.mxu0 0.0
    %7570 = vmatpush1.msra.mxu0 0.0
    %7571 = vmatprep.subr.mxu0 0.0
    %7572 = vmatpush1.msra.mxu0 0.0
    %7573 = vmatprep.subr.mxu0 0.0
    %7574 = vmatpush1.msra.mxu0 0.0
    %7575 = vmatprep.subr.mxu0 0.0
    %7576 = vmatpush1.msra.mxu0 0.0
    %7577 = vmatprep.subr.mxu0 %v7297
    %7578 = vmatpush1.msra.mxu0 %v7296
    %7579 = vmatprep.subr.mxu0 0.0
    %7580 = vmatpush2.msra.mxu0 0.0
    %7581 = vmatprep.subr.mxu0 0.0
    %7582 = vmatpush2.msra.mxu0 0.0
    %7583 = vmatprep.subr.mxu0 0.0
    %7584 = vmatpush2.msra.mxu0 0.0
    %7585 = vmatprep.subr.mxu0 0.0
    %7586 = vmatpush2.msra.mxu0 0.0
    %7587 = vmatprep.subr.mxu0 0.0
    %7588 = vmatpush2.msra.mxu0 0.0
    %7589 = vmatprep.subr.mxu0 0.0
    %7590 = vmatpush2.msra.mxu0 0.0
    %7591 = vmatprep.subr.mxu0 0.0
    %7592 = vmatpush2.msra.mxu0 0.0
    %7593 = vmatprep.subr.mxu0 0.0
    %7594 = vmatpush2.msra.mxu0 0.0
    %7595 = vmatprep.subr.mxu0 0.0
    %7596 = vmatpush2.msra.mxu0 0.0
    %7597 = vmatprep.subr.mxu0 0.0
    %7598 = vmatpush2.msra.mxu0 0.0
    %7599 = vmatprep.subr.mxu0 0.0
    %7600 = vmatpush2.msra.mxu0 0.0
    %7601 = vmatprep.subr.mxu0 0.0
    %7602 = vmatpush2.msra.mxu0 0.0
    %7603 = vmatprep.subr.mxu0 0.0
    %7604 = vmatpush2.msra.mxu0 0.0
    %7605 = vmatprep.subr.mxu0 0.0
    %7606 = vmatpush2.msra.mxu0 0.0
    %7607 = vmatprep.subr.mxu0 0.0
    %7608 = vmatpush2.msra.mxu0 0.0
    %7609 = vmatprep.subr.mxu0 0.0
    %7610 = vmatpush2.msra.mxu0 0.0
    %7611 = vmatprep.mubr.f32.mxu0 0.0
    %7612 = vmatmul.mubr.f32.gmra.mxu0 %v7545
    %v7613 = vpop.f32.mrf.mxu0
    %v7614 = vadd.f32 0.0, %v7613
    %v7615 = vpop.f32.mrf.mxu0
    %v7616 = vadd.f32 0.0, %v7615
    %7617 = vdwg.mxu0
    %v7619 = vsel %vm3539, %v7543, 0
    %7621 = vmatprep.subr.mxu0 0.0
    %7622 = vmatpush1.msra.mxu0 0.0
    %7623 = vmatprep.subr.mxu0 0.0
    %7624 = vmatpush1.msra.mxu0 0.0
    %7625 = vmatprep.subr.mxu0 0.0
    %7626 = vmatpush1.msra.mxu0 0.0
    %7627 = vmatprep.subr.mxu0 0.0
    %7628 = vmatpush1.msra.mxu0 0.0
    %7629 = vmatprep.subr.mxu0 0.0
    %7630 = vmatpush1.msra.mxu0 0.0
    %7631 = vmatprep.subr.mxu0 0.0
    %7632 = vmatpush1.msra.mxu0 0.0
    %7633 = vmatprep.subr.mxu0 0.0
    %7634 = vmatpush1.msra.mxu0 0.0
    %7635 = vmatprep.subr.mxu0 0.0
    %7636 = vmatpush1.msra.mxu0 0.0
    %7637 = vmatprep.subr.mxu0 0.0
    %7638 = vmatpush1.msra.mxu0 0.0
    %7639 = vmatprep.subr.mxu0 0.0
    %7640 = vmatpush1.msra.mxu0 0.0
    %7641 = vmatprep.subr.mxu0 0.0
    %7642 = vmatpush1.msra.mxu0 0.0
    %7643 = vmatprep.subr.mxu0 0.0
    %7644 = vmatpush1.msra.mxu0 0.0
    %7645 = vmatprep.subr.mxu0 0.0
    %7646 = vmatpush1.msra.mxu0 0.0
    %7647 = vmatprep.subr.mxu0 0.0
    %7648 = vmatpush1.msra.mxu0 0.0
    %7649 = vmatprep.subr.mxu0 0.0
    %7650 = vmatpush1.msra.mxu0 0.0
    %7651 = vmatprep.subr.mxu0 %v7297
    %7652 = vmatpush1.msra.mxu0 %v7296
    %7653 = vmatprep.subr.mxu0 0.0
    %7654 = vmatpush2.msra.mxu0 0.0
    %7655 = vmatprep.subr.mxu0 0.0
    %7656 = vmatpush2.msra.mxu0 0.0
    %7657 = vmatprep.subr.mxu0 0.0
    %7658 = vmatpush2.msra.mxu0 0.0
    %7659 = vmatprep.subr.mxu0 0.0
    %7660 = vmatpush2.msra.mxu0 0.0
    %7661 = vmatprep.subr.mxu0 0.0
    %7662 = vmatpush2.msra.mxu0 0.0
    %7663 = vmatprep.subr.mxu0 0.0
    %7664 = vmatpush2.msra.mxu0 0.0
    %7665 = vmatprep.subr.mxu0 0.0
    %7666 = vmatpush2.msra.mxu0 0.0
    %7667 = vmatprep.subr.mxu0 0.0
    %7668 = vmatpush2.msra.mxu0 0.0
    %7669 = vmatprep.subr.mxu0 0.0
    %7670 = vmatpush2.msra.mxu0 0.0
    %7671 = vmatprep.subr.mxu0 0.0
    %7672 = vmatpush2.msra.mxu0 0.0
    %7673 = vmatprep.subr.mxu0 0.0
    %7674 = vmatpush2.msra.mxu0 0.0
    %7675 = vmatprep.subr.mxu0 0.0
    %7676 = vmatpush2.msra.mxu0 0.0
    %7677 = vmatprep.subr.mxu0 0.0
    %7678 = vmatpush2.msra.mxu0 0.0
    %7679 = vmatprep.subr.mxu0 0.0
    %7680 = vmatpush2.msra.mxu0 0.0
    %7681 = vmatprep.subr.mxu0 0.0
    %7682 = vmatpush2.msra.mxu0 0.0
    %7683 = vmatprep.subr.mxu0 0.0
    %7684 = vmatpush2.msra.mxu0 0.0
    %7685 = vmatprep.mubr.f32.mxu0 0.0
    %7686 = vmatmul.mubr.f32.gmra.mxu0 %v7619
    %v7687 = vpop.f32.mrf.mxu0
    %v7688 = vadd.f32 0.0, %v7687
    %v7689 = vpop.f32.mrf.mxu0
    %v7690 = vadd.f32 0.0, %v7689
    %7691 = vdwg.mxu0
    %v7692 = vlaneseq
    %v7693 = vshrl.u32 %v7692, 7
    %v7694 = vsub.s32 0, %v7693
    %v7695 = vrot.slane %v7614, %v7694
    %v7696 = vlaneseq
    %v7697 = vshrl.u32 %v7696, 7
    %v7698 = vsub.s32 0, %v7697
    %v7699 = vrot.slane %v7616, %v7698
    %v7700 = vmul.f32 %v6366, %v7695
    %v7701 = vmul.f32 %v6368, %v7699
    %v7702 = vmul.f32 %v6370, %v7695
    %v7703 = vmul.f32 %v6372, %v7699
    %v7704 = vmul.f32 %v6376, %v7695
    %v7705 = vmul.f32 %v6378, %v7699
    %v7706 = vmul.f32 %v6380, %v7695
    %v7707 = vmul.f32 %v6382, %v7699
    %v7708 = vlaneseq
    %v7709 = vshrl.u32 %v7708, 7
    %v7710 = vsub.s32 0, %v7709
    %v7711 = vrot.slane %v7688, %v7710
    %v7712 = vlaneseq
    %v7713 = vshrl.u32 %v7712, 7
    %v7714 = vsub.s32 0, %v7713
    %v7715 = vrot.slane %v7690, %v7714
    %v7716 = vadd.f32 %v7700, %v7711
    %v7717 = vadd.f32 %v7701, %v7715
    %v7718 = vadd.f32 %v7702, %v7711
    %v7719 = vadd.f32 %v7703, %v7715
    %v7720 = vadd.f32 %v7704, %v7711
    %v7721 = vadd.f32 %v7705, %v7715
    %v7722 = vadd.f32 %v7706, %v7711
    %v7723 = vadd.f32 %v7707, %v7715
    %v7724 = vmax.f32 %v7716, 0.0
    %v7725 = vmax.f32 %v7717, 0.0
    %v7726 = vmax.f32 %v7718, 0.0
    %v7727 = vmax.f32 %v7719, 0.0
    %v7728 = vmax.f32 %v7720, 0.0
    %v7729 = vmax.f32 %v7721, 0.0
    %v7730 = vmax.f32 %v7722, 0.0
    %v7731 = vmax.f32 %v7723, 0.0
    %v7732 = vmul.f32 %v6792, %v7695
    %v7733 = vmul.f32 %v6794, %v7699
    %v7734 = vmul.f32 %v6796, %v7695
    %v7735 = vmul.f32 %v6798, %v7699
    %v7736 = vmul.f32 %v6802, %v7695
    %v7737 = vmul.f32 %v6804, %v7699
    %v7738 = vmul.f32 %v6806, %v7695
    %v7739 = vmul.f32 %v6808, %v7699
    %v7740 = vadd.f32 %v7732, %v7711
    %v7741 = vadd.f32 %v7733, %v7715
    %v7742 = vadd.f32 %v7734, %v7711
    %v7743 = vadd.f32 %v7735, %v7715
    %v7744 = vadd.f32 %v7736, %v7711
    %v7745 = vadd.f32 %v7737, %v7715
    %v7746 = vadd.f32 %v7738, %v7711
    %v7747 = vadd.f32 %v7739, %v7715
    %v7748 = vmax.f32 %v7740, 0.0
    %v7749 = vmax.f32 %v7741, 0.0
    %v7750 = vmax.f32 %v7742, 0.0
    %v7751 = vmax.f32 %v7743, 0.0
    %v7752 = vmax.f32 %v7744, 0.0
    %v7753 = vmax.f32 %v7745, 0.0
    %v7754 = vmax.f32 %v7746, 0.0
    %v7755 = vmax.f32 %v7747, 0.0
    %v7756 = vpack.c.bf16 %v7726, %v7724
    %v7757 = vpack.c.bf16 %v7727, %v7725
    %v7758 = vpack.c.bf16 %v7730, %v7728
    %v7759 = vpack.c.bf16 %v7731, %v7729
    %v7760 = vpack.c.bf16 %v7750, %v7748
    %v7761 = vpack.c.bf16 %v7751, %v7749
    %v7762 = vpack.c.bf16 %v7754, %v7752
    %v7763 = vpack.c.bf16 %v7755, %v7753
    %vm7764 = vcmp.eq.s32.totalorder %v676, %v3523
    %vm7765 = vcmp.eq.s32.totalorder %v677, %v3523
    %vm7766 = vcmp.eq.s32.totalorder %v678, %v3523
    %vm7767 = vcmp.eq.s32.totalorder %v679, %v3523
    %v7768 = vsel %vm7764, 1, 0
    %v7769 = vsel %vm7765, 1, 0
    %v7770 = vsel %vm7766, 1, 0
    %v7771 = vsel %vm7767, 1, 0
    %v7772 = vcvt.s32.f32 %v7768
    %v7773 = vcvt.s32.f32 %v7769
    %v7774 = vcvt.s32.f32 %v7770
    %v7775 = vcvt.s32.f32 %v7771
    %v7776 = vpack.c.bf16 %v7773, %v7772
    %v7777 = vpack.c.bf16 %v7775, %v7774
    %vm7778 = vcmp.eq.s32.totalorder %v676, %v3531
    %vm7779 = vcmp.eq.s32.totalorder %v677, %v3531
    %vm7780 = vcmp.eq.s32.totalorder %v678, %v3531
    %vm7781 = vcmp.eq.s32.totalorder %v679, %v3531
    %v7782 = vsel %vm7778, 1, 0
    %v7783 = vsel %vm7779, 1, 0
    %v7784 = vsel %vm7780, 1, 0
    %v7785 = vsel %vm7781, 1, 0
    %v7786 = vcvt.s32.f32 %v7782
    %v7787 = vcvt.s32.f32 %v7783
    %v7788 = vcvt.s32.f32 %v7784
    %v7789 = vcvt.s32.f32 %v7785
    %v7790 = vpack.c.bf16 %v7787, %v7786
    %v7791 = vpack.c.bf16 %v7789, %v7788
    %v7792 = vsel %vm3342, %v3538, 0
    %v7794 = vsel %vm3342, %v5609, 0
    %v7797 = vsel %vm3342, %v7790, 0
    %v7800 = vsel %vm3342, %v7791, 0
    %7802 = vmatprep.subr.bf16.mxu0 0
    %7803 = vmatpush1.bf16.msra.mxu0 0
    %7804 = vmatprep.subr.bf16.mxu0 0
    %7805 = vmatpush1.bf16.msra.mxu0 0
    %7806 = vmatprep.subr.bf16.mxu0 0
    %7807 = vmatpush1.bf16.msra.mxu0 0
    %7808 = vmatprep.subr.bf16.mxu0 0
    %7809 = vmatpush1.bf16.msra.mxu0 0
    %7810 = vmatprep.subr.bf16.mxu0 0
    %7811 = vmatpush1.bf16.msra.mxu0 0
    %7812 = vmatprep.subr.bf16.mxu0 0
    %7813 = vmatpush1.bf16.msra.mxu0 0
    %7814 = vmatprep.subr.bf16.mxu0 %v7763
    %7815 = vmatpush1.bf16.msra.mxu0 %v7762
    %7816 = vmatprep.subr.bf16.mxu0 %v7761
    %7817 = vmatpush1.bf16.msra.mxu0 %v7760
    %7818 = vmatprep.subr.bf16.mxu0 0
    %7819 = vmatpush2.bf16.msra.mxu0 0
    %7820 = vmatprep.subr.bf16.mxu0 0
    %7821 = vmatpush2.bf16.msra.mxu0 0
    %7822 = vmatprep.subr.bf16.mxu0 0
    %7823 = vmatpush2.bf16.msra.mxu0 0
    %7824 = vmatprep.subr.bf16.mxu0 0
    %7825 = vmatpush2.bf16.msra.mxu0 0
    %7826 = vmatprep.subr.bf16.mxu0 0
    %7827 = vmatpush2.bf16.msra.mxu0 0
    %7828 = vmatprep.subr.bf16.mxu0 0
    %7829 = vmatpush2.bf16.msra.mxu0 0
    %7830 = vmatprep.subr.bf16.mxu0 0
    %7831 = vmatpush2.bf16.msra.mxu0 0
    %7832 = vmatprep.subr.bf16.mxu0 0
    %7833 = vmatpush2.bf16.msra.mxu0 0
    %7834 = vmatprep.mubr.bf16.mxu0 0
    %7835 = vmatmul.mubr.bf16.gmra.mxu0 %v7792
    %v7836 = vpop.f32.mrf.mxu0
    %v7837 = vadd.f32 0.0, %v7836
    %v7838 = vpop.f32.mrf.mxu0
    %v7839 = vadd.f32 0.0, %v7838
    %v7840 = vpop.f32.mrf.mxu0
    %v7841 = vadd.f32 0.0, %v7840
    %v7842 = vpop.f32.mrf.mxu0
    %v7843 = vadd.f32 0.0, %v7842
    %7844 = vmatprep.mubr.bf16.mxu0 0
    %7845 = vmatmul.mubr.bf16.gmra.mxu0 %v7794
    %v7846 = vpop.f32.mrf.mxu0
    %v7847 = vadd.f32 0.0, %v7846
    %v7848 = vpop.f32.mrf.mxu0
    %v7849 = vadd.f32 0.0, %v7848
    %v7850 = vpop.f32.mrf.mxu0
    %v7851 = vadd.f32 0.0, %v7850
    %v7852 = vpop.f32.mrf.mxu0
    %v7853 = vadd.f32 0.0, %v7852
    %7854 = vmatprep.mubr.bf16.mxu0 0
    %7855 = vmatmul.mubr.bf16.gmra.mxu0 %v7797
    %v7856 = vpop.f32.mrf.mxu0
    %v7857 = vadd.f32 0.0, %v7856
    %v7858 = vpop.f32.mrf.mxu0
    %v7859 = vadd.f32 0.0, %v7858
    %v7860 = vpop.f32.mrf.mxu0
    %v7861 = vadd.f32 0.0, %v7860
    %v7862 = vpop.f32.mrf.mxu0
    %v7863 = vadd.f32 0.0, %v7862
    %7864 = vmatprep.mubr.bf16.mxu0 0
    %7865 = vmatmul.mubr.bf16.gmra.mxu0 %v7800
    %v7866 = vpop.f32.mrf.mxu0
    %v7867 = vadd.f32 0.0, %v7866
    %v7868 = vpop.f32.mrf.mxu0
    %v7869 = vadd.f32 0.0, %v7868
    %v7870 = vpop.f32.mrf.mxu0
    %v7871 = vadd.f32 0.0, %v7870
    %v7872 = vpop.f32.mrf.mxu0
    %v7873 = vadd.f32 0.0, %v7872
    %7874 = vdwg.mxu0
    %v7875 = vsel %vm3342, %v3530, 0
    %v7877 = vsel %vm3342, %v5602, 0
    %v7880 = vsel %vm3342, %v7776, 0
    %v7883 = vsel %vm3342, %v7777, 0
    %7885 = vmatprep.subr.bf16.mxu0 0
    %7886 = vmatpush1.bf16.msra.mxu0 0
    %7887 = vmatprep.subr.bf16.mxu0 0
    %7888 = vmatpush1.bf16.msra.mxu0 0
    %7889 = vmatprep.subr.bf16.mxu0 0
    %7890 = vmatpush1.bf16.msra.mxu0 0
    %7891 = vmatprep.subr.bf16.mxu0 0
    %7892 = vmatpush1.bf16.msra.mxu0 0
    %7893 = vmatprep.subr.bf16.mxu0 0
    %7894 = vmatpush1.bf16.msra.mxu0 0
    %7895 = vmatprep.subr.bf16.mxu0 0
    %7896 = vmatpush1.bf16.msra.mxu0 0
    %7897 = vmatprep.subr.bf16.mxu0 %v7759
    %7898 = vmatpush1.bf16.msra.mxu0 %v7758
    %7899 = vmatprep.subr.bf16.mxu0 %v7757
    %7900 = vmatpush1.bf16.msra.mxu0 %v7756
    %7901 = vmatprep.subr.bf16.mxu0 0
    %7902 = vmatpush2.bf16.msra.mxu0 0
    %7903 = vmatprep.subr.bf16.mxu0 0
    %7904 = vmatpush2.bf16.msra.mxu0 0
    %7905 = vmatprep.subr.bf16.mxu0 0
    %7906 = vmatpush2.bf16.msra.mxu0 0
    %7907 = vmatprep.subr.bf16.mxu0 0
    %7908 = vmatpush2.bf16.msra.mxu0 0
    %7909 = vmatprep.subr.bf16.mxu0 0
    %7910 = vmatpush2.bf16.msra.mxu0 0
    %7911 = vmatprep.subr.bf16.mxu0 0
    %7912 = vmatpush2.bf16.msra.mxu0 0
    %7913 = vmatprep.subr.bf16.mxu0 0
    %7914 = vmatpush2.bf16.msra.mxu0 0
    %7915 = vmatprep.subr.bf16.mxu0 0
    %7916 = vmatpush2.bf16.msra.mxu0 0
    %7917 = vmatprep.mubr.bf16.mxu0 0
    %7918 = vmatmul.mubr.bf16.gmra.mxu0 %v7875
    %v7919 = vpop.f32.mrf.mxu0
    %v7920 = vadd.f32 %v7837, %v7919
    %v7921 = vpop.f32.mrf.mxu0
    %v7922 = vadd.f32 %v7839, %v7921
    %v7923 = vpop.f32.mrf.mxu0
    %v7924 = vadd.f32 %v7841, %v7923
    %v7925 = vpop.f32.mrf.mxu0
    %v7926 = vadd.f32 %v7843, %v7925
    %7927 = vmatprep.mubr.bf16.mxu0 0
    %7928 = vmatmul.mubr.bf16.gmra.mxu0 %v7877
    %v7929 = vpop.f32.mrf.mxu0
    %v7930 = vadd.f32 %v7847, %v7929
    %v7931 = vpop.f32.mrf.mxu0
    %v7932 = vadd.f32 %v7849, %v7931
    %v7933 = vpop.f32.mrf.mxu0
    %v7934 = vadd.f32 %v7851, %v7933
    %v7935 = vpop.f32.mrf.mxu0
    %v7936 = vadd.f32 %v7853, %v7935
    %7937 = vmatprep.mubr.bf16.mxu0 0
    %7938 = vmatmul.mubr.bf16.gmra.mxu0 %v7880
    %v7939 = vpop.f32.mrf.mxu0
    %v7940 = vadd.f32 %v7857, %v7939
    %v7941 = vpop.f32.mrf.mxu0
    %v7942 = vadd.f32 %v7859, %v7941
    %v7943 = vpop.f32.mrf.mxu0
    %v7944 = vadd.f32 %v7861, %v7943
    %v7945 = vpop.f32.mrf.mxu0
    %v7946 = vadd.f32 %v7863, %v7945
    %7947 = vmatprep.mubr.bf16.mxu0 0
    %7948 = vmatmul.mubr.bf16.gmra.mxu0 %v7883
    %v7949 = vpop.f32.mrf.mxu0
    %v7950 = vadd.f32 %v7867, %v7949
    %v7951 = vpop.f32.mrf.mxu0
    %v7952 = vadd.f32 %v7869, %v7951
    %v7953 = vpop.f32.mrf.mxu0
    %v7954 = vadd.f32 %v7871, %v7953
    %v7955 = vpop.f32.mrf.mxu0
    %v7956 = vadd.f32 %v7873, %v7955
    %7957 = vdwg.mxu0
    %v7958 = vpack.c.bf16 %v7924, %v7920
    %v7959 = vpack.c.bf16 %v7926, %v7922
    %v7960 = vpack.c.bf16 %v7934, %v7930
    %v7961 = vpack.c.bf16 %v7936, %v7932
    %v7962 = vpack.c.bf16 %v7944, %v7940
    %v7963 = vpack.c.bf16 %v7946, %v7942
    %v7964 = vpack.c.bf16 %v7954, %v7950
    %v7965 = vpack.c.bf16 %v7956, %v7952
    %v7966 = vld [vmem:[%s16] sm:$0xff]
    %v7967 = vld [vmem:[%s16 + $0x8] sm:$0xff]
    %v7968 = vld [vmem:[%s16 + $0x10] sm:$0xff]
    %v7969 = vld [vmem:[%s16 + $0x18] sm:$0xff]
    %v7970 = vld [vmem:[%s16 + $0x20] sm:$0xff]
    %v7971 = vld [vmem:[%s16 + $0x28] sm:$0xff]
    %v7972 = vld [vmem:[%s16 + $0x30] sm:$0xff]
    %v7973 = vld [vmem:[%s16 + $0x38] sm:$0xff]
    %v7974 = vld [vmem:[%s16 + $0x40] sm:$0xff]
    %v7975 = vld [vmem:[%s16 + $0x48] sm:$0xff]
    %v7976 = vld [vmem:[%s16 + $0x50] sm:$0xff]
    %v7977 = vld [vmem:[%s16 + $0x58] sm:$0xff]
    %v7978 = vld [vmem:[%s16 + $0x60] sm:$0xff]
    %v7979 = vld [vmem:[%s16 + $0x68] sm:$0xff]
    %v7980 = vld [vmem:[%s16 + $0x70] sm:$0xff]
    %v7981 = vld [vmem:[%s16 + $0x78] sm:$0xff]
    %v7982 = vld [vmem:[%s16 + $0x80] sm:$0xff]
    %v7983 = vld [vmem:[%s16 + $0x88] sm:$0xff]
    %v7984 = vld [vmem:[%s16 + $0x90] sm:$0xff]
    %v7985 = vld [vmem:[%s16 + $0x98] sm:$0xff]
    %v7986 = vld [vmem:[%s16 + $0xa0] sm:$0xff]
    %v7987 = vld [vmem:[%s16 + $0xa8] sm:$0xff]
    %v7988 = vld [vmem:[%s16 + $0xb0] sm:$0xff]
    %v7989 = vld [vmem:[%s16 + $0xb8] sm:$0xff]
    %v7990 = vld [vmem:[%s16 + $0xc0] sm:$0xff]
    %v7991 = vld [vmem:[%s16 + $0xc8] sm:$0xff]
    %v7992 = vld [vmem:[%s16 + $0xd0] sm:$0xff]
    %v7993 = vld [vmem:[%s16 + $0xd8] sm:$0xff]
    %v7994 = vld [vmem:[%s16 + $0xe0] sm:$0xff]
    %v7995 = vld [vmem:[%s16 + $0xe8] sm:$0xff]
    %v7996 = vld [vmem:[%s16 + $0xf0] sm:$0xff]
    %v7997 = vld [vmem:[%s16 + $0xf8] sm:$0xff]
    %v7998 = vld [vmem:[%s16 + $0x100] sm:$0xff]
    %v7999 = vld [vmem:[%s16 + $0x108] sm:$0xff]
    %v8000 = vld [vmem:[%s16 + $0x110] sm:$0xff]
    %v8001 = vld [vmem:[%s16 + $0x118] sm:$0xff]
    %v8002 = vld [vmem:[%s16 + $0x120] sm:$0xff]
    %v8003 = vld [vmem:[%s16 + $0x128] sm:$0xff]
    %v8004 = vld [vmem:[%s16 + $0x130] sm:$0xff]
    %v8005 = vld [vmem:[%s16 + $0x138] sm:$0xff]
    %v8006 = vld [vmem:[%s16 + $0x140] sm:$0xff]
    %v8007 = vld [vmem:[%s16 + $0x148] sm:$0xff]
    %v8008 = vld [vmem:[%s16 + $0x150] sm:$0xff]
    %v8009 = vld [vmem:[%s16 + $0x158] sm:$0xff]
    %v8010 = vld [vmem:[%s16 + $0x160] sm:$0xff]
    %v8011 = vld [vmem:[%s16 + $0x168] sm:$0xff]
    %v8012 = vld [vmem:[%s16 + $0x170] sm:$0xff]
    %v8013 = vld [vmem:[%s16 + $0x178] sm:$0xff]
    %v8014 = vld [vmem:[%s16 + $0x180] sm:$0xff]
    %v8015 = vld [vmem:[%s16 + $0x188] sm:$0xff]
    %v8016 = vld [vmem:[%s16 + $0x190] sm:$0xff]
    %v8017 = vld [vmem:[%s16 + $0x198] sm:$0xff]
    %v8018 = vld [vmem:[%s16 + $0x1a0] sm:$0xff]
    %v8019 = vld [vmem:[%s16 + $0x1a8] sm:$0xff]
    %v8020 = vld [vmem:[%s16 + $0x1b0] sm:$0xff]
    %v8021 = vld [vmem:[%s16 + $0x1b8] sm:$0xff]
    %v8022 = vld [vmem:[%s16 + $0x1c0] sm:$0xff]
    %v8023 = vld [vmem:[%s16 + $0x1c8] sm:$0xff]
    %v8024 = vld [vmem:[%s16 + $0x1d0] sm:$0xff]
    %v8025 = vld [vmem:[%s16 + $0x1d8] sm:$0xff]
    %v8026 = vld [vmem:[%s16 + $0x1e0] sm:$0xff]
    %v8027 = vld [vmem:[%s16 + $0x1e8] sm:$0xff]
    %v8028 = vld [vmem:[%s16 + $0x1f0] sm:$0xff]
    %v8029 = vld [vmem:[%s16 + $0x1f8] sm:$0xff]
    %v8030 = vld [vmem:[%s17] sm:$0xff]
    %v8031 = vld [vmem:[%s17 + $0x8] sm:$0xff]
    %v8032 = vld [vmem:[%s17 + $0x10] sm:$0xff]
    %v8033 = vld [vmem:[%s17 + $0x18] sm:$0xff]
    %v8034 = vld [vmem:[%s17 + $0x20] sm:$0xff]
    %v8035 = vld [vmem:[%s17 + $0x28] sm:$0xff]
    %v8036 = vld [vmem:[%s17 + $0x30] sm:$0xff]
    %v8037 = vld [vmem:[%s17 + $0x38] sm:$0xff]
    %v8038 = vld [vmem:[%s17 + $0x40] sm:$0xff]
    %v8039 = vld [vmem:[%s17 + $0x48] sm:$0xff]
    %v8040 = vld [vmem:[%s17 + $0x50] sm:$0xff]
    %v8041 = vld [vmem:[%s17 + $0x58] sm:$0xff]
    %v8042 = vld [vmem:[%s17 + $0x60] sm:$0xff]
    %v8043 = vld [vmem:[%s17 + $0x68] sm:$0xff]
    %v8044 = vld [vmem:[%s17 + $0x70] sm:$0xff]
    %v8045 = vld [vmem:[%s17 + $0x78] sm:$0xff]
    %v8046 = vld [vmem:[%s17 + $0x80] sm:$0xff]
    %v8047 = vld [vmem:[%s17 + $0x88] sm:$0xff]
    %v8048 = vld [vmem:[%s17 + $0x90] sm:$0xff]
    %v8049 = vld [vmem:[%s17 + $0x98] sm:$0xff]
    %v8050 = vld [vmem:[%s17 + $0xa0] sm:$0xff]
    %v8051 = vld [vmem:[%s17 + $0xa8] sm:$0xff]
    %v8052 = vld [vmem:[%s17 + $0xb0] sm:$0xff]
    %v8053 = vld [vmem:[%s17 + $0xb8] sm:$0xff]
    %v8054 = vld [vmem:[%s17 + $0xc0] sm:$0xff]
    %v8055 = vld [vmem:[%s17 + $0xc8] sm:$0xff]
    %v8056 = vld [vmem:[%s17 + $0xd0] sm:$0xff]
    %v8057 = vld [vmem:[%s17 + $0xd8] sm:$0xff]
    %v8058 = vld [vmem:[%s17 + $0xe0] sm:$0xff]
    %v8059 = vld [vmem:[%s17 + $0xe8] sm:$0xff]
    %v8060 = vld [vmem:[%s17 + $0xf0] sm:$0xff]
    %v8061 = vld [vmem:[%s17 + $0xf8] sm:$0xff]
    %v8062 = vld [vmem:[%s17 + $0x100] sm:$0xff]
    %v8063 = vld [vmem:[%s17 + $0x108] sm:$0xff]
    %v8064 = vld [vmem:[%s17 + $0x110] sm:$0xff]
    %v8065 = vld [vmem:[%s17 + $0x118] sm:$0xff]
    %v8066 = vld [vmem:[%s17 + $0x120] sm:$0xff]
    %v8067 = vld [vmem:[%s17 + $0x128] sm:$0xff]
    %v8068 = vld [vmem:[%s17 + $0x130] sm:$0xff]
    %v8069 = vld [vmem:[%s17 + $0x138] sm:$0xff]
    %v8070 = vld [vmem:[%s17 + $0x140] sm:$0xff]
    %v8071 = vld [vmem:[%s17 + $0x148] sm:$0xff]
    %v8072 = vld [vmem:[%s17 + $0x150] sm:$0xff]
    %v8073 = vld [vmem:[%s17 + $0x158] sm:$0xff]
    %v8074 = vld [vmem:[%s17 + $0x160] sm:$0xff]
    %v8075 = vld [vmem:[%s17 + $0x168] sm:$0xff]
    %v8076 = vld [vmem:[%s17 + $0x170] sm:$0xff]
    %v8077 = vld [vmem:[%s17 + $0x178] sm:$0xff]
    %v8078 = vld [vmem:[%s17 + $0x180] sm:$0xff]
    %v8079 = vld [vmem:[%s17 + $0x188] sm:$0xff]
    %v8080 = vld [vmem:[%s17 + $0x190] sm:$0xff]
    %v8081 = vld [vmem:[%s17 + $0x198] sm:$0xff]
    %v8082 = vld [vmem:[%s17 + $0x1a0] sm:$0xff]
    %v8083 = vld [vmem:[%s17 + $0x1a8] sm:$0xff]
    %v8084 = vld [vmem:[%s17 + $0x1b0] sm:$0xff]
    %v8085 = vld [vmem:[%s17 + $0x1b8] sm:$0xff]
    %v8086 = vld [vmem:[%s17 + $0x1c0] sm:$0xff]
    %v8087 = vld [vmem:[%s17 + $0x1c8] sm:$0xff]
    %v8088 = vld [vmem:[%s17 + $0x1d0] sm:$0xff]
    %v8089 = vld [vmem:[%s17 + $0x1d8] sm:$0xff]
    %v8090 = vld [vmem:[%s17 + $0x1e0] sm:$0xff]
    %v8091 = vld [vmem:[%s17 + $0x1e8] sm:$0xff]
    %v8092 = vld [vmem:[%s17 + $0x1f0] sm:$0xff]
    %v8093 = vld [vmem:[%s17 + $0x1f8] sm:$0xff]
    %v8095 = vshrl.u32 %v7958, 16
    %v8097 = vrot.slane %v8095, 7
    %v8098 = vshll.u32 %v7958, 16
    %v8100 = vor.u32 %v8097, %v8098
    %v8102 = vshrl.u32 %v7959, 16
    %v8104 = vrot.slane %v8102, 7
    %v8105 = vshll.u32 %v7959, 16
    %v8107 = vor.u32 %v8104, %v8105
    %v8109 = vshrl.u32 %v7960, 16
    %v8111 = vrot.slane %v8109, 7
    %v8112 = vshll.u32 %v7960, 16
    %v8114 = vor.u32 %v8111, %v8112
    %v8115 = vsel %vm1755, %v8097, %v8114
    %v8117 = vshrl.u32 %v7961, 16
    %v8119 = vrot.slane %v8117, 7
    %v8120 = vshll.u32 %v7961, 16
    %v8122 = vor.u32 %v8119, %v8120
    %v8123 = vsel %vm1755, %v8104, %v8122
    %v8125 = vshrl.u32 %v7962, 16
    %v8127 = vrot.slane %v8125, 7
    %v8128 = vshll.u32 %v7962, 16
    %v8130 = vor.u32 %v8127, %v8128
    %v8131 = vsel %vm1755, %v8111, %v8130
    %v8133 = vshrl.u32 %v7963, 16
    %v8135 = vrot.slane %v8133, 7
    %v8136 = vshll.u32 %v7963, 16
    %v8138 = vor.u32 %v8135, %v8136
    %v8139 = vsel %vm1755, %v8119, %v8138
    %v8141 = vshrl.u32 %v7964, 16
    %v8143 = vrot.slane %v8141, 7
    %v8144 = vshll.u32 %v7964, 16
    %v8146 = vor.u32 %v8143, %v8144
    %v8147 = vsel %vm1755, %v8127, %v8146
    %v8149 = vshrl.u32 %v7965, 16
    %v8151 = vrot.slane %v8149, 7
    %v8152 = vshll.u32 %v7965, 16
    %v8154 = vor.u32 %v8151, %v8152
    %v8155 = vsel %vm1755, %v8135, %v8154
    %v8164 = vsel %vm1756, 0, %v8100
    %v8165 = vsel %vm1756, 0, %v8107
    %v8166 = vrot.slane %v8098, 1
    %v8167 = vor.u32 %v8095, %v8166
    %v8168 = vrot.slane %v8112, 1
    %v8169 = vsel %vm3800, %v8167, %v8168
    %v8170 = vrot.slane %v8105, 1
    %v8171 = vor.u32 %v8102, %v8170
    %v8172 = vrot.slane %v8120, 1
    %v8173 = vsel %vm3800, %v8171, %v8172
    %v8174 = vor.u32 %v8109, %v8168
    %v8175 = vrot.slane %v8128, 1
    %v8176 = vsel %vm3800, %v8174, %v8175
    %v8177 = vor.u32 %v8117, %v8172
    %v8178 = vrot.slane %v8136, 1
    %v8179 = vsel %vm3800, %v8177, %v8178
    %v8180 = vor.u32 %v8125, %v8175
    %v8181 = vrot.slane %v8144, 1
    %v8182 = vsel %vm3800, %v8180, %v8181
    %v8183 = vor.u32 %v8133, %v8178
    %v8184 = vrot.slane %v8152, 1
    %v8185 = vsel %vm3800, %v8183, %v8184
    %v8186 = vor.u32 %v8141, %v8181
    %v8187 = vor.u32 %v8149, %v8184
    %v8196 = vsel %vm3801, %v8186, 0
    %v8197 = vsel %vm3801, %v8187, 0
    %vm8198 = vcmp.eq.s32.totalorder %v2956, 0
    %vm8199 = vcmp.eq.s32.totalorder %v2957, 0
    %vm8200 = vcmp.eq.s32.totalorder %v2958, 0
    %vm8201 = vcmp.eq.s32.totalorder %v2959, 0
    %vm8202 = vcmp.eq.s32.totalorder %v2960, 0
    %vm8203 = vcmp.eq.s32.totalorder %v2961, 0
    %vm8204 = vcmp.eq.s32.totalorder %v2962, 0
    %vm8205 = vcmp.eq.s32.totalorder %v2963, 0
    %vm8206 = vmpackc.low %vm8198, %vm8198
    %vm8207 = vmpackc.low %vm8199, %vm8199
    %vm8208 = vmpackc.low %vm8200, %vm8200
    %vm8209 = vmpackc.low %vm8201, %vm8201
    %vm8210 = vmpackc.low %vm8202, %vm8202
    %vm8211 = vmpackc.low %vm8203, %vm8203
    %vm8212 = vmpackc.low %vm8204, %vm8204
    %vm8213 = vmpackc.low %vm8205, %vm8205
    %v8214 = vsel %vm8206, 65537, 0
    %v8215 = vsel %vm8207, 65537, 0
    %v8216 = vsel %vm8208, 65537, 0
    %v8217 = vsel %vm8209, 65537, 0
    %v8218 = vsel %vm8210, 65537, 0
    %v8219 = vsel %vm8211, 65537, 0
    %v8220 = vsel %vm8212, 65537, 0
    %v8221 = vsel %vm8213, 65537, 0
    %v8222 = vunpack.c.l.b16 %v8214
    %v8223 = vunpack.c.l.b16 %v8215
    %v8224 = vunpack.c.l.b16 %v8216
    %v8225 = vunpack.c.l.b16 %v8217
    %v8226 = vunpack.c.l.b16 %v8218
    %v8227 = vunpack.c.l.b16 %v8219
    %v8228 = vunpack.c.l.b16 %v8220
    %v8229 = vunpack.c.l.b16 %v8221
    %v8230 = vpack.c.b16 %v8223, %v8222
    %v8231 = vpack.c.b16 %v8225, %v8224
    %v8232 = vpack.c.b16 %v8227, %v8226
    %v8233 = vpack.c.b16 %v8229, %v8228
    %vm8234 = vcmp.ne.s16.totalorder %v8230, 0
    %vm8235 = vcmp.ne.s16.totalorder %v8231, 0
    %vm8236 = vcmp.ne.s16.totalorder %v8232, 0
    %vm8237 = vcmp.ne.s16.totalorder %v8233, 0
    %v8238 = vsel %vm8234, 0, %v8164
    %v8239 = vsel %vm8234, 0, %v8165
    %v8240 = vsel %vm8235, 0, %v8115
    %v8241 = vsel %vm8235, 0, %v8123
    %v8242 = vsel %vm8236, 0, %v8131
    %v8243 = vsel %vm8236, 0, %v8139
    %v8244 = vsel %vm8237, 0, %v8147
    %v8245 = vsel %vm8237, 0, %v8155
    %vm8246 = vcmp.eq.s32.totalorder %v2956, 31
    %vm8247 = vcmp.eq.s32.totalorder %v2957, 31
    %vm8248 = vcmp.eq.s32.totalorder %v2958, 31
    %vm8249 = vcmp.eq.s32.totalorder %v2959, 31
    %vm8250 = vcmp.eq.s32.totalorder %v2960, 31
    %vm8251 = vcmp.eq.s32.totalorder %v2961, 31
    %vm8252 = vcmp.eq.s32.totalorder %v2962, 31
    %vm8253 = vcmp.eq.s32.totalorder %v2963, 31
    %vm8254 = vmpackc.low %vm8246, %vm8246
    %vm8255 = vmpackc.low %vm8247, %vm8247
    %vm8256 = vmpackc.low %vm8248, %vm8248
    %vm8257 = vmpackc.low %vm8249, %vm8249
    %vm8258 = vmpackc.low %vm8250, %vm8250
    %vm8259 = vmpackc.low %vm8251, %vm8251
    %vm8260 = vmpackc.low %vm8252, %vm8252
    %vm8261 = vmpackc.low %vm8253, %vm8253
    %v8262 = vsel %vm8254, 65537, 0
    %v8263 = vsel %vm8255, 65537, 0
    %v8264 = vsel %vm8256, 65537, 0
    %v8265 = vsel %vm8257, 65537, 0
    %v8266 = vsel %vm8258, 65537, 0
    %v8267 = vsel %vm8259, 65537, 0
    %v8268 = vsel %vm8260, 65537, 0
    %v8269 = vsel %vm8261, 65537, 0
    %v8270 = vunpack.c.l.b16 %v8262
    %v8271 = vunpack.c.l.b16 %v8263
    %v8272 = vunpack.c.l.b16 %v8264
    %v8273 = vunpack.c.l.b16 %v8265
    %v8274 = vunpack.c.l.b16 %v8266
    %v8275 = vunpack.c.l.b16 %v8267
    %v8276 = vunpack.c.l.b16 %v8268
    %v8277 = vunpack.c.l.b16 %v8269
    %v8278 = vpack.c.b16 %v8271, %v8270
    %v8279 = vpack.c.b16 %v8273, %v8272
    %v8280 = vpack.c.b16 %v8275, %v8274
    %v8281 = vpack.c.b16 %v8277, %v8276
    %vm8282 = vcmp.ne.s16.totalorder %v8278, 0
    %vm8283 = vcmp.ne.s16.totalorder %v8279, 0
    %vm8284 = vcmp.ne.s16.totalorder %v8280, 0
    %vm8285 = vcmp.ne.s16.totalorder %v8281, 0
    %v8286 = vsel %vm8282, 0, %v8169
    %v8287 = vsel %vm8282, 0, %v8173
    %v8288 = vsel %vm8283, 0, %v8176
    %v8289 = vsel %vm8283, 0, %v8179
    %v8290 = vsel %vm8284, 0, %v8182
    %v8291 = vsel %vm8284, 0, %v8185
    %v8292 = vsel %vm8285, 0, %v8196
    %v8293 = vsel %vm8285, 0, %v8197
    %v8294 = vld [vmem:[%s18] sm:$0x3]
    %v8296 = vlaneseq
    %v8297 = vshrl.u32 %v8296, 7
    %v8298 = vsub.s32 0, %v8297
    %v8299 = vrot.slane %v8294, %v8298
    %v8300 = vlaneseq
    %v8301 = vshrl.u32 %v8300, 7
    %v8302 = vsub.s32 1, %v8301
    %v8303 = vrot.slane %v8294, %v8302
    %v8370 = vunpack.c.l.b16 %v7966
    %v8371 = vunpack.c.h.b16 %v7966
    %v8372 = vunpack.c.l.b16 %v7967
    %v8373 = vunpack.c.h.b16 %v7967
    %v8374 = vunpack.c.l.b16 %v7968
    %v8375 = vunpack.c.h.b16 %v7968
    %v8376 = vunpack.c.l.b16 %v7969
    %v8377 = vunpack.c.h.b16 %v7969
    %v8378 = vunpack.c.l.b16 %v7970
    %v8379 = vunpack.c.h.b16 %v7970
    %v8380 = vunpack.c.l.b16 %v7971
    %v8381 = vunpack.c.h.b16 %v7971
    %v8382 = vunpack.c.l.b16 %v7972
    %v8383 = vunpack.c.h.b16 %v7972
    %v8384 = vunpack.c.l.b16 %v7973
    %v8385 = vunpack.c.h.b16 %v7973
    %v8386 = vunpack.c.l.b16 %v7974
    %v8387 = vunpack.c.h.b16 %v7974
    %v8388 = vunpack.c.l.b16 %v7975
    %v8389 = vunpack.c.h.b16 %v7975
    %v8390 = vunpack.c.l.b16 %v7976
    %v8391 = vunpack.c.h.b16 %v7976
    %v8392 = vunpack.c.l.b16 %v7977
    %v8393 = vunpack.c.h.b16 %v7977
    %v8394 = vunpack.c.l.b16 %v7978
    %v8395 = vunpack.c.h.b16 %v7978
    %v8396 = vunpack.c.l.b16 %v7979
    %v8397 = vunpack.c.h.b16 %v7979
    %v8398 = vunpack.c.l.b16 %v7980
    %v8399 = vunpack.c.h.b16 %v7980
    %v8400 = vunpack.c.l.b16 %v7981
    %v8401 = vunpack.c.h.b16 %v7981
    %v8402 = vunpack.c.l.b16 %v7982
    %v8403 = vunpack.c.h.b16 %v7982
    %v8404 = vunpack.c.l.b16 %v7983
    %v8405 = vunpack.c.h.b16 %v7983
    %v8406 = vunpack.c.l.b16 %v7984
    %v8407 = vunpack.c.h.b16 %v7984
    %v8408 = vunpack.c.l.b16 %v7985
    %v8409 = vunpack.c.h.b16 %v7985
    %v8410 = vunpack.c.l.b16 %v7986
    %v8411 = vunpack.c.h.b16 %v7986
    %v8412 = vunpack.c.l.b16 %v7987
    %v8413 = vunpack.c.h.b16 %v7987
    %v8414 = vunpack.c.l.b16 %v7988
    %v8415 = vunpack.c.h.b16 %v7988
    %v8416 = vunpack.c.l.b16 %v7989
    %v8417 = vunpack.c.h.b16 %v7989
    %v8418 = vunpack.c.l.b16 %v7990
    %v8419 = vunpack.c.h.b16 %v7990
    %v8420 = vunpack.c.l.b16 %v7991
    %v8421 = vunpack.c.h.b16 %v7991
    %v8422 = vunpack.c.l.b16 %v7992
    %v8423 = vunpack.c.h.b16 %v7992
    %v8424 = vunpack.c.l.b16 %v7993
    %v8425 = vunpack.c.h.b16 %v7993
    %v8426 = vunpack.c.l.b16 %v7994
    %v8427 = vunpack.c.h.b16 %v7994
    %v8428 = vunpack.c.l.b16 %v7995
    %v8429 = vunpack.c.h.b16 %v7995
    %v8430 = vunpack.c.l.b16 %v7996
    %v8431 = vunpack.c.h.b16 %v7996
    %v8432 = vunpack.c.l.b16 %v7997
    %v8433 = vunpack.c.h.b16 %v7997
    %v8434 = vunpack.c.l.b16 %v7998
    %v8435 = vunpack.c.h.b16 %v7998
    %v8436 = vunpack.c.l.b16 %v7999
    %v8437 = vunpack.c.h.b16 %v7999
    %v8438 = vunpack.c.l.b16 %v8000
    %v8439 = vunpack.c.h.b16 %v8000
    %v8440 = vunpack.c.l.b16 %v8001
    %v8441 = vunpack.c.h.b16 %v8001
    %v8442 = vunpack.c.l.b16 %v8002
    %v8443 = vunpack.c.h.b16 %v8002
    %v8444 = vunpack.c.l.b16 %v8003
    %v8445 = vunpack.c.h.b16 %v8003
    %v8446 = vunpack.c.l.b16 %v8004
    %v8447 = vunpack.c.h.b16 %v8004
    %v8448 = vunpack.c.l.b16 %v8005
    %v8449 = vunpack.c.h.b16 %v8005
    %v8450 = vunpack.c.l.b16 %v8006
    %v8451 = vunpack.c.h.b16 %v8006
    %v8452 = vunpack.c.l.b16 %v8007
    %v8453 = vunpack.c.h.b16 %v8007
    %v8454 = vunpack.c.l.b16 %v8008
    %v8455 = vunpack.c.h.b16 %v8008
    %v8456 = vunpack.c.l.b16 %v8009
    %v8457 = vunpack.c.h.b16 %v8009
    %v8458 = vunpack.c.l.b16 %v8010
    %v8459 = vunpack.c.h.b16 %v8010
    %v8460 = vunpack.c.l.b16 %v8011
    %v8461 = vunpack.c.h.b16 %v8011
    %v8462 = vunpack.c.l.b16 %v8012
    %v8463 = vunpack.c.h.b16 %v8012
    %v8464 = vunpack.c.l.b16 %v8013
    %v8465 = vunpack.c.h.b16 %v8013
    %v8466 = vunpack.c.l.b16 %v8014
    %v8467 = vunpack.c.h.b16 %v8014
    %v8468 = vunpack.c.l.b16 %v8015
    %v8469 = vunpack.c.h.b16 %v8015
    %v8470 = vunpack.c.l.b16 %v8016
    %v8471 = vunpack.c.h.b16 %v8016
    %v8472 = vunpack.c.l.b16 %v8017
    %v8473 = vunpack.c.h.b16 %v8017
    %v8474 = vunpack.c.l.b16 %v8018
    %v8475 = vunpack.c.h.b16 %v8018
    %v8476 = vunpack.c.l.b16 %v8019
    %v8477 = vunpack.c.h.b16 %v8019
    %v8478 = vunpack.c.l.b16 %v8020
    %v8479 = vunpack.c.h.b16 %v8020
    %v8480 = vunpack.c.l.b16 %v8021
    %v8481 = vunpack.c.h.b16 %v8021
    %v8482 = vunpack.c.l.b16 %v8022
    %v8483 = vunpack.c.h.b16 %v8022
    %v8484 = vunpack.c.l.b16 %v8023
    %v8485 = vunpack.c.h.b16 %v8023
    %v8486 = vunpack.c.l.b16 %v8024
    %v8487 = vunpack.c.h.b16 %v8024
    %v8488 = vunpack.c.l.b16 %v8025
    %v8489 = vunpack.c.h.b16 %v8025
    %v8490 = vunpack.c.l.b16 %v8026
    %v8491 = vunpack.c.h.b16 %v8026
    %v8492 = vunpack.c.l.b16 %v8027
    %v8493 = vunpack.c.h.b16 %v8027
    %v8494 = vunpack.c.l.b16 %v8028
    %v8495 = vunpack.c.h.b16 %v8028
    %v8496 = vunpack.c.l.b16 %v8029
    %v8497 = vunpack.c.h.b16 %v8029
    %v8498 = vpack.c.b16 %v8372, %v8370
    %v8499 = vpack.c.b16 %v8373, %v8371
    %v8500 = vpack.c.b16 %v8376, %v8374
    %v8501 = vpack.c.b16 %v8377, %v8375
    %v8502 = vpack.c.b16 %v8380, %v8378
    %v8503 = vpack.c.b16 %v8381, %v8379
    %v8504 = vpack.c.b16 %v8384, %v8382
    %v8505 = vpack.c.b16 %v8385, %v8383
    %v8506 = vpack.c.b16 %v8388, %v8386
    %v8507 = vpack.c.b16 %v8389, %v8387
    %v8508 = vpack.c.b16 %v8392, %v8390
    %v8509 = vpack.c.b16 %v8393, %v8391
    %v8510 = vpack.c.b16 %v8396, %v8394
    %v8511 = vpack.c.b16 %v8397, %v8395
    %v8512 = vpack.c.b16 %v8400, %v8398
    %v8513 = vpack.c.b16 %v8401, %v8399
    %v8514 = vpack.c.b16 %v8404, %v8402
    %v8515 = vpack.c.b16 %v8405, %v8403
    %v8516 = vpack.c.b16 %v8408, %v8406
    %v8517 = vpack.c.b16 %v8409, %v8407
    %v8518 = vpack.c.b16 %v8412, %v8410
    %v8519 = vpack.c.b16 %v8413, %v8411
    %v8520 = vpack.c.b16 %v8416, %v8414
    %v8521 = vpack.c.b16 %v8417, %v8415
    %v8522 = vpack.c.b16 %v8420, %v8418
    %v8523 = vpack.c.b16 %v8421, %v8419
    %v8524 = vpack.c.b16 %v8424, %v8422
    %v8525 = vpack.c.b16 %v8425, %v8423
    %v8526 = vpack.c.b16 %v8428, %v8426
    %v8527 = vpack.c.b16 %v8429, %v8427
    %v8528 = vpack.c.b16 %v8432, %v8430
    %v8529 = vpack.c.b16 %v8433, %v8431
    %v8530 = vpack.c.b16 %v8436, %v8434
    %v8531 = vpack.c.b16 %v8437, %v8435
    %v8532 = vpack.c.b16 %v8440, %v8438
    %v8533 = vpack.c.b16 %v8441, %v8439
    %v8534 = vpack.c.b16 %v8444, %v8442
    %v8535 = vpack.c.b16 %v8445, %v8443
    %v8536 = vpack.c.b16 %v8448, %v8446
    %v8537 = vpack.c.b16 %v8449, %v8447
    %v8538 = vpack.c.b16 %v8452, %v8450
    %v8539 = vpack.c.b16 %v8453, %v8451
    %v8540 = vpack.c.b16 %v8456, %v8454
    %v8541 = vpack.c.b16 %v8457, %v8455
    %v8542 = vpack.c.b16 %v8460, %v8458
    %v8543 = vpack.c.b16 %v8461, %v8459
    %v8544 = vpack.c.b16 %v8464, %v8462
    %v8545 = vpack.c.b16 %v8465, %v8463
    %v8546 = vpack.c.b16 %v8468, %v8466
    %v8547 = vpack.c.b16 %v8469, %v8467
    %v8548 = vpack.c.b16 %v8472, %v8470
    %v8549 = vpack.c.b16 %v8473, %v8471
    %v8550 = vpack.c.b16 %v8476, %v8474
    %v8551 = vpack.c.b16 %v8477, %v8475
    %v8552 = vpack.c.b16 %v8480, %v8478
    %v8553 = vpack.c.b16 %v8481, %v8479
    %v8554 = vpack.c.b16 %v8484, %v8482
    %v8555 = vpack.c.b16 %v8485, %v8483
    %v8556 = vpack.c.b16 %v8488, %v8486
    %v8557 = vpack.c.b16 %v8489, %v8487
    %v8558 = vpack.c.b16 %v8492, %v8490
    %v8559 = vpack.c.b16 %v8493, %v8491
    %v8560 = vpack.c.b16 %v8496, %v8494
    %v8561 = vpack.c.b16 %v8497, %v8495
    %8626 = vmatprep.subr.bf16.mxu0 %v8513
    %8627 = vmatpush1.bf16.msra.mxu0 %v8512
    %8628 = vmatprep.subr.bf16.mxu0 %v8511
    %8629 = vmatpush1.bf16.msra.mxu0 %v8510
    %8630 = vmatprep.subr.bf16.mxu0 %v8509
    %8631 = vmatpush1.bf16.msra.mxu0 %v8508
    %8632 = vmatprep.subr.bf16.mxu0 %v8507
    %8633 = vmatpush1.bf16.msra.mxu0 %v8506
    %8634 = vmatprep.subr.bf16.mxu0 %v8505
    %8635 = vmatpush1.bf16.msra.mxu0 %v8504
    %8636 = vmatprep.subr.bf16.mxu0 %v8503
    %8637 = vmatpush1.bf16.msra.mxu0 %v8502
    %8638 = vmatprep.subr.bf16.mxu0 %v8501
    %8639 = vmatpush1.bf16.msra.mxu0 %v8500
    %8640 = vmatprep.subr.bf16.mxu0 %v8499
    %8641 = vmatpush1.bf16.msra.mxu0 %v8498
    %8642 = vmatprep.subr.bf16.mxu0 %v8529
    %8643 = vmatpush2.bf16.msra.mxu0 %v8528
    %8644 = vmatprep.subr.bf16.mxu0 %v8527
    %8645 = vmatpush2.bf16.msra.mxu0 %v8526
    %8646 = vmatprep.subr.bf16.mxu0 %v8525
    %8647 = vmatpush2.bf16.msra.mxu0 %v8524
    %8648 = vmatprep.subr.bf16.mxu0 %v8523
    %8649 = vmatpush2.bf16.msra.mxu0 %v8522
    %8650 = vmatprep.subr.bf16.mxu0 %v8521
    %8651 = vmatpush2.bf16.msra.mxu0 %v8520
    %8652 = vmatprep.subr.bf16.mxu0 %v8519
    %8653 = vmatpush2.bf16.msra.mxu0 %v8518
    %8654 = vmatprep.subr.bf16.mxu0 %v8517
    %8655 = vmatpush2.bf16.msra.mxu0 %v8516
    %8656 = vmatprep.subr.bf16.mxu0 %v8515
    %8657 = vmatpush2.bf16.msra.mxu0 %v8514
    %8658 = vmatprep.mubr.bf16.mxu0 %v8239
    %8659 = vmatmul.mubr.bf16.gmra.mxu0 %v8238
    %v8660 = vpop.f32.mrf.mxu0
    %v8661 = vadd.f32 %v8299, %v8660
    %v8662 = vpop.f32.mrf.mxu0
    %v8663 = vadd.f32 %v8303, %v8662
    %v8664 = vpop.f32.mrf.mxu0
    %v8665 = vadd.f32 %v8299, %v8664
    %v8666 = vpop.f32.mrf.mxu0
    %v8667 = vadd.f32 %v8303, %v8666
    %8668 = vmatprep.mubr.bf16.mxu0 %v8241
    %8669 = vmatmul.mubr.bf16.gmra.mxu0 %v8240
    %v8670 = vpop.f32.mrf.mxu0
    %v8671 = vadd.f32 %v8299, %v8670
    %v8672 = vpop.f32.mrf.mxu0
    %v8673 = vadd.f32 %v8303, %v8672
    %v8674 = vpop.f32.mrf.mxu0
    %v8675 = vadd.f32 %v8299, %v8674
    %v8676 = vpop.f32.mrf.mxu0
    %v8677 = vadd.f32 %v8303, %v8676
    %8678 = vmatprep.mubr.bf16.mxu0 %v8243
    %8679 = vmatmul.mubr.bf16.gmra.mxu0 %v8242
    %v8680 = vpop.f32.mrf.mxu0
    %v8681 = vadd.f32 %v8299, %v8680
    %v8682 = vpop.f32.mrf.mxu0
    %v8683 = vadd.f32 %v8303, %v8682
    %v8684 = vpop.f32.mrf.mxu0
    %v8685 = vadd.f32 %v8299, %v8684
    %v8686 = vpop.f32.mrf.mxu0
    %v8687 = vadd.f32 %v8303, %v8686
    %8688 = vmatprep.mubr.bf16.mxu0 %v8245
    %8689 = vmatmul.mubr.bf16.gmra.mxu0 %v8244
    %v8690 = vpop.f32.mrf.mxu0
    %v8691 = vadd.f32 %v8299, %v8690
    %v8692 = vpop.f32.mrf.mxu0
    %v8693 = vadd.f32 %v8303, %v8692
    %v8694 = vpop.f32.mrf.mxu0
    %v8695 = vadd.f32 %v8299, %v8694
    %v8696 = vpop.f32.mrf.mxu0
    %v8697 = vadd.f32 %v8303, %v8696
    %8698 = vdwg.mxu0
    %8699 = vmatprep.subr.bf16.mxu0 %v8545
    %8700 = vmatpush1.bf16.msra.mxu0 %v8544
    %8701 = vmatprep.subr.bf16.mxu0 %v8543
    %8702 = vmatpush1.bf16.msra.mxu0 %v8542
    %8703 = vmatprep.subr.bf16.mxu0 %v8541
    %8704 = vmatpush1.bf16.msra.mxu0 %v8540
    %8705 = vmatprep.subr.bf16.mxu0 %v8539
    %8706 = vmatpush1.bf16.msra.mxu0 %v8538
    %8707 = vmatprep.subr.bf16.mxu0 %v8537
    %8708 = vmatpush1.bf16.msra.mxu0 %v8536
    %8709 = vmatprep.subr.bf16.mxu0 %v8535
    %8710 = vmatpush1.bf16.msra.mxu0 %v8534
    %8711 = vmatprep.subr.bf16.mxu0 %v8533
    %8712 = vmatpush1.bf16.msra.mxu0 %v8532
    %8713 = vmatprep.subr.bf16.mxu0 %v8531
    %8714 = vmatpush1.bf16.msra.mxu0 %v8530
    %8715 = vmatprep.subr.bf16.mxu0 %v8561
    %8716 = vmatpush2.bf16.msra.mxu0 %v8560
    %8717 = vmatprep.subr.bf16.mxu0 %v8559
    %8718 = vmatpush2.bf16.msra.mxu0 %v8558
    %8719 = vmatprep.subr.bf16.mxu0 %v8557
    %8720 = vmatpush2.bf16.msra.mxu0 %v8556
    %8721 = vmatprep.subr.bf16.mxu0 %v8555
    %8722 = vmatpush2.bf16.msra.mxu0 %v8554
    %8723 = vmatprep.subr.bf16.mxu0 %v8553
    %8724 = vmatpush2.bf16.msra.mxu0 %v8552
    %8725 = vmatprep.subr.bf16.mxu0 %v8551
    %8726 = vmatpush2.bf16.msra.mxu0 %v8550
    %8727 = vmatprep.subr.bf16.mxu0 %v8549
    %8728 = vmatpush2.bf16.msra.mxu0 %v8548
    %8729 = vmatprep.subr.bf16.mxu0 %v8547
    %8730 = vmatpush2.bf16.msra.mxu0 %v8546
    %8731 = vmatprep.mubr.bf16.mxu0 %v7959
    %8732 = vmatmul.mubr.bf16.gmra.mxu0 %v7958
    %v8733 = vpop.f32.mrf.mxu0
    %v8734 = vadd.f32 %v8661, %v8733
    %v8735 = vpop.f32.mrf.mxu0
    %v8736 = vadd.f32 %v8663, %v8735
    %v8737 = vpop.f32.mrf.mxu0
    %v8738 = vadd.f32 %v8665, %v8737
    %v8739 = vpop.f32.mrf.mxu0
    %v8740 = vadd.f32 %v8667, %v8739
    %8741 = vmatprep.mubr.bf16.mxu0 %v7961
    %8742 = vmatmul.mubr.bf16.gmra.mxu0 %v7960
    %v8743 = vpop.f32.mrf.mxu0
    %v8744 = vadd.f32 %v8671, %v8743
    %v8745 = vpop.f32.mrf.mxu0
    %v8746 = vadd.f32 %v8673, %v8745
    %v8747 = vpop.f32.mrf.mxu0
    %v8748 = vadd.f32 %v8675, %v8747
    %v8749 = vpop.f32.mrf.mxu0
    %v8750 = vadd.f32 %v8677, %v8749
    %8751 = vmatprep.mubr.bf16.mxu0 %v7963
    %8752 = vmatmul.mubr.bf16.gmra.mxu0 %v7962
    %v8753 = vpop.f32.mrf.mxu0
    %v8754 = vadd.f32 %v8681, %v8753
    %v8755 = vpop.f32.mrf.mxu0
    %v8756 = vadd.f32 %v8683, %v8755
    %v8757 = vpop.f32.mrf.mxu0
    %v8758 = vadd.f32 %v8685, %v8757
    %v8759 = vpop.f32.mrf.mxu0
    %v8760 = vadd.f32 %v8687, %v8759
    %8761 = vmatprep.mubr.bf16.mxu0 %v7965
    %8762 = vmatmul.mubr.bf16.gmra.mxu0 %v7964
    %v8763 = vpop.f32.mrf.mxu0
    %v8764 = vadd.f32 %v8691, %v8763
    %v8765 = vpop.f32.mrf.mxu0
    %v8766 = vadd.f32 %v8693, %v8765
    %v8767 = vpop.f32.mrf.mxu0
    %v8768 = vadd.f32 %v8695, %v8767
    %v8769 = vpop.f32.mrf.mxu0
    %v8770 = vadd.f32 %v8697, %v8769
    %8771 = vdwg.mxu0
    %v8772 = vtanh.pop %v8734
    %v8773 = vtanh.pop %v8736
    %v8774 = vtanh.pop %v8738
    %v8775 = vtanh.pop %v8740
    %v8776 = vtanh.pop %v8744
    %v8777 = vtanh.pop %v8746
    %v8778 = vtanh.pop %v8748
    %v8779 = vtanh.pop %v8750
    %v8780 = vtanh.pop %v8754
    %v8781 = vtanh.pop %v8756
    %v8782 = vtanh.pop %v8758
    %v8783 = vtanh.pop %v8760
    %v8784 = vtanh.pop %v8764
    %v8785 = vtanh.pop %v8766
    %v8786 = vtanh.pop %v8768
    %v8787 = vtanh.pop %v8770
    %v8852 = vunpack.c.l.b16 %v8030
    %v8853 = vunpack.c.h.b16 %v8030
    %v8854 = vunpack.c.l.b16 %v8031
    %v8855 = vunpack.c.h.b16 %v8031
    %v8856 = vunpack.c.l.b16 %v8032
    %v8857 = vunpack.c.h.b16 %v8032
    %v8858 = vunpack.c.l.b16 %v8033
    %v8859 = vunpack.c.h.b16 %v8033
    %v8860 = vunpack.c.l.b16 %v8034
    %v8861 = vunpack.c.h.b16 %v8034
    %v8862 = vunpack.c.l.b16 %v8035
    %v8863 = vunpack.c.h.b16 %v8035
    %v8864 = vunpack.c.l.b16 %v8036
    %v8865 = vunpack.c.h.b16 %v8036
    %v8866 = vunpack.c.l.b16 %v8037
    %v8867 = vunpack.c.h.b16 %v8037
    %v8868 = vunpack.c.l.b16 %v8038
    %v8869 = vunpack.c.h.b16 %v8038
    %v8870 = vunpack.c.l.b16 %v8039
    %v8871 = vunpack.c.h.b16 %v8039
    %v8872 = vunpack.c.l.b16 %v8040
    %v8873 = vunpack.c.h.b16 %v8040
    %v8874 = vunpack.c.l.b16 %v8041
    %v8875 = vunpack.c.h.b16 %v8041
    %v8876 = vunpack.c.l.b16 %v8042
    %v8877 = vunpack.c.h.b16 %v8042
    %v8878 = vunpack.c.l.b16 %v8043
    %v8879 = vunpack.c.h.b16 %v8043
    %v8880 = vunpack.c.l.b16 %v8044
    %v8881 = vunpack.c.h.b16 %v8044
    %v8882 = vunpack.c.l.b16 %v8045
    %v8883 = vunpack.c.h.b16 %v8045
    %v8884 = vunpack.c.l.b16 %v8046
    %v8885 = vunpack.c.h.b16 %v8046
    %v8886 = vunpack.c.l.b16 %v8047
    %v8887 = vunpack.c.h.b16 %v8047
    %v8888 = vunpack.c.l.b16 %v8048
    %v8889 = vunpack.c.h.b16 %v8048
    %v8890 = vunpack.c.l.b16 %v8049
    %v8891 = vunpack.c.h.b16 %v8049
    %v8892 = vunpack.c.l.b16 %v8050
    %v8893 = vunpack.c.h.b16 %v8050
    %v8894 = vunpack.c.l.b16 %v8051
    %v8895 = vunpack.c.h.b16 %v8051
    %v8896 = vunpack.c.l.b16 %v8052
    %v8897 = vunpack.c.h.b16 %v8052
    %v8898 = vunpack.c.l.b16 %v8053
    %v8899 = vunpack.c.h.b16 %v8053
    %v8900 = vunpack.c.l.b16 %v8054
    %v8901 = vunpack.c.h.b16 %v8054
    %v8902 = vunpack.c.l.b16 %v8055
    %v8903 = vunpack.c.h.b16 %v8055
    %v8904 = vunpack.c.l.b16 %v8056
    %v8905 = vunpack.c.h.b16 %v8056
    %v8906 = vunpack.c.l.b16 %v8057
    %v8907 = vunpack.c.h.b16 %v8057
    %v8908 = vunpack.c.l.b16 %v8058
    %v8909 = vunpack.c.h.b16 %v8058
    %v8910 = vunpack.c.l.b16 %v8059
    %v8911 = vunpack.c.h.b16 %v8059
    %v8912 = vunpack.c.l.b16 %v8060
    %v8913 = vunpack.c.h.b16 %v8060
    %v8914 = vunpack.c.l.b16 %v8061
    %v8915 = vunpack.c.h.b16 %v8061
    %v8916 = vunpack.c.l.b16 %v8062
    %v8917 = vunpack.c.h.b16 %v8062
    %v8918 = vunpack.c.l.b16 %v8063
    %v8919 = vunpack.c.h.b16 %v8063
    %v8920 = vunpack.c.l.b16 %v8064
    %v8921 = vunpack.c.h.b16 %v8064
    %v8922 = vunpack.c.l.b16 %v8065
    %v8923 = vunpack.c.h.b16 %v8065
    %v8924 = vunpack.c.l.b16 %v8066
    %v8925 = vunpack.c.h.b16 %v8066
    %v8926 = vunpack.c.l.b16 %v8067
    %v8927 = vunpack.c.h.b16 %v8067
    %v8928 = vunpack.c.l.b16 %v8068
    %v8929 = vunpack.c.h.b16 %v8068
    %v8930 = vunpack.c.l.b16 %v8069
    %v8931 = vunpack.c.h.b16 %v8069
    %v8932 = vunpack.c.l.b16 %v8070
    %v8933 = vunpack.c.h.b16 %v8070
    %v8934 = vunpack.c.l.b16 %v8071
    %v8935 = vunpack.c.h.b16 %v8071
    %v8936 = vunpack.c.l.b16 %v8072
    %v8937 = vunpack.c.h.b16 %v8072
    %v8938 = vunpack.c.l.b16 %v8073
    %v8939 = vunpack.c.h.b16 %v8073
    %v8940 = vunpack.c.l.b16 %v8074
    %v8941 = vunpack.c.h.b16 %v8074
    %v8942 = vunpack.c.l.b16 %v8075
    %v8943 = vunpack.c.h.b16 %v8075
    %v8944 = vunpack.c.l.b16 %v8076
    %v8945 = vunpack.c.h.b16 %v8076
    %v8946 = vunpack.c.l.b16 %v8077
    %v8947 = vunpack.c.h.b16 %v8077
    %v8948 = vunpack.c.l.b16 %v8078
    %v8949 = vunpack.c.h.b16 %v8078
    %v8950 = vunpack.c.l.b16 %v8079
    %v8951 = vunpack.c.h.b16 %v8079
    %v8952 = vunpack.c.l.b16 %v8080
    %v8953 = vunpack.c.h.b16 %v8080
    %v8954 = vunpack.c.l.b16 %v8081
    %v8955 = vunpack.c.h.b16 %v8081
    %v8956 = vunpack.c.l.b16 %v8082
    %v8957 = vunpack.c.h.b16 %v8082
    %v8958 = vunpack.c.l.b16 %v8083
    %v8959 = vunpack.c.h.b16 %v8083
    %v8960 = vunpack.c.l.b16 %v8084
    %v8961 = vunpack.c.h.b16 %v8084
    %v8962 = vunpack.c.l.b16 %v8085
    %v8963 = vunpack.c.h.b16 %v8085
    %v8964 = vunpack.c.l.b16 %v8086
    %v8965 = vunpack.c.h.b16 %v8086
    %v8966 = vunpack.c.l.b16 %v8087
    %v8967 = vunpack.c.h.b16 %v8087
    %v8968 = vunpack.c.l.b16 %v8088
    %v8969 = vunpack.c.h.b16 %v8088
    %v8970 = vunpack.c.l.b16 %v8089
    %v8971 = vunpack.c.h.b16 %v8089
    %v8972 = vunpack.c.l.b16 %v8090
    %v8973 = vunpack.c.h.b16 %v8090
    %v8974 = vunpack.c.l.b16 %v8091
    %v8975 = vunpack.c.h.b16 %v8091
    %v8976 = vunpack.c.l.b16 %v8092
    %v8977 = vunpack.c.h.b16 %v8092
    %v8978 = vunpack.c.l.b16 %v8093
    %v8979 = vunpack.c.h.b16 %v8093
    %v8980 = vpack.c.b16 %v8854, %v8852
    %v8981 = vpack.c.b16 %v8855, %v8853
    %v8982 = vpack.c.b16 %v8858, %v8856
    %v8983 = vpack.c.b16 %v8859, %v8857
    %v8984 = vpack.c.b16 %v8862, %v8860
    %v8985 = vpack.c.b16 %v8863, %v8861
    %v8986 = vpack.c.b16 %v8866, %v8864
    %v8987 = vpack.c.b16 %v8867, %v8865
    %v8988 = vpack.c.b16 %v8870, %v8868
    %v8989 = vpack.c.b16 %v8871, %v8869
    %v8990 = vpack.c.b16 %v8874, %v8872
    %v8991 = vpack.c.b16 %v8875, %v8873
    %v8992 = vpack.c.b16 %v8878, %v8876
    %v8993 = vpack.c.b16 %v8879, %v8877
    %v8994 = vpack.c.b16 %v8882, %v8880
    %v8995 = vpack.c.b16 %v8883, %v8881
    %v8996 = vpack.c.b16 %v8886, %v8884
    %v8997 = vpack.c.b16 %v8887, %v8885
    %v8998 = vpack.c.b16 %v8890, %v8888
    %v8999 = vpack.c.b16 %v8891, %v8889
    %v9000 = vpack.c.b16 %v8894, %v8892
    %v9001 = vpack.c.b16 %v8895, %v8893
    %v9002 = vpack.c.b16 %v8898, %v8896
    %v9003 = vpack.c.b16 %v8899, %v8897
    %v9004 = vpack.c.b16 %v8902, %v8900
    %v9005 = vpack.c.b16 %v8903, %v8901
    %v9006 = vpack.c.b16 %v8906, %v8904
    %v9007 = vpack.c.b16 %v8907, %v8905
    %v9008 = vpack.c.b16 %v8910, %v8908
    %v9009 = vpack.c.b16 %v8911, %v8909
    %v9010 = vpack.c.b16 %v8914, %v8912
    %v9011 = vpack.c.b16 %v8915, %v8913
    %v9012 = vpack.c.b16 %v8918, %v8916
    %v9013 = vpack.c.b16 %v8919, %v8917
    %v9014 = vpack.c.b16 %v8922, %v8920
    %v9015 = vpack.c.b16 %v8923, %v8921
    %v9016 = vpack.c.b16 %v8926, %v8924
    %v9017 = vpack.c.b16 %v8927, %v8925
    %v9018 = vpack.c.b16 %v8930, %v8928
    %v9019 = vpack.c.b16 %v8931, %v8929
    %v9020 = vpack.c.b16 %v8934, %v8932
    %v9021 = vpack.c.b16 %v8935, %v8933
    %v9022 = vpack.c.b16 %v8938, %v8936
    %v9023 = vpack.c.b16 %v8939, %v8937
    %v9024 = vpack.c.b16 %v8942, %v8940
    %v9025 = vpack.c.b16 %v8943, %v8941
    %v9026 = vpack.c.b16 %v8946, %v8944
    %v9027 = vpack.c.b16 %v8947, %v8945
    %v9028 = vpack.c.b16 %v8950, %v8948
    %v9029 = vpack.c.b16 %v8951, %v8949
    %v9030 = vpack.c.b16 %v8954, %v8952
    %v9031 = vpack.c.b16 %v8955, %v8953
    %v9032 = vpack.c.b16 %v8958, %v8956
    %v9033 = vpack.c.b16 %v8959, %v8957
    %v9034 = vpack.c.b16 %v8962, %v8960
    %v9035 = vpack.c.b16 %v8963, %v8961
    %v9036 = vpack.c.b16 %v8966, %v8964
    %v9037 = vpack.c.b16 %v8967, %v8965
    %v9038 = vpack.c.b16 %v8970, %v8968
    %v9039 = vpack.c.b16 %v8971, %v8969
    %v9040 = vpack.c.b16 %v8974, %v8972
    %v9041 = vpack.c.b16 %v8975, %v8973
    %v9042 = vpack.c.b16 %v8978, %v8976
    %v9043 = vpack.c.b16 %v8979, %v8977
    %9108 = vmatprep.subr.bf16.mxu0 %v8995
    %9109 = vmatpush1.bf16.msra.mxu0 %v8994
    %9110 = vmatprep.subr.bf16.mxu0 %v8993
    %9111 = vmatpush1.bf16.msra.mxu0 %v8992
    %9112 = vmatprep.subr.bf16.mxu0 %v8991
    %9113 = vmatpush1.bf16.msra.mxu0 %v8990
    %9114 = vmatprep.subr.bf16.mxu0 %v8989
    %9115 = vmatpush1.bf16.msra.mxu0 %v8988
    %9116 = vmatprep.subr.bf16.mxu0 %v8987
    %9117 = vmatpush1.bf16.msra.mxu0 %v8986
    %9118 = vmatprep.subr.bf16.mxu0 %v8985
    %9119 = vmatpush1.bf16.msra.mxu0 %v8984
    %9120 = vmatprep.subr.bf16.mxu0 %v8983
    %9121 = vmatpush1.bf16.msra.mxu0 %v8982
    %9122 = vmatprep.subr.bf16.mxu0 %v8981
    %9123 = vmatpush1.bf16.msra.mxu0 %v8980
    %9124 = vmatprep.subr.bf16.mxu0 %v9011
    %9125 = vmatpush2.bf16.msra.mxu0 %v9010
    %9126 = vmatprep.subr.bf16.mxu0 %v9009
    %9127 = vmatpush2.bf16.msra.mxu0 %v9008
    %9128 = vmatprep.subr.bf16.mxu0 %v9007
    %9129 = vmatpush2.bf16.msra.mxu0 %v9006
    %9130 = vmatprep.subr.bf16.mxu0 %v9005
    %9131 = vmatpush2.bf16.msra.mxu0 %v9004
    %9132 = vmatprep.subr.bf16.mxu0 %v9003
    %9133 = vmatpush2.bf16.msra.mxu0 %v9002
    %9134 = vmatprep.subr.bf16.mxu0 %v9001
    %9135 = vmatpush2.bf16.msra.mxu0 %v9000
    %9136 = vmatprep.subr.bf16.mxu0 %v8999
    %9137 = vmatpush2.bf16.msra.mxu0 %v8998
    %9138 = vmatprep.subr.bf16.mxu0 %v8997
    %9139 = vmatpush2.bf16.msra.mxu0 %v8996
    %9140 = vmatprep.mubr.bf16.mxu0 %v7959
    %9141 = vmatmul.mubr.bf16.gmra.mxu0 %v7958
    %v9142 = vpop.f32.mrf.mxu0
    %v9143 = vadd.f32 %v8299, %v9142
    %v9144 = vpop.f32.mrf.mxu0
    %v9145 = vadd.f32 %v8303, %v9144
    %v9146 = vpop.f32.mrf.mxu0
    %v9147 = vadd.f32 %v8299, %v9146
    %v9148 = vpop.f32.mrf.mxu0
    %v9149 = vadd.f32 %v8303, %v9148
    %9150 = vmatprep.mubr.bf16.mxu0 %v7961
    %9151 = vmatmul.mubr.bf16.gmra.mxu0 %v7960
    %v9152 = vpop.f32.mrf.mxu0
    %v9153 = vadd.f32 %v8299, %v9152
    %v9154 = vpop.f32.mrf.mxu0
    %v9155 = vadd.f32 %v8303, %v9154
    %v9156 = vpop.f32.mrf.mxu0
    %v9157 = vadd.f32 %v8299, %v9156
    %v9158 = vpop.f32.mrf.mxu0
    %v9159 = vadd.f32 %v8303, %v9158
    %9160 = vmatprep.mubr.bf16.mxu0 %v7963
    %9161 = vmatmul.mubr.bf16.gmra.mxu0 %v7962
    %v9162 = vpop.f32.mrf.mxu0
    %v9163 = vadd.f32 %v8299, %v9162
    %v9164 = vpop.f32.mrf.mxu0
    %v9165 = vadd.f32 %v8303, %v9164
    %v9166 = vpop.f32.mrf.mxu0
    %v9167 = vadd.f32 %v8299, %v9166
    %v9168 = vpop.f32.mrf.mxu0
    %v9169 = vadd.f32 %v8303, %v9168
    %9170 = vmatprep.mubr.bf16.mxu0 %v7965
    %9171 = vmatmul.mubr.bf16.gmra.mxu0 %v7964
    %v9172 = vpop.f32.mrf.mxu0
    %v9173 = vadd.f32 %v8299, %v9172
    %v9174 = vpop.f32.mrf.mxu0
    %v9175 = vadd.f32 %v8303, %v9174
    %v9176 = vpop.f32.mrf.mxu0
    %v9177 = vadd.f32 %v8299, %v9176
    %v9178 = vpop.f32.mrf.mxu0
    %v9179 = vadd.f32 %v8303, %v9178
    %9180 = vdwg.mxu0
    %9181 = vmatprep.subr.bf16.mxu0 %v9027
    %9182 = vmatpush1.bf16.msra.mxu0 %v9026
    %9183 = vmatprep.subr.bf16.mxu0 %v9025
    %9184 = vmatpush1.bf16.msra.mxu0 %v9024
    %9185 = vmatprep.subr.bf16.mxu0 %v9023
    %9186 = vmatpush1.bf16.msra.mxu0 %v9022
    %9187 = vmatprep.subr.bf16.mxu0 %v9021
    %9188 = vmatpush1.bf16.msra.mxu0 %v9020
    %9189 = vmatprep.subr.bf16.mxu0 %v9019
    %9190 = vmatpush1.bf16.msra.mxu0 %v9018
    %9191 = vmatprep.subr.bf16.mxu0 %v9017
    %9192 = vmatpush1.bf16.msra.mxu0 %v9016
    %9193 = vmatprep.subr.bf16.mxu0 %v9015
    %9194 = vmatpush1.bf16.msra.mxu0 %v9014
    %9195 = vmatprep.subr.bf16.mxu0 %v9013
    %9196 = vmatpush1.bf16.msra.mxu0 %v9012
    %9197 = vmatprep.subr.bf16.mxu0 %v9043
    %9198 = vmatpush2.bf16.msra.mxu0 %v9042
    %9199 = vmatprep.subr.bf16.mxu0 %v9041
    %9200 = vmatpush2.bf16.msra.mxu0 %v9040
    %9201 = vmatprep.subr.bf16.mxu0 %v9039
    %9202 = vmatpush2.bf16.msra.mxu0 %v9038
    %9203 = vmatprep.subr.bf16.mxu0 %v9037
    %9204 = vmatpush2.bf16.msra.mxu0 %v9036
    %9205 = vmatprep.subr.bf16.mxu0 %v9035
    %9206 = vmatpush2.bf16.msra.mxu0 %v9034
    %9207 = vmatprep.subr.bf16.mxu0 %v9033
    %9208 = vmatpush2.bf16.msra.mxu0 %v9032
    %9209 = vmatprep.subr.bf16.mxu0 %v9031
    %9210 = vmatpush2.bf16.msra.mxu0 %v9030
    %9211 = vmatprep.subr.bf16.mxu0 %v9029
    %9212 = vmatpush2.bf16.msra.mxu0 %v9028
    %9213 = vmatprep.mubr.bf16.mxu0 %v8287
    %9214 = vmatmul.mubr.bf16.gmra.mxu0 %v8286
    %v9215 = vpop.f32.mrf.mxu0
    %v9216 = vadd.f32 %v9143, %v9215
    %v9217 = vpop.f32.mrf.mxu0
    %v9218 = vadd.f32 %v9145, %v9217
    %v9219 = vpop.f32.mrf.mxu0
    %v9220 = vadd.f32 %v9147, %v9219
    %v9221 = vpop.f32.mrf.mxu0
    %v9222 = vadd.f32 %v9149, %v9221
    %9223 = vmatprep.mubr.bf16.mxu0 %v8289
    %9224 = vmatmul.mubr.bf16.gmra.mxu0 %v8288
    %v9225 = vpop.f32.mrf.mxu0
    %v9226 = vadd.f32 %v9153, %v9225
    %v9227 = vpop.f32.mrf.mxu0
    %v9228 = vadd.f32 %v9155, %v9227
    %v9229 = vpop.f32.mrf.mxu0
    %v9230 = vadd.f32 %v9157, %v9229
    %v9231 = vpop.f32.mrf.mxu0
    %v9232 = vadd.f32 %v9159, %v9231
    %9233 = vmatprep.mubr.bf16.mxu0 %v8291
    %9234 = vmatmul.mubr.bf16.gmra.mxu0 %v8290
    %v9235 = vpop.f32.mrf.mxu0
    %v9236 = vadd.f32 %v9163, %v9235
    %v9237 = vpop.f32.mrf.mxu0
    %v9238 = vadd.f32 %v9165, %v9237
    %v9239 = vpop.f32.mrf.mxu0
    %v9240 = vadd.f32 %v9167, %v9239
    %v9241 = vpop.f32.mrf.mxu0
    %v9242 = vadd.f32 %v9169, %v9241
    %9243 = vmatprep.mubr.bf16.mxu0 %v8293
    %9244 = vmatmul.mubr.bf16.gmra.mxu0 %v8292
    %v9245 = vpop.f32.mrf.mxu0
    %v9246 = vadd.f32 %v9173, %v9245
    %v9247 = vpop.f32.mrf.mxu0
    %v9248 = vadd.f32 %v9175, %v9247
    %v9249 = vpop.f32.mrf.mxu0
    %v9250 = vadd.f32 %v9177, %v9249
    %v9251 = vpop.f32.mrf.mxu0
    %v9252 = vadd.f32 %v9179, %v9251
    %9253 = vdwg.mxu0
    %v9254 = vtanh.pop %v9216
    %v9255 = vtanh.pop %v9218
    %v9256 = vtanh.pop %v9220
    %v9257 = vtanh.pop %v9222
    %v9258 = vtanh.pop %v9226
    %v9259 = vtanh.pop %v9228
    %v9260 = vtanh.pop %v9230
    %v9261 = vtanh.pop %v9232
    %v9262 = vtanh.pop %v9236
    %v9263 = vtanh.pop %v9238
    %v9264 = vtanh.pop %v9240
    %v9265 = vtanh.pop %v9242
    %v9266 = vtanh.pop %v9246
    %v9267 = vtanh.pop %v9248
    %v9268 = vtanh.pop %v9250
    %v9269 = vtanh.pop %v9252
    %vm9270 = vcmp.eq.s32.totalorder %v680, %v3523
    %vm9271 = vcmp.eq.s32.totalorder %v681, %v3523
    %vm9272 = vcmp.eq.s32.totalorder %v682, %v3523
    %vm9273 = vcmp.eq.s32.totalorder %v683, %v3523
    %vm9274 = vcmp.eq.s32.totalorder %v684, %v3523
    %vm9275 = vcmp.eq.s32.totalorder %v685, %v3523
    %vm9276 = vcmp.eq.s32.totalorder %v686, %v3523
    %vm9277 = vcmp.eq.s32.totalorder %v687, %v3523
    %v9278 = vsel %vm9270, 1, 0
    %v9279 = vsel %vm9271, 1, 0
    %v9280 = vsel %vm9272, 1, 0
    %v9281 = vsel %vm9273, 1, 0
    %v9282 = vsel %vm9274, 1, 0
    %v9283 = vsel %vm9275, 1, 0
    %v9284 = vsel %vm9276, 1, 0
    %v9285 = vsel %vm9277, 1, 0
    %v9286 = vcvt.s32.f32 %v9278
    %v9287 = vcvt.s32.f32 %v9279
    %v9288 = vcvt.s32.f32 %v9280
    %v9289 = vcvt.s32.f32 %v9281
    %v9290 = vcvt.s32.f32 %v9282
    %v9291 = vcvt.s32.f32 %v9283
    %v9292 = vcvt.s32.f32 %v9284
    %v9293 = vcvt.s32.f32 %v9285
    %vm9294 = vcmp.eq.s32.totalorder %v680, %v3531
    %vm9295 = vcmp.eq.s32.totalorder %v681, %v3531
    %vm9296 = vcmp.eq.s32.totalorder %v682, %v3531
    %vm9297 = vcmp.eq.s32.totalorder %v683, %v3531
    %vm9298 = vcmp.eq.s32.totalorder %v684, %v3531
    %vm9299 = vcmp.eq.s32.totalorder %v685, %v3531
    %vm9300 = vcmp.eq.s32.totalorder %v686, %v3531
    %vm9301 = vcmp.eq.s32.totalorder %v687, %v3531
    %v9302 = vsel %vm9294, 1, 0
    %v9303 = vsel %vm9295, 1, 0
    %v9304 = vsel %vm9296, 1, 0
    %v9305 = vsel %vm9297, 1, 0
    %v9306 = vsel %vm9298, 1, 0
    %v9307 = vsel %vm9299, 1, 0
    %v9308 = vsel %vm9300, 1, 0
    %v9309 = vsel %vm9301, 1, 0
    %v9310 = vcvt.s32.f32 %v9302
    %v9311 = vcvt.s32.f32 %v9303
    %v9312 = vcvt.s32.f32 %v9304
    %v9313 = vcvt.s32.f32 %v9305
    %v9314 = vcvt.s32.f32 %v9306
    %v9315 = vcvt.s32.f32 %v9307
    %v9316 = vcvt.s32.f32 %v9308
    %v9317 = vcvt.s32.f32 %v9309
    %v9319 = vsel %vm1437, %v3536, 0
    %v9322 = vsel %vm1437, %v3537, 0
    %v9325 = vsel %vm1437, %v5607, 0
    %v9328 = vsel %vm1437, %v5608, 0
    %v9331 = vsel %vm1437, %v7786, 0
    %v9334 = vsel %vm1437, %v7787, 0
    %v9337 = vsel %vm1437, %v7788, 0
    %v9340 = vsel %vm1437, %v7789, 0
    %v9343 = vsel %vm1437, %v9310, 0
    %v9346 = vsel %vm1437, %v9311, 0
    %v9349 = vsel %vm1437, %v9312, 0
    %v9352 = vsel %vm1437, %v9313, 0
    %v9355 = vsel %vm1437, %v9314, 0
    %v9358 = vsel %vm1437, %v9315, 0
    %v9361 = vsel %vm1437, %v9316, 0
    %v9364 = vsel %vm1437, %v9317, 0
    %9366 = vmatprep.subr.mxu0 0.0
    %9367 = vmatpush1.msra.mxu0 0.0
    %9368 = vmatprep.subr.mxu0 0.0
    %9369 = vmatpush1.msra.mxu0 0.0
    %9370 = vmatprep.subr.mxu0 0.0
    %9371 = vmatpush1.msra.mxu0 0.0
    %9372 = vmatprep.subr.mxu0 0.0
    %9373 = vmatpush1.msra.mxu0 0.0
    %9374 = vmatprep.subr.mxu0 0.0
    %9375 = vmatpush1.msra.mxu0 0.0
    %9376 = vmatprep.subr.mxu0 0.0
    %9377 = vmatpush1.msra.mxu0 0.0
    %9378 = vmatprep.subr.mxu0 0.0
    %9379 = vmatpush1.msra.mxu0 0.0
    %9380 = vmatprep.subr.mxu0 0.0
    %9381 = vmatpush1.msra.mxu0 0.0
    %9382 = vmatprep.subr.mxu0 %v9269
    %9383 = vmatpush1.msra.mxu0 %v9268
    %9384 = vmatprep.subr.mxu0 %v9267
    %9385 = vmatpush1.msra.mxu0 %v9266
    %9386 = vmatprep.subr.mxu0 %v9265
    %9387 = vmatpush1.msra.mxu0 %v9264
    %9388 = vmatprep.subr.mxu0 %v9263
    %9389 = vmatpush1.msra.mxu0 %v9262
    %9390 = vmatprep.subr.mxu0 %v9261
    %9391 = vmatpush1.msra.mxu0 %v9260
    %9392 = vmatprep.subr.mxu0 %v9259
    %9393 = vmatpush1.msra.mxu0 %v9258
    %9394 = vmatprep.subr.mxu0 %v9257
    %9395 = vmatpush1.msra.mxu0 %v9256
    %9396 = vmatprep.subr.mxu0 %v9255
    %9397 = vmatpush1.msra.mxu0 %v9254
    %9398 = vmatprep.subr.mxu0 0.0
    %9399 = vmatpush2.msra.mxu0 0.0
    %9400 = vmatprep.subr.mxu0 0.0
    %9401 = vmatpush2.msra.mxu0 0.0
    %9402 = vmatprep.subr.mxu0 0.0
    %9403 = vmatpush2.msra.mxu0 0.0
    %9404 = vmatprep.subr.mxu0 0.0
    %9405 = vmatpush2.msra.mxu0 0.0
    %9406 = vmatprep.subr.mxu0 0.0
    %9407 = vmatpush2.msra.mxu0 0.0
    %9408 = vmatprep.subr.mxu0 0.0
    %9409 = vmatpush2.msra.mxu0 0.0
    %9410 = vmatprep.subr.mxu0 0.0
    %9411 = vmatpush2.msra.mxu0 0.0
    %9412 = vmatprep.subr.mxu0 0.0
    %9413 = vmatpush2.msra.mxu0 0.0
    %9414 = vmatprep.subr.mxu0 0.0
    %9415 = vmatpush2.msra.mxu0 0.0
    %9416 = vmatprep.subr.mxu0 0.0
    %9417 = vmatpush2.msra.mxu0 0.0
    %9418 = vmatprep.subr.mxu0 0.0
    %9419 = vmatpush2.msra.mxu0 0.0
    %9420 = vmatprep.subr.mxu0 0.0
    %9421 = vmatpush2.msra.mxu0 0.0
    %9422 = vmatprep.subr.mxu0 0.0
    %9423 = vmatpush2.msra.mxu0 0.0
    %9424 = vmatprep.subr.mxu0 0.0
    %9425 = vmatpush2.msra.mxu0 0.0
    %9426 = vmatprep.subr.mxu0 0.0
    %9427 = vmatpush2.msra.mxu0 0.0
    %9428 = vmatprep.subr.mxu0 0.0
    %9429 = vmatpush2.msra.mxu0 0.0
    %9430 = vmatprep.mubr.f32.mxu0 0.0
    %9431 = vmatmul.mubr.f32.gmra.mxu0 %v9319
    %v9432 = vpop.f32.mrf.mxu0
    %v9433 = vadd.f32 0.0, %v9432
    %v9434 = vpop.f32.mrf.mxu0
    %v9435 = vadd.f32 0.0, %v9434
    %9436 = vmatprep.mubr.f32.mxu0 0.0
    %9437 = vmatmul.mubr.f32.gmra.mxu0 %v9322
    %v9438 = vpop.f32.mrf.mxu0
    %v9439 = vadd.f32 0.0, %v9438
    %v9440 = vpop.f32.mrf.mxu0
    %v9441 = vadd.f32 0.0, %v9440
    %9442 = vmatprep.mubr.f32.mxu0 0.0
    %9443 = vmatmul.mubr.f32.gmra.mxu0 %v9325
    %v9444 = vpop.f32.mrf.mxu0
    %v9445 = vadd.f32 0.0, %v9444
    %v9446 = vpop.f32.mrf.mxu0
    %v9447 = vadd.f32 0.0, %v9446
    %9448 = vmatprep.mubr.f32.mxu0 0.0
    %9449 = vmatmul.mubr.f32.gmra.mxu0 %v9328
    %v9450 = vpop.f32.mrf.mxu0
    %v9451 = vadd.f32 0.0, %v9450
    %v9452 = vpop.f32.mrf.mxu0
    %v9453 = vadd.f32 0.0, %v9452
    %9454 = vmatprep.mubr.f32.mxu0 0.0
    %9455 = vmatmul.mubr.f32.gmra.mxu0 %v9331
    %v9456 = vpop.f32.mrf.mxu0
    %v9457 = vadd.f32 0.0, %v9456
    %v9458 = vpop.f32.mrf.mxu0
    %v9459 = vadd.f32 0.0, %v9458
    %9460 = vmatprep.mubr.f32.mxu0 0.0
    %9461 = vmatmul.mubr.f32.gmra.mxu0 %v9334
    %v9462 = vpop.f32.mrf.mxu0
    %v9463 = vadd.f32 0.0, %v9462
    %v9464 = vpop.f32.mrf.mxu0
    %v9465 = vadd.f32 0.0, %v9464
    %9466 = vmatprep.mubr.f32.mxu0 0.0
    %9467 = vmatmul.mubr.f32.gmra.mxu0 %v9337
    %v9468 = vpop.f32.mrf.mxu0
    %v9469 = vadd.f32 0.0, %v9468
    %v9470 = vpop.f32.mrf.mxu0
    %v9471 = vadd.f32 0.0, %v9470
    %9472 = vmatprep.mubr.f32.mxu0 0.0
    %9473 = vmatmul.mubr.f32.gmra.mxu0 %v9340
    %v9474 = vpop.f32.mrf.mxu0
    %v9475 = vadd.f32 0.0, %v9474
    %v9476 = vpop.f32.mrf.mxu0
    %v9477 = vadd.f32 0.0, %v9476
    %9478 = vmatprep.mubr.f32.mxu0 0.0
    %9479 = vmatmul.mubr.f32.gmra.mxu0 %v9343
    %v9480 = vpop.f32.mrf.mxu0
    %v9481 = vadd.f32 0.0, %v9480
    %v9482 = vpop.f32.mrf.mxu0
    %v9483 = vadd.f32 0.0, %v9482
    %9484 = vmatprep.mubr.f32.mxu0 0.0
    %9485 = vmatmul.mubr.f32.gmra.mxu0 %v9346
    %v9486 = vpop.f32.mrf.mxu0
    %v9487 = vadd.f32 0.0, %v9486
    %v9488 = vpop.f32.mrf.mxu0
    %v9489 = vadd.f32 0.0, %v9488
    %9490 = vmatprep.mubr.f32.mxu0 0.0
    %9491 = vmatmul.mubr.f32.gmra.mxu0 %v9349
    %v9492 = vpop.f32.mrf.mxu0
    %v9493 = vadd.f32 0.0, %v9492
    %v9494 = vpop.f32.mrf.mxu0
    %v9495 = vadd.f32 0.0, %v9494
    %9496 = vmatprep.mubr.f32.mxu0 0.0
    %9497 = vmatmul.mubr.f32.gmra.mxu0 %v9352
    %v9498 = vpop.f32.mrf.mxu0
    %v9499 = vadd.f32 0.0, %v9498
    %v9500 = vpop.f32.mrf.mxu0
    %v9501 = vadd.f32 0.0, %v9500
    %9502 = vmatprep.mubr.f32.mxu0 0.0
    %9503 = vmatmul.mubr.f32.gmra.mxu0 %v9355
    %v9504 = vpop.f32.mrf.mxu0
    %v9505 = vadd.f32 0.0, %v9504
    %v9506 = vpop.f32.mrf.mxu0
    %v9507 = vadd.f32 0.0, %v9506
    %9508 = vmatprep.mubr.f32.mxu0 0.0
    %9509 = vmatmul.mubr.f32.gmra.mxu0 %v9358
    %v9510 = vpop.f32.mrf.mxu0
    %v9511 = vadd.f32 0.0, %v9510
    %v9512 = vpop.f32.mrf.mxu0
    %v9513 = vadd.f32 0.0, %v9512
    %9514 = vmatprep.mubr.f32.mxu0 0.0
    %9515 = vmatmul.mubr.f32.gmra.mxu0 %v9361
    %v9516 = vpop.f32.mrf.mxu0
    %v9517 = vadd.f32 0.0, %v9516
    %v9518 = vpop.f32.mrf.mxu0
    %v9519 = vadd.f32 0.0, %v9518
    %9520 = vmatprep.mubr.f32.mxu0 0.0
    %9521 = vmatmul.mubr.f32.gmra.mxu0 %v9364
    %v9522 = vpop.f32.mrf.mxu0
    %v9523 = vadd.f32 0.0, %v9522
    %v9524 = vpop.f32.mrf.mxu0
    %v9525 = vadd.f32 0.0, %v9524
    %9526 = vdwg.mxu0
    %v9528 = vsel %vm1437, %v3528, 0
    %v9531 = vsel %vm1437, %v3529, 0
    %v9534 = vsel %vm1437, %v5600, 0
    %v9537 = vsel %vm1437, %v5601, 0
    %v9540 = vsel %vm1437, %v7772, 0
    %v9543 = vsel %vm1437, %v7773, 0
    %v9546 = vsel %vm1437, %v7774, 0
    %v9549 = vsel %vm1437, %v7775, 0
    %v9552 = vsel %vm1437, %v9286, 0
    %v9555 = vsel %vm1437, %v9287, 0
    %v9558 = vsel %vm1437, %v9288, 0
    %v9561 = vsel %vm1437, %v9289, 0
    %v9564 = vsel %vm1437, %v9290, 0
    %v9567 = vsel %vm1437, %v9291, 0
    %v9570 = vsel %vm1437, %v9292, 0
    %v9573 = vsel %vm1437, %v9293, 0
    %9575 = vmatprep.subr.mxu0 0.0
    %9576 = vmatpush1.msra.mxu0 0.0
    %9577 = vmatprep.subr.mxu0 0.0
    %9578 = vmatpush1.msra.mxu0 0.0
    %9579 = vmatprep.subr.mxu0 0.0
    %9580 = vmatpush1.msra.mxu0 0.0
    %9581 = vmatprep.subr.mxu0 0.0
    %9582 = vmatpush1.msra.mxu0 0.0
    %9583 = vmatprep.subr.mxu0 0.0
    %9584 = vmatpush1.msra.mxu0 0.0
    %9585 = vmatprep.subr.mxu0 0.0
    %9586 = vmatpush1.msra.mxu0 0.0
    %9587 = vmatprep.subr.mxu0 0.0
    %9588 = vmatpush1.msra.mxu0 0.0
    %9589 = vmatprep.subr.mxu0 0.0
    %9590 = vmatpush1.msra.mxu0 0.0
    %9591 = vmatprep.subr.mxu0 %v8787
    %9592 = vmatpush1.msra.mxu0 %v8786
    %9593 = vmatprep.subr.mxu0 %v8785
    %9594 = vmatpush1.msra.mxu0 %v8784
    %9595 = vmatprep.subr.mxu0 %v8783
    %9596 = vmatpush1.msra.mxu0 %v8782
    %9597 = vmatprep.subr.mxu0 %v8781
    %9598 = vmatpush1.msra.mxu0 %v8780
    %9599 = vmatprep.subr.mxu0 %v8779
    %9600 = vmatpush1.msra.mxu0 %v8778
    %9601 = vmatprep.subr.mxu0 %v8777
    %9602 = vmatpush1.msra.mxu0 %v8776
    %9603 = vmatprep.subr.mxu0 %v8775
    %9604 = vmatpush1.msra.mxu0 %v8774
    %9605 = vmatprep.subr.mxu0 %v8773
    %9606 = vmatpush1.msra.mxu0 %v8772
    %9607 = vmatprep.subr.mxu0 0.0
    %9608 = vmatpush2.msra.mxu0 0.0
    %9609 = vmatprep.subr.mxu0 0.0
    %9610 = vmatpush2.msra.mxu0 0.0
    %9611 = vmatprep.subr.mxu0 0.0
    %9612 = vmatpush2.msra.mxu0 0.0
    %9613 = vmatprep.subr.mxu0 0.0
    %9614 = vmatpush2.msra.mxu0 0.0
    %9615 = vmatprep.subr.mxu0 0.0
    %9616 = vmatpush2.msra.mxu0 0.0
    %9617 = vmatprep.subr.mxu0 0.0
    %9618 = vmatpush2.msra.mxu0 0.0
    %9619 = vmatprep.subr.mxu0 0.0
    %9620 = vmatpush2.msra.mxu0 0.0
    %9621 = vmatprep.subr.mxu0 0.0
    %9622 = vmatpush2.msra.mxu0 0.0
    %9623 = vmatprep.subr.mxu0 0.0
    %9624 = vmatpush2.msra.mxu0 0.0
    %9625 = vmatprep.subr.mxu0 0.0
    %9626 = vmatpush2.msra.mxu0 0.0
    %9627 = vmatprep.subr.mxu0 0.0
    %9628 = vmatpush2.msra.mxu0 0.0
    %9629 = vmatprep.subr.mxu0 0.0
    %9630 = vmatpush2.msra.mxu0 0.0
    %9631 = vmatprep.subr.mxu0 0.0
    %9632 = vmatpush2.msra.mxu0 0.0
    %9633 = vmatprep.subr.mxu0 0.0
    %9634 = vmatpush2.msra.mxu0 0.0
    %9635 = vmatprep.subr.mxu0 0.0
    %9636 = vmatpush2.msra.mxu0 0.0
    %9637 = vmatprep.subr.mxu0 0.0
    %9638 = vmatpush2.msra.mxu0 0.0
    %9639 = vmatprep.mubr.f32.mxu0 0.0
    %9640 = vmatmul.mubr.f32.gmra.mxu0 %v9528
    %v9641 = vpop.f32.mrf.mxu0
    %v9642 = vadd.f32 %v9433, %v9641
    %v9643 = vpop.f32.mrf.mxu0
    %v9644 = vadd.f32 %v9435, %v9643
    %9645 = vmatprep.mubr.f32.mxu0 0.0
    %9646 = vmatmul.mubr.f32.gmra.mxu0 %v9531
    %v9647 = vpop.f32.mrf.mxu0
    %v9648 = vadd.f32 %v9439, %v9647
    %v9649 = vpop.f32.mrf.mxu0
    %v9650 = vadd.f32 %v9441, %v9649
    %9651 = vmatprep.mubr.f32.mxu0 0.0
    %9652 = vmatmul.mubr.f32.gmra.mxu0 %v9534
    %v9653 = vpop.f32.mrf.mxu0
    %v9654 = vadd.f32 %v9445, %v9653
    %v9655 = vpop.f32.mrf.mxu0
    %v9656 = vadd.f32 %v9447, %v9655
    %9657 = vmatprep.mubr.f32.mxu0 0.0
    %9658 = vmatmul.mubr.f32.gmra.mxu0 %v9537
    %v9659 = vpop.f32.mrf.mxu0
    %v9660 = vadd.f32 %v9451, %v9659
    %v9661 = vpop.f32.mrf.mxu0
    %v9662 = vadd.f32 %v9453, %v9661
    %9663 = vmatprep.mubr.f32.mxu0 0.0
    %9664 = vmatmul.mubr.f32.gmra.mxu0 %v9540
    %v9665 = vpop.f32.mrf.mxu0
    %v9666 = vadd.f32 %v9457, %v9665
    %v9667 = vpop.f32.mrf.mxu0
    %v9668 = vadd.f32 %v9459, %v9667
    %9669 = vmatprep.mubr.f32.mxu0 0.0
    %9670 = vmatmul.mubr.f32.gmra.mxu0 %v9543
    %v9671 = vpop.f32.mrf.mxu0
    %v9672 = vadd.f32 %v9463, %v9671
    %v9673 = vpop.f32.mrf.mxu0
    %v9674 = vadd.f32 %v9465, %v9673
    %9675 = vmatprep.mubr.f32.mxu0 0.0
    %9676 = vmatmul.mubr.f32.gmra.mxu0 %v9546
    %v9677 = vpop.f32.mrf.mxu0
    %v9678 = vadd.f32 %v9469, %v9677
    %v9679 = vpop.f32.mrf.mxu0
    %v9680 = vadd.f32 %v9471, %v9679
    %9681 = vmatprep.mubr.f32.mxu0 0.0
    %9682 = vmatmul.mubr.f32.gmra.mxu0 %v9549
    %v9683 = vpop.f32.mrf.mxu0
    %v9684 = vadd.f32 %v9475, %v9683
    %v9685 = vpop.f32.mrf.mxu0
    %v9686 = vadd.f32 %v9477, %v9685
    %9687 = vmatprep.mubr.f32.mxu0 0.0
    %9688 = vmatmul.mubr.f32.gmra.mxu0 %v9552
    %v9689 = vpop.f32.mrf.mxu0
    %v9690 = vadd.f32 %v9481, %v9689
    %v9691 = vpop.f32.mrf.mxu0
    %v9692 = vadd.f32 %v9483, %v9691
    %9693 = vmatprep.mubr.f32.mxu0 0.0
    %9694 = vmatmul.mubr.f32.gmra.mxu0 %v9555
    %v9695 = vpop.f32.mrf.mxu0
    %v9696 = vadd.f32 %v9487, %v9695
    %v9697 = vpop.f32.mrf.mxu0
    %v9698 = vadd.f32 %v9489, %v9697
    %9699 = vmatprep.mubr.f32.mxu0 0.0
    %9700 = vmatmul.mubr.f32.gmra.mxu0 %v9558
    %v9701 = vpop.f32.mrf.mxu0
    %v9702 = vadd.f32 %v9493, %v9701
    %v9703 = vpop.f32.mrf.mxu0
    %v9704 = vadd.f32 %v9495, %v9703
    %9705 = vmatprep.mubr.f32.mxu0 0.0
    %9706 = vmatmul.mubr.f32.gmra.mxu0 %v9561
    %v9707 = vpop.f32.mrf.mxu0
    %v9708 = vadd.f32 %v9499, %v9707
    %v9709 = vpop.f32.mrf.mxu0
    %v9710 = vadd.f32 %v9501, %v9709
    %9711 = vmatprep.mubr.f32.mxu0 0.0
    %9712 = vmatmul.mubr.f32.gmra.mxu0 %v9564
    %v9713 = vpop.f32.mrf.mxu0
    %v9714 = vadd.f32 %v9505, %v9713
    %v9715 = vpop.f32.mrf.mxu0
    %v9716 = vadd.f32 %v9507, %v9715
    %9717 = vmatprep.mubr.f32.mxu0 0.0
    %9718 = vmatmul.mubr.f32.gmra.mxu0 %v9567
    %v9719 = vpop.f32.mrf.mxu0
    %v9720 = vadd.f32 %v9511, %v9719
    %v9721 = vpop.f32.mrf.mxu0
    %v9722 = vadd.f32 %v9513, %v9721
    %9723 = vmatprep.mubr.f32.mxu0 0.0
    %9724 = vmatmul.mubr.f32.gmra.mxu0 %v9570
    %v9725 = vpop.f32.mrf.mxu0
    %v9726 = vadd.f32 %v9517, %v9725
    %v9727 = vpop.f32.mrf.mxu0
    %v9728 = vadd.f32 %v9519, %v9727
    %9729 = vmatprep.mubr.f32.mxu0 0.0
    %9730 = vmatmul.mubr.f32.gmra.mxu0 %v9573
    %v9731 = vpop.f32.mrf.mxu0
    %v9732 = vadd.f32 %v9523, %v9731
    %v9733 = vpop.f32.mrf.mxu0
    %v9734 = vadd.f32 %v9525, %v9733
    %9735 = vdwg.mxu0
    %9736 = vst.msk [vmem:[#allocation8] sm:$0xff] %vm1437, %v9642
    %9737 = vst.msk [vmem:[#allocation8 + $0x8] sm:$0xff] %vm1437, %v9648
    %9738 = vst.msk [vmem:[#allocation8 + $0x10] sm:$0xff] %vm1437, %v9654
    %9739 = vst.msk [vmem:[#allocation8 + $0x18] sm:$0xff] %vm1437, %v9660
    %9740 = vst.msk [vmem:[#allocation8 + $0x20] sm:$0xff] %vm1437, %v9666
    %9741 = vst.msk [vmem:[#allocation8 + $0x28] sm:$0xff] %vm1437, %v9672
    %9742 = vst.msk [vmem:[#allocation8 + $0x30] sm:$0xff] %vm1437, %v9678
    %9743 = vst.msk [vmem:[#allocation8 + $0x38] sm:$0xff] %vm1437, %v9684
    %9752 = vrot.lane.b32.xlu0 %v9642, 64
    %v9753 = vpop.permute.xlu0 %9752
    %9754 = vrot.lane.b32.xlu0 %v9648, 64
    %v9755 = vpop.permute.xlu0 %9754
    %9756 = vrot.lane.b32.xlu0 %v9654, 64
    %v9757 = vpop.permute.xlu0 %9756
    %9758 = vrot.lane.b32.xlu0 %v9660, 64
    %v9759 = vpop.permute.xlu0 %9758
    %9760 = vrot.lane.b32.xlu0 %v9666, 64
    %v9761 = vpop.permute.xlu0 %9760
    %9762 = vrot.lane.b32.xlu0 %v9672, 64
    %v9763 = vpop.permute.xlu0 %9762
    %9764 = vrot.lane.b32.xlu0 %v9678, 64
    %v9765 = vpop.permute.xlu0 %9764
    %9766 = vrot.lane.b32.xlu0 %v9684, 64
    %v9767 = vpop.permute.xlu0 %9766
    %s9776 = scalar_lea.vmem [#allocation8], 64
    %9777 = vst.msk [vmem:[%s9776] sm:$0xff] %vm1437, %v9753
    %9778 = vst.msk [vmem:[%s9776 + $0x8] sm:$0xff] %vm1437, %v9755
    %9779 = vst.msk [vmem:[%s9776 + $0x10] sm:$0xff] %vm1437, %v9757
    %9780 = vst.msk [vmem:[%s9776 + $0x18] sm:$0xff] %vm1437, %v9759
    %9781 = vst.msk [vmem:[%s9776 + $0x20] sm:$0xff] %vm1437, %v9761
    %9782 = vst.msk [vmem:[%s9776 + $0x28] sm:$0xff] %vm1437, %v9763
    %9783 = vst.msk [vmem:[%s9776 + $0x30] sm:$0xff] %vm1437, %v9765
    %9784 = vst.msk [vmem:[%s9776 + $0x38] sm:$0xff] %vm1437, %v9767
    %s9785 = scalar_lea.vmem [#allocation8], 128
    %9786 = vst.msk [vmem:[%s9785] sm:$0xff] %vm1437, %v9644
    %9787 = vst.msk [vmem:[%s9785 + $0x8] sm:$0xff] %vm1437, %v9650
    %9788 = vst.msk [vmem:[%s9785 + $0x10] sm:$0xff] %vm1437, %v9656
    %9789 = vst.msk [vmem:[%s9785 + $0x18] sm:$0xff] %vm1437, %v9662
    %9790 = vst.msk [vmem:[%s9785 + $0x20] sm:$0xff] %vm1437, %v9668
    %9791 = vst.msk [vmem:[%s9785 + $0x28] sm:$0xff] %vm1437, %v9674
    %9792 = vst.msk [vmem:[%s9785 + $0x30] sm:$0xff] %vm1437, %v9680
    %9793 = vst.msk [vmem:[%s9785 + $0x38] sm:$0xff] %vm1437, %v9686
    %s9794 = scalar_lea.vmem [#allocation8], 192
    %9795 = vst.msk [vmem:[%s9794] sm:$0xff] %vm1437, %v9690
    %9796 = vst.msk [vmem:[%s9794 + $0x8] sm:$0xff] %vm1437, %v9696
    %9797 = vst.msk [vmem:[%s9794 + $0x10] sm:$0xff] %vm1437, %v9702
    %9798 = vst.msk [vmem:[%s9794 + $0x18] sm:$0xff] %vm1437, %v9708
    %9799 = vst.msk [vmem:[%s9794 + $0x20] sm:$0xff] %vm1437, %v9714
    %9800 = vst.msk [vmem:[%s9794 + $0x28] sm:$0xff] %vm1437, %v9720
    %9801 = vst.msk [vmem:[%s9794 + $0x30] sm:$0xff] %vm1437, %v9726
    %9802 = vst.msk [vmem:[%s9794 + $0x38] sm:$0xff] %vm1437, %v9732
    %9811 = vrot.lane.b32.xlu0 %v9690, 64
    %v9812 = vpop.permute.xlu0 %9811
    %9813 = vrot.lane.b32.xlu0 %v9696, 64
    %v9814 = vpop.permute.xlu0 %9813
    %9815 = vrot.lane.b32.xlu0 %v9702, 64
    %v9816 = vpop.permute.xlu0 %9815
    %9817 = vrot.lane.b32.xlu0 %v9708, 64
    %v9818 = vpop.permute.xlu0 %9817
    %9819 = vrot.lane.b32.xlu0 %v9714, 64
    %v9820 = vpop.permute.xlu0 %9819
    %9821 = vrot.lane.b32.xlu0 %v9720, 64
    %v9822 = vpop.permute.xlu0 %9821
    %9823 = vrot.lane.b32.xlu0 %v9726, 64
    %v9824 = vpop.permute.xlu0 %9823
    %9825 = vrot.lane.b32.xlu0 %v9732, 64
    %v9826 = vpop.permute.xlu0 %9825
    %s9835 = scalar_lea.vmem [#allocation8], 256
    %9836 = vst.msk [vmem:[%s9835] sm:$0xff] %vm1437, %v9812
    %9837 = vst.msk [vmem:[%s9835 + $0x8] sm:$0xff] %vm1437, %v9814
    %9838 = vst.msk [vmem:[%s9835 + $0x10] sm:$0xff] %vm1437, %v9816
    %9839 = vst.msk [vmem:[%s9835 + $0x18] sm:$0xff] %vm1437, %v9818
    %9840 = vst.msk [vmem:[%s9835 + $0x20] sm:$0xff] %vm1437, %v9820
    %9841 = vst.msk [vmem:[%s9835 + $0x28] sm:$0xff] %vm1437, %v9822
    %9842 = vst.msk [vmem:[%s9835 + $0x30] sm:$0xff] %vm1437, %v9824
    %9843 = vst.msk [vmem:[%s9835 + $0x38] sm:$0xff] %vm1437, %v9826
    %s9844 = scalar_lea.vmem [#allocation8], 320
    %9845 = vst.msk [vmem:[%s9844] sm:$0xff] %vm1437, %v9692
    %9846 = vst.msk [vmem:[%s9844 + $0x8] sm:$0xff] %vm1437, %v9698
    %9847 = vst.msk [vmem:[%s9844 + $0x10] sm:$0xff] %vm1437, %v9704
    %9848 = vst.msk [vmem:[%s9844 + $0x18] sm:$0xff] %vm1437, %v9710
    %9849 = vst.msk [vmem:[%s9844 + $0x20] sm:$0xff] %vm1437, %v9716
    %9850 = vst.msk [vmem:[%s9844 + $0x28] sm:$0xff] %vm1437, %v9722
    %9851 = vst.msk [vmem:[%s9844 + $0x30] sm:$0xff] %vm1437, %v9728
    %9852 = vst.msk [vmem:[%s9844 + $0x38] sm:$0xff] %vm1437, %v9734
    // Predicated region
    $region90: #{generator_forward.1} parent=1 // pred_check
      _
    $region91: #{generator_forward.1} parent=1 // pred_check_branch
      %9854 = sbr.rel (0) target = $region93
    $region92: #{generator_forward.1} parent=1 // pred_region
      %s9856 = ssub.s32 6144, 6144
      %9857 = vsyncadd [#allocation4], %s9856
      %s9858 = sshll.u32 [#allocation8], 4
      %s9859 = int_to_ptr.vmem [resolvable:$true] %s9858
      %9864 = dma.vmem_to_hbm [thread:$0]  %s9859, 6144, %s19, [#allocation4], 128, 128, 8
    $region93: #{generator_forward.1} parent=1 // pred_fallthru
      _
    // Predicated region
    $region94: #{generator_forward.1} parent=1 // pred_check
      _
    $region95: #{generator_forward.1} parent=1 // pred_check_branch
      %9866 = sbr.rel (0) target = $region97
    $region96: #{generator_forward.1} parent=1 // pred_region
      %9867 = dma.done [#allocation4], 6144
    $region97: #{generator_forward.1} parent=1 // pred_fallthru
      _
    %9868 = vsyncpa [#allocation3], 1
    %9869 = vsyncpa [#allocation6], 1
    %9870 = vsyncpa [#allocation4], 1

</llo_original>
